<compile_context>
chip_gen: v7x
topology: tpu7x:2x2x1
jax: 0.10.0
libtpu: 0.0.40
codegen_flags: <defaults>
</compile_context>

<pallas_src>
import functools

import jax
import jax.numpy as jnp
from jax.experimental import pallas as pl
from jax.experimental.pallas import tpu as pltpu

EPS = 1e-5
LANE = 128


def _round_up(n, m):
    return ((n + m - 1) // m) * m


# ----------------------------------------------------------------------------
# Kernel
# ----------------------------------------------------------------------------
def mlp3_kernel(x_ref, w1_ref, b1_ref, w2_ref, b2_ref, w3_ref, b3_ref, o_ref):
    x = x_ref[...]                                                  # (bm, Fp) bf16

    # Layer 1: Linear (+ folded BN) + ReLU.   (Dropout(0.5) == identity in eval.)
    h = jnp.dot(x, w1_ref[...], preferred_element_type=jnp.float32) + b1_ref[...]
    h = jnp.maximum(h, 0.0)

    # Layer 2: Linear (+ folded BN) + ReLU.
    h = jnp.dot(h.astype(jnp.bfloat16), w2_ref[...],
                preferred_element_type=jnp.float32) + b2_ref[...]
    h = jnp.maximum(h, 0.0)

    # Layer 3 (output padded to 128 lanes) + exact sigmoid.
    # Exact divide: 1/inf == 0, so strongly negative pre-activations are safe.
    h = jnp.dot(h.astype(jnp.bfloat16), w3_ref[...],
                preferred_element_type=jnp.float32) + b3_ref[...]
    o_ref[...] = (1.0 / (1.0 + jnp.exp(-h))).astype(o_ref.dtype)
    # TODO(synk): training-mode Dropout (PRNG mask + 1/(1-p) scale) and batch-stat BN
    # are not modeled; this kernel implements eval-mode semantics only.


# ----------------------------------------------------------------------------
# Host-side parameter prep: fold BN, pad to TPU-friendly shapes, cast to bf16
# ----------------------------------------------------------------------------
def fold_and_pad_params(raw):
    (w1, b1, g1, be1, m1, v1,
     w2, b2, g2, be2, m2, v2,
     w3, b3) = raw
    F, H1 = w1.shape
    H2 = w2.shape[1]
    OUT = w3.shape[1]

    s1 = g1 * jax.lax.rsqrt(v1 + EPS)                  # (1, H1)
    w1f = w1 * s1
    b1f = (b1 - m1) * s1 + be1
    s2 = g2 * jax.lax.rsqrt(v2 + EPS)                  # (1, H2)
    w2f = w2 * s2
    b2f = (b2 - m2) * s2 + be2

    Fp = _round_up(F, LANE)
    H1p = _round_up(H1, LANE)      # 1064 -> 1152
    H2p = _round_up(H2, LANE)      # 512  -> 512
    OUTp = _round_up(OUT, LANE)    # 1    -> 128 (lane-dense output stores)

    w1p = jnp.zeros((Fp, H1p), jnp.float32).at[:F, :H1].set(w1f)
    b1p = jnp.zeros((1, H1p), jnp.float32).at[:, :H1].set(b1f)
    w2p = jnp.zeros((H1p, H2p), jnp.float32).at[:H1, :H2].set(w2f)
    b2p = jnp.zeros((1, H2p), jnp.float32).at[:, :H2].set(b2f)
    w3p = jnp.zeros((H2p, OUTp), jnp.float32).at[:H2, :OUT].set(w3)
    b3p = jnp.zeros((1, OUTp), jnp.float32).at[:, :OUT].set(b3)

    # Weights in bf16 (native MXU format), biases kept in f32 (added post-accumulation).
    return (w1p.astype(jnp.bfloat16), b1p,
            w2p.astype(jnp.bfloat16), b2p,
            w3p.astype(jnp.bfloat16), b3p)


# ----------------------------------------------------------------------------
# Grid sizing
# ----------------------------------------------------------------------------
def _num_batch_tiles(batch):
    """>=2 'parallel' batch tiles only pay off on dual-TensorCore chips (v7x),
    and only when the batch is big enough to amortize the duplicated ~1.6 MiB
    per-core weight DMA.  On single-TC v5e/v6e the grid is a serial loop, so one
    step avoids ~0.35 us/step pipeline overhead on a ~2-5 us kernel."""
    try:
        kind = jax.devices()[0].device_kind.lower()
    except Exception:
        kind = ""
    dual_tc = ("v7" in kind) or ("7x" in kind)
    return 2 if (dual_tc and batch >= 512) else 1


# ----------------------------------------------------------------------------
# Forward wrapper
# ----------------------------------------------------------------------------
@functools.partial(jax.jit, static_argnames=("block_b", "out_features"))
def mlp3_forward(x, params, block_b=1024, out_features=1):
    assert block_b % 8 == 0
    w1, b1, w2, b2, w3, b3 = params
    B, F = x.shape
    Fp, H1p = w1.shape
    H2p = w2.shape[1]
    OUTp = w3.shape[1]

    # Generation-aware, adaptive batch tiling (keeps batch padding < 8 rows).
    n_tiles = _num_batch_tiles(B)
    bm = min(block_b, _round_up(-(-B // n_tiles), 8))
    Bp = _round_up(B, bm)

    # Cast first (halves pad traffic), then pad; allow_input_fusion lets XLA fuse
    # this producer into the pallas_call operand instead of an HBM round trip.
    xp = x.astype(jnp.bfloat16)
    if (Bp, Fp) != (B, F):
        xp = jnp.pad(xp, ((0, Bp - B), (0, Fp - F)))

    # Loop-invariant parameters: fully resident, single-buffered (no 2x VMEM).
    def const_spec(shape):
        return pl.BlockSpec(shape, lambda i: (0, 0), pipeline_mode=pl.Buffered(1))

    out = pl.pallas_call(
        mlp3_kernel,
        out_shape=jax.ShapeDtypeStruct((Bp, OUTp), jnp.bfloat16),
        grid_spec=pltpu.PrefetchScalarGridSpec(
            num_scalar_prefetch=0,
            grid=(Bp // bm,),
            in_specs=[
                pl.BlockSpec((bm, Fp), lambda i: (i, 0)),     # x tile (double-buffered)
                const_spec((Fp, H1p)), const_spec((1, H1p)),  # W1', b1'
                const_spec((H1p, H2p)), const_spec((1, H2p)), # W2', b2'
                const_spec((H2p, OUTp)), const_spec((1, OUTp)),  # W3, b3 (padded)
            ],
            out_specs=pl.BlockSpec((bm, OUTp), lambda i: (i, 0)),
        ),
        compiler_params=pltpu.CompilerParams(
            dimension_semantics=("parallel",),
            allow_input_fusion=[True, False, False, False, False, False, False],
        ),
    )(xp, w1, b1, w2, b2, w3, b3)

    # Slice off batch/lane padding; return f32 for downstream use.
    return out[:B, :out_features].astype(jnp.float32)


# ----------------------------------------------------------------------------
# References
# ----------------------------------------------------------------------------
def mlp3_reference(x, raw_params):
    """Original-module eval-mode math, pure f32."""
    (w1, b1, g1, be1, m1, v1,
     w2, b2, g2, be2, m2, v2,
     w3, b3) = raw_params
    h = x @ w1 + b1
    h = (h - m1) * jax.lax.rsqrt(v1 + EPS) * g1 + be1
    h = jnp.maximum(h, 0.0)
    h = h @ w2 + b2
    h = (h - m2) * jax.lax.rsqrt(v2 + EPS) * g2 + be2
    h = jnp.maximum(h, 0.0)
    h = h @ w3 + b3
    return jax.nn.sigmoid(h)


def mlp3_reference_folded(x, params, out_features=1):
    """Mirrors the kernel numerics (folded BN, bf16 operands, f32 acc, bf16 output)."""
    w1, b1, w2, b2, w3, b3 = params
    Fp = w1.shape[0]
    xp = jnp.pad(x.astype(jnp.bfloat16), ((0, 0), (0, Fp - x.shape[1])))
    h = jnp.dot(xp, w1, preferred_element_type=jnp.float32) + b1
    h = jnp.maximum(h, 0.0)
    h = jnp.dot(h.astype(jnp.bfloat16), w2, preferred_element_type=jnp.float32) + b2
    h = jnp.maximum(h, 0.0)
    h = jnp.dot(h.astype(jnp.bfloat16), w3, preferred_element_type=jnp.float32) + b3
    y = (1.0 / (1.0 + jnp.exp(-h))).astype(jnp.bfloat16).astype(jnp.float32)
    return y[:, :out_features]


# ----------------------------------------------------------------------------
# Deterministic "PyTorch-style" parameter init
# ----------------------------------------------------------------------------
def init_params(key, input_size, h1=1064, h2=512, out=1):
    ks = jax.random.split(key, 10)

    def lin(kw, kb, fin, fout):
        bound = 1.0 / jnp.sqrt(fin)
        w = jax.random.uniform(kw, (fin, fout), jnp.float32, -bound, bound)
        b = jax.random.uniform(kb, (1, fout), jnp.float32, -bound, bound)
        return w, b

    w1, b1 = lin(ks[0], ks[1], input_size, h1)
    w2, b2 = lin(ks[2], ks[3], h1, h2)
    w3, b3 = lin(ks[4], ks[5], h2, out)
    # BN params: PyTorch defaults perturbed slightly so the BN folding is exercised.
    g1 = 1.0 + 0.1 * jax.random.normal(ks[6], (1, h1), jnp.float32)
    be1 = 0.1 * jax.random.normal(ks[7], (1, h1), jnp.float32)
    m1 = jnp.zeros((1, h1), jnp.float32)
    v1 = jnp.ones((1, h1), jnp.float32)
    g2 = 1.0 + 0.1 * jax.random.normal(ks[8], (1, h2), jnp.float32)
    be2 = 0.1 * jax.random.normal(ks[9], (1, h2), jnp.float32)
    m2 = jnp.zeros((1, h2), jnp.float32)
    v2 = jnp.ones((1, h2), jnp.float32)
    return (w1, b1, g1, be1, m1, v1,
            w2, b2, g2, be2, m2, v2,
            w3, b3)


if __name__ == "__main__":
    key = jax.random.PRNGKey(0)
    k_x, k_p = jax.random.split(key)

    B, INPUT_SIZE = 512, 32
    x = jax.random.normal(k_x, (B, INPUT_SIZE), jnp.float32)

    raw = init_params(k_p, INPUT_SIZE)
    params = fold_and_pad_params(raw)

    out = mlp3_forward(x, params)
    out = jax.block_until_ready(out)
    assert out.shape == (B, 1)

    # Tight check against a JAX reference with identical numerics
    # (folded BN, bf16 operands, bf16 output quantization).
    ref_exact = mlp3_reference_folded(x, params)
    err_exact = float(jnp.max(jnp.abs(out - ref_exact)))
    assert err_exact < 8e-3, err_exact
    # Looser check against the original-module f32 math (bf16 quantization dominates).
    ref_f32 = mlp3_reference(x, raw)
    err_f32 = float(jnp.max(jnp.abs(out - ref_f32)))
    assert err_f32 < 3e-2, err_f32

    print("KERNEL_OK")
</pallas_src>

<mosaic_0001>
module attributes {stable_mosaic.version = 11 : i64} {
  func.func @mlp3_kernel(%arg0: i32, %arg1: memref<512x128xbf16, #tpu.memory_space<vmem>>, %arg2: memref<128x1152xbf16, #tpu.memory_space<vmem>>, %arg3: memref<1x1152xf32, #tpu.memory_space<vmem>>, %arg4: memref<1152x512xbf16, #tpu.memory_space<vmem>>, %arg5: memref<1x512xf32, #tpu.memory_space<vmem>>, %arg6: memref<512x128xbf16, #tpu.memory_space<vmem>>, %arg7: memref<1x128xf32, #tpu.memory_space<vmem>>, %arg8: memref<512x128xbf16, #tpu.memory_space<vmem>>) attributes {dimension_semantics = [#tpu.dimension_semantics<parallel>], iteration_bounds = array<i64: 1>, scalar_prefetch = 0 : i64, scratch_operands = 0 : i64, tpu.core_type = #tpu.core_type<tc>, window_params = [{transform_indices = @transform_0, window_bounds = array<i64: 512, 128>}, {pipeline_mode = #tpu.pipeline_mode<synchronous>, transform_indices = @transform_1, window_bounds = array<i64: 128, 1152>}, {pipeline_mode = #tpu.pipeline_mode<synchronous>, transform_indices = @transform_2, window_bounds = array<i64: 1, 1152>}, {pipeline_mode = #tpu.pipeline_mode<synchronous>, transform_indices = @transform_3, window_bounds = array<i64: 1152, 512>}, {pipeline_mode = #tpu.pipeline_mode<synchronous>, transform_indices = @transform_4, window_bounds = array<i64: 1, 512>}, {pipeline_mode = #tpu.pipeline_mode<synchronous>, transform_indices = @transform_5, window_bounds = array<i64: 512, 128>}, {pipeline_mode = #tpu.pipeline_mode<synchronous>, transform_indices = @transform_6, window_bounds = array<i64: 1, 128>}, {transform_indices = @transform_7, window_bounds = array<i64: 512, 128>}]} {
    %c0 = arith.constant 0 : index
    %c0_0 = arith.constant 0 : index
    %0 = vector.load %arg1[%c0, %c0_0] : memref<512x128xbf16, #tpu.memory_space<vmem>>, vector<512x128xbf16>
    %c0_1 = arith.constant 0 : index
    %c0_2 = arith.constant 0 : index
    %1 = vector.load %arg2[%c0_1, %c0_2] : memref<128x1152xbf16, #tpu.memory_space<vmem>>, vector<128x1152xbf16>
    %cst = arith.constant dense<0.000000e+00> : vector<512x1152xf32>
    %2 = tpu.matmul %0, %1, %cst {dimension_numbers = #tpu.dot_dimension_numbers<[1], [0], [0], [1], [0, 0, 1, 1], [], []>} : vector<512x128xbf16>, vector<128x1152xbf16>, vector<512x1152xf32> -> vector<512x1152xf32>
    %c0_3 = arith.constant 0 : index
    %c0_4 = arith.constant 0 : index
    %3 = vector.load %arg3[%c0_3, %c0_4] : memref<1x1152xf32, #tpu.memory_space<vmem>>, vector<1x1152xf32>
    %4 = vector.broadcast %3 : vector<1x1152xf32> to vector<512x1152xf32>
    %5 = arith.addf %2, %4 : vector<512x1152xf32>
    %cst_5 = arith.constant 0.000000e+00 : f32
    %6 = vector.broadcast %cst_5 : f32 to vector<512x1152xf32>
    %7 = arith.maximumf %5, %6 : vector<512x1152xf32>
    %8 = arith.truncf %7 : vector<512x1152xf32> to vector<512x1152xbf16>
    %c0_6 = arith.constant 0 : index
    %c0_7 = arith.constant 0 : index
    %9 = vector.load %arg4[%c0_6, %c0_7] : memref<1152x512xbf16, #tpu.memory_space<vmem>>, vector<1152x512xbf16>
    %cst_8 = arith.constant dense<0.000000e+00> : vector<512x512xf32>
    %10 = tpu.matmul %8, %9, %cst_8 {dimension_numbers = #tpu.dot_dimension_numbers<[1], [0], [0], [1], [0, 0, 1, 1], [], []>} : vector<512x1152xbf16>, vector<1152x512xbf16>, vector<512x512xf32> -> vector<512x512xf32>
    %c0_9 = arith.constant 0 : index
    %c0_10 = arith.constant 0 : index
    %11 = vector.load %arg5[%c0_9, %c0_10] : memref<1x512xf32, #tpu.memory_space<vmem>>, vector<1x512xf32>
    %12 = vector.broadcast %11 : vector<1x512xf32> to vector<512x512xf32>
    %13 = arith.addf %10, %12 : vector<512x512xf32>
    %cst_11 = arith.constant 0.000000e+00 : f32
    %14 = vector.broadcast %cst_11 : f32 to vector<512x512xf32>
    %15 = arith.maximumf %13, %14 : vector<512x512xf32>
    %16 = arith.truncf %15 : vector<512x512xf32> to vector<512x512xbf16>
    %c0_12 = arith.constant 0 : index
    %c0_13 = arith.constant 0 : index
    %17 = vector.load %arg6[%c0_12, %c0_13] : memref<512x128xbf16, #tpu.memory_space<vmem>>, vector<512x128xbf16>
    %cst_14 = arith.constant dense<0.000000e+00> : vector<512x128xf32>
    %18 = tpu.matmul %16, %17, %cst_14 {dimension_numbers = #tpu.dot_dimension_numbers<[1], [0], [0], [1], [0, 0, 1, 1], [], []>} : vector<512x512xbf16>, vector<512x128xbf16>, vector<512x128xf32> -> vector<512x128xf32>
    %c0_15 = arith.constant 0 : index
    %c0_16 = arith.constant 0 : index
    %19 = vector.load %arg7[%c0_15, %c0_16] : memref<1x128xf32, #tpu.memory_space<vmem>>, vector<1x128xf32>
    %20 = vector.broadcast %19 : vector<1x128xf32> to vector<512x128xf32>
    %21 = arith.addf %18, %20 : vector<512x128xf32>
    %cst_17 = arith.constant 0.000000e+00 : f32
    %22 = vector.broadcast %cst_17 : f32 to vector<512x128xf32>
    %23 = arith.subf %22, %21 : vector<512x128xf32>
    %24 = math.exp %23 : vector<512x128xf32>
    %cst_18 = arith.constant 1.000000e+00 : f32
    %25 = vector.broadcast %cst_18 : f32 to vector<512x128xf32>
    %26 = arith.addf %25, %24 : vector<512x128xf32>
    %cst_19 = arith.constant 1.000000e+00 : f32
    %27 = vector.broadcast %cst_19 : f32 to vector<512x128xf32>
    %28 = arith.divf %27, %26 : vector<512x128xf32>
    %29 = arith.truncf %28 : vector<512x128xf32> to vector<512x128xbf16>
    %c0_20 = arith.constant 0 : index
    %c0_21 = arith.constant 0 : index
    %30 = vector.load %arg8[%c0_20, %c0_21] : memref<512x128xbf16, #tpu.memory_space<vmem>>, vector<512x128xbf16>
    tpu.vector_store %arg8[%c0_20, %c0_21], %29 {strides = array<i32>} : memref<512x128xbf16, #tpu.memory_space<vmem>>, vector<512x128xbf16>,
    return
  }
  func.func @transform_0(%arg0: i32) -> (i32, i32) {
    %c0_i32 = arith.constant 0 : i32
    %c0_i32_0 = arith.constant 0 : i32
    return %arg0, %c0_i32 : i32, i32
  }
  func.func @transform_1(%arg0: i32) -> (i32, i32) {
    %c0_i32 = arith.constant 0 : i32
    %c0_i32_0 = arith.constant 0 : i32
    %c0_i32_1 = arith.constant 0 : i32
    return %c0_i32, %c0_i32_0 : i32, i32
  }
  func.func @transform_2(%arg0: i32) -> (i32, i32) {
    %c0_i32 = arith.constant 0 : i32
    %c0_i32_0 = arith.constant 0 : i32
    %c0_i32_1 = arith.constant 0 : i32
    return %c0_i32, %c0_i32_0 : i32, i32
  }
  func.func @transform_3(%arg0: i32) -> (i32, i32) {
    %c0_i32 = arith.constant 0 : i32
    %c0_i32_0 = arith.constant 0 : i32
    %c0_i32_1 = arith.constant 0 : i32
    return %c0_i32, %c0_i32_0 : i32, i32
  }
  func.func @transform_4(%arg0: i32) -> (i32, i32) {
    %c0_i32 = arith.constant 0 : i32
    %c0_i32_0 = arith.constant 0 : i32
    %c0_i32_1 = arith.constant 0 : i32
    return %c0_i32, %c0_i32_0 : i32, i32
  }
  func.func @transform_5(%arg0: i32) -> (i32, i32) {
    %c0_i32 = arith.constant 0 : i32
    %c0_i32_0 = arith.constant 0 : i32
    %c0_i32_1 = arith.constant 0 : i32
    return %c0_i32, %c0_i32_0 : i32, i32
  }
  func.func @transform_6(%arg0: i32) -> (i32, i32) {
    %c0_i32 = arith.constant 0 : i32
    %c0_i32_0 = arith.constant 0 : i32
    %c0_i32_1 = arith.constant 0 : i32
    return %c0_i32, %c0_i32_0 : i32, i32
  }
  func.func @transform_7(%arg0: i32) -> (i32, i32) {
    %c0_i32 = arith.constant 0 : i32
    %c0_i32_0 = arith.constant 0 : i32
    return %arg0, %c0_i32 : i32, i32
  }
}

</mosaic_0001>

<llo_original>
// kernel: mlp3_forward.2
$region0: #{mlp3_forward.2}
  #allocation0 [shape = 'u32[]', space=smem, size = 0x4, offset = 0x4, fixed_abs, tag = 'smem constant byte address 0x4 - core index']
  #allocation1 [shape = 'u32[144,128]{1,0:T(1,128)}', space=vmem, size = 0x12000, scoped, tag = 'internal scratch']
  #allocation2 [shape = 'u32[2048]{0}', space=vmem, size = 0x2000, scoped, tag = 'scoped memory for mlp3_forward.2']
  #allocation3 [shape = 'u32[2048]{0}', space=vmem, size = 0x2000, scoped, tag = 'scoped memory for mlp3_forward.2']
  #allocation4 [shape = 'u32[2048]{0}', space=vmem, size = 0x2000, scoped, tag = 'scoped memory for mlp3_forward.2']
  #allocation5 [shape = 'u32[2048]{0}', space=vmem, size = 0x2000, scoped, tag = 'scoped memory for mlp3_forward.2']
  #allocation6 [shape = 'u32[2048]{0}', space=vmem, size = 0x2000, scoped, tag = 'scoped memory for mlp3_forward.2']
  %s0 = inlined_call_operand.hbm [shape: bf16[128,1152], index: 0, kind: input, shape index: {}]
  %s1 = inlined_call_operand.hbm [shape: f32[1,1152], index: 1, kind: input, shape index: {}]
  %s2 = inlined_call_operand.hbm [shape: bf16[1152,512], index: 2, kind: input, shape index: {}]
  %s3 = inlined_call_operand.hbm [shape: f32[1,512], index: 3, kind: input, shape index: {}]
  %s4 = inlined_call_operand.hbm [shape: bf16[512,128], index: 4, kind: input, shape index: {}]
  %s5 = inlined_call_operand.hbm [shape: f32[1,128], index: 5, kind: input, shape index: {}]
  %s6 = inlined_call_operand.vmem [shape: bf16[512,32], index: 6, kind: input, shape index: {}]
  %s7 = inlined_call_operand.<no memory space> [shape: bf16[], index: 7, kind: input, shape index: {}]
  %s8 = inlined_call_operand.vmem [shape: bf16[512,128], index: 8, kind: output, shape index: {}]
  %s9 = sld [smem:[#allocation0]]
  $region62: #{mlp3_forward.2} parent=0
    _
  %s11 = ssub.s32 1, %s9
  %s12 = scalar_select 0, %s11, %s9
  %v13 = vstv %s7
  %v14 = vunpack.i.l.bf16 %v13
  %v16 = vunpack.i.h.bf16 %v13
  $region1: #{mlp3_forward.2} parent=0
    #allocation7 [shape = 'u8[294912]{0}', space=vmem, size = 0x48000, scoped, tag = 'input window, operand 1, single buffered']
    #allocation8 [shape = 's32[1]{0}', space=sflag, size = 0x4, scoped, tag = 'scoped memory for mlp3_forward.2']
    #allocation9 [shape = 'u8[4608]{0}', space=vmem, size = 0x1400, scoped, tag = 'input window, operand 2, single buffered']
    #allocation10 [shape = 's32[1]{0}', space=sflag, size = 0x4, scoped, tag = 'scoped memory for mlp3_forward.2']
    #allocation11 [shape = 'u8[1179648]{0}', space=vmem, size = 0x120000, scoped, tag = 'input window, operand 3, single buffered']
    #allocation12 [shape = 'u8[2048]{0}', space=vmem, size = 0x800, scoped, tag = 'input window, operand 4, single buffered']
    #allocation13 [shape = 's32[1]{0}', space=sflag, size = 0x4, scoped, tag = 'scoped memory for mlp3_forward.2']
    #allocation14 [shape = 'u8[131072]{0}', space=vmem, size = 0x20000, scoped, tag = 'input window, operand 5, single buffered']
    #allocation15 [shape = 'u8[512]{0}', space=vmem, size = 0x400, scoped, tag = 'input window, operand 6, single buffered']
    #allocation16 [shape = 's32[1]{0}', space=sflag, size = 0x4, scoped, tag = 'scoped memory for mlp3_forward.2']
    #allocation17 [shape = 'u8[131072]{0}', space=vmem, size = 0x20000, dematerialized = true, scoped, tag = 'FusionAdapter Buffer %fusion.1 = bf16[512,128]{1,0:T(8,128)(2,1)} fusion(%param_6.1, %param_7), kind=kLoop, calls=%fused_computation.2.clone, metadata={op_name="jit(mlp3_forward)/jit(_pad)/pad" stack_frame_id=8}']
    %18 = vsyncpa [#allocation8], 0
    %19 = vsyncpa [#allocation10], 0
    %20 = vsyncpa [#allocation13], 0
    %21 = vsyncpa [#allocation16], 0
    // Predicated region
    $region2: #{mlp3_forward.2} parent=1 // pred_check
      _
    $region3: #{mlp3_forward.2} parent=1 // pred_check_branch
      %23 = sbr.rel (0) target = $region5
    $region4: #{mlp3_forward.2} parent=1 // pred_region
      _
    $region5: #{mlp3_forward.2} parent=1 // pred_fallthru
      _
    // Predicated region
    $region6: #{mlp3_forward.2} parent=1 // pred_check
      _
    $region7: #{mlp3_forward.2} parent=1 // pred_check_branch
      %25 = sbr.rel (0) target = $region9
    $region8: #{mlp3_forward.2} parent=1 // pred_region
      %s27 = ssub.s32 9216, 9216
      %28 = vsyncadd [#allocation8], %s27
      %s29 = sshll.u32 [#allocation7], 4
      %s30 = int_to_ptr.vmem [resolvable:$true] %s29
      %35 = dma.hbm_to_vmem [thread:$0]  %s0, 9216, %s30, [#allocation8], 576, 576, 36
    $region9: #{mlp3_forward.2} parent=1 // pred_fallthru
      _
    // Predicated region
    $region10: #{mlp3_forward.2} parent=1 // pred_check
      _
    $region11: #{mlp3_forward.2} parent=1 // pred_check_branch
      %37 = sbr.rel (0) target = $region13
    $region12: #{mlp3_forward.2} parent=1 // pred_region
      %s39 = ssub.s32 144, 144
      %40 = vsyncadd [#allocation10], %s39
      %s42 = sshll.u32 [#allocation9], 4
      %s43 = int_to_ptr.vmem [resolvable:$true] %s42
      %45 = dma.hbm_to_vmem [thread:$0]  %s1, 144, %s43, [#allocation10]
    $region13: #{mlp3_forward.2} parent=1 // pred_fallthru
      _
    // Predicated region
    $region14: #{mlp3_forward.2} parent=1 // pred_check
      _
    $region15: #{mlp3_forward.2} parent=1 // pred_check_branch
      %47 = sbr.rel (0) target = $region17
    $region16: #{mlp3_forward.2} parent=1 // pred_region
      %s49 = ssub.s32 36864, 36864
      %50 = vsyncadd [#allocation10], %s49
      %s51 = sshll.u32 [#allocation11], 4
      %s52 = int_to_ptr.vmem [resolvable:$true] %s51
      %57 = dma.hbm_to_vmem [thread:$0]  %s2, 36864, %s52, [#allocation10], 256, 256, 16
    $region17: #{mlp3_forward.2} parent=1 // pred_fallthru
      _
    // Predicated region
    $region18: #{mlp3_forward.2} parent=1 // pred_check
      _
    $region19: #{mlp3_forward.2} parent=1 // pred_check_branch
      %59 = sbr.rel (0) target = $region21
    $region20: #{mlp3_forward.2} parent=1 // pred_region
      %s61 = ssub.s32 64, 64
      %62 = vsyncadd [#allocation13], %s61
      %s64 = sshll.u32 [#allocation12], 4
      %s65 = int_to_ptr.vmem [resolvable:$true] %s64
      %67 = dma.hbm_to_vmem [thread:$0]  %s3, 64, %s65, [#allocation13]
    $region21: #{mlp3_forward.2} parent=1 // pred_fallthru
      _
    // Predicated region
    $region22: #{mlp3_forward.2} parent=1 // pred_check
      _
    $region23: #{mlp3_forward.2} parent=1 // pred_check_branch
      %69 = sbr.rel (0) target = $region25
    $region24: #{mlp3_forward.2} parent=1 // pred_region
      %s71 = ssub.s32 4096, 4096
      %72 = vsyncadd [#allocation13], %s71
      %s73 = sshll.u32 [#allocation14], 4
      %s74 = int_to_ptr.vmem [resolvable:$true] %s73
      %79 = dma.hbm_to_vmem [thread:$0]  %s4, 4096, %s74, [#allocation13], 64, 64, 4
    $region25: #{mlp3_forward.2} parent=1 // pred_fallthru
      _
    // Predicated region
    $region26: #{mlp3_forward.2} parent=1 // pred_check
      _
    $region27: #{mlp3_forward.2} parent=1 // pred_check_branch
      %81 = sbr.rel (0) target = $region29
    $region28: #{mlp3_forward.2} parent=1 // pred_region
      %s83 = ssub.s32 16, 16
      %84 = vsyncadd [#allocation16], %s83
      %s86 = sshll.u32 [#allocation15], 4
      %s87 = int_to_ptr.vmem [resolvable:$true] %s86
      %89 = dma.hbm_to_vmem [thread:$0]  %s5, 16, %s87, [#allocation16]
    $region29: #{mlp3_forward.2} parent=1 // pred_fallthru
      _
    // Predicated region
    $region30: #{mlp3_forward.2} parent=1 // pred_check
      _
    $region31: #{mlp3_forward.2} parent=1 // pred_check_branch
      %91 = sbr.rel (0) target = $region33
    $region32: #{mlp3_forward.2} parent=1 // pred_region
      %92 = dma.done [#allocation8], 9216
    $region33: #{mlp3_forward.2} parent=1 // pred_fallthru
      _
    // Predicated region
    $region34: #{mlp3_forward.2} parent=1 // pred_check
      _
    $region35: #{mlp3_forward.2} parent=1 // pred_check_branch
      %94 = sbr.rel (0) target = $region37
    $region36: #{mlp3_forward.2} parent=1 // pred_region
      %95 = dma.done [#allocation10], 144
    $region37: #{mlp3_forward.2} parent=1 // pred_fallthru
      _
    // Predicated region
    $region38: #{mlp3_forward.2} parent=1 // pred_check
      _
    $region39: #{mlp3_forward.2} parent=1 // pred_check_branch
      %97 = sbr.rel (0) target = $region41
    $region40: #{mlp3_forward.2} parent=1 // pred_region
      %98 = dma.done [#allocation10], 36864
    $region41: #{mlp3_forward.2} parent=1 // pred_fallthru
      _
    // Predicated region
    $region42: #{mlp3_forward.2} parent=1 // pred_check
      _
    $region43: #{mlp3_forward.2} parent=1 // pred_check_branch
      %100 = sbr.rel (0) target = $region45
    $region44: #{mlp3_forward.2} parent=1 // pred_region
      %101 = dma.done [#allocation13], 64
    $region45: #{mlp3_forward.2} parent=1 // pred_fallthru
      _
    // Predicated region
    $region46: #{mlp3_forward.2} parent=1 // pred_check
      _
    $region47: #{mlp3_forward.2} parent=1 // pred_check_branch
      %103 = sbr.rel (0) target = $region49
    $region48: #{mlp3_forward.2} parent=1 // pred_region
      %104 = dma.done [#allocation13], 4096
    $region49: #{mlp3_forward.2} parent=1 // pred_fallthru
      _
    // Predicated region
    $region50: #{mlp3_forward.2} parent=1 // pred_check
      _
    $region51: #{mlp3_forward.2} parent=1 // pred_check_branch
      %106 = sbr.rel (0) target = $region53
    $region52: #{mlp3_forward.2} parent=1 // pred_region
      %107 = dma.done [#allocation16], 16
    $region53: #{mlp3_forward.2} parent=1 // pred_fallthru
      _
    %s109 = sor.u32 255, 127
    %s110 = sand.u32 %s109, 85
    %s111 = sshrl.u32 %s110, 1
    %s112 = sor.u32 %s110, %s111
    %s113 = sand.u32 51, %s112
    %s114 = sshrl.u32 %s113, 2
    %s115 = sor.u32 %s113, %s114
    %s116 = sand.u32 15, %s115
    %v117 = vld [vmem:[%s6] sm:%s116]
    %v118 = vunpack.c.l.bf16 %v117
    %v119 = vunpack.c.h.bf16 %v117
    %v120 = vlaneseq
    %v121 = vand.u32 %v120, 127
    %vm123 = vcmp.lt.s32.totalorder %v121, 32
    %v124 = vsel %vm123, %v118, %v14
    %v125 = vpack.c.bf16 0.0, %v124
    %127 = vst [vmem:[#allocation17] sm:$0xf] %v125
    %s128 = scalar_lea.vmem %s6, 4
    %s130 = sor.u32 255, 127
    %s131 = sand.u32 %s130, 85
    %s132 = sshrl.u32 %s131, 1
    %s133 = sor.u32 %s131, %s132
    %s134 = sand.u32 51, %s133
    %s135 = sshrl.u32 %s134, 2
    %s136 = sor.u32 %s134, %s135
    %s137 = sand.u32 15, %s136
    %v138 = vld [vmem:[%s128] sm:%s137]
    %v139 = vunpack.c.l.bf16 %v138
    %v140 = vunpack.c.h.bf16 %v138
    %v141 = vlaneseq
    %v142 = vand.u32 %v141, 127
    %vm144 = vcmp.lt.s32.totalorder %v142, 32
    %v145 = vsel %vm144, %v139, %v14
    %s146 = scalar_lea.vmem [#allocation17], 4
    %v147 = vpack.c.bf16 0.0, %v145
    %149 = vst [vmem:[%s146] sm:$0xf] %v147
    %s150 = scalar_lea.vmem %s6, 8
    %s152 = sor.u32 255, 127
    %s153 = sand.u32 %s152, 85
    %s154 = sshrl.u32 %s153, 1
    %s155 = sor.u32 %s153, %s154
    %s156 = sand.u32 51, %s155
    %s157 = sshrl.u32 %s156, 2
    %s158 = sor.u32 %s156, %s157
    %s159 = sand.u32 15, %s158
    %v160 = vld [vmem:[%s150] sm:%s159]
    %v161 = vunpack.c.l.bf16 %v160
    %v162 = vunpack.c.h.bf16 %v160
    %v163 = vlaneseq
    %v164 = vand.u32 %v163, 127
    %vm166 = vcmp.lt.s32.totalorder %v164, 32
    %v167 = vsel %vm166, %v161, %v14
    %s168 = scalar_lea.vmem [#allocation17], 8
    %v169 = vpack.c.bf16 0.0, %v167
    %171 = vst [vmem:[%s168] sm:$0xf] %v169
    %s172 = scalar_lea.vmem %s6, 12
    %s174 = sor.u32 255, 127
    %s175 = sand.u32 %s174, 85
    %s176 = sshrl.u32 %s175, 1
    %s177 = sor.u32 %s175, %s176
    %s178 = sand.u32 51, %s177
    %s179 = sshrl.u32 %s178, 2
    %s180 = sor.u32 %s178, %s179
    %s181 = sand.u32 15, %s180
    %v182 = vld [vmem:[%s172] sm:%s181]
    %v183 = vunpack.c.l.bf16 %v182
    %v184 = vunpack.c.h.bf16 %v182
    %v185 = vlaneseq
    %v186 = vand.u32 %v185, 127
    %vm188 = vcmp.lt.s32.totalorder %v186, 32
    %v189 = vsel %vm188, %v183, %v14
    %s190 = scalar_lea.vmem [#allocation17], 12
    %v191 = vpack.c.bf16 0.0, %v189
    %193 = vst [vmem:[%s190] sm:$0xf] %v191
    %s194 = scalar_lea.vmem %s6, 16
    %s196 = sor.u32 255, 127
    %s197 = sand.u32 %s196, 85
    %s198 = sshrl.u32 %s197, 1
    %s199 = sor.u32 %s197, %s198
    %s200 = sand.u32 51, %s199
    %s201 = sshrl.u32 %s200, 2
    %s202 = sor.u32 %s200, %s201
    %s203 = sand.u32 15, %s202
    %v204 = vld [vmem:[%s194] sm:%s203]
    %v205 = vunpack.c.l.bf16 %v204
    %v206 = vunpack.c.h.bf16 %v204
    %v207 = vlaneseq
    %v208 = vand.u32 %v207, 127
    %vm210 = vcmp.lt.s32.totalorder %v208, 32
    %v211 = vsel %vm210, %v205, %v14
    %s212 = scalar_lea.vmem [#allocation17], 16
    %v213 = vpack.c.bf16 0.0, %v211
    %215 = vst [vmem:[%s212] sm:$0xf] %v213
    %s216 = scalar_lea.vmem %s6, 20
    %s218 = sor.u32 255, 127
    %s219 = sand.u32 %s218, 85
    %s220 = sshrl.u32 %s219, 1
    %s221 = sor.u32 %s219, %s220
    %s222 = sand.u32 51, %s221
    %s223 = sshrl.u32 %s222, 2
    %s224 = sor.u32 %s222, %s223
    %s225 = sand.u32 15, %s224
    %v226 = vld [vmem:[%s216] sm:%s225]
    %v227 = vunpack.c.l.bf16 %v226
    %v228 = vunpack.c.h.bf16 %v226
    %v229 = vlaneseq
    %v230 = vand.u32 %v229, 127
    %vm232 = vcmp.lt.s32.totalorder %v230, 32
    %v233 = vsel %vm232, %v227, %v14
    %s234 = scalar_lea.vmem [#allocation17], 20
    %v235 = vpack.c.bf16 0.0, %v233
    %237 = vst [vmem:[%s234] sm:$0xf] %v235
    %s238 = scalar_lea.vmem %s6, 24
    %s240 = sor.u32 255, 127
    %s241 = sand.u32 %s240, 85
    %s242 = sshrl.u32 %s241, 1
    %s243 = sor.u32 %s241, %s242
    %s244 = sand.u32 51, %s243
    %s245 = sshrl.u32 %s244, 2
    %s246 = sor.u32 %s244, %s245
    %s247 = sand.u32 15, %s246
    %v248 = vld [vmem:[%s238] sm:%s247]
    %v249 = vunpack.c.l.bf16 %v248
    %v250 = vunpack.c.h.bf16 %v248
    %v251 = vlaneseq
    %v252 = vand.u32 %v251, 127
    %vm254 = vcmp.lt.s32.totalorder %v252, 32
    %v255 = vsel %vm254, %v249, %v14
    %s256 = scalar_lea.vmem [#allocation17], 24
    %v257 = vpack.c.bf16 0.0, %v255
    %259 = vst [vmem:[%s256] sm:$0xf] %v257
    %s260 = scalar_lea.vmem %s6, 28
    %s262 = sor.u32 255, 127
    %s263 = sand.u32 %s262, 85
    %s264 = sshrl.u32 %s263, 1
    %s265 = sor.u32 %s263, %s264
    %s266 = sand.u32 51, %s265
    %s267 = sshrl.u32 %s266, 2
    %s268 = sor.u32 %s266, %s267
    %s269 = sand.u32 15, %s268
    %v270 = vld [vmem:[%s260] sm:%s269]
    %v271 = vunpack.c.l.bf16 %v270
    %v272 = vunpack.c.h.bf16 %v270
    %v273 = vlaneseq
    %v274 = vand.u32 %v273, 127
    %vm276 = vcmp.lt.s32.totalorder %v274, 32
    %v277 = vsel %vm276, %v271, %v14
    %s278 = scalar_lea.vmem [#allocation17], 28
    %v279 = vpack.c.bf16 0.0, %v277
    %281 = vst [vmem:[%s278] sm:$0xf] %v279
    %s282 = scalar_lea.vmem %s6, 32
    %s284 = sor.u32 255, 127
    %s285 = sand.u32 %s284, 85
    %s286 = sshrl.u32 %s285, 1
    %s287 = sor.u32 %s285, %s286
    %s288 = sand.u32 51, %s287
    %s289 = sshrl.u32 %s288, 2
    %s290 = sor.u32 %s288, %s289
    %s291 = sand.u32 15, %s290
    %v292 = vld [vmem:[%s282] sm:%s291]
    %v293 = vunpack.c.l.bf16 %v292
    %v294 = vunpack.c.h.bf16 %v292
    %v295 = vlaneseq
    %v296 = vand.u32 %v295, 127
    %vm298 = vcmp.lt.s32.totalorder %v296, 32
    %v299 = vsel %vm298, %v293, %v14
    %s300 = scalar_lea.vmem [#allocation17], 32
    %v301 = vpack.c.bf16 0.0, %v299
    %303 = vst [vmem:[%s300] sm:$0xf] %v301
    %s304 = scalar_lea.vmem %s6, 36
    %s306 = sor.u32 255, 127
    %s307 = sand.u32 %s306, 85
    %s308 = sshrl.u32 %s307, 1
    %s309 = sor.u32 %s307, %s308
    %s310 = sand.u32 51, %s309
    %s311 = sshrl.u32 %s310, 2
    %s312 = sor.u32 %s310, %s311
    %s313 = sand.u32 15, %s312
    %v314 = vld [vmem:[%s304] sm:%s313]
    %v315 = vunpack.c.l.bf16 %v314
    %v316 = vunpack.c.h.bf16 %v314
    %v317 = vlaneseq
    %v318 = vand.u32 %v317, 127
    %vm320 = vcmp.lt.s32.totalorder %v318, 32
    %v321 = vsel %vm320, %v315, %v14
    %s322 = scalar_lea.vmem [#allocation17], 36
    %v323 = vpack.c.bf16 0.0, %v321
    %325 = vst [vmem:[%s322] sm:$0xf] %v323
    %s326 = scalar_lea.vmem %s6, 40
    %s328 = sor.u32 255, 127
    %s329 = sand.u32 %s328, 85
    %s330 = sshrl.u32 %s329, 1
    %s331 = sor.u32 %s329, %s330
    %s332 = sand.u32 51, %s331
    %s333 = sshrl.u32 %s332, 2
    %s334 = sor.u32 %s332, %s333
    %s335 = sand.u32 15, %s334
    %v336 = vld [vmem:[%s326] sm:%s335]
    %v337 = vunpack.c.l.bf16 %v336
    %v338 = vunpack.c.h.bf16 %v336
    %v339 = vlaneseq
    %v340 = vand.u32 %v339, 127
    %vm342 = vcmp.lt.s32.totalorder %v340, 32
    %v343 = vsel %vm342, %v337, %v14
    %s344 = scalar_lea.vmem [#allocation17], 40
    %v345 = vpack.c.bf16 0.0, %v343
    %347 = vst [vmem:[%s344] sm:$0xf] %v345
    %s348 = scalar_lea.vmem %s6, 44
    %s350 = sor.u32 255, 127
    %s351 = sand.u32 %s350, 85
    %s352 = sshrl.u32 %s351, 1
    %s353 = sor.u32 %s351, %s352
    %s354 = sand.u32 51, %s353
    %s355 = sshrl.u32 %s354, 2
    %s356 = sor.u32 %s354, %s355
    %s357 = sand.u32 15, %s356
    %v358 = vld [vmem:[%s348] sm:%s357]
    %v359 = vunpack.c.l.bf16 %v358
    %v360 = vunpack.c.h.bf16 %v358
    %v361 = vlaneseq
    %v362 = vand.u32 %v361, 127
    %vm364 = vcmp.lt.s32.totalorder %v362, 32
    %v365 = vsel %vm364, %v359, %v14
    %s366 = scalar_lea.vmem [#allocation17], 44
    %v367 = vpack.c.bf16 0.0, %v365
    %369 = vst [vmem:[%s366] sm:$0xf] %v367
    %s370 = scalar_lea.vmem %s6, 48
    %s372 = sor.u32 255, 127
    %s373 = sand.u32 %s372, 85
    %s374 = sshrl.u32 %s373, 1
    %s375 = sor.u32 %s373, %s374
    %s376 = sand.u32 51, %s375
    %s377 = sshrl.u32 %s376, 2
    %s378 = sor.u32 %s376, %s377
    %s379 = sand.u32 15, %s378
    %v380 = vld [vmem:[%s370] sm:%s379]
    %v381 = vunpack.c.l.bf16 %v380
    %v382 = vunpack.c.h.bf16 %v380
    %v383 = vlaneseq
    %v384 = vand.u32 %v383, 127
    %vm386 = vcmp.lt.s32.totalorder %v384, 32
    %v387 = vsel %vm386, %v381, %v14
    %s388 = scalar_lea.vmem [#allocation17], 48
    %v389 = vpack.c.bf16 0.0, %v387
    %391 = vst [vmem:[%s388] sm:$0xf] %v389
    %s392 = scalar_lea.vmem %s6, 52
    %s394 = sor.u32 255, 127
    %s395 = sand.u32 %s394, 85
    %s396 = sshrl.u32 %s395, 1
    %s397 = sor.u32 %s395, %s396
    %s398 = sand.u32 51, %s397
    %s399 = sshrl.u32 %s398, 2
    %s400 = sor.u32 %s398, %s399
    %s401 = sand.u32 15, %s400
    %v402 = vld [vmem:[%s392] sm:%s401]
    %v403 = vunpack.c.l.bf16 %v402
    %v404 = vunpack.c.h.bf16 %v402
    %v405 = vlaneseq
    %v406 = vand.u32 %v405, 127
    %vm408 = vcmp.lt.s32.totalorder %v406, 32
    %v409 = vsel %vm408, %v403, %v14
    %s410 = scalar_lea.vmem [#allocation17], 52
    %v411 = vpack.c.bf16 0.0, %v409
    %413 = vst [vmem:[%s410] sm:$0xf] %v411
    %s414 = scalar_lea.vmem %s6, 56
    %s416 = sor.u32 255, 127
    %s417 = sand.u32 %s416, 85
    %s418 = sshrl.u32 %s417, 1
    %s419 = sor.u32 %s417, %s418
    %s420 = sand.u32 51, %s419
    %s421 = sshrl.u32 %s420, 2
    %s422 = sor.u32 %s420, %s421
    %s423 = sand.u32 15, %s422
    %v424 = vld [vmem:[%s414] sm:%s423]
    %v425 = vunpack.c.l.bf16 %v424
    %v426 = vunpack.c.h.bf16 %v424
    %v427 = vlaneseq
    %v428 = vand.u32 %v427, 127
    %vm430 = vcmp.lt.s32.totalorder %v428, 32
    %v431 = vsel %vm430, %v425, %v14
    %s432 = scalar_lea.vmem [#allocation17], 56
    %v433 = vpack.c.bf16 0.0, %v431
    %435 = vst [vmem:[%s432] sm:$0xf] %v433
    %s436 = scalar_lea.vmem %s6, 60
    %s438 = sor.u32 255, 127
    %s439 = sand.u32 %s438, 85
    %s440 = sshrl.u32 %s439, 1
    %s441 = sor.u32 %s439, %s440
    %s442 = sand.u32 51, %s441
    %s443 = sshrl.u32 %s442, 2
    %s444 = sor.u32 %s442, %s443
    %s445 = sand.u32 15, %s444
    %v446 = vld [vmem:[%s436] sm:%s445]
    %v447 = vunpack.c.l.bf16 %v446
    %v448 = vunpack.c.h.bf16 %v446
    %v449 = vlaneseq
    %v450 = vand.u32 %v449, 127
    %vm452 = vcmp.lt.s32.totalorder %v450, 32
    %v453 = vsel %vm452, %v447, %v14
    %s454 = scalar_lea.vmem [#allocation17], 60
    %v455 = vpack.c.bf16 0.0, %v453
    %457 = vst [vmem:[%s454] sm:$0xf] %v455
    %s458 = scalar_lea.vmem %s6, 64
    %s460 = sor.u32 255, 127
    %s461 = sand.u32 %s460, 85
    %s462 = sshrl.u32 %s461, 1
    %s463 = sor.u32 %s461, %s462
    %s464 = sand.u32 51, %s463
    %s465 = sshrl.u32 %s464, 2
    %s466 = sor.u32 %s464, %s465
    %s467 = sand.u32 15, %s466
    %v468 = vld [vmem:[%s458] sm:%s467]
    %v469 = vunpack.c.l.bf16 %v468
    %v470 = vunpack.c.h.bf16 %v468
    %v471 = vlaneseq
    %v472 = vand.u32 %v471, 127
    %vm474 = vcmp.lt.s32.totalorder %v472, 32
    %v475 = vsel %vm474, %v469, %v14
    %s476 = scalar_lea.vmem [#allocation17], 64
    %v477 = vpack.c.bf16 0.0, %v475
    %479 = vst [vmem:[%s476] sm:$0xf] %v477
    %s480 = scalar_lea.vmem %s6, 68
    %s482 = sor.u32 255, 127
    %s483 = sand.u32 %s482, 85
    %s484 = sshrl.u32 %s483, 1
    %s485 = sor.u32 %s483, %s484
    %s486 = sand.u32 51, %s485
    %s487 = sshrl.u32 %s486, 2
    %s488 = sor.u32 %s486, %s487
    %s489 = sand.u32 15, %s488
    %v490 = vld [vmem:[%s480] sm:%s489]
    %v491 = vunpack.c.l.bf16 %v490
    %v492 = vunpack.c.h.bf16 %v490
    %v493 = vlaneseq
    %v494 = vand.u32 %v493, 127
    %vm496 = vcmp.lt.s32.totalorder %v494, 32
    %v497 = vsel %vm496, %v491, %v14
    %s498 = scalar_lea.vmem [#allocation17], 68
    %v499 = vpack.c.bf16 0.0, %v497
    %501 = vst [vmem:[%s498] sm:$0xf] %v499
    %s502 = scalar_lea.vmem %s6, 72
    %s504 = sor.u32 255, 127
    %s505 = sand.u32 %s504, 85
    %s506 = sshrl.u32 %s505, 1
    %s507 = sor.u32 %s505, %s506
    %s508 = sand.u32 51, %s507
    %s509 = sshrl.u32 %s508, 2
    %s510 = sor.u32 %s508, %s509
    %s511 = sand.u32 15, %s510
    %v512 = vld [vmem:[%s502] sm:%s511]
    %v513 = vunpack.c.l.bf16 %v512
    %v514 = vunpack.c.h.bf16 %v512
    %v515 = vlaneseq
    %v516 = vand.u32 %v515, 127
    %vm518 = vcmp.lt.s32.totalorder %v516, 32
    %v519 = vsel %vm518, %v513, %v14
    %s520 = scalar_lea.vmem [#allocation17], 72
    %v521 = vpack.c.bf16 0.0, %v519
    %523 = vst [vmem:[%s520] sm:$0xf] %v521
    %s524 = scalar_lea.vmem %s6, 76
    %s526 = sor.u32 255, 127
    %s527 = sand.u32 %s526, 85
    %s528 = sshrl.u32 %s527, 1
    %s529 = sor.u32 %s527, %s528
    %s530 = sand.u32 51, %s529
    %s531 = sshrl.u32 %s530, 2
    %s532 = sor.u32 %s530, %s531
    %s533 = sand.u32 15, %s532
    %v534 = vld [vmem:[%s524] sm:%s533]
    %v535 = vunpack.c.l.bf16 %v534
    %v536 = vunpack.c.h.bf16 %v534
    %v537 = vlaneseq
    %v538 = vand.u32 %v537, 127
    %vm540 = vcmp.lt.s32.totalorder %v538, 32
    %v541 = vsel %vm540, %v535, %v14
    %s542 = scalar_lea.vmem [#allocation17], 76
    %v543 = vpack.c.bf16 0.0, %v541
    %545 = vst [vmem:[%s542] sm:$0xf] %v543
    %s546 = scalar_lea.vmem %s6, 80
    %s548 = sor.u32 255, 127
    %s549 = sand.u32 %s548, 85
    %s550 = sshrl.u32 %s549, 1
    %s551 = sor.u32 %s549, %s550
    %s552 = sand.u32 51, %s551
    %s553 = sshrl.u32 %s552, 2
    %s554 = sor.u32 %s552, %s553
    %s555 = sand.u32 15, %s554
    %v556 = vld [vmem:[%s546] sm:%s555]
    %v557 = vunpack.c.l.bf16 %v556
    %v558 = vunpack.c.h.bf16 %v556
    %v559 = vlaneseq
    %v560 = vand.u32 %v559, 127
    %vm562 = vcmp.lt.s32.totalorder %v560, 32
    %v563 = vsel %vm562, %v557, %v14
    %s564 = scalar_lea.vmem [#allocation17], 80
    %v565 = vpack.c.bf16 0.0, %v563
    %567 = vst [vmem:[%s564] sm:$0xf] %v565
    %s568 = scalar_lea.vmem %s6, 84
    %s570 = sor.u32 255, 127
    %s571 = sand.u32 %s570, 85
    %s572 = sshrl.u32 %s571, 1
    %s573 = sor.u32 %s571, %s572
    %s574 = sand.u32 51, %s573
    %s575 = sshrl.u32 %s574, 2
    %s576 = sor.u32 %s574, %s575
    %s577 = sand.u32 15, %s576
    %v578 = vld [vmem:[%s568] sm:%s577]
    %v579 = vunpack.c.l.bf16 %v578
    %v580 = vunpack.c.h.bf16 %v578
    %v581 = vlaneseq
    %v582 = vand.u32 %v581, 127
    %vm584 = vcmp.lt.s32.totalorder %v582, 32
    %v585 = vsel %vm584, %v579, %v14
    %s586 = scalar_lea.vmem [#allocation17], 84
    %v587 = vpack.c.bf16 0.0, %v585
    %589 = vst [vmem:[%s586] sm:$0xf] %v587
    %s590 = scalar_lea.vmem %s6, 88
    %s592 = sor.u32 255, 127
    %s593 = sand.u32 %s592, 85
    %s594 = sshrl.u32 %s593, 1
    %s595 = sor.u32 %s593, %s594
    %s596 = sand.u32 51, %s595
    %s597 = sshrl.u32 %s596, 2
    %s598 = sor.u32 %s596, %s597
    %s599 = sand.u32 15, %s598
    %v600 = vld [vmem:[%s590] sm:%s599]
    %v601 = vunpack.c.l.bf16 %v600
    %v602 = vunpack.c.h.bf16 %v600
    %v603 = vlaneseq
    %v604 = vand.u32 %v603, 127
    %vm606 = vcmp.lt.s32.totalorder %v604, 32
    %v607 = vsel %vm606, %v601, %v14
    %s608 = scalar_lea.vmem [#allocation17], 88
    %v609 = vpack.c.bf16 0.0, %v607
    %611 = vst [vmem:[%s608] sm:$0xf] %v609
    %s612 = scalar_lea.vmem %s6, 92
    %s614 = sor.u32 255, 127
    %s615 = sand.u32 %s614, 85
    %s616 = sshrl.u32 %s615, 1
    %s617 = sor.u32 %s615, %s616
    %s618 = sand.u32 51, %s617
    %s619 = sshrl.u32 %s618, 2
    %s620 = sor.u32 %s618, %s619
    %s621 = sand.u32 15, %s620
    %v622 = vld [vmem:[%s612] sm:%s621]
    %v623 = vunpack.c.l.bf16 %v622
    %v624 = vunpack.c.h.bf16 %v622
    %v625 = vlaneseq
    %v626 = vand.u32 %v625, 127
    %vm628 = vcmp.lt.s32.totalorder %v626, 32
    %v629 = vsel %vm628, %v623, %v14
    %s630 = scalar_lea.vmem [#allocation17], 92
    %v631 = vpack.c.bf16 0.0, %v629
    %633 = vst [vmem:[%s630] sm:$0xf] %v631
    %s634 = scalar_lea.vmem %s6, 96
    %s636 = sor.u32 255, 127
    %s637 = sand.u32 %s636, 85
    %s638 = sshrl.u32 %s637, 1
    %s639 = sor.u32 %s637, %s638
    %s640 = sand.u32 51, %s639
    %s641 = sshrl.u32 %s640, 2
    %s642 = sor.u32 %s640, %s641
    %s643 = sand.u32 15, %s642
    %v644 = vld [vmem:[%s634] sm:%s643]
    %v645 = vunpack.c.l.bf16 %v644
    %v646 = vunpack.c.h.bf16 %v644
    %v647 = vlaneseq
    %v648 = vand.u32 %v647, 127
    %vm650 = vcmp.lt.s32.totalorder %v648, 32
    %v651 = vsel %vm650, %v645, %v14
    %s652 = scalar_lea.vmem [#allocation17], 96
    %v653 = vpack.c.bf16 0.0, %v651
    %655 = vst [vmem:[%s652] sm:$0xf] %v653
    %s656 = scalar_lea.vmem %s6, 100
    %s658 = sor.u32 255, 127
    %s659 = sand.u32 %s658, 85
    %s660 = sshrl.u32 %s659, 1
    %s661 = sor.u32 %s659, %s660
    %s662 = sand.u32 51, %s661
    %s663 = sshrl.u32 %s662, 2
    %s664 = sor.u32 %s662, %s663
    %s665 = sand.u32 15, %s664
    %v666 = vld [vmem:[%s656] sm:%s665]
    %v667 = vunpack.c.l.bf16 %v666
    %v668 = vunpack.c.h.bf16 %v666
    %v669 = vlaneseq
    %v670 = vand.u32 %v669, 127
    %vm672 = vcmp.lt.s32.totalorder %v670, 32
    %v673 = vsel %vm672, %v667, %v14
    %s674 = scalar_lea.vmem [#allocation17], 100
    %v675 = vpack.c.bf16 0.0, %v673
    %677 = vst [vmem:[%s674] sm:$0xf] %v675
    %s678 = scalar_lea.vmem %s6, 104
    %s680 = sor.u32 255, 127
    %s681 = sand.u32 %s680, 85
    %s682 = sshrl.u32 %s681, 1
    %s683 = sor.u32 %s681, %s682
    %s684 = sand.u32 51, %s683
    %s685 = sshrl.u32 %s684, 2
    %s686 = sor.u32 %s684, %s685
    %s687 = sand.u32 15, %s686
    %v688 = vld [vmem:[%s678] sm:%s687]
    %v689 = vunpack.c.l.bf16 %v688
    %v690 = vunpack.c.h.bf16 %v688
    %v691 = vlaneseq
    %v692 = vand.u32 %v691, 127
    %vm694 = vcmp.lt.s32.totalorder %v692, 32
    %v695 = vsel %vm694, %v689, %v14
    %s696 = scalar_lea.vmem [#allocation17], 104
    %v697 = vpack.c.bf16 0.0, %v695
    %699 = vst [vmem:[%s696] sm:$0xf] %v697
    %s700 = scalar_lea.vmem %s6, 108
    %s702 = sor.u32 255, 127
    %s703 = sand.u32 %s702, 85
    %s704 = sshrl.u32 %s703, 1
    %s705 = sor.u32 %s703, %s704
    %s706 = sand.u32 51, %s705
    %s707 = sshrl.u32 %s706, 2
    %s708 = sor.u32 %s706, %s707
    %s709 = sand.u32 15, %s708
    %v710 = vld [vmem:[%s700] sm:%s709]
    %v711 = vunpack.c.l.bf16 %v710
    %v712 = vunpack.c.h.bf16 %v710
    %v713 = vlaneseq
    %v714 = vand.u32 %v713, 127
    %vm716 = vcmp.lt.s32.totalorder %v714, 32
    %v717 = vsel %vm716, %v711, %v14
    %s718 = scalar_lea.vmem [#allocation17], 108
    %v719 = vpack.c.bf16 0.0, %v717
    %721 = vst [vmem:[%s718] sm:$0xf] %v719
    %s722 = scalar_lea.vmem %s6, 112
    %s724 = sor.u32 255, 127
    %s725 = sand.u32 %s724, 85
    %s726 = sshrl.u32 %s725, 1
    %s727 = sor.u32 %s725, %s726
    %s728 = sand.u32 51, %s727
    %s729 = sshrl.u32 %s728, 2
    %s730 = sor.u32 %s728, %s729
    %s731 = sand.u32 15, %s730
    %v732 = vld [vmem:[%s722] sm:%s731]
    %v733 = vunpack.c.l.bf16 %v732
    %v734 = vunpack.c.h.bf16 %v732
    %v735 = vlaneseq
    %v736 = vand.u32 %v735, 127
    %vm738 = vcmp.lt.s32.totalorder %v736, 32
    %v739 = vsel %vm738, %v733, %v14
    %s740 = scalar_lea.vmem [#allocation17], 112
    %v741 = vpack.c.bf16 0.0, %v739
    %743 = vst [vmem:[%s740] sm:$0xf] %v741
    %s744 = scalar_lea.vmem %s6, 116
    %s746 = sor.u32 255, 127
    %s747 = sand.u32 %s746, 85
    %s748 = sshrl.u32 %s747, 1
    %s749 = sor.u32 %s747, %s748
    %s750 = sand.u32 51, %s749
    %s751 = sshrl.u32 %s750, 2
    %s752 = sor.u32 %s750, %s751
    %s753 = sand.u32 15, %s752
    %v754 = vld [vmem:[%s744] sm:%s753]
    %v755 = vunpack.c.l.bf16 %v754
    %v756 = vunpack.c.h.bf16 %v754
    %v757 = vlaneseq
    %v758 = vand.u32 %v757, 127
    %vm760 = vcmp.lt.s32.totalorder %v758, 32
    %v761 = vsel %vm760, %v755, %v14
    %s762 = scalar_lea.vmem [#allocation17], 116
    %v763 = vpack.c.bf16 0.0, %v761
    %765 = vst [vmem:[%s762] sm:$0xf] %v763
    %s766 = scalar_lea.vmem %s6, 120
    %s768 = sor.u32 255, 127
    %s769 = sand.u32 %s768, 85
    %s770 = sshrl.u32 %s769, 1
    %s771 = sor.u32 %s769, %s770
    %s772 = sand.u32 51, %s771
    %s773 = sshrl.u32 %s772, 2
    %s774 = sor.u32 %s772, %s773
    %s775 = sand.u32 15, %s774
    %v776 = vld [vmem:[%s766] sm:%s775]
    %v777 = vunpack.c.l.bf16 %v776
    %v778 = vunpack.c.h.bf16 %v776
    %v779 = vlaneseq
    %v780 = vand.u32 %v779, 127
    %vm782 = vcmp.lt.s32.totalorder %v780, 32
    %v783 = vsel %vm782, %v777, %v14
    %s784 = scalar_lea.vmem [#allocation17], 120
    %v785 = vpack.c.bf16 0.0, %v783
    %787 = vst [vmem:[%s784] sm:$0xf] %v785
    %s788 = scalar_lea.vmem %s6, 124
    %s790 = sor.u32 255, 127
    %s791 = sand.u32 %s790, 85
    %s792 = sshrl.u32 %s791, 1
    %s793 = sor.u32 %s791, %s792
    %s794 = sand.u32 51, %s793
    %s795 = sshrl.u32 %s794, 2
    %s796 = sor.u32 %s794, %s795
    %s797 = sand.u32 15, %s796
    %v798 = vld [vmem:[%s788] sm:%s797]
    %v799 = vunpack.c.l.bf16 %v798
    %v800 = vunpack.c.h.bf16 %v798
    %v801 = vlaneseq
    %v802 = vand.u32 %v801, 127
    %vm804 = vcmp.lt.s32.totalorder %v802, 32
    %v805 = vsel %vm804, %v799, %v14
    %s806 = scalar_lea.vmem [#allocation17], 124
    %v807 = vpack.c.bf16 0.0, %v805
    %809 = vst [vmem:[%s806] sm:$0xf] %v807
    %s810 = scalar_lea.vmem %s6, 128
    %s812 = sor.u32 255, 127
    %s813 = sand.u32 %s812, 85
    %s814 = sshrl.u32 %s813, 1
    %s815 = sor.u32 %s813, %s814
    %s816 = sand.u32 51, %s815
    %s817 = sshrl.u32 %s816, 2
    %s818 = sor.u32 %s816, %s817
    %s819 = sand.u32 15, %s818
    %v820 = vld [vmem:[%s810] sm:%s819]
    %v821 = vunpack.c.l.bf16 %v820
    %v822 = vunpack.c.h.bf16 %v820
    %v823 = vlaneseq
    %v824 = vand.u32 %v823, 127
    %vm826 = vcmp.lt.s32.totalorder %v824, 32
    %v827 = vsel %vm826, %v821, %v14
    %s828 = scalar_lea.vmem [#allocation17], 128
    %v829 = vpack.c.bf16 0.0, %v827
    %831 = vst [vmem:[%s828] sm:$0xf] %v829
    %s832 = scalar_lea.vmem %s6, 132
    %s834 = sor.u32 255, 127
    %s835 = sand.u32 %s834, 85
    %s836 = sshrl.u32 %s835, 1
    %s837 = sor.u32 %s835, %s836
    %s838 = sand.u32 51, %s837
    %s839 = sshrl.u32 %s838, 2
    %s840 = sor.u32 %s838, %s839
    %s841 = sand.u32 15, %s840
    %v842 = vld [vmem:[%s832] sm:%s841]
    %v843 = vunpack.c.l.bf16 %v842
    %v844 = vunpack.c.h.bf16 %v842
    %v845 = vlaneseq
    %v846 = vand.u32 %v845, 127
    %vm848 = vcmp.lt.s32.totalorder %v846, 32
    %v849 = vsel %vm848, %v843, %v14
    %s850 = scalar_lea.vmem [#allocation17], 132
    %v851 = vpack.c.bf16 0.0, %v849
    %853 = vst [vmem:[%s850] sm:$0xf] %v851
    %s854 = scalar_lea.vmem %s6, 136
    %s856 = sor.u32 255, 127
    %s857 = sand.u32 %s856, 85
    %s858 = sshrl.u32 %s857, 1
    %s859 = sor.u32 %s857, %s858
    %s860 = sand.u32 51, %s859
    %s861 = sshrl.u32 %s860, 2
    %s862 = sor.u32 %s860, %s861
    %s863 = sand.u32 15, %s862
    %v864 = vld [vmem:[%s854] sm:%s863]
    %v865 = vunpack.c.l.bf16 %v864
    %v866 = vunpack.c.h.bf16 %v864
    %v867 = vlaneseq
    %v868 = vand.u32 %v867, 127
    %vm870 = vcmp.lt.s32.totalorder %v868, 32
    %v871 = vsel %vm870, %v865, %v14
    %s872 = scalar_lea.vmem [#allocation17], 136
    %v873 = vpack.c.bf16 0.0, %v871
    %875 = vst [vmem:[%s872] sm:$0xf] %v873
    %s876 = scalar_lea.vmem %s6, 140
    %s878 = sor.u32 255, 127
    %s879 = sand.u32 %s878, 85
    %s880 = sshrl.u32 %s879, 1
    %s881 = sor.u32 %s879, %s880
    %s882 = sand.u32 51, %s881
    %s883 = sshrl.u32 %s882, 2
    %s884 = sor.u32 %s882, %s883
    %s885 = sand.u32 15, %s884
    %v886 = vld [vmem:[%s876] sm:%s885]
    %v887 = vunpack.c.l.bf16 %v886
    %v888 = vunpack.c.h.bf16 %v886
    %v889 = vlaneseq
    %v890 = vand.u32 %v889, 127
    %vm892 = vcmp.lt.s32.totalorder %v890, 32
    %v893 = vsel %vm892, %v887, %v14
    %s894 = scalar_lea.vmem [#allocation17], 140
    %v895 = vpack.c.bf16 0.0, %v893
    %897 = vst [vmem:[%s894] sm:$0xf] %v895
    %s898 = scalar_lea.vmem %s6, 144
    %s900 = sor.u32 255, 127
    %s901 = sand.u32 %s900, 85
    %s902 = sshrl.u32 %s901, 1
    %s903 = sor.u32 %s901, %s902
    %s904 = sand.u32 51, %s903
    %s905 = sshrl.u32 %s904, 2
    %s906 = sor.u32 %s904, %s905
    %s907 = sand.u32 15, %s906
    %v908 = vld [vmem:[%s898] sm:%s907]
    %v909 = vunpack.c.l.bf16 %v908
    %v910 = vunpack.c.h.bf16 %v908
    %v911 = vlaneseq
    %v912 = vand.u32 %v911, 127
    %vm914 = vcmp.lt.s32.totalorder %v912, 32
    %v915 = vsel %vm914, %v909, %v14
    %s916 = scalar_lea.vmem [#allocation17], 144
    %v917 = vpack.c.bf16 0.0, %v915
    %919 = vst [vmem:[%s916] sm:$0xf] %v917
    %s920 = scalar_lea.vmem %s6, 148
    %s922 = sor.u32 255, 127
    %s923 = sand.u32 %s922, 85
    %s924 = sshrl.u32 %s923, 1
    %s925 = sor.u32 %s923, %s924
    %s926 = sand.u32 51, %s925
    %s927 = sshrl.u32 %s926, 2
    %s928 = sor.u32 %s926, %s927
    %s929 = sand.u32 15, %s928
    %v930 = vld [vmem:[%s920] sm:%s929]
    %v931 = vunpack.c.l.bf16 %v930
    %v932 = vunpack.c.h.bf16 %v930
    %v933 = vlaneseq
    %v934 = vand.u32 %v933, 127
    %vm936 = vcmp.lt.s32.totalorder %v934, 32
    %v937 = vsel %vm936, %v931, %v14
    %s938 = scalar_lea.vmem [#allocation17], 148
    %v939 = vpack.c.bf16 0.0, %v937
    %941 = vst [vmem:[%s938] sm:$0xf] %v939
    %s942 = scalar_lea.vmem %s6, 152
    %s944 = sor.u32 255, 127
    %s945 = sand.u32 %s944, 85
    %s946 = sshrl.u32 %s945, 1
    %s947 = sor.u32 %s945, %s946
    %s948 = sand.u32 51, %s947
    %s949 = sshrl.u32 %s948, 2
    %s950 = sor.u32 %s948, %s949
    %s951 = sand.u32 15, %s950
    %v952 = vld [vmem:[%s942] sm:%s951]
    %v953 = vunpack.c.l.bf16 %v952
    %v954 = vunpack.c.h.bf16 %v952
    %v955 = vlaneseq
    %v956 = vand.u32 %v955, 127
    %vm958 = vcmp.lt.s32.totalorder %v956, 32
    %v959 = vsel %vm958, %v953, %v14
    %s960 = scalar_lea.vmem [#allocation17], 152
    %v961 = vpack.c.bf16 0.0, %v959
    %963 = vst [vmem:[%s960] sm:$0xf] %v961
    %s964 = scalar_lea.vmem %s6, 156
    %s966 = sor.u32 255, 127
    %s967 = sand.u32 %s966, 85
    %s968 = sshrl.u32 %s967, 1
    %s969 = sor.u32 %s967, %s968
    %s970 = sand.u32 51, %s969
    %s971 = sshrl.u32 %s970, 2
    %s972 = sor.u32 %s970, %s971
    %s973 = sand.u32 15, %s972
    %v974 = vld [vmem:[%s964] sm:%s973]
    %v975 = vunpack.c.l.bf16 %v974
    %v976 = vunpack.c.h.bf16 %v974
    %v977 = vlaneseq
    %v978 = vand.u32 %v977, 127
    %vm980 = vcmp.lt.s32.totalorder %v978, 32
    %v981 = vsel %vm980, %v975, %v14
    %s982 = scalar_lea.vmem [#allocation17], 156
    %v983 = vpack.c.bf16 0.0, %v981
    %985 = vst [vmem:[%s982] sm:$0xf] %v983
    %s986 = scalar_lea.vmem %s6, 160
    %s988 = sor.u32 255, 127
    %s989 = sand.u32 %s988, 85
    %s990 = sshrl.u32 %s989, 1
    %s991 = sor.u32 %s989, %s990
    %s992 = sand.u32 51, %s991
    %s993 = sshrl.u32 %s992, 2
    %s994 = sor.u32 %s992, %s993
    %s995 = sand.u32 15, %s994
    %v996 = vld [vmem:[%s986] sm:%s995]
    %v997 = vunpack.c.l.bf16 %v996
    %v998 = vunpack.c.h.bf16 %v996
    %v999 = vlaneseq
    %v1000 = vand.u32 %v999, 127
    %vm1002 = vcmp.lt.s32.totalorder %v1000, 32
    %v1003 = vsel %vm1002, %v997, %v14
    %s1004 = scalar_lea.vmem [#allocation17], 160
    %v1005 = vpack.c.bf16 0.0, %v1003
    %1007 = vst [vmem:[%s1004] sm:$0xf] %v1005
    %s1008 = scalar_lea.vmem %s6, 164
    %s1010 = sor.u32 255, 127
    %s1011 = sand.u32 %s1010, 85
    %s1012 = sshrl.u32 %s1011, 1
    %s1013 = sor.u32 %s1011, %s1012
    %s1014 = sand.u32 51, %s1013
    %s1015 = sshrl.u32 %s1014, 2
    %s1016 = sor.u32 %s1014, %s1015
    %s1017 = sand.u32 15, %s1016
    %v1018 = vld [vmem:[%s1008] sm:%s1017]
    %v1019 = vunpack.c.l.bf16 %v1018
    %v1020 = vunpack.c.h.bf16 %v1018
    %v1021 = vlaneseq
    %v1022 = vand.u32 %v1021, 127
    %vm1024 = vcmp.lt.s32.totalorder %v1022, 32
    %v1025 = vsel %vm1024, %v1019, %v14
    %s1026 = scalar_lea.vmem [#allocation17], 164
    %v1027 = vpack.c.bf16 0.0, %v1025
    %1029 = vst [vmem:[%s1026] sm:$0xf] %v1027
    %s1030 = scalar_lea.vmem %s6, 168
    %s1032 = sor.u32 255, 127
    %s1033 = sand.u32 %s1032, 85
    %s1034 = sshrl.u32 %s1033, 1
    %s1035 = sor.u32 %s1033, %s1034
    %s1036 = sand.u32 51, %s1035
    %s1037 = sshrl.u32 %s1036, 2
    %s1038 = sor.u32 %s1036, %s1037
    %s1039 = sand.u32 15, %s1038
    %v1040 = vld [vmem:[%s1030] sm:%s1039]
    %v1041 = vunpack.c.l.bf16 %v1040
    %v1042 = vunpack.c.h.bf16 %v1040
    %v1043 = vlaneseq
    %v1044 = vand.u32 %v1043, 127
    %vm1046 = vcmp.lt.s32.totalorder %v1044, 32
    %v1047 = vsel %vm1046, %v1041, %v14
    %s1048 = scalar_lea.vmem [#allocation17], 168
    %v1049 = vpack.c.bf16 0.0, %v1047
    %1051 = vst [vmem:[%s1048] sm:$0xf] %v1049
    %s1052 = scalar_lea.vmem %s6, 172
    %s1054 = sor.u32 255, 127
    %s1055 = sand.u32 %s1054, 85
    %s1056 = sshrl.u32 %s1055, 1
    %s1057 = sor.u32 %s1055, %s1056
    %s1058 = sand.u32 51, %s1057
    %s1059 = sshrl.u32 %s1058, 2
    %s1060 = sor.u32 %s1058, %s1059
    %s1061 = sand.u32 15, %s1060
    %v1062 = vld [vmem:[%s1052] sm:%s1061]
    %v1063 = vunpack.c.l.bf16 %v1062
    %v1064 = vunpack.c.h.bf16 %v1062
    %v1065 = vlaneseq
    %v1066 = vand.u32 %v1065, 127
    %vm1068 = vcmp.lt.s32.totalorder %v1066, 32
    %v1069 = vsel %vm1068, %v1063, %v14
    %s1070 = scalar_lea.vmem [#allocation17], 172
    %v1071 = vpack.c.bf16 0.0, %v1069
    %1073 = vst [vmem:[%s1070] sm:$0xf] %v1071
    %s1074 = scalar_lea.vmem %s6, 176
    %s1076 = sor.u32 255, 127
    %s1077 = sand.u32 %s1076, 85
    %s1078 = sshrl.u32 %s1077, 1
    %s1079 = sor.u32 %s1077, %s1078
    %s1080 = sand.u32 51, %s1079
    %s1081 = sshrl.u32 %s1080, 2
    %s1082 = sor.u32 %s1080, %s1081
    %s1083 = sand.u32 15, %s1082
    %v1084 = vld [vmem:[%s1074] sm:%s1083]
    %v1085 = vunpack.c.l.bf16 %v1084
    %v1086 = vunpack.c.h.bf16 %v1084
    %v1087 = vlaneseq
    %v1088 = vand.u32 %v1087, 127
    %vm1090 = vcmp.lt.s32.totalorder %v1088, 32
    %v1091 = vsel %vm1090, %v1085, %v14
    %s1092 = scalar_lea.vmem [#allocation17], 176
    %v1093 = vpack.c.bf16 0.0, %v1091
    %1095 = vst [vmem:[%s1092] sm:$0xf] %v1093
    %s1096 = scalar_lea.vmem %s6, 180
    %s1098 = sor.u32 255, 127
    %s1099 = sand.u32 %s1098, 85
    %s1100 = sshrl.u32 %s1099, 1
    %s1101 = sor.u32 %s1099, %s1100
    %s1102 = sand.u32 51, %s1101
    %s1103 = sshrl.u32 %s1102, 2
    %s1104 = sor.u32 %s1102, %s1103
    %s1105 = sand.u32 15, %s1104
    %v1106 = vld [vmem:[%s1096] sm:%s1105]
    %v1107 = vunpack.c.l.bf16 %v1106
    %v1108 = vunpack.c.h.bf16 %v1106
    %v1109 = vlaneseq
    %v1110 = vand.u32 %v1109, 127
    %vm1112 = vcmp.lt.s32.totalorder %v1110, 32
    %v1113 = vsel %vm1112, %v1107, %v14
    %s1114 = scalar_lea.vmem [#allocation17], 180
    %v1115 = vpack.c.bf16 0.0, %v1113
    %1117 = vst [vmem:[%s1114] sm:$0xf] %v1115
    %s1118 = scalar_lea.vmem %s6, 184
    %s1120 = sor.u32 255, 127
    %s1121 = sand.u32 %s1120, 85
    %s1122 = sshrl.u32 %s1121, 1
    %s1123 = sor.u32 %s1121, %s1122
    %s1124 = sand.u32 51, %s1123
    %s1125 = sshrl.u32 %s1124, 2
    %s1126 = sor.u32 %s1124, %s1125
    %s1127 = sand.u32 15, %s1126
    %v1128 = vld [vmem:[%s1118] sm:%s1127]
    %v1129 = vunpack.c.l.bf16 %v1128
    %v1130 = vunpack.c.h.bf16 %v1128
    %v1131 = vlaneseq
    %v1132 = vand.u32 %v1131, 127
    %vm1134 = vcmp.lt.s32.totalorder %v1132, 32
    %v1135 = vsel %vm1134, %v1129, %v14
    %s1136 = scalar_lea.vmem [#allocation17], 184
    %v1137 = vpack.c.bf16 0.0, %v1135
    %1139 = vst [vmem:[%s1136] sm:$0xf] %v1137
    %s1140 = scalar_lea.vmem %s6, 188
    %s1142 = sor.u32 255, 127
    %s1143 = sand.u32 %s1142, 85
    %s1144 = sshrl.u32 %s1143, 1
    %s1145 = sor.u32 %s1143, %s1144
    %s1146 = sand.u32 51, %s1145
    %s1147 = sshrl.u32 %s1146, 2
    %s1148 = sor.u32 %s1146, %s1147
    %s1149 = sand.u32 15, %s1148
    %v1150 = vld [vmem:[%s1140] sm:%s1149]
    %v1151 = vunpack.c.l.bf16 %v1150
    %v1152 = vunpack.c.h.bf16 %v1150
    %v1153 = vlaneseq
    %v1154 = vand.u32 %v1153, 127
    %vm1156 = vcmp.lt.s32.totalorder %v1154, 32
    %v1157 = vsel %vm1156, %v1151, %v14
    %s1158 = scalar_lea.vmem [#allocation17], 188
    %v1159 = vpack.c.bf16 0.0, %v1157
    %1161 = vst [vmem:[%s1158] sm:$0xf] %v1159
    %s1162 = scalar_lea.vmem %s6, 192
    %s1164 = sor.u32 255, 127
    %s1165 = sand.u32 %s1164, 85
    %s1166 = sshrl.u32 %s1165, 1
    %s1167 = sor.u32 %s1165, %s1166
    %s1168 = sand.u32 51, %s1167
    %s1169 = sshrl.u32 %s1168, 2
    %s1170 = sor.u32 %s1168, %s1169
    %s1171 = sand.u32 15, %s1170
    %v1172 = vld [vmem:[%s1162] sm:%s1171]
    %v1173 = vunpack.c.l.bf16 %v1172
    %v1174 = vunpack.c.h.bf16 %v1172
    %v1175 = vlaneseq
    %v1176 = vand.u32 %v1175, 127
    %vm1178 = vcmp.lt.s32.totalorder %v1176, 32
    %v1179 = vsel %vm1178, %v1173, %v14
    %s1180 = scalar_lea.vmem [#allocation17], 192
    %v1181 = vpack.c.bf16 0.0, %v1179
    %1183 = vst [vmem:[%s1180] sm:$0xf] %v1181
    %s1184 = scalar_lea.vmem %s6, 196
    %s1186 = sor.u32 255, 127
    %s1187 = sand.u32 %s1186, 85
    %s1188 = sshrl.u32 %s1187, 1
    %s1189 = sor.u32 %s1187, %s1188
    %s1190 = sand.u32 51, %s1189
    %s1191 = sshrl.u32 %s1190, 2
    %s1192 = sor.u32 %s1190, %s1191
    %s1193 = sand.u32 15, %s1192
    %v1194 = vld [vmem:[%s1184] sm:%s1193]
    %v1195 = vunpack.c.l.bf16 %v1194
    %v1196 = vunpack.c.h.bf16 %v1194
    %v1197 = vlaneseq
    %v1198 = vand.u32 %v1197, 127
    %vm1200 = vcmp.lt.s32.totalorder %v1198, 32
    %v1201 = vsel %vm1200, %v1195, %v14
    %s1202 = scalar_lea.vmem [#allocation17], 196
    %v1203 = vpack.c.bf16 0.0, %v1201
    %1205 = vst [vmem:[%s1202] sm:$0xf] %v1203
    %s1206 = scalar_lea.vmem %s6, 200
    %s1208 = sor.u32 255, 127
    %s1209 = sand.u32 %s1208, 85
    %s1210 = sshrl.u32 %s1209, 1
    %s1211 = sor.u32 %s1209, %s1210
    %s1212 = sand.u32 51, %s1211
    %s1213 = sshrl.u32 %s1212, 2
    %s1214 = sor.u32 %s1212, %s1213
    %s1215 = sand.u32 15, %s1214
    %v1216 = vld [vmem:[%s1206] sm:%s1215]
    %v1217 = vunpack.c.l.bf16 %v1216
    %v1218 = vunpack.c.h.bf16 %v1216
    %v1219 = vlaneseq
    %v1220 = vand.u32 %v1219, 127
    %vm1222 = vcmp.lt.s32.totalorder %v1220, 32
    %v1223 = vsel %vm1222, %v1217, %v14
    %s1224 = scalar_lea.vmem [#allocation17], 200
    %v1225 = vpack.c.bf16 0.0, %v1223
    %1227 = vst [vmem:[%s1224] sm:$0xf] %v1225
    %s1228 = scalar_lea.vmem %s6, 204
    %s1230 = sor.u32 255, 127
    %s1231 = sand.u32 %s1230, 85
    %s1232 = sshrl.u32 %s1231, 1
    %s1233 = sor.u32 %s1231, %s1232
    %s1234 = sand.u32 51, %s1233
    %s1235 = sshrl.u32 %s1234, 2
    %s1236 = sor.u32 %s1234, %s1235
    %s1237 = sand.u32 15, %s1236
    %v1238 = vld [vmem:[%s1228] sm:%s1237]
    %v1239 = vunpack.c.l.bf16 %v1238
    %v1240 = vunpack.c.h.bf16 %v1238
    %v1241 = vlaneseq
    %v1242 = vand.u32 %v1241, 127
    %vm1244 = vcmp.lt.s32.totalorder %v1242, 32
    %v1245 = vsel %vm1244, %v1239, %v14
    %s1246 = scalar_lea.vmem [#allocation17], 204
    %v1247 = vpack.c.bf16 0.0, %v1245
    %1249 = vst [vmem:[%s1246] sm:$0xf] %v1247
    %s1250 = scalar_lea.vmem %s6, 208
    %s1252 = sor.u32 255, 127
    %s1253 = sand.u32 %s1252, 85
    %s1254 = sshrl.u32 %s1253, 1
    %s1255 = sor.u32 %s1253, %s1254
    %s1256 = sand.u32 51, %s1255
    %s1257 = sshrl.u32 %s1256, 2
    %s1258 = sor.u32 %s1256, %s1257
    %s1259 = sand.u32 15, %s1258
    %v1260 = vld [vmem:[%s1250] sm:%s1259]
    %v1261 = vunpack.c.l.bf16 %v1260
    %v1262 = vunpack.c.h.bf16 %v1260
    %v1263 = vlaneseq
    %v1264 = vand.u32 %v1263, 127
    %vm1266 = vcmp.lt.s32.totalorder %v1264, 32
    %v1267 = vsel %vm1266, %v1261, %v14
    %s1268 = scalar_lea.vmem [#allocation17], 208
    %v1269 = vpack.c.bf16 0.0, %v1267
    %1271 = vst [vmem:[%s1268] sm:$0xf] %v1269
    %s1272 = scalar_lea.vmem %s6, 212
    %s1274 = sor.u32 255, 127
    %s1275 = sand.u32 %s1274, 85
    %s1276 = sshrl.u32 %s1275, 1
    %s1277 = sor.u32 %s1275, %s1276
    %s1278 = sand.u32 51, %s1277
    %s1279 = sshrl.u32 %s1278, 2
    %s1280 = sor.u32 %s1278, %s1279
    %s1281 = sand.u32 15, %s1280
    %v1282 = vld [vmem:[%s1272] sm:%s1281]
    %v1283 = vunpack.c.l.bf16 %v1282
    %v1284 = vunpack.c.h.bf16 %v1282
    %v1285 = vlaneseq
    %v1286 = vand.u32 %v1285, 127
    %vm1288 = vcmp.lt.s32.totalorder %v1286, 32
    %v1289 = vsel %vm1288, %v1283, %v14
    %s1290 = scalar_lea.vmem [#allocation17], 212
    %v1291 = vpack.c.bf16 0.0, %v1289
    %1293 = vst [vmem:[%s1290] sm:$0xf] %v1291
    %s1294 = scalar_lea.vmem %s6, 216
    %s1296 = sor.u32 255, 127
    %s1297 = sand.u32 %s1296, 85
    %s1298 = sshrl.u32 %s1297, 1
    %s1299 = sor.u32 %s1297, %s1298
    %s1300 = sand.u32 51, %s1299
    %s1301 = sshrl.u32 %s1300, 2
    %s1302 = sor.u32 %s1300, %s1301
    %s1303 = sand.u32 15, %s1302
    %v1304 = vld [vmem:[%s1294] sm:%s1303]
    %v1305 = vunpack.c.l.bf16 %v1304
    %v1306 = vunpack.c.h.bf16 %v1304
    %v1307 = vlaneseq
    %v1308 = vand.u32 %v1307, 127
    %vm1310 = vcmp.lt.s32.totalorder %v1308, 32
    %v1311 = vsel %vm1310, %v1305, %v14
    %s1312 = scalar_lea.vmem [#allocation17], 216
    %v1313 = vpack.c.bf16 0.0, %v1311
    %1315 = vst [vmem:[%s1312] sm:$0xf] %v1313
    %s1316 = scalar_lea.vmem %s6, 220
    %s1318 = sor.u32 255, 127
    %s1319 = sand.u32 %s1318, 85
    %s1320 = sshrl.u32 %s1319, 1
    %s1321 = sor.u32 %s1319, %s1320
    %s1322 = sand.u32 51, %s1321
    %s1323 = sshrl.u32 %s1322, 2
    %s1324 = sor.u32 %s1322, %s1323
    %s1325 = sand.u32 15, %s1324
    %v1326 = vld [vmem:[%s1316] sm:%s1325]
    %v1327 = vunpack.c.l.bf16 %v1326
    %v1328 = vunpack.c.h.bf16 %v1326
    %v1329 = vlaneseq
    %v1330 = vand.u32 %v1329, 127
    %vm1332 = vcmp.lt.s32.totalorder %v1330, 32
    %v1333 = vsel %vm1332, %v1327, %v14
    %s1334 = scalar_lea.vmem [#allocation17], 220
    %v1335 = vpack.c.bf16 0.0, %v1333
    %1337 = vst [vmem:[%s1334] sm:$0xf] %v1335
    %s1338 = scalar_lea.vmem %s6, 224
    %s1340 = sor.u32 255, 127
    %s1341 = sand.u32 %s1340, 85
    %s1342 = sshrl.u32 %s1341, 1
    %s1343 = sor.u32 %s1341, %s1342
    %s1344 = sand.u32 51, %s1343
    %s1345 = sshrl.u32 %s1344, 2
    %s1346 = sor.u32 %s1344, %s1345
    %s1347 = sand.u32 15, %s1346
    %v1348 = vld [vmem:[%s1338] sm:%s1347]
    %v1349 = vunpack.c.l.bf16 %v1348
    %v1350 = vunpack.c.h.bf16 %v1348
    %v1351 = vlaneseq
    %v1352 = vand.u32 %v1351, 127
    %vm1354 = vcmp.lt.s32.totalorder %v1352, 32
    %v1355 = vsel %vm1354, %v1349, %v14
    %s1356 = scalar_lea.vmem [#allocation17], 224
    %v1357 = vpack.c.bf16 0.0, %v1355
    %1359 = vst [vmem:[%s1356] sm:$0xf] %v1357
    %s1360 = scalar_lea.vmem %s6, 228
    %s1362 = sor.u32 255, 127
    %s1363 = sand.u32 %s1362, 85
    %s1364 = sshrl.u32 %s1363, 1
    %s1365 = sor.u32 %s1363, %s1364
    %s1366 = sand.u32 51, %s1365
    %s1367 = sshrl.u32 %s1366, 2
    %s1368 = sor.u32 %s1366, %s1367
    %s1369 = sand.u32 15, %s1368
    %v1370 = vld [vmem:[%s1360] sm:%s1369]
    %v1371 = vunpack.c.l.bf16 %v1370
    %v1372 = vunpack.c.h.bf16 %v1370
    %v1373 = vlaneseq
    %v1374 = vand.u32 %v1373, 127
    %vm1376 = vcmp.lt.s32.totalorder %v1374, 32
    %v1377 = vsel %vm1376, %v1371, %v14
    %s1378 = scalar_lea.vmem [#allocation17], 228
    %v1379 = vpack.c.bf16 0.0, %v1377
    %1381 = vst [vmem:[%s1378] sm:$0xf] %v1379
    %s1382 = scalar_lea.vmem %s6, 232
    %s1384 = sor.u32 255, 127
    %s1385 = sand.u32 %s1384, 85
    %s1386 = sshrl.u32 %s1385, 1
    %s1387 = sor.u32 %s1385, %s1386
    %s1388 = sand.u32 51, %s1387
    %s1389 = sshrl.u32 %s1388, 2
    %s1390 = sor.u32 %s1388, %s1389
    %s1391 = sand.u32 15, %s1390
    %v1392 = vld [vmem:[%s1382] sm:%s1391]
    %v1393 = vunpack.c.l.bf16 %v1392
    %v1394 = vunpack.c.h.bf16 %v1392
    %v1395 = vlaneseq
    %v1396 = vand.u32 %v1395, 127
    %vm1398 = vcmp.lt.s32.totalorder %v1396, 32
    %v1399 = vsel %vm1398, %v1393, %v14
    %s1400 = scalar_lea.vmem [#allocation17], 232
    %v1401 = vpack.c.bf16 0.0, %v1399
    %1403 = vst [vmem:[%s1400] sm:$0xf] %v1401
    %s1404 = scalar_lea.vmem %s6, 236
    %s1406 = sor.u32 255, 127
    %s1407 = sand.u32 %s1406, 85
    %s1408 = sshrl.u32 %s1407, 1
    %s1409 = sor.u32 %s1407, %s1408
    %s1410 = sand.u32 51, %s1409
    %s1411 = sshrl.u32 %s1410, 2
    %s1412 = sor.u32 %s1410, %s1411
    %s1413 = sand.u32 15, %s1412
    %v1414 = vld [vmem:[%s1404] sm:%s1413]
    %v1415 = vunpack.c.l.bf16 %v1414
    %v1416 = vunpack.c.h.bf16 %v1414
    %v1417 = vlaneseq
    %v1418 = vand.u32 %v1417, 127
    %vm1420 = vcmp.lt.s32.totalorder %v1418, 32
    %v1421 = vsel %vm1420, %v1415, %v14
    %s1422 = scalar_lea.vmem [#allocation17], 236
    %v1423 = vpack.c.bf16 0.0, %v1421
    %1425 = vst [vmem:[%s1422] sm:$0xf] %v1423
    %s1426 = scalar_lea.vmem %s6, 240
    %s1428 = sor.u32 255, 127
    %s1429 = sand.u32 %s1428, 85
    %s1430 = sshrl.u32 %s1429, 1
    %s1431 = sor.u32 %s1429, %s1430
    %s1432 = sand.u32 51, %s1431
    %s1433 = sshrl.u32 %s1432, 2
    %s1434 = sor.u32 %s1432, %s1433
    %s1435 = sand.u32 15, %s1434
    %v1436 = vld [vmem:[%s1426] sm:%s1435]
    %v1437 = vunpack.c.l.bf16 %v1436
    %v1438 = vunpack.c.h.bf16 %v1436
    %v1439 = vlaneseq
    %v1440 = vand.u32 %v1439, 127
    %vm1442 = vcmp.lt.s32.totalorder %v1440, 32
    %v1443 = vsel %vm1442, %v1437, %v14
    %s1444 = scalar_lea.vmem [#allocation17], 240
    %v1445 = vpack.c.bf16 0.0, %v1443
    %1447 = vst [vmem:[%s1444] sm:$0xf] %v1445
    %s1448 = scalar_lea.vmem %s6, 244
    %s1450 = sor.u32 255, 127
    %s1451 = sand.u32 %s1450, 85
    %s1452 = sshrl.u32 %s1451, 1
    %s1453 = sor.u32 %s1451, %s1452
    %s1454 = sand.u32 51, %s1453
    %s1455 = sshrl.u32 %s1454, 2
    %s1456 = sor.u32 %s1454, %s1455
    %s1457 = sand.u32 15, %s1456
    %v1458 = vld [vmem:[%s1448] sm:%s1457]
    %v1459 = vunpack.c.l.bf16 %v1458
    %v1460 = vunpack.c.h.bf16 %v1458
    %v1461 = vlaneseq
    %v1462 = vand.u32 %v1461, 127
    %vm1464 = vcmp.lt.s32.totalorder %v1462, 32
    %v1465 = vsel %vm1464, %v1459, %v14
    %s1466 = scalar_lea.vmem [#allocation17], 244
    %v1467 = vpack.c.bf16 0.0, %v1465
    %1469 = vst [vmem:[%s1466] sm:$0xf] %v1467
    %s1470 = scalar_lea.vmem %s6, 248
    %s1472 = sor.u32 255, 127
    %s1473 = sand.u32 %s1472, 85
    %s1474 = sshrl.u32 %s1473, 1
    %s1475 = sor.u32 %s1473, %s1474
    %s1476 = sand.u32 51, %s1475
    %s1477 = sshrl.u32 %s1476, 2
    %s1478 = sor.u32 %s1476, %s1477
    %s1479 = sand.u32 15, %s1478
    %v1480 = vld [vmem:[%s1470] sm:%s1479]
    %v1481 = vunpack.c.l.bf16 %v1480
    %v1482 = vunpack.c.h.bf16 %v1480
    %v1483 = vlaneseq
    %v1484 = vand.u32 %v1483, 127
    %vm1486 = vcmp.lt.s32.totalorder %v1484, 32
    %v1487 = vsel %vm1486, %v1481, %v14
    %s1488 = scalar_lea.vmem [#allocation17], 248
    %v1489 = vpack.c.bf16 0.0, %v1487
    %1491 = vst [vmem:[%s1488] sm:$0xf] %v1489
    %s1492 = scalar_lea.vmem %s6, 252
    %s1494 = sor.u32 255, 127
    %s1495 = sand.u32 %s1494, 85
    %s1496 = sshrl.u32 %s1495, 1
    %s1497 = sor.u32 %s1495, %s1496
    %s1498 = sand.u32 51, %s1497
    %s1499 = sshrl.u32 %s1498, 2
    %s1500 = sor.u32 %s1498, %s1499
    %s1501 = sand.u32 15, %s1500
    %v1502 = vld [vmem:[%s1492] sm:%s1501]
    %v1503 = vunpack.c.l.bf16 %v1502
    %v1504 = vunpack.c.h.bf16 %v1502
    %v1505 = vlaneseq
    %v1506 = vand.u32 %v1505, 127
    %vm1508 = vcmp.lt.s32.totalorder %v1506, 32
    %v1509 = vsel %vm1508, %v1503, %v14
    %s1510 = scalar_lea.vmem [#allocation17], 252
    %v1511 = vpack.c.bf16 0.0, %v1509
    %1513 = vst [vmem:[%s1510] sm:$0xf] %v1511
    %v1515 = vld [vmem:[#allocation17] sm:$0xf]
    %v1516 = vld [vmem:[#allocation17 + $0x4] sm:$0xf]
    %v1517 = vld [vmem:[#allocation17 + $0x8] sm:$0xf]
    %v1518 = vld [vmem:[#allocation17 + $0xc] sm:$0xf]
    %v1519 = vld [vmem:[#allocation17 + $0x10] sm:$0xf]
    %v1520 = vld [vmem:[#allocation17 + $0x14] sm:$0xf]
    %v1521 = vld [vmem:[#allocation17 + $0x18] sm:$0xf]
    %v1522 = vld [vmem:[#allocation17 + $0x1c] sm:$0xf]
    %v1523 = vld [vmem:[#allocation17 + $0x20] sm:$0xf]
    %v1524 = vld [vmem:[#allocation17 + $0x24] sm:$0xf]
    %v1525 = vld [vmem:[#allocation17 + $0x28] sm:$0xf]
    %v1526 = vld [vmem:[#allocation17 + $0x2c] sm:$0xf]
    %v1527 = vld [vmem:[#allocation17 + $0x30] sm:$0xf]
    %v1528 = vld [vmem:[#allocation17 + $0x34] sm:$0xf]
    %v1529 = vld [vmem:[#allocation17 + $0x38] sm:$0xf]
    %v1530 = vld [vmem:[#allocation17 + $0x3c] sm:$0xf]
    %v1531 = vld [vmem:[#allocation17 + $0x40] sm:$0xf]
    %v1532 = vld [vmem:[#allocation17 + $0x44] sm:$0xf]
    %v1533 = vld [vmem:[#allocation17 + $0x48] sm:$0xf]
    %v1534 = vld [vmem:[#allocation17 + $0x4c] sm:$0xf]
    %v1535 = vld [vmem:[#allocation17 + $0x50] sm:$0xf]
    %v1536 = vld [vmem:[#allocation17 + $0x54] sm:$0xf]
    %v1537 = vld [vmem:[#allocation17 + $0x58] sm:$0xf]
    %v1538 = vld [vmem:[#allocation17 + $0x5c] sm:$0xf]
    %v1539 = vld [vmem:[#allocation17 + $0x60] sm:$0xf]
    %v1540 = vld [vmem:[#allocation17 + $0x64] sm:$0xf]
    %v1541 = vld [vmem:[#allocation17 + $0x68] sm:$0xf]
    %v1542 = vld [vmem:[#allocation17 + $0x6c] sm:$0xf]
    %v1543 = vld [vmem:[#allocation17 + $0x70] sm:$0xf]
    %v1544 = vld [vmem:[#allocation17 + $0x74] sm:$0xf]
    %v1545 = vld [vmem:[#allocation17 + $0x78] sm:$0xf]
    %v1546 = vld [vmem:[#allocation17 + $0x7c] sm:$0xf]
    %v1547 = vld [vmem:[#allocation17 + $0x80] sm:$0xf]
    %v1548 = vld [vmem:[#allocation17 + $0x84] sm:$0xf]
    %v1549 = vld [vmem:[#allocation17 + $0x88] sm:$0xf]
    %v1550 = vld [vmem:[#allocation17 + $0x8c] sm:$0xf]
    %v1551 = vld [vmem:[#allocation17 + $0x90] sm:$0xf]
    %v1552 = vld [vmem:[#allocation17 + $0x94] sm:$0xf]
    %v1553 = vld [vmem:[#allocation17 + $0x98] sm:$0xf]
    %v1554 = vld [vmem:[#allocation17 + $0x9c] sm:$0xf]
    %v1555 = vld [vmem:[#allocation17 + $0xa0] sm:$0xf]
    %v1556 = vld [vmem:[#allocation17 + $0xa4] sm:$0xf]
    %v1557 = vld [vmem:[#allocation17 + $0xa8] sm:$0xf]
    %v1558 = vld [vmem:[#allocation17 + $0xac] sm:$0xf]
    %v1559 = vld [vmem:[#allocation17 + $0xb0] sm:$0xf]
    %v1560 = vld [vmem:[#allocation17 + $0xb4] sm:$0xf]
    %v1561 = vld [vmem:[#allocation17 + $0xb8] sm:$0xf]
    %v1562 = vld [vmem:[#allocation17 + $0xbc] sm:$0xf]
    %v1563 = vld [vmem:[#allocation17 + $0xc0] sm:$0xf]
    %v1564 = vld [vmem:[#allocation17 + $0xc4] sm:$0xf]
    %v1565 = vld [vmem:[#allocation17 + $0xc8] sm:$0xf]
    %v1566 = vld [vmem:[#allocation17 + $0xcc] sm:$0xf]
    %v1567 = vld [vmem:[#allocation17 + $0xd0] sm:$0xf]
    %v1568 = vld [vmem:[#allocation17 + $0xd4] sm:$0xf]
    %v1569 = vld [vmem:[#allocation17 + $0xd8] sm:$0xf]
    %v1570 = vld [vmem:[#allocation17 + $0xdc] sm:$0xf]
    %v1571 = vld [vmem:[#allocation17 + $0xe0] sm:$0xf]
    %v1572 = vld [vmem:[#allocation17 + $0xe4] sm:$0xf]
    %v1573 = vld [vmem:[#allocation17 + $0xe8] sm:$0xf]
    %v1574 = vld [vmem:[#allocation17 + $0xec] sm:$0xf]
    %v1575 = vld [vmem:[#allocation17 + $0xf0] sm:$0xf]
    %v1576 = vld [vmem:[#allocation17 + $0xf4] sm:$0xf]
    %v1577 = vld [vmem:[#allocation17 + $0xf8] sm:$0xf]
    %v1578 = vld [vmem:[#allocation17 + $0xfc] sm:$0xf]
    %v1579 = vld [vmem:[#allocation7] sm:$0xff]
    %v1580 = vld [vmem:[#allocation7 + $0x8] sm:$0xff]
    %v1581 = vld [vmem:[#allocation7 + $0x10] sm:$0xff]
    %v1582 = vld [vmem:[#allocation7 + $0x18] sm:$0xff]
    %v1583 = vld [vmem:[#allocation7 + $0x20] sm:$0xf]
    %v1584 = vld [vmem:[#allocation7 + $0x24] sm:$0xff]
    %v1585 = vld [vmem:[#allocation7 + $0x2c] sm:$0xff]
    %v1586 = vld [vmem:[#allocation7 + $0x34] sm:$0xff]
    %v1587 = vld [vmem:[#allocation7 + $0x3c] sm:$0xff]
    %v1588 = vld [vmem:[#allocation7 + $0x44] sm:$0xf]
    %v1589 = vld [vmem:[#allocation7 + $0x48] sm:$0xff]
    %v1590 = vld [vmem:[#allocation7 + $0x50] sm:$0xff]
    %v1591 = vld [vmem:[#allocation7 + $0x58] sm:$0xff]
    %v1592 = vld [vmem:[#allocation7 + $0x60] sm:$0xff]
    %v1593 = vld [vmem:[#allocation7 + $0x68] sm:$0xf]
    %v1594 = vld [vmem:[#allocation7 + $0x6c] sm:$0xff]
    %v1595 = vld [vmem:[#allocation7 + $0x74] sm:$0xff]
    %v1596 = vld [vmem:[#allocation7 + $0x7c] sm:$0xff]
    %v1597 = vld [vmem:[#allocation7 + $0x84] sm:$0xff]
    %v1598 = vld [vmem:[#allocation7 + $0x8c] sm:$0xf]
    %v1599 = vld [vmem:[#allocation7 + $0x90] sm:$0xff]
    %v1600 = vld [vmem:[#allocation7 + $0x98] sm:$0xff]
    %v1601 = vld [vmem:[#allocation7 + $0xa0] sm:$0xff]
    %v1602 = vld [vmem:[#allocation7 + $0xa8] sm:$0xff]
    %v1603 = vld [vmem:[#allocation7 + $0xb0] sm:$0xf]
    %v1604 = vld [vmem:[#allocation7 + $0xb4] sm:$0xff]
    %v1605 = vld [vmem:[#allocation7 + $0xbc] sm:$0xff]
    %v1606 = vld [vmem:[#allocation7 + $0xc4] sm:$0xff]
    %v1607 = vld [vmem:[#allocation7 + $0xcc] sm:$0xff]
    %v1608 = vld [vmem:[#allocation7 + $0xd4] sm:$0xf]
    %v1609 = vld [vmem:[#allocation7 + $0xd8] sm:$0xff]
    %v1610 = vld [vmem:[#allocation7 + $0xe0] sm:$0xff]
    %v1611 = vld [vmem:[#allocation7 + $0xe8] sm:$0xff]
    %v1612 = vld [vmem:[#allocation7 + $0xf0] sm:$0xff]
    %v1613 = vld [vmem:[#allocation7 + $0xf8] sm:$0xf]
    %v1614 = vld [vmem:[#allocation7 + $0xfc] sm:$0xff]
    %v1615 = vld [vmem:[#allocation7 + $0x104] sm:$0xff]
    %v1616 = vld [vmem:[#allocation7 + $0x10c] sm:$0xff]
    %v1617 = vld [vmem:[#allocation7 + $0x114] sm:$0xff]
    %v1618 = vld [vmem:[#allocation7 + $0x11c] sm:$0xf]
    %v1619 = vld [vmem:[#allocation7 + $0x120] sm:$0xff]
    %v1620 = vld [vmem:[#allocation7 + $0x128] sm:$0xff]
    %v1621 = vld [vmem:[#allocation7 + $0x130] sm:$0xff]
    %v1622 = vld [vmem:[#allocation7 + $0x138] sm:$0xff]
    %v1623 = vld [vmem:[#allocation7 + $0x140] sm:$0xf]
    %v1624 = vld [vmem:[#allocation7 + $0x144] sm:$0xff]
    %v1625 = vld [vmem:[#allocation7 + $0x14c] sm:$0xff]
    %v1626 = vld [vmem:[#allocation7 + $0x154] sm:$0xff]
    %v1627 = vld [vmem:[#allocation7 + $0x15c] sm:$0xff]
    %v1628 = vld [vmem:[#allocation7 + $0x164] sm:$0xf]
    %v1629 = vld [vmem:[#allocation7 + $0x168] sm:$0xff]
    %v1630 = vld [vmem:[#allocation7 + $0x170] sm:$0xff]
    %v1631 = vld [vmem:[#allocation7 + $0x178] sm:$0xff]
    %v1632 = vld [vmem:[#allocation7 + $0x180] sm:$0xff]
    %v1633 = vld [vmem:[#allocation7 + $0x188] sm:$0xf]
    %v1634 = vld [vmem:[#allocation7 + $0x18c] sm:$0xff]
    %v1635 = vld [vmem:[#allocation7 + $0x194] sm:$0xff]
    %v1636 = vld [vmem:[#allocation7 + $0x19c] sm:$0xff]
    %v1637 = vld [vmem:[#allocation7 + $0x1a4] sm:$0xff]
    %v1638 = vld [vmem:[#allocation7 + $0x1ac] sm:$0xf]
    %v1639 = vld [vmem:[#allocation7 + $0x1b0] sm:$0xff]
    %v1640 = vld [vmem:[#allocation7 + $0x1b8] sm:$0xff]
    %v1641 = vld [vmem:[#allocation7 + $0x1c0] sm:$0xff]
    %v1642 = vld [vmem:[#allocation7 + $0x1c8] sm:$0xff]
    %v1643 = vld [vmem:[#allocation7 + $0x1d0] sm:$0xf]
    %v1644 = vld [vmem:[#allocation7 + $0x1d4] sm:$0xff]
    %v1645 = vld [vmem:[#allocation7 + $0x1dc] sm:$0xff]
    %v1646 = vld [vmem:[#allocation7 + $0x1e4] sm:$0xff]
    %v1647 = vld [vmem:[#allocation7 + $0x1ec] sm:$0xff]
    %v1648 = vld [vmem:[#allocation7 + $0x1f4] sm:$0xf]
    %v1649 = vld [vmem:[#allocation7 + $0x1f8] sm:$0xff]
    %v1650 = vld [vmem:[#allocation7 + $0x200] sm:$0xff]
    %v1651 = vld [vmem:[#allocation7 + $0x208] sm:$0xff]
    %v1652 = vld [vmem:[#allocation7 + $0x210] sm:$0xff]
    %v1653 = vld [vmem:[#allocation7 + $0x218] sm:$0xf]
    %v1654 = vld [vmem:[#allocation7 + $0x21c] sm:$0xff]
    %v1655 = vld [vmem:[#allocation7 + $0x224] sm:$0xff]
    %v1656 = vld [vmem:[#allocation7 + $0x22c] sm:$0xff]
    %v1657 = vld [vmem:[#allocation7 + $0x234] sm:$0xff]
    %v1658 = vld [vmem:[#allocation7 + $0x23c] sm:$0xf]
    %v1659 = vld [vmem:[#allocation9] sm:$0xff]
    %v1660 = vld [vmem:[#allocation9 + $0x8] sm:$0x1]
    %v1663 = vlaneseq
    %v1664 = vshrl.u32 %v1663, 7
    %v1665 = vsub.s32 0, %v1664
    %v1666 = vrot.slane %v1659, %v1665
    %v1667 = vlaneseq
    %v1668 = vshrl.u32 %v1667, 7
    %v1669 = vsub.s32 1, %v1668
    %v1670 = vrot.slane %v1659, %v1669
    %v1671 = vlaneseq
    %v1672 = vshrl.u32 %v1671, 7
    %v1673 = vsub.s32 2, %v1672
    %v1674 = vrot.slane %v1659, %v1673
    %v1675 = vlaneseq
    %v1676 = vshrl.u32 %v1675, 7
    %v1677 = vsub.s32 3, %v1676
    %v1678 = vrot.slane %v1659, %v1677
    %v1679 = vlaneseq
    %v1680 = vshrl.u32 %v1679, 7
    %v1681 = vsub.s32 4, %v1680
    %v1682 = vrot.slane %v1659, %v1681
    %v1683 = vlaneseq
    %v1684 = vshrl.u32 %v1683, 7
    %v1685 = vsub.s32 5, %v1684
    %v1686 = vrot.slane %v1659, %v1685
    %v1687 = vlaneseq
    %v1688 = vshrl.u32 %v1687, 7
    %v1689 = vsub.s32 6, %v1688
    %v1690 = vrot.slane %v1659, %v1689
    %v1691 = vlaneseq
    %v1692 = vshrl.u32 %v1691, 7
    %v1693 = vsub.s32 7, %v1692
    %v1694 = vrot.slane %v1659, %v1693
    %v1695 = vlaneseq
    %v1696 = vshrl.u32 %v1695, 7
    %v1697 = vsub.s32 0, %v1696
    %v1698 = vrot.slane %v1660, %v1697
    %v1772 = vunpack.c.l.b16 %v1515
    %v1773 = vunpack.c.l.b16 %v1516
    %v1774 = vunpack.c.l.b16 %v1517
    %v1775 = vunpack.c.l.b16 %v1518
    %v1776 = vunpack.c.l.b16 %v1519
    %v1777 = vunpack.c.l.b16 %v1520
    %v1778 = vunpack.c.l.b16 %v1521
    %v1779 = vunpack.c.l.b16 %v1522
    %v1780 = vunpack.c.l.b16 %v1523
    %v1781 = vunpack.c.l.b16 %v1524
    %v1782 = vunpack.c.l.b16 %v1525
    %v1783 = vunpack.c.l.b16 %v1526
    %v1784 = vunpack.c.l.b16 %v1527
    %v1785 = vunpack.c.l.b16 %v1528
    %v1786 = vunpack.c.l.b16 %v1529
    %v1787 = vunpack.c.l.b16 %v1530
    %v1788 = vunpack.c.l.b16 %v1531
    %v1789 = vunpack.c.l.b16 %v1532
    %v1790 = vunpack.c.l.b16 %v1533
    %v1791 = vunpack.c.l.b16 %v1534
    %v1792 = vunpack.c.l.b16 %v1535
    %v1793 = vunpack.c.l.b16 %v1536
    %v1794 = vunpack.c.l.b16 %v1537
    %v1795 = vunpack.c.l.b16 %v1538
    %v1796 = vunpack.c.l.b16 %v1539
    %v1797 = vunpack.c.l.b16 %v1540
    %v1798 = vunpack.c.l.b16 %v1541
    %v1799 = vunpack.c.l.b16 %v1542
    %v1800 = vunpack.c.l.b16 %v1543
    %v1801 = vunpack.c.l.b16 %v1544
    %v1802 = vunpack.c.l.b16 %v1545
    %v1803 = vunpack.c.l.b16 %v1546
    %v1804 = vunpack.c.l.b16 %v1547
    %v1805 = vunpack.c.l.b16 %v1548
    %v1806 = vunpack.c.l.b16 %v1549
    %v1807 = vunpack.c.l.b16 %v1550
    %v1808 = vunpack.c.l.b16 %v1551
    %v1809 = vunpack.c.l.b16 %v1552
    %v1810 = vunpack.c.l.b16 %v1553
    %v1811 = vunpack.c.l.b16 %v1554
    %v1812 = vunpack.c.l.b16 %v1555
    %v1813 = vunpack.c.l.b16 %v1556
    %v1814 = vunpack.c.l.b16 %v1557
    %v1815 = vunpack.c.l.b16 %v1558
    %v1816 = vunpack.c.l.b16 %v1559
    %v1817 = vunpack.c.l.b16 %v1560
    %v1818 = vunpack.c.l.b16 %v1561
    %v1819 = vunpack.c.l.b16 %v1562
    %v1820 = vunpack.c.l.b16 %v1563
    %v1821 = vunpack.c.l.b16 %v1564
    %v1822 = vunpack.c.l.b16 %v1565
    %v1823 = vunpack.c.l.b16 %v1566
    %v1824 = vunpack.c.l.b16 %v1567
    %v1825 = vunpack.c.l.b16 %v1568
    %v1826 = vunpack.c.l.b16 %v1569
    %v1827 = vunpack.c.l.b16 %v1570
    %v1828 = vunpack.c.l.b16 %v1571
    %v1829 = vunpack.c.l.b16 %v1572
    %v1830 = vunpack.c.l.b16 %v1573
    %v1831 = vunpack.c.l.b16 %v1574
    %v1832 = vunpack.c.l.b16 %v1575
    %v1833 = vunpack.c.l.b16 %v1576
    %v1834 = vunpack.c.l.b16 %v1577
    %v1835 = vunpack.c.l.b16 %v1578
    %v1836 = vpack.c.b16 %v1773, %v1772
    %v1837 = vpack.c.b16 %v1775, %v1774
    %v1838 = vpack.c.b16 %v1777, %v1776
    %v1839 = vpack.c.b16 %v1779, %v1778
    %v1840 = vpack.c.b16 %v1781, %v1780
    %v1841 = vpack.c.b16 %v1783, %v1782
    %v1842 = vpack.c.b16 %v1785, %v1784
    %v1843 = vpack.c.b16 %v1787, %v1786
    %v1844 = vpack.c.b16 %v1789, %v1788
    %v1845 = vpack.c.b16 %v1791, %v1790
    %v1846 = vpack.c.b16 %v1793, %v1792
    %v1847 = vpack.c.b16 %v1795, %v1794
    %v1848 = vpack.c.b16 %v1797, %v1796
    %v1849 = vpack.c.b16 %v1799, %v1798
    %v1850 = vpack.c.b16 %v1801, %v1800
    %v1851 = vpack.c.b16 %v1803, %v1802
    %v1852 = vpack.c.b16 %v1805, %v1804
    %v1853 = vpack.c.b16 %v1807, %v1806
    %v1854 = vpack.c.b16 %v1809, %v1808
    %v1855 = vpack.c.b16 %v1811, %v1810
    %v1856 = vpack.c.b16 %v1813, %v1812
    %v1857 = vpack.c.b16 %v1815, %v1814
    %v1858 = vpack.c.b16 %v1817, %v1816
    %v1859 = vpack.c.b16 %v1819, %v1818
    %v1860 = vpack.c.b16 %v1821, %v1820
    %v1861 = vpack.c.b16 %v1823, %v1822
    %v1862 = vpack.c.b16 %v1825, %v1824
    %v1863 = vpack.c.b16 %v1827, %v1826
    %v1864 = vpack.c.b16 %v1829, %v1828
    %v1865 = vpack.c.b16 %v1831, %v1830
    %v1866 = vpack.c.b16 %v1833, %v1832
    %v1867 = vpack.c.b16 %v1835, %v1834
    %v1980 = vunpack.c.l.b16 %v1579
    %v1981 = vunpack.c.h.b16 %v1579
    %v1982 = vunpack.c.l.b16 %v1580
    %v1983 = vunpack.c.h.b16 %v1580
    %v1984 = vunpack.c.l.b16 %v1581
    %v1985 = vunpack.c.h.b16 %v1581
    %v1986 = vunpack.c.l.b16 %v1582
    %v1987 = vunpack.c.h.b16 %v1582
    %v1988 = vunpack.c.l.b16 %v1583
    %v1989 = vunpack.c.l.b16 %v1584
    %v1990 = vunpack.c.h.b16 %v1584
    %v1991 = vunpack.c.l.b16 %v1585
    %v1992 = vunpack.c.h.b16 %v1585
    %v1993 = vunpack.c.l.b16 %v1586
    %v1994 = vunpack.c.h.b16 %v1586
    %v1995 = vunpack.c.l.b16 %v1587
    %v1996 = vunpack.c.h.b16 %v1587
    %v1997 = vunpack.c.l.b16 %v1588
    %v1998 = vunpack.c.l.b16 %v1589
    %v1999 = vunpack.c.h.b16 %v1589
    %v2000 = vunpack.c.l.b16 %v1590
    %v2001 = vunpack.c.h.b16 %v1590
    %v2002 = vunpack.c.l.b16 %v1591
    %v2003 = vunpack.c.h.b16 %v1591
    %v2004 = vunpack.c.l.b16 %v1592
    %v2005 = vunpack.c.h.b16 %v1592
    %v2006 = vunpack.c.l.b16 %v1593
    %v2007 = vunpack.c.l.b16 %v1594
    %v2008 = vunpack.c.h.b16 %v1594
    %v2009 = vunpack.c.l.b16 %v1595
    %v2010 = vunpack.c.h.b16 %v1595
    %v2011 = vunpack.c.l.b16 %v1596
    %v2012 = vunpack.c.h.b16 %v1596
    %v2013 = vunpack.c.l.b16 %v1597
    %v2014 = vunpack.c.h.b16 %v1597
    %v2015 = vunpack.c.l.b16 %v1598
    %v2016 = vunpack.c.l.b16 %v1599
    %v2017 = vunpack.c.h.b16 %v1599
    %v2018 = vunpack.c.l.b16 %v1600
    %v2019 = vunpack.c.h.b16 %v1600
    %v2020 = vunpack.c.l.b16 %v1601
    %v2021 = vunpack.c.h.b16 %v1601
    %v2022 = vunpack.c.l.b16 %v1602
    %v2023 = vunpack.c.h.b16 %v1602
    %v2024 = vunpack.c.l.b16 %v1603
    %v2025 = vunpack.c.l.b16 %v1604
    %v2026 = vunpack.c.h.b16 %v1604
    %v2027 = vunpack.c.l.b16 %v1605
    %v2028 = vunpack.c.h.b16 %v1605
    %v2029 = vunpack.c.l.b16 %v1606
    %v2030 = vunpack.c.h.b16 %v1606
    %v2031 = vunpack.c.l.b16 %v1607
    %v2032 = vunpack.c.h.b16 %v1607
    %v2033 = vunpack.c.l.b16 %v1608
    %v2034 = vunpack.c.l.b16 %v1609
    %v2035 = vunpack.c.h.b16 %v1609
    %v2036 = vunpack.c.l.b16 %v1610
    %v2037 = vunpack.c.h.b16 %v1610
    %v2038 = vunpack.c.l.b16 %v1611
    %v2039 = vunpack.c.h.b16 %v1611
    %v2040 = vunpack.c.l.b16 %v1612
    %v2041 = vunpack.c.h.b16 %v1612
    %v2042 = vunpack.c.l.b16 %v1613
    %v2043 = vunpack.c.l.b16 %v1614
    %v2044 = vunpack.c.h.b16 %v1614
    %v2045 = vunpack.c.l.b16 %v1615
    %v2046 = vunpack.c.h.b16 %v1615
    %v2047 = vunpack.c.l.b16 %v1616
    %v2048 = vunpack.c.h.b16 %v1616
    %v2049 = vunpack.c.l.b16 %v1617
    %v2050 = vunpack.c.h.b16 %v1617
    %v2051 = vunpack.c.l.b16 %v1618
    %v2052 = vunpack.c.l.b16 %v1619
    %v2053 = vunpack.c.h.b16 %v1619
    %v2054 = vunpack.c.l.b16 %v1620
    %v2055 = vunpack.c.h.b16 %v1620
    %v2056 = vunpack.c.l.b16 %v1621
    %v2057 = vunpack.c.h.b16 %v1621
    %v2058 = vunpack.c.l.b16 %v1622
    %v2059 = vunpack.c.h.b16 %v1622
    %v2060 = vunpack.c.l.b16 %v1623
    %v2061 = vunpack.c.l.b16 %v1624
    %v2062 = vunpack.c.h.b16 %v1624
    %v2063 = vunpack.c.l.b16 %v1625
    %v2064 = vunpack.c.h.b16 %v1625
    %v2065 = vunpack.c.l.b16 %v1626
    %v2066 = vunpack.c.h.b16 %v1626
    %v2067 = vunpack.c.l.b16 %v1627
    %v2068 = vunpack.c.h.b16 %v1627
    %v2069 = vunpack.c.l.b16 %v1628
    %v2070 = vunpack.c.l.b16 %v1629
    %v2071 = vunpack.c.h.b16 %v1629
    %v2072 = vunpack.c.l.b16 %v1630
    %v2073 = vunpack.c.h.b16 %v1630
    %v2074 = vunpack.c.l.b16 %v1631
    %v2075 = vunpack.c.h.b16 %v1631
    %v2076 = vunpack.c.l.b16 %v1632
    %v2077 = vunpack.c.h.b16 %v1632
    %v2078 = vunpack.c.l.b16 %v1633
    %v2079 = vunpack.c.l.b16 %v1634
    %v2080 = vunpack.c.h.b16 %v1634
    %v2081 = vunpack.c.l.b16 %v1635
    %v2082 = vunpack.c.h.b16 %v1635
    %v2083 = vunpack.c.l.b16 %v1636
    %v2084 = vunpack.c.h.b16 %v1636
    %v2085 = vunpack.c.l.b16 %v1637
    %v2086 = vunpack.c.h.b16 %v1637
    %v2087 = vunpack.c.l.b16 %v1638
    %v2088 = vunpack.c.l.b16 %v1639
    %v2089 = vunpack.c.h.b16 %v1639
    %v2090 = vunpack.c.l.b16 %v1640
    %v2091 = vunpack.c.h.b16 %v1640
    %v2092 = vunpack.c.l.b16 %v1641
    %v2093 = vunpack.c.h.b16 %v1641
    %v2094 = vunpack.c.l.b16 %v1642
    %v2095 = vunpack.c.h.b16 %v1642
    %v2096 = vunpack.c.l.b16 %v1643
    %v2097 = vunpack.c.l.b16 %v1644
    %v2098 = vunpack.c.h.b16 %v1644
    %v2099 = vunpack.c.l.b16 %v1645
    %v2100 = vunpack.c.h.b16 %v1645
    %v2101 = vunpack.c.l.b16 %v1646
    %v2102 = vunpack.c.h.b16 %v1646
    %v2103 = vunpack.c.l.b16 %v1647
    %v2104 = vunpack.c.h.b16 %v1647
    %v2105 = vunpack.c.l.b16 %v1648
    %v2106 = vunpack.c.l.b16 %v1649
    %v2107 = vunpack.c.h.b16 %v1649
    %v2108 = vunpack.c.l.b16 %v1650
    %v2109 = vunpack.c.h.b16 %v1650
    %v2110 = vunpack.c.l.b16 %v1651
    %v2111 = vunpack.c.h.b16 %v1651
    %v2112 = vunpack.c.l.b16 %v1652
    %v2113 = vunpack.c.h.b16 %v1652
    %v2114 = vunpack.c.l.b16 %v1653
    %v2115 = vunpack.c.l.b16 %v1654
    %v2116 = vunpack.c.h.b16 %v1654
    %v2117 = vunpack.c.l.b16 %v1655
    %v2118 = vunpack.c.h.b16 %v1655
    %v2119 = vunpack.c.l.b16 %v1656
    %v2120 = vunpack.c.h.b16 %v1656
    %v2121 = vunpack.c.l.b16 %v1657
    %v2122 = vunpack.c.h.b16 %v1657
    %v2123 = vunpack.c.l.b16 %v1658
    %v2124 = vpack.c.b16 %v1989, %v1980
    %v2125 = vpack.c.b16 %v1990, %v1981
    %v2126 = vpack.c.b16 %v1991, %v1982
    %v2127 = vpack.c.b16 %v1992, %v1983
    %v2128 = vpack.c.b16 %v1993, %v1984
    %v2129 = vpack.c.b16 %v1994, %v1985
    %v2130 = vpack.c.b16 %v1995, %v1986
    %v2131 = vpack.c.b16 %v1996, %v1987
    %v2132 = vpack.c.b16 %v1997, %v1988
    %v2133 = vpack.c.b16 %v2007, %v1998
    %v2134 = vpack.c.b16 %v2008, %v1999
    %v2135 = vpack.c.b16 %v2009, %v2000
    %v2136 = vpack.c.b16 %v2010, %v2001
    %v2137 = vpack.c.b16 %v2011, %v2002
    %v2138 = vpack.c.b16 %v2012, %v2003
    %v2139 = vpack.c.b16 %v2013, %v2004
    %v2140 = vpack.c.b16 %v2014, %v2005
    %v2141 = vpack.c.b16 %v2015, %v2006
    %v2142 = vpack.c.b16 %v2025, %v2016
    %v2143 = vpack.c.b16 %v2026, %v2017
    %v2144 = vpack.c.b16 %v2027, %v2018
    %v2145 = vpack.c.b16 %v2028, %v2019
    %v2146 = vpack.c.b16 %v2029, %v2020
    %v2147 = vpack.c.b16 %v2030, %v2021
    %v2148 = vpack.c.b16 %v2031, %v2022
    %v2149 = vpack.c.b16 %v2032, %v2023
    %v2150 = vpack.c.b16 %v2033, %v2024
    %v2151 = vpack.c.b16 %v2043, %v2034
    %v2152 = vpack.c.b16 %v2044, %v2035
    %v2153 = vpack.c.b16 %v2045, %v2036
    %v2154 = vpack.c.b16 %v2046, %v2037
    %v2155 = vpack.c.b16 %v2047, %v2038
    %v2156 = vpack.c.b16 %v2048, %v2039
    %v2157 = vpack.c.b16 %v2049, %v2040
    %v2158 = vpack.c.b16 %v2050, %v2041
    %v2159 = vpack.c.b16 %v2051, %v2042
    %v2160 = vpack.c.b16 %v2061, %v2052
    %v2161 = vpack.c.b16 %v2062, %v2053
    %v2162 = vpack.c.b16 %v2063, %v2054
    %v2163 = vpack.c.b16 %v2064, %v2055
    %v2164 = vpack.c.b16 %v2065, %v2056
    %v2165 = vpack.c.b16 %v2066, %v2057
    %v2166 = vpack.c.b16 %v2067, %v2058
    %v2167 = vpack.c.b16 %v2068, %v2059
    %v2168 = vpack.c.b16 %v2069, %v2060
    %v2169 = vpack.c.b16 %v2079, %v2070
    %v2170 = vpack.c.b16 %v2080, %v2071
    %v2171 = vpack.c.b16 %v2081, %v2072
    %v2172 = vpack.c.b16 %v2082, %v2073
    %v2173 = vpack.c.b16 %v2083, %v2074
    %v2174 = vpack.c.b16 %v2084, %v2075
    %v2175 = vpack.c.b16 %v2085, %v2076
    %v2176 = vpack.c.b16 %v2086, %v2077
    %v2177 = vpack.c.b16 %v2087, %v2078
    %v2178 = vpack.c.b16 %v2097, %v2088
    %v2179 = vpack.c.b16 %v2098, %v2089
    %v2180 = vpack.c.b16 %v2099, %v2090
    %v2181 = vpack.c.b16 %v2100, %v2091
    %v2182 = vpack.c.b16 %v2101, %v2092
    %v2183 = vpack.c.b16 %v2102, %v2093
    %v2184 = vpack.c.b16 %v2103, %v2094
    %v2185 = vpack.c.b16 %v2104, %v2095
    %v2186 = vpack.c.b16 %v2105, %v2096
    %v2187 = vpack.c.b16 %v2115, %v2106
    %v2188 = vpack.c.b16 %v2116, %v2107
    %v2189 = vpack.c.b16 %v2117, %v2108
    %v2190 = vpack.c.b16 %v2118, %v2109
    %v2191 = vpack.c.b16 %v2119, %v2110
    %v2192 = vpack.c.b16 %v2120, %v2111
    %v2193 = vpack.c.b16 %v2121, %v2112
    %v2194 = vpack.c.b16 %v2122, %v2113
    %v2195 = vpack.c.b16 %v2123, %v2114
    %2268 = vmatprep.subr.bf16.mxu0 %v2125
    %2269 = vmatpush1.bf16.msra.mxu0 %v2124
    %2270 = vmatprep.subr.bf16.mxu0 %v2134
    %2271 = vmatpush1.bf16.msra.mxu0 %v2133
    %2272 = vmatprep.subr.bf16.mxu0 %v2143
    %2273 = vmatpush1.bf16.msra.mxu0 %v2142
    %2274 = vmatprep.subr.bf16.mxu0 %v2152
    %2275 = vmatpush1.bf16.msra.mxu0 %v2151
    %2276 = vmatprep.subr.bf16.mxu0 %v2161
    %2277 = vmatpush1.bf16.msra.mxu0 %v2160
    %2278 = vmatprep.subr.bf16.mxu0 %v2170
    %2279 = vmatpush1.bf16.msra.mxu0 %v2169
    %2280 = vmatprep.subr.bf16.mxu0 %v2179
    %2281 = vmatpush1.bf16.msra.mxu0 %v2178
    %2282 = vmatprep.subr.bf16.mxu0 %v2188
    %2283 = vmatpush1.bf16.msra.mxu0 %v2187
    %2284 = vmatprep.subr.bf16.mxu0 0
    %2285 = vmatpush1.bf16.msra.mxu0 0
    %2286 = vmatprep.subr.bf16.mxu0 0
    %2287 = vmatpush1.bf16.msra.mxu0 0
    %2288 = vmatprep.subr.bf16.mxu0 0
    %2289 = vmatpush1.bf16.msra.mxu0 0
    %2290 = vmatprep.subr.bf16.mxu0 0
    %2291 = vmatpush1.bf16.msra.mxu0 0
    %2292 = vmatprep.subr.bf16.mxu0 0
    %2293 = vmatpush1.bf16.msra.mxu0 0
    %2294 = vmatprep.subr.bf16.mxu0 0
    %2295 = vmatpush1.bf16.msra.mxu0 0
    %2296 = vmatprep.subr.bf16.mxu0 0
    %2297 = vmatpush1.bf16.msra.mxu0 0
    %2298 = vmatprep.subr.bf16.mxu0 0
    %2299 = vmatpush1.bf16.msra.mxu0 0
    %2300 = vmatprep.mubr.bf16.mxu0 0
    %2301 = vmatmul.mubr.bf16.gmra.mrb[0].mxu0 %v1836
    %v2302 = vpop.f32.mrb[0].mxu0
    %v2303 = vadd.f32 %v1666, %v2302
    %v2304 = vpop.f32.mrb[0].mxu0
    %v2305 = vadd.f32 %v1670, %v2304
    %v2306 = vpop.f32.mrb[0].mxu0
    %v2307 = vadd.f32 %v1666, %v2306
    %v2308 = vpop.f32.mrb[0].mxu0
    %v2309 = vadd.f32 %v1670, %v2308
    %2310 = vmatprep.mubr.bf16.mxu0 0
    %2311 = vmatmul.mubr.bf16.gmra.mrb[0].mxu0 %v1837
    %v2312 = vpop.f32.mrb[0].mxu0
    %v2313 = vadd.f32 %v1666, %v2312
    %v2314 = vpop.f32.mrb[0].mxu0
    %v2315 = vadd.f32 %v1670, %v2314
    %v2316 = vpop.f32.mrb[0].mxu0
    %v2317 = vadd.f32 %v1666, %v2316
    %v2318 = vpop.f32.mrb[0].mxu0
    %v2319 = vadd.f32 %v1670, %v2318
    %2320 = vmatprep.mubr.bf16.mxu0 0
    %2321 = vmatmul.mubr.bf16.gmra.mrb[0].mxu0 %v1838
    %v2322 = vpop.f32.mrb[0].mxu0
    %v2323 = vadd.f32 %v1666, %v2322
    %v2324 = vpop.f32.mrb[0].mxu0
    %v2325 = vadd.f32 %v1670, %v2324
    %v2326 = vpop.f32.mrb[0].mxu0
    %v2327 = vadd.f32 %v1666, %v2326
    %v2328 = vpop.f32.mrb[0].mxu0
    %v2329 = vadd.f32 %v1670, %v2328
    %2330 = vmatprep.mubr.bf16.mxu0 0
    %2331 = vmatmul.mubr.bf16.gmra.mrb[0].mxu0 %v1839
    %v2332 = vpop.f32.mrb[0].mxu0
    %v2333 = vadd.f32 %v1666, %v2332
    %v2334 = vpop.f32.mrb[0].mxu0
    %v2335 = vadd.f32 %v1670, %v2334
    %v2336 = vpop.f32.mrb[0].mxu0
    %v2337 = vadd.f32 %v1666, %v2336
    %v2338 = vpop.f32.mrb[0].mxu0
    %v2339 = vadd.f32 %v1670, %v2338
    %2340 = vmatprep.mubr.bf16.mxu0 0
    %2341 = vmatmul.mubr.bf16.gmra.mrb[0].mxu0 %v1840
    %v2342 = vpop.f32.mrb[0].mxu0
    %v2343 = vadd.f32 %v1666, %v2342
    %v2344 = vpop.f32.mrb[0].mxu0
    %v2345 = vadd.f32 %v1670, %v2344
    %v2346 = vpop.f32.mrb[0].mxu0
    %v2347 = vadd.f32 %v1666, %v2346
    %v2348 = vpop.f32.mrb[0].mxu0
    %v2349 = vadd.f32 %v1670, %v2348
    %2350 = vmatprep.mubr.bf16.mxu0 0
    %2351 = vmatmul.mubr.bf16.gmra.mrb[0].mxu0 %v1841
    %v2352 = vpop.f32.mrb[0].mxu0
    %v2353 = vadd.f32 %v1666, %v2352
    %v2354 = vpop.f32.mrb[0].mxu0
    %v2355 = vadd.f32 %v1670, %v2354
    %v2356 = vpop.f32.mrb[0].mxu0
    %v2357 = vadd.f32 %v1666, %v2356
    %v2358 = vpop.f32.mrb[0].mxu0
    %v2359 = vadd.f32 %v1670, %v2358
    %2360 = vmatprep.mubr.bf16.mxu0 0
    %2361 = vmatmul.mubr.bf16.gmra.mrb[0].mxu0 %v1842
    %v2362 = vpop.f32.mrb[0].mxu0
    %v2363 = vadd.f32 %v1666, %v2362
    %v2364 = vpop.f32.mrb[0].mxu0
    %v2365 = vadd.f32 %v1670, %v2364
    %v2366 = vpop.f32.mrb[0].mxu0
    %v2367 = vadd.f32 %v1666, %v2366
    %v2368 = vpop.f32.mrb[0].mxu0
    %v2369 = vadd.f32 %v1670, %v2368
    %2370 = vmatprep.mubr.bf16.mxu0 0
    %2371 = vmatmul.mubr.bf16.gmra.mrb[0].mxu0 %v1843
    %v2372 = vpop.f32.mrb[0].mxu0
    %v2373 = vadd.f32 %v1666, %v2372
    %v2374 = vpop.f32.mrb[0].mxu0
    %v2375 = vadd.f32 %v1670, %v2374
    %v2376 = vpop.f32.mrb[0].mxu0
    %v2377 = vadd.f32 %v1666, %v2376
    %v2378 = vpop.f32.mrb[0].mxu0
    %v2379 = vadd.f32 %v1670, %v2378
    %2380 = vmatprep.mubr.bf16.mxu0 0
    %2381 = vmatmul.mubr.bf16.gmra.mrb[0].mxu0 %v1844
    %v2382 = vpop.f32.mrb[0].mxu0
    %v2383 = vadd.f32 %v1666, %v2382
    %v2384 = vpop.f32.mrb[0].mxu0
    %v2385 = vadd.f32 %v1670, %v2384
    %v2386 = vpop.f32.mrb[0].mxu0
    %v2387 = vadd.f32 %v1666, %v2386
    %v2388 = vpop.f32.mrb[0].mxu0
    %v2389 = vadd.f32 %v1670, %v2388
    %2390 = vmatprep.mubr.bf16.mxu0 0
    %2391 = vmatmul.mubr.bf16.gmra.mrb[0].mxu0 %v1845
    %v2392 = vpop.f32.mrb[0].mxu0
    %v2393 = vadd.f32 %v1666, %v2392
    %v2394 = vpop.f32.mrb[0].mxu0
    %v2395 = vadd.f32 %v1670, %v2394
    %v2396 = vpop.f32.mrb[0].mxu0
    %v2397 = vadd.f32 %v1666, %v2396
    %v2398 = vpop.f32.mrb[0].mxu0
    %v2399 = vadd.f32 %v1670, %v2398
    %2400 = vmatprep.mubr.bf16.mxu0 0
    %2401 = vmatmul.mubr.bf16.gmra.mrb[0].mxu0 %v1846
    %v2402 = vpop.f32.mrb[0].mxu0
    %v2403 = vadd.f32 %v1666, %v2402
    %v2404 = vpop.f32.mrb[0].mxu0
    %v2405 = vadd.f32 %v1670, %v2404
    %v2406 = vpop.f32.mrb[0].mxu0
    %v2407 = vadd.f32 %v1666, %v2406
    %v2408 = vpop.f32.mrb[0].mxu0
    %v2409 = vadd.f32 %v1670, %v2408
    %2410 = vmatprep.mubr.bf16.mxu0 0
    %2411 = vmatmul.mubr.bf16.gmra.mrb[0].mxu0 %v1847
    %v2412 = vpop.f32.mrb[0].mxu0
    %v2413 = vadd.f32 %v1666, %v2412
    %v2414 = vpop.f32.mrb[0].mxu0
    %v2415 = vadd.f32 %v1670, %v2414
    %v2416 = vpop.f32.mrb[0].mxu0
    %v2417 = vadd.f32 %v1666, %v2416
    %v2418 = vpop.f32.mrb[0].mxu0
    %v2419 = vadd.f32 %v1670, %v2418
    %2420 = vmatprep.mubr.bf16.mxu0 0
    %2421 = vmatmul.mubr.bf16.gmra.mrb[0].mxu0 %v1848
    %v2422 = vpop.f32.mrb[0].mxu0
    %v2423 = vadd.f32 %v1666, %v2422
    %v2424 = vpop.f32.mrb[0].mxu0
    %v2425 = vadd.f32 %v1670, %v2424
    %v2426 = vpop.f32.mrb[0].mxu0
    %v2427 = vadd.f32 %v1666, %v2426
    %v2428 = vpop.f32.mrb[0].mxu0
    %v2429 = vadd.f32 %v1670, %v2428
    %2430 = vmatprep.mubr.bf16.mxu0 0
    %2431 = vmatmul.mubr.bf16.gmra.mrb[0].mxu0 %v1849
    %v2432 = vpop.f32.mrb[0].mxu0
    %v2433 = vadd.f32 %v1666, %v2432
    %v2434 = vpop.f32.mrb[0].mxu0
    %v2435 = vadd.f32 %v1670, %v2434
    %v2436 = vpop.f32.mrb[0].mxu0
    %v2437 = vadd.f32 %v1666, %v2436
    %v2438 = vpop.f32.mrb[0].mxu0
    %v2439 = vadd.f32 %v1670, %v2438
    %2440 = vmatprep.mubr.bf16.mxu0 0
    %2441 = vmatmul.mubr.bf16.gmra.mrb[0].mxu0 %v1850
    %v2442 = vpop.f32.mrb[0].mxu0
    %v2443 = vadd.f32 %v1666, %v2442
    %v2444 = vpop.f32.mrb[0].mxu0
    %v2445 = vadd.f32 %v1670, %v2444
    %v2446 = vpop.f32.mrb[0].mxu0
    %v2447 = vadd.f32 %v1666, %v2446
    %v2448 = vpop.f32.mrb[0].mxu0
    %v2449 = vadd.f32 %v1670, %v2448
    %2450 = vmatprep.mubr.bf16.mxu0 0
    %2451 = vmatmul.mubr.bf16.gmra.mrb[0].mxu0 %v1851
    %v2452 = vpop.f32.mrb[0].mxu0
    %v2453 = vadd.f32 %v1666, %v2452
    %v2454 = vpop.f32.mrb[0].mxu0
    %v2455 = vadd.f32 %v1670, %v2454
    %v2456 = vpop.f32.mrb[0].mxu0
    %v2457 = vadd.f32 %v1666, %v2456
    %v2458 = vpop.f32.mrb[0].mxu0
    %v2459 = vadd.f32 %v1670, %v2458
    %2460 = vmatprep.mubr.bf16.mxu0 0
    %2461 = vmatmul.mubr.bf16.gmra.mrb[0].mxu0 %v1852
    %v2462 = vpop.f32.mrb[0].mxu0
    %v2463 = vadd.f32 %v1666, %v2462
    %v2464 = vpop.f32.mrb[0].mxu0
    %v2465 = vadd.f32 %v1670, %v2464
    %v2466 = vpop.f32.mrb[0].mxu0
    %v2467 = vadd.f32 %v1666, %v2466
    %v2468 = vpop.f32.mrb[0].mxu0
    %v2469 = vadd.f32 %v1670, %v2468
    %2470 = vmatprep.mubr.bf16.mxu0 0
    %2471 = vmatmul.mubr.bf16.gmra.mrb[0].mxu0 %v1853
    %v2472 = vpop.f32.mrb[0].mxu0
    %v2473 = vadd.f32 %v1666, %v2472
    %v2474 = vpop.f32.mrb[0].mxu0
    %v2475 = vadd.f32 %v1670, %v2474
    %v2476 = vpop.f32.mrb[0].mxu0
    %v2477 = vadd.f32 %v1666, %v2476
    %v2478 = vpop.f32.mrb[0].mxu0
    %v2479 = vadd.f32 %v1670, %v2478
    %2480 = vmatprep.mubr.bf16.mxu0 0
    %2481 = vmatmul.mubr.bf16.gmra.mrb[0].mxu0 %v1854
    %v2482 = vpop.f32.mrb[0].mxu0
    %v2483 = vadd.f32 %v1666, %v2482
    %v2484 = vpop.f32.mrb[0].mxu0
    %v2485 = vadd.f32 %v1670, %v2484
    %v2486 = vpop.f32.mrb[0].mxu0
    %v2487 = vadd.f32 %v1666, %v2486
    %v2488 = vpop.f32.mrb[0].mxu0
    %v2489 = vadd.f32 %v1670, %v2488
    %2490 = vmatprep.mubr.bf16.mxu0 0
    %2491 = vmatmul.mubr.bf16.gmra.mrb[0].mxu0 %v1855
    %v2492 = vpop.f32.mrb[0].mxu0
    %v2493 = vadd.f32 %v1666, %v2492
    %v2494 = vpop.f32.mrb[0].mxu0
    %v2495 = vadd.f32 %v1670, %v2494
    %v2496 = vpop.f32.mrb[0].mxu0
    %v2497 = vadd.f32 %v1666, %v2496
    %v2498 = vpop.f32.mrb[0].mxu0
    %v2499 = vadd.f32 %v1670, %v2498
    %2500 = vmatprep.mubr.bf16.mxu0 0
    %2501 = vmatmul.mubr.bf16.gmra.mrb[0].mxu0 %v1856
    %v2502 = vpop.f32.mrb[0].mxu0
    %v2503 = vadd.f32 %v1666, %v2502
    %v2504 = vpop.f32.mrb[0].mxu0
    %v2505 = vadd.f32 %v1670, %v2504
    %v2506 = vpop.f32.mrb[0].mxu0
    %v2507 = vadd.f32 %v1666, %v2506
    %v2508 = vpop.f32.mrb[0].mxu0
    %v2509 = vadd.f32 %v1670, %v2508
    %2510 = vmatprep.mubr.bf16.mxu0 0
    %2511 = vmatmul.mubr.bf16.gmra.mrb[0].mxu0 %v1857
    %v2512 = vpop.f32.mrb[0].mxu0
    %v2513 = vadd.f32 %v1666, %v2512
    %v2514 = vpop.f32.mrb[0].mxu0
    %v2515 = vadd.f32 %v1670, %v2514
    %v2516 = vpop.f32.mrb[0].mxu0
    %v2517 = vadd.f32 %v1666, %v2516
    %v2518 = vpop.f32.mrb[0].mxu0
    %v2519 = vadd.f32 %v1670, %v2518
    %2520 = vmatprep.mubr.bf16.mxu0 0
    %2521 = vmatmul.mubr.bf16.gmra.mrb[0].mxu0 %v1858
    %v2522 = vpop.f32.mrb[0].mxu0
    %v2523 = vadd.f32 %v1666, %v2522
    %v2524 = vpop.f32.mrb[0].mxu0
    %v2525 = vadd.f32 %v1670, %v2524
    %v2526 = vpop.f32.mrb[0].mxu0
    %v2527 = vadd.f32 %v1666, %v2526
    %v2528 = vpop.f32.mrb[0].mxu0
    %v2529 = vadd.f32 %v1670, %v2528
    %2530 = vmatprep.mubr.bf16.mxu0 0
    %2531 = vmatmul.mubr.bf16.gmra.mrb[0].mxu0 %v1859
    %v2532 = vpop.f32.mrb[0].mxu0
    %v2533 = vadd.f32 %v1666, %v2532
    %v2534 = vpop.f32.mrb[0].mxu0
    %v2535 = vadd.f32 %v1670, %v2534
    %v2536 = vpop.f32.mrb[0].mxu0
    %v2537 = vadd.f32 %v1666, %v2536
    %v2538 = vpop.f32.mrb[0].mxu0
    %v2539 = vadd.f32 %v1670, %v2538
    %2540 = vmatprep.mubr.bf16.mxu0 0
    %2541 = vmatmul.mubr.bf16.gmra.mrb[0].mxu0 %v1860
    %v2542 = vpop.f32.mrb[0].mxu0
    %v2543 = vadd.f32 %v1666, %v2542
    %v2544 = vpop.f32.mrb[0].mxu0
    %v2545 = vadd.f32 %v1670, %v2544
    %v2546 = vpop.f32.mrb[0].mxu0
    %v2547 = vadd.f32 %v1666, %v2546
    %v2548 = vpop.f32.mrb[0].mxu0
    %v2549 = vadd.f32 %v1670, %v2548
    %2550 = vmatprep.mubr.bf16.mxu0 0
    %2551 = vmatmul.mubr.bf16.gmra.mrb[0].mxu0 %v1861
    %v2552 = vpop.f32.mrb[0].mxu0
    %v2553 = vadd.f32 %v1666, %v2552
    %v2554 = vpop.f32.mrb[0].mxu0
    %v2555 = vadd.f32 %v1670, %v2554
    %v2556 = vpop.f32.mrb[0].mxu0
    %v2557 = vadd.f32 %v1666, %v2556
    %v2558 = vpop.f32.mrb[0].mxu0
    %v2559 = vadd.f32 %v1670, %v2558
    %2560 = vmatprep.mubr.bf16.mxu0 0
    %2561 = vmatmul.mubr.bf16.gmra.mrb[0].mxu0 %v1862
    %v2562 = vpop.f32.mrb[0].mxu0
    %v2563 = vadd.f32 %v1666, %v2562
    %v2564 = vpop.f32.mrb[0].mxu0
    %v2565 = vadd.f32 %v1670, %v2564
    %v2566 = vpop.f32.mrb[0].mxu0
    %v2567 = vadd.f32 %v1666, %v2566
    %v2568 = vpop.f32.mrb[0].mxu0
    %v2569 = vadd.f32 %v1670, %v2568
    %2570 = vmatprep.mubr.bf16.mxu0 0
    %2571 = vmatmul.mubr.bf16.gmra.mrb[0].mxu0 %v1863
    %v2572 = vpop.f32.mrb[0].mxu0
    %v2573 = vadd.f32 %v1666, %v2572
    %v2574 = vpop.f32.mrb[0].mxu0
    %v2575 = vadd.f32 %v1670, %v2574
    %v2576 = vpop.f32.mrb[0].mxu0
    %v2577 = vadd.f32 %v1666, %v2576
    %v2578 = vpop.f32.mrb[0].mxu0
    %v2579 = vadd.f32 %v1670, %v2578
    %2580 = vmatprep.mubr.bf16.mxu0 0
    %2581 = vmatmul.mubr.bf16.gmra.mrb[0].mxu0 %v1864
    %v2582 = vpop.f32.mrb[0].mxu0
    %v2583 = vadd.f32 %v1666, %v2582
    %v2584 = vpop.f32.mrb[0].mxu0
    %v2585 = vadd.f32 %v1670, %v2584
    %v2586 = vpop.f32.mrb[0].mxu0
    %v2587 = vadd.f32 %v1666, %v2586
    %v2588 = vpop.f32.mrb[0].mxu0
    %v2589 = vadd.f32 %v1670, %v2588
    %2590 = vmatprep.mubr.bf16.mxu0 0
    %2591 = vmatmul.mubr.bf16.gmra.mrb[0].mxu0 %v1865
    %v2592 = vpop.f32.mrb[0].mxu0
    %v2593 = vadd.f32 %v1666, %v2592
    %v2594 = vpop.f32.mrb[0].mxu0
    %v2595 = vadd.f32 %v1670, %v2594
    %v2596 = vpop.f32.mrb[0].mxu0
    %v2597 = vadd.f32 %v1666, %v2596
    %v2598 = vpop.f32.mrb[0].mxu0
    %v2599 = vadd.f32 %v1670, %v2598
    %2600 = vmatprep.mubr.bf16.mxu0 0
    %2601 = vmatmul.mubr.bf16.gmra.mrb[0].mxu0 %v1866
    %v2602 = vpop.f32.mrb[0].mxu0
    %v2603 = vadd.f32 %v1666, %v2602
    %v2604 = vpop.f32.mrb[0].mxu0
    %v2605 = vadd.f32 %v1670, %v2604
    %v2606 = vpop.f32.mrb[0].mxu0
    %v2607 = vadd.f32 %v1666, %v2606
    %v2608 = vpop.f32.mrb[0].mxu0
    %v2609 = vadd.f32 %v1670, %v2608
    %2610 = vmatprep.mubr.bf16.mxu0 0
    %2611 = vmatmul.mubr.bf16.gmra.mrb[0].mxu0 %v1867
    %v2612 = vpop.f32.mrb[0].mxu0
    %v2613 = vadd.f32 %v1666, %v2612
    %v2614 = vpop.f32.mrb[0].mxu0
    %v2615 = vadd.f32 %v1670, %v2614
    %v2616 = vpop.f32.mrb[0].mxu0
    %v2617 = vadd.f32 %v1666, %v2616
    %v2618 = vpop.f32.mrb[0].mxu0
    %v2619 = vadd.f32 %v1670, %v2618
    %2620 = vdwg.mxu0
    %2621 = vmatprep.subr.bf16.mxu0 %v2127
    %2622 = vmatpush1.bf16.msra.mxu0 %v2126
    %2623 = vmatprep.subr.bf16.mxu0 %v2136
    %2624 = vmatpush1.bf16.msra.mxu0 %v2135
    %2625 = vmatprep.subr.bf16.mxu0 %v2145
    %2626 = vmatpush1.bf16.msra.mxu0 %v2144
    %2627 = vmatprep.subr.bf16.mxu0 %v2154
    %2628 = vmatpush1.bf16.msra.mxu0 %v2153
    %2629 = vmatprep.subr.bf16.mxu0 %v2163
    %2630 = vmatpush1.bf16.msra.mxu0 %v2162
    %2631 = vmatprep.subr.bf16.mxu0 %v2172
    %2632 = vmatpush1.bf16.msra.mxu0 %v2171
    %2633 = vmatprep.subr.bf16.mxu0 %v2181
    %2634 = vmatpush1.bf16.msra.mxu0 %v2180
    %2635 = vmatprep.subr.bf16.mxu0 %v2190
    %2636 = vmatpush1.bf16.msra.mxu0 %v2189
    %2637 = vmatprep.subr.bf16.mxu0 0
    %2638 = vmatpush1.bf16.msra.mxu0 0
    %2639 = vmatprep.subr.bf16.mxu0 0
    %2640 = vmatpush1.bf16.msra.mxu0 0
    %2641 = vmatprep.subr.bf16.mxu0 0
    %2642 = vmatpush1.bf16.msra.mxu0 0
    %2643 = vmatprep.subr.bf16.mxu0 0
    %2644 = vmatpush1.bf16.msra.mxu0 0
    %2645 = vmatprep.subr.bf16.mxu0 0
    %2646 = vmatpush1.bf16.msra.mxu0 0
    %2647 = vmatprep.subr.bf16.mxu0 0
    %2648 = vmatpush1.bf16.msra.mxu0 0
    %2649 = vmatprep.subr.bf16.mxu0 0
    %2650 = vmatpush1.bf16.msra.mxu0 0
    %2651 = vmatprep.subr.bf16.mxu0 0
    %2652 = vmatpush1.bf16.msra.mxu0 0
    %2653 = vmatprep.mubr.bf16.mxu0 0
    %2654 = vmatmul.mubr.bf16.gmra.mrb[0].mxu0 %v1836
    %v2655 = vpop.f32.mrb[0].mxu0
    %v2656 = vadd.f32 %v1674, %v2655
    %v2657 = vpop.f32.mrb[0].mxu0
    %v2658 = vadd.f32 %v1678, %v2657
    %v2659 = vpop.f32.mrb[0].mxu0
    %v2660 = vadd.f32 %v1674, %v2659
    %v2661 = vpop.f32.mrb[0].mxu0
    %v2662 = vadd.f32 %v1678, %v2661
    %2663 = vmatprep.mubr.bf16.mxu0 0
    %2664 = vmatmul.mubr.bf16.gmra.mrb[0].mxu0 %v1837
    %v2665 = vpop.f32.mrb[0].mxu0
    %v2666 = vadd.f32 %v1674, %v2665
    %v2667 = vpop.f32.mrb[0].mxu0
    %v2668 = vadd.f32 %v1678, %v2667
    %v2669 = vpop.f32.mrb[0].mxu0
    %v2670 = vadd.f32 %v1674, %v2669
    %v2671 = vpop.f32.mrb[0].mxu0
    %v2672 = vadd.f32 %v1678, %v2671
    %2673 = vmatprep.mubr.bf16.mxu0 0
    %2674 = vmatmul.mubr.bf16.gmra.mrb[0].mxu0 %v1838
    %v2675 = vpop.f32.mrb[0].mxu0
    %v2676 = vadd.f32 %v1674, %v2675
    %v2677 = vpop.f32.mrb[0].mxu0
    %v2678 = vadd.f32 %v1678, %v2677
    %v2679 = vpop.f32.mrb[0].mxu0
    %v2680 = vadd.f32 %v1674, %v2679
    %v2681 = vpop.f32.mrb[0].mxu0
    %v2682 = vadd.f32 %v1678, %v2681
    %2683 = vmatprep.mubr.bf16.mxu0 0
    %2684 = vmatmul.mubr.bf16.gmra.mrb[0].mxu0 %v1839
    %v2685 = vpop.f32.mrb[0].mxu0
    %v2686 = vadd.f32 %v1674, %v2685
    %v2687 = vpop.f32.mrb[0].mxu0
    %v2688 = vadd.f32 %v1678, %v2687
    %v2689 = vpop.f32.mrb[0].mxu0
    %v2690 = vadd.f32 %v1674, %v2689
    %v2691 = vpop.f32.mrb[0].mxu0
    %v2692 = vadd.f32 %v1678, %v2691
    %2693 = vmatprep.mubr.bf16.mxu0 0
    %2694 = vmatmul.mubr.bf16.gmra.mrb[0].mxu0 %v1840
    %v2695 = vpop.f32.mrb[0].mxu0
    %v2696 = vadd.f32 %v1674, %v2695
    %v2697 = vpop.f32.mrb[0].mxu0
    %v2698 = vadd.f32 %v1678, %v2697
    %v2699 = vpop.f32.mrb[0].mxu0
    %v2700 = vadd.f32 %v1674, %v2699
    %v2701 = vpop.f32.mrb[0].mxu0
    %v2702 = vadd.f32 %v1678, %v2701
    %2703 = vmatprep.mubr.bf16.mxu0 0
    %2704 = vmatmul.mubr.bf16.gmra.mrb[0].mxu0 %v1841
    %v2705 = vpop.f32.mrb[0].mxu0
    %v2706 = vadd.f32 %v1674, %v2705
    %v2707 = vpop.f32.mrb[0].mxu0
    %v2708 = vadd.f32 %v1678, %v2707
    %v2709 = vpop.f32.mrb[0].mxu0
    %v2710 = vadd.f32 %v1674, %v2709
    %v2711 = vpop.f32.mrb[0].mxu0
    %v2712 = vadd.f32 %v1678, %v2711
    %2713 = vmatprep.mubr.bf16.mxu0 0
    %2714 = vmatmul.mubr.bf16.gmra.mrb[0].mxu0 %v1842
    %v2715 = vpop.f32.mrb[0].mxu0
    %v2716 = vadd.f32 %v1674, %v2715
    %v2717 = vpop.f32.mrb[0].mxu0
    %v2718 = vadd.f32 %v1678, %v2717
    %v2719 = vpop.f32.mrb[0].mxu0
    %v2720 = vadd.f32 %v1674, %v2719
    %v2721 = vpop.f32.mrb[0].mxu0
    %v2722 = vadd.f32 %v1678, %v2721
    %2723 = vmatprep.mubr.bf16.mxu0 0
    %2724 = vmatmul.mubr.bf16.gmra.mrb[0].mxu0 %v1843
    %v2725 = vpop.f32.mrb[0].mxu0
    %v2726 = vadd.f32 %v1674, %v2725
    %v2727 = vpop.f32.mrb[0].mxu0
    %v2728 = vadd.f32 %v1678, %v2727
    %v2729 = vpop.f32.mrb[0].mxu0
    %v2730 = vadd.f32 %v1674, %v2729
    %v2731 = vpop.f32.mrb[0].mxu0
    %v2732 = vadd.f32 %v1678, %v2731
    %2733 = vmatprep.mubr.bf16.mxu0 0
    %2734 = vmatmul.mubr.bf16.gmra.mrb[0].mxu0 %v1844
    %v2735 = vpop.f32.mrb[0].mxu0
    %v2736 = vadd.f32 %v1674, %v2735
    %v2737 = vpop.f32.mrb[0].mxu0
    %v2738 = vadd.f32 %v1678, %v2737
    %v2739 = vpop.f32.mrb[0].mxu0
    %v2740 = vadd.f32 %v1674, %v2739
    %v2741 = vpop.f32.mrb[0].mxu0
    %v2742 = vadd.f32 %v1678, %v2741
    %2743 = vmatprep.mubr.bf16.mxu0 0
    %2744 = vmatmul.mubr.bf16.gmra.mrb[0].mxu0 %v1845
    %v2745 = vpop.f32.mrb[0].mxu0
    %v2746 = vadd.f32 %v1674, %v2745
    %v2747 = vpop.f32.mrb[0].mxu0
    %v2748 = vadd.f32 %v1678, %v2747
    %v2749 = vpop.f32.mrb[0].mxu0
    %v2750 = vadd.f32 %v1674, %v2749
    %v2751 = vpop.f32.mrb[0].mxu0
    %v2752 = vadd.f32 %v1678, %v2751
    %2753 = vmatprep.mubr.bf16.mxu0 0
    %2754 = vmatmul.mubr.bf16.gmra.mrb[0].mxu0 %v1846
    %v2755 = vpop.f32.mrb[0].mxu0
    %v2756 = vadd.f32 %v1674, %v2755
    %v2757 = vpop.f32.mrb[0].mxu0
    %v2758 = vadd.f32 %v1678, %v2757
    %v2759 = vpop.f32.mrb[0].mxu0
    %v2760 = vadd.f32 %v1674, %v2759
    %v2761 = vpop.f32.mrb[0].mxu0
    %v2762 = vadd.f32 %v1678, %v2761
    %2763 = vmatprep.mubr.bf16.mxu0 0
    %2764 = vmatmul.mubr.bf16.gmra.mrb[0].mxu0 %v1847
    %v2765 = vpop.f32.mrb[0].mxu0
    %v2766 = vadd.f32 %v1674, %v2765
    %v2767 = vpop.f32.mrb[0].mxu0
    %v2768 = vadd.f32 %v1678, %v2767
    %v2769 = vpop.f32.mrb[0].mxu0
    %v2770 = vadd.f32 %v1674, %v2769
    %v2771 = vpop.f32.mrb[0].mxu0
    %v2772 = vadd.f32 %v1678, %v2771
    %2773 = vmatprep.mubr.bf16.mxu0 0
    %2774 = vmatmul.mubr.bf16.gmra.mrb[0].mxu0 %v1848
    %v2775 = vpop.f32.mrb[0].mxu0
    %v2776 = vadd.f32 %v1674, %v2775
    %v2777 = vpop.f32.mrb[0].mxu0
    %v2778 = vadd.f32 %v1678, %v2777
    %v2779 = vpop.f32.mrb[0].mxu0
    %v2780 = vadd.f32 %v1674, %v2779
    %v2781 = vpop.f32.mrb[0].mxu0
    %v2782 = vadd.f32 %v1678, %v2781
    %2783 = vmatprep.mubr.bf16.mxu0 0
    %2784 = vmatmul.mubr.bf16.gmra.mrb[0].mxu0 %v1849
    %v2785 = vpop.f32.mrb[0].mxu0
    %v2786 = vadd.f32 %v1674, %v2785
    %v2787 = vpop.f32.mrb[0].mxu0
    %v2788 = vadd.f32 %v1678, %v2787
    %v2789 = vpop.f32.mrb[0].mxu0
    %v2790 = vadd.f32 %v1674, %v2789
    %v2791 = vpop.f32.mrb[0].mxu0
    %v2792 = vadd.f32 %v1678, %v2791
    %2793 = vmatprep.mubr.bf16.mxu0 0
    %2794 = vmatmul.mubr.bf16.gmra.mrb[0].mxu0 %v1850
    %v2795 = vpop.f32.mrb[0].mxu0
    %v2796 = vadd.f32 %v1674, %v2795
    %v2797 = vpop.f32.mrb[0].mxu0
    %v2798 = vadd.f32 %v1678, %v2797
    %v2799 = vpop.f32.mrb[0].mxu0
    %v2800 = vadd.f32 %v1674, %v2799
    %v2801 = vpop.f32.mrb[0].mxu0
    %v2802 = vadd.f32 %v1678, %v2801
    %2803 = vmatprep.mubr.bf16.mxu0 0
    %2804 = vmatmul.mubr.bf16.gmra.mrb[0].mxu0 %v1851
    %v2805 = vpop.f32.mrb[0].mxu0
    %v2806 = vadd.f32 %v1674, %v2805
    %v2807 = vpop.f32.mrb[0].mxu0
    %v2808 = vadd.f32 %v1678, %v2807
    %v2809 = vpop.f32.mrb[0].mxu0
    %v2810 = vadd.f32 %v1674, %v2809
    %v2811 = vpop.f32.mrb[0].mxu0
    %v2812 = vadd.f32 %v1678, %v2811
    %2813 = vmatprep.mubr.bf16.mxu0 0
    %2814 = vmatmul.mubr.bf16.gmra.mrb[0].mxu0 %v1852
    %v2815 = vpop.f32.mrb[0].mxu0
    %v2816 = vadd.f32 %v1674, %v2815
    %v2817 = vpop.f32.mrb[0].mxu0
    %v2818 = vadd.f32 %v1678, %v2817
    %v2819 = vpop.f32.mrb[0].mxu0
    %v2820 = vadd.f32 %v1674, %v2819
    %v2821 = vpop.f32.mrb[0].mxu0
    %v2822 = vadd.f32 %v1678, %v2821
    %2823 = vmatprep.mubr.bf16.mxu0 0
    %2824 = vmatmul.mubr.bf16.gmra.mrb[0].mxu0 %v1853
    %v2825 = vpop.f32.mrb[0].mxu0
    %v2826 = vadd.f32 %v1674, %v2825
    %v2827 = vpop.f32.mrb[0].mxu0
    %v2828 = vadd.f32 %v1678, %v2827
    %v2829 = vpop.f32.mrb[0].mxu0
    %v2830 = vadd.f32 %v1674, %v2829
    %v2831 = vpop.f32.mrb[0].mxu0
    %v2832 = vadd.f32 %v1678, %v2831
    %2833 = vmatprep.mubr.bf16.mxu0 0
    %2834 = vmatmul.mubr.bf16.gmra.mrb[0].mxu0 %v1854
    %v2835 = vpop.f32.mrb[0].mxu0
    %v2836 = vadd.f32 %v1674, %v2835
    %v2837 = vpop.f32.mrb[0].mxu0
    %v2838 = vadd.f32 %v1678, %v2837
    %v2839 = vpop.f32.mrb[0].mxu0
    %v2840 = vadd.f32 %v1674, %v2839
    %v2841 = vpop.f32.mrb[0].mxu0
    %v2842 = vadd.f32 %v1678, %v2841
    %2843 = vmatprep.mubr.bf16.mxu0 0
    %2844 = vmatmul.mubr.bf16.gmra.mrb[0].mxu0 %v1855
    %v2845 = vpop.f32.mrb[0].mxu0
    %v2846 = vadd.f32 %v1674, %v2845
    %v2847 = vpop.f32.mrb[0].mxu0
    %v2848 = vadd.f32 %v1678, %v2847
    %v2849 = vpop.f32.mrb[0].mxu0
    %v2850 = vadd.f32 %v1674, %v2849
    %v2851 = vpop.f32.mrb[0].mxu0
    %v2852 = vadd.f32 %v1678, %v2851
    %2853 = vmatprep.mubr.bf16.mxu0 0
    %2854 = vmatmul.mubr.bf16.gmra.mrb[0].mxu0 %v1856
    %v2855 = vpop.f32.mrb[0].mxu0
    %v2856 = vadd.f32 %v1674, %v2855
    %v2857 = vpop.f32.mrb[0].mxu0
    %v2858 = vadd.f32 %v1678, %v2857
    %v2859 = vpop.f32.mrb[0].mxu0
    %v2860 = vadd.f32 %v1674, %v2859
    %v2861 = vpop.f32.mrb[0].mxu0
    %v2862 = vadd.f32 %v1678, %v2861
    %2863 = vmatprep.mubr.bf16.mxu0 0
    %2864 = vmatmul.mubr.bf16.gmra.mrb[0].mxu0 %v1857
    %v2865 = vpop.f32.mrb[0].mxu0
    %v2866 = vadd.f32 %v1674, %v2865
    %v2867 = vpop.f32.mrb[0].mxu0
    %v2868 = vadd.f32 %v1678, %v2867
    %v2869 = vpop.f32.mrb[0].mxu0
    %v2870 = vadd.f32 %v1674, %v2869
    %v2871 = vpop.f32.mrb[0].mxu0
    %v2872 = vadd.f32 %v1678, %v2871
    %2873 = vmatprep.mubr.bf16.mxu0 0
    %2874 = vmatmul.mubr.bf16.gmra.mrb[0].mxu0 %v1858
    %v2875 = vpop.f32.mrb[0].mxu0
    %v2876 = vadd.f32 %v1674, %v2875
    %v2877 = vpop.f32.mrb[0].mxu0
    %v2878 = vadd.f32 %v1678, %v2877
    %v2879 = vpop.f32.mrb[0].mxu0
    %v2880 = vadd.f32 %v1674, %v2879
    %v2881 = vpop.f32.mrb[0].mxu0
    %v2882 = vadd.f32 %v1678, %v2881
    %2883 = vmatprep.mubr.bf16.mxu0 0
    %2884 = vmatmul.mubr.bf16.gmra.mrb[0].mxu0 %v1859
    %v2885 = vpop.f32.mrb[0].mxu0
    %v2886 = vadd.f32 %v1674, %v2885
    %v2887 = vpop.f32.mrb[0].mxu0
    %v2888 = vadd.f32 %v1678, %v2887
    %v2889 = vpop.f32.mrb[0].mxu0
    %v2890 = vadd.f32 %v1674, %v2889
    %v2891 = vpop.f32.mrb[0].mxu0
    %v2892 = vadd.f32 %v1678, %v2891
    %2893 = vmatprep.mubr.bf16.mxu0 0
    %2894 = vmatmul.mubr.bf16.gmra.mrb[0].mxu0 %v1860
    %v2895 = vpop.f32.mrb[0].mxu0
    %v2896 = vadd.f32 %v1674, %v2895
    %v2897 = vpop.f32.mrb[0].mxu0
    %v2898 = vadd.f32 %v1678, %v2897
    %v2899 = vpop.f32.mrb[0].mxu0
    %v2900 = vadd.f32 %v1674, %v2899
    %v2901 = vpop.f32.mrb[0].mxu0
    %v2902 = vadd.f32 %v1678, %v2901
    %2903 = vmatprep.mubr.bf16.mxu0 0
    %2904 = vmatmul.mubr.bf16.gmra.mrb[0].mxu0 %v1861
    %v2905 = vpop.f32.mrb[0].mxu0
    %v2906 = vadd.f32 %v1674, %v2905
    %v2907 = vpop.f32.mrb[0].mxu0
    %v2908 = vadd.f32 %v1678, %v2907
    %v2909 = vpop.f32.mrb[0].mxu0
    %v2910 = vadd.f32 %v1674, %v2909
    %v2911 = vpop.f32.mrb[0].mxu0
    %v2912 = vadd.f32 %v1678, %v2911
    %2913 = vmatprep.mubr.bf16.mxu0 0
    %2914 = vmatmul.mubr.bf16.gmra.mrb[0].mxu0 %v1862
    %v2915 = vpop.f32.mrb[0].mxu0
    %v2916 = vadd.f32 %v1674, %v2915
    %v2917 = vpop.f32.mrb[0].mxu0
    %v2918 = vadd.f32 %v1678, %v2917
    %v2919 = vpop.f32.mrb[0].mxu0
    %v2920 = vadd.f32 %v1674, %v2919
    %v2921 = vpop.f32.mrb[0].mxu0
    %v2922 = vadd.f32 %v1678, %v2921
    %2923 = vmatprep.mubr.bf16.mxu0 0
    %2924 = vmatmul.mubr.bf16.gmra.mrb[0].mxu0 %v1863
    %v2925 = vpop.f32.mrb[0].mxu0
    %v2926 = vadd.f32 %v1674, %v2925
    %v2927 = vpop.f32.mrb[0].mxu0
    %v2928 = vadd.f32 %v1678, %v2927
    %v2929 = vpop.f32.mrb[0].mxu0
    %v2930 = vadd.f32 %v1674, %v2929
    %v2931 = vpop.f32.mrb[0].mxu0
    %v2932 = vadd.f32 %v1678, %v2931
    %2933 = vmatprep.mubr.bf16.mxu0 0
    %2934 = vmatmul.mubr.bf16.gmra.mrb[0].mxu0 %v1864
    %v2935 = vpop.f32.mrb[0].mxu0
    %v2936 = vadd.f32 %v1674, %v2935
    %v2937 = vpop.f32.mrb[0].mxu0
    %v2938 = vadd.f32 %v1678, %v2937
    %v2939 = vpop.f32.mrb[0].mxu0
    %v2940 = vadd.f32 %v1674, %v2939
    %v2941 = vpop.f32.mrb[0].mxu0
    %v2942 = vadd.f32 %v1678, %v2941
    %2943 = vmatprep.mubr.bf16.mxu0 0
    %2944 = vmatmul.mubr.bf16.gmra.mrb[0].mxu0 %v1865
    %v2945 = vpop.f32.mrb[0].mxu0
    %v2946 = vadd.f32 %v1674, %v2945
    %v2947 = vpop.f32.mrb[0].mxu0
    %v2948 = vadd.f32 %v1678, %v2947
    %v2949 = vpop.f32.mrb[0].mxu0
    %v2950 = vadd.f32 %v1674, %v2949
    %v2951 = vpop.f32.mrb[0].mxu0
    %v2952 = vadd.f32 %v1678, %v2951
    %2953 = vmatprep.mubr.bf16.mxu0 0
    %2954 = vmatmul.mubr.bf16.gmra.mrb[0].mxu0 %v1866
    %v2955 = vpop.f32.mrb[0].mxu0
    %v2956 = vadd.f32 %v1674, %v2955
    %v2957 = vpop.f32.mrb[0].mxu0
    %v2958 = vadd.f32 %v1678, %v2957
    %v2959 = vpop.f32.mrb[0].mxu0
    %v2960 = vadd.f32 %v1674, %v2959
    %v2961 = vpop.f32.mrb[0].mxu0
    %v2962 = vadd.f32 %v1678, %v2961
    %2963 = vmatprep.mubr.bf16.mxu0 0
    %2964 = vmatmul.mubr.bf16.gmra.mrb[0].mxu0 %v1867
    %v2965 = vpop.f32.mrb[0].mxu0
    %v2966 = vadd.f32 %v1674, %v2965
    %v2967 = vpop.f32.mrb[0].mxu0
    %v2968 = vadd.f32 %v1678, %v2967
    %v2969 = vpop.f32.mrb[0].mxu0
    %v2970 = vadd.f32 %v1674, %v2969
    %v2971 = vpop.f32.mrb[0].mxu0
    %v2972 = vadd.f32 %v1678, %v2971
    %2973 = vdwg.mxu0
    %2974 = vmatprep.subr.bf16.mxu0 %v2129
    %2975 = vmatpush1.bf16.msra.mxu0 %v2128
    %2976 = vmatprep.subr.bf16.mxu0 %v2138
    %2977 = vmatpush1.bf16.msra.mxu0 %v2137
    %2978 = vmatprep.subr.bf16.mxu0 %v2147
    %2979 = vmatpush1.bf16.msra.mxu0 %v2146
    %2980 = vmatprep.subr.bf16.mxu0 %v2156
    %2981 = vmatpush1.bf16.msra.mxu0 %v2155
    %2982 = vmatprep.subr.bf16.mxu0 %v2165
    %2983 = vmatpush1.bf16.msra.mxu0 %v2164
    %2984 = vmatprep.subr.bf16.mxu0 %v2174
    %2985 = vmatpush1.bf16.msra.mxu0 %v2173
    %2986 = vmatprep.subr.bf16.mxu0 %v2183
    %2987 = vmatpush1.bf16.msra.mxu0 %v2182
    %2988 = vmatprep.subr.bf16.mxu0 %v2192
    %2989 = vmatpush1.bf16.msra.mxu0 %v2191
    %2990 = vmatprep.subr.bf16.mxu0 0
    %2991 = vmatpush1.bf16.msra.mxu0 0
    %2992 = vmatprep.subr.bf16.mxu0 0
    %2993 = vmatpush1.bf16.msra.mxu0 0
    %2994 = vmatprep.subr.bf16.mxu0 0
    %2995 = vmatpush1.bf16.msra.mxu0 0
    %2996 = vmatprep.subr.bf16.mxu0 0
    %2997 = vmatpush1.bf16.msra.mxu0 0
    %2998 = vmatprep.subr.bf16.mxu0 0
    %2999 = vmatpush1.bf16.msra.mxu0 0
    %3000 = vmatprep.subr.bf16.mxu0 0
    %3001 = vmatpush1.bf16.msra.mxu0 0
    %3002 = vmatprep.subr.bf16.mxu0 0
    %3003 = vmatpush1.bf16.msra.mxu0 0
    %3004 = vmatprep.subr.bf16.mxu0 0
    %3005 = vmatpush1.bf16.msra.mxu0 0
    %3006 = vmatprep.mubr.bf16.mxu0 0
    %3007 = vmatmul.mubr.bf16.gmra.mrb[0].mxu0 %v1836
    %v3008 = vpop.f32.mrb[0].mxu0
    %v3009 = vadd.f32 %v1682, %v3008
    %v3010 = vpop.f32.mrb[0].mxu0
    %v3011 = vadd.f32 %v1686, %v3010
    %v3012 = vpop.f32.mrb[0].mxu0
    %v3013 = vadd.f32 %v1682, %v3012
    %v3014 = vpop.f32.mrb[0].mxu0
    %v3015 = vadd.f32 %v1686, %v3014
    %3016 = vmatprep.mubr.bf16.mxu0 0
    %3017 = vmatmul.mubr.bf16.gmra.mrb[0].mxu0 %v1837
    %v3018 = vpop.f32.mrb[0].mxu0
    %v3019 = vadd.f32 %v1682, %v3018
    %v3020 = vpop.f32.mrb[0].mxu0
    %v3021 = vadd.f32 %v1686, %v3020
    %v3022 = vpop.f32.mrb[0].mxu0
    %v3023 = vadd.f32 %v1682, %v3022
    %v3024 = vpop.f32.mrb[0].mxu0
    %v3025 = vadd.f32 %v1686, %v3024
    %3026 = vmatprep.mubr.bf16.mxu0 0
    %3027 = vmatmul.mubr.bf16.gmra.mrb[0].mxu0 %v1838
    %v3028 = vpop.f32.mrb[0].mxu0
    %v3029 = vadd.f32 %v1682, %v3028
    %v3030 = vpop.f32.mrb[0].mxu0
    %v3031 = vadd.f32 %v1686, %v3030
    %v3032 = vpop.f32.mrb[0].mxu0
    %v3033 = vadd.f32 %v1682, %v3032
    %v3034 = vpop.f32.mrb[0].mxu0
    %v3035 = vadd.f32 %v1686, %v3034
    %3036 = vmatprep.mubr.bf16.mxu0 0
    %3037 = vmatmul.mubr.bf16.gmra.mrb[0].mxu0 %v1839
    %v3038 = vpop.f32.mrb[0].mxu0
    %v3039 = vadd.f32 %v1682, %v3038
    %v3040 = vpop.f32.mrb[0].mxu0
    %v3041 = vadd.f32 %v1686, %v3040
    %v3042 = vpop.f32.mrb[0].mxu0
    %v3043 = vadd.f32 %v1682, %v3042
    %v3044 = vpop.f32.mrb[0].mxu0
    %v3045 = vadd.f32 %v1686, %v3044
    %3046 = vmatprep.mubr.bf16.mxu0 0
    %3047 = vmatmul.mubr.bf16.gmra.mrb[0].mxu0 %v1840
    %v3048 = vpop.f32.mrb[0].mxu0
    %v3049 = vadd.f32 %v1682, %v3048
    %v3050 = vpop.f32.mrb[0].mxu0
    %v3051 = vadd.f32 %v1686, %v3050
    %v3052 = vpop.f32.mrb[0].mxu0
    %v3053 = vadd.f32 %v1682, %v3052
    %v3054 = vpop.f32.mrb[0].mxu0
    %v3055 = vadd.f32 %v1686, %v3054
    %3056 = vmatprep.mubr.bf16.mxu0 0
    %3057 = vmatmul.mubr.bf16.gmra.mrb[0].mxu0 %v1841
    %v3058 = vpop.f32.mrb[0].mxu0
    %v3059 = vadd.f32 %v1682, %v3058
    %v3060 = vpop.f32.mrb[0].mxu0
    %v3061 = vadd.f32 %v1686, %v3060
    %v3062 = vpop.f32.mrb[0].mxu0
    %v3063 = vadd.f32 %v1682, %v3062
    %v3064 = vpop.f32.mrb[0].mxu0
    %v3065 = vadd.f32 %v1686, %v3064
    %3066 = vmatprep.mubr.bf16.mxu0 0
    %3067 = vmatmul.mubr.bf16.gmra.mrb[0].mxu0 %v1842
    %v3068 = vpop.f32.mrb[0].mxu0
    %v3069 = vadd.f32 %v1682, %v3068
    %v3070 = vpop.f32.mrb[0].mxu0
    %v3071 = vadd.f32 %v1686, %v3070
    %v3072 = vpop.f32.mrb[0].mxu0
    %v3073 = vadd.f32 %v1682, %v3072
    %v3074 = vpop.f32.mrb[0].mxu0
    %v3075 = vadd.f32 %v1686, %v3074
    %3076 = vmatprep.mubr.bf16.mxu0 0
    %3077 = vmatmul.mubr.bf16.gmra.mrb[0].mxu0 %v1843
    %v3078 = vpop.f32.mrb[0].mxu0
    %v3079 = vadd.f32 %v1682, %v3078
    %v3080 = vpop.f32.mrb[0].mxu0
    %v3081 = vadd.f32 %v1686, %v3080
    %v3082 = vpop.f32.mrb[0].mxu0
    %v3083 = vadd.f32 %v1682, %v3082
    %v3084 = vpop.f32.mrb[0].mxu0
    %v3085 = vadd.f32 %v1686, %v3084
    %3086 = vmatprep.mubr.bf16.mxu0 0
    %3087 = vmatmul.mubr.bf16.gmra.mrb[0].mxu0 %v1844
    %v3088 = vpop.f32.mrb[0].mxu0
    %v3089 = vadd.f32 %v1682, %v3088
    %v3090 = vpop.f32.mrb[0].mxu0
    %v3091 = vadd.f32 %v1686, %v3090
    %v3092 = vpop.f32.mrb[0].mxu0
    %v3093 = vadd.f32 %v1682, %v3092
    %v3094 = vpop.f32.mrb[0].mxu0
    %v3095 = vadd.f32 %v1686, %v3094
    %3096 = vmatprep.mubr.bf16.mxu0 0
    %3097 = vmatmul.mubr.bf16.gmra.mrb[0].mxu0 %v1845
    %v3098 = vpop.f32.mrb[0].mxu0
    %v3099 = vadd.f32 %v1682, %v3098
    %v3100 = vpop.f32.mrb[0].mxu0
    %v3101 = vadd.f32 %v1686, %v3100
    %v3102 = vpop.f32.mrb[0].mxu0
    %v3103 = vadd.f32 %v1682, %v3102
    %v3104 = vpop.f32.mrb[0].mxu0
    %v3105 = vadd.f32 %v1686, %v3104
    %3106 = vmatprep.mubr.bf16.mxu0 0
    %3107 = vmatmul.mubr.bf16.gmra.mrb[0].mxu0 %v1846
    %v3108 = vpop.f32.mrb[0].mxu0
    %v3109 = vadd.f32 %v1682, %v3108
    %v3110 = vpop.f32.mrb[0].mxu0
    %v3111 = vadd.f32 %v1686, %v3110
    %v3112 = vpop.f32.mrb[0].mxu0
    %v3113 = vadd.f32 %v1682, %v3112
    %v3114 = vpop.f32.mrb[0].mxu0
    %v3115 = vadd.f32 %v1686, %v3114
    %3116 = vmatprep.mubr.bf16.mxu0 0
    %3117 = vmatmul.mubr.bf16.gmra.mrb[0].mxu0 %v1847
    %v3118 = vpop.f32.mrb[0].mxu0
    %v3119 = vadd.f32 %v1682, %v3118
    %v3120 = vpop.f32.mrb[0].mxu0
    %v3121 = vadd.f32 %v1686, %v3120
    %v3122 = vpop.f32.mrb[0].mxu0
    %v3123 = vadd.f32 %v1682, %v3122
    %v3124 = vpop.f32.mrb[0].mxu0
    %v3125 = vadd.f32 %v1686, %v3124
    %3126 = vmatprep.mubr.bf16.mxu0 0
    %3127 = vmatmul.mubr.bf16.gmra.mrb[0].mxu0 %v1848
    %v3128 = vpop.f32.mrb[0].mxu0
    %v3129 = vadd.f32 %v1682, %v3128
    %v3130 = vpop.f32.mrb[0].mxu0
    %v3131 = vadd.f32 %v1686, %v3130
    %v3132 = vpop.f32.mrb[0].mxu0
    %v3133 = vadd.f32 %v1682, %v3132
    %v3134 = vpop.f32.mrb[0].mxu0
    %v3135 = vadd.f32 %v1686, %v3134
    %3136 = vmatprep.mubr.bf16.mxu0 0
    %3137 = vmatmul.mubr.bf16.gmra.mrb[0].mxu0 %v1849
    %v3138 = vpop.f32.mrb[0].mxu0
    %v3139 = vadd.f32 %v1682, %v3138
    %v3140 = vpop.f32.mrb[0].mxu0
    %v3141 = vadd.f32 %v1686, %v3140
    %v3142 = vpop.f32.mrb[0].mxu0
    %v3143 = vadd.f32 %v1682, %v3142
    %v3144 = vpop.f32.mrb[0].mxu0
    %v3145 = vadd.f32 %v1686, %v3144
    %3146 = vmatprep.mubr.bf16.mxu0 0
    %3147 = vmatmul.mubr.bf16.gmra.mrb[0].mxu0 %v1850
    %v3148 = vpop.f32.mrb[0].mxu0
    %v3149 = vadd.f32 %v1682, %v3148
    %v3150 = vpop.f32.mrb[0].mxu0
    %v3151 = vadd.f32 %v1686, %v3150
    %v3152 = vpop.f32.mrb[0].mxu0
    %v3153 = vadd.f32 %v1682, %v3152
    %v3154 = vpop.f32.mrb[0].mxu0
    %v3155 = vadd.f32 %v1686, %v3154
    %3156 = vmatprep.mubr.bf16.mxu0 0
    %3157 = vmatmul.mubr.bf16.gmra.mrb[0].mxu0 %v1851
    %v3158 = vpop.f32.mrb[0].mxu0
    %v3159 = vadd.f32 %v1682, %v3158
    %v3160 = vpop.f32.mrb[0].mxu0
    %v3161 = vadd.f32 %v1686, %v3160
    %v3162 = vpop.f32.mrb[0].mxu0
    %v3163 = vadd.f32 %v1682, %v3162
    %v3164 = vpop.f32.mrb[0].mxu0
    %v3165 = vadd.f32 %v1686, %v3164
    %3166 = vmatprep.mubr.bf16.mxu0 0
    %3167 = vmatmul.mubr.bf16.gmra.mrb[0].mxu0 %v1852
    %v3168 = vpop.f32.mrb[0].mxu0
    %v3169 = vadd.f32 %v1682, %v3168
    %v3170 = vpop.f32.mrb[0].mxu0
    %v3171 = vadd.f32 %v1686, %v3170
    %v3172 = vpop.f32.mrb[0].mxu0
    %v3173 = vadd.f32 %v1682, %v3172
    %v3174 = vpop.f32.mrb[0].mxu0
    %v3175 = vadd.f32 %v1686, %v3174
    %3176 = vmatprep.mubr.bf16.mxu0 0
    %3177 = vmatmul.mubr.bf16.gmra.mrb[0].mxu0 %v1853
    %v3178 = vpop.f32.mrb[0].mxu0
    %v3179 = vadd.f32 %v1682, %v3178
    %v3180 = vpop.f32.mrb[0].mxu0
    %v3181 = vadd.f32 %v1686, %v3180
    %v3182 = vpop.f32.mrb[0].mxu0
    %v3183 = vadd.f32 %v1682, %v3182
    %v3184 = vpop.f32.mrb[0].mxu0
    %v3185 = vadd.f32 %v1686, %v3184
    %3186 = vmatprep.mubr.bf16.mxu0 0
    %3187 = vmatmul.mubr.bf16.gmra.mrb[0].mxu0 %v1854
    %v3188 = vpop.f32.mrb[0].mxu0
    %v3189 = vadd.f32 %v1682, %v3188
    %v3190 = vpop.f32.mrb[0].mxu0
    %v3191 = vadd.f32 %v1686, %v3190
    %v3192 = vpop.f32.mrb[0].mxu0
    %v3193 = vadd.f32 %v1682, %v3192
    %v3194 = vpop.f32.mrb[0].mxu0
    %v3195 = vadd.f32 %v1686, %v3194
    %3196 = vmatprep.mubr.bf16.mxu0 0
    %3197 = vmatmul.mubr.bf16.gmra.mrb[0].mxu0 %v1855
    %v3198 = vpop.f32.mrb[0].mxu0
    %v3199 = vadd.f32 %v1682, %v3198
    %v3200 = vpop.f32.mrb[0].mxu0
    %v3201 = vadd.f32 %v1686, %v3200
    %v3202 = vpop.f32.mrb[0].mxu0
    %v3203 = vadd.f32 %v1682, %v3202
    %v3204 = vpop.f32.mrb[0].mxu0
    %v3205 = vadd.f32 %v1686, %v3204
    %3206 = vmatprep.mubr.bf16.mxu0 0
    %3207 = vmatmul.mubr.bf16.gmra.mrb[0].mxu0 %v1856
    %v3208 = vpop.f32.mrb[0].mxu0
    %v3209 = vadd.f32 %v1682, %v3208
    %v3210 = vpop.f32.mrb[0].mxu0
    %v3211 = vadd.f32 %v1686, %v3210
    %v3212 = vpop.f32.mrb[0].mxu0
    %v3213 = vadd.f32 %v1682, %v3212
    %v3214 = vpop.f32.mrb[0].mxu0
    %v3215 = vadd.f32 %v1686, %v3214
    %3216 = vmatprep.mubr.bf16.mxu0 0
    %3217 = vmatmul.mubr.bf16.gmra.mrb[0].mxu0 %v1857
    %v3218 = vpop.f32.mrb[0].mxu0
    %v3219 = vadd.f32 %v1682, %v3218
    %v3220 = vpop.f32.mrb[0].mxu0
    %v3221 = vadd.f32 %v1686, %v3220
    %v3222 = vpop.f32.mrb[0].mxu0
    %v3223 = vadd.f32 %v1682, %v3222
    %v3224 = vpop.f32.mrb[0].mxu0
    %v3225 = vadd.f32 %v1686, %v3224
    %3226 = vmatprep.mubr.bf16.mxu0 0
    %3227 = vmatmul.mubr.bf16.gmra.mrb[0].mxu0 %v1858
    %v3228 = vpop.f32.mrb[0].mxu0
    %v3229 = vadd.f32 %v1682, %v3228
    %v3230 = vpop.f32.mrb[0].mxu0
    %v3231 = vadd.f32 %v1686, %v3230
    %v3232 = vpop.f32.mrb[0].mxu0
    %v3233 = vadd.f32 %v1682, %v3232
    %v3234 = vpop.f32.mrb[0].mxu0
    %v3235 = vadd.f32 %v1686, %v3234
    %3236 = vmatprep.mubr.bf16.mxu0 0
    %3237 = vmatmul.mubr.bf16.gmra.mrb[0].mxu0 %v1859
    %v3238 = vpop.f32.mrb[0].mxu0
    %v3239 = vadd.f32 %v1682, %v3238
    %v3240 = vpop.f32.mrb[0].mxu0
    %v3241 = vadd.f32 %v1686, %v3240
    %v3242 = vpop.f32.mrb[0].mxu0
    %v3243 = vadd.f32 %v1682, %v3242
    %v3244 = vpop.f32.mrb[0].mxu0
    %v3245 = vadd.f32 %v1686, %v3244
    %3246 = vmatprep.mubr.bf16.mxu0 0
    %3247 = vmatmul.mubr.bf16.gmra.mrb[0].mxu0 %v1860
    %v3248 = vpop.f32.mrb[0].mxu0
    %v3249 = vadd.f32 %v1682, %v3248
    %v3250 = vpop.f32.mrb[0].mxu0
    %v3251 = vadd.f32 %v1686, %v3250
    %v3252 = vpop.f32.mrb[0].mxu0
    %v3253 = vadd.f32 %v1682, %v3252
    %v3254 = vpop.f32.mrb[0].mxu0
    %v3255 = vadd.f32 %v1686, %v3254
    %3256 = vmatprep.mubr.bf16.mxu0 0
    %3257 = vmatmul.mubr.bf16.gmra.mrb[0].mxu0 %v1861
    %v3258 = vpop.f32.mrb[0].mxu0
    %v3259 = vadd.f32 %v1682, %v3258
    %v3260 = vpop.f32.mrb[0].mxu0
    %v3261 = vadd.f32 %v1686, %v3260
    %v3262 = vpop.f32.mrb[0].mxu0
    %v3263 = vadd.f32 %v1682, %v3262
    %v3264 = vpop.f32.mrb[0].mxu0
    %v3265 = vadd.f32 %v1686, %v3264
    %3266 = vmatprep.mubr.bf16.mxu0 0
    %3267 = vmatmul.mubr.bf16.gmra.mrb[0].mxu0 %v1862
    %v3268 = vpop.f32.mrb[0].mxu0
    %v3269 = vadd.f32 %v1682, %v3268
    %v3270 = vpop.f32.mrb[0].mxu0
    %v3271 = vadd.f32 %v1686, %v3270
    %v3272 = vpop.f32.mrb[0].mxu0
    %v3273 = vadd.f32 %v1682, %v3272
    %v3274 = vpop.f32.mrb[0].mxu0
    %v3275 = vadd.f32 %v1686, %v3274
    %3276 = vmatprep.mubr.bf16.mxu0 0
    %3277 = vmatmul.mubr.bf16.gmra.mrb[0].mxu0 %v1863
    %v3278 = vpop.f32.mrb[0].mxu0
    %v3279 = vadd.f32 %v1682, %v3278
    %v3280 = vpop.f32.mrb[0].mxu0
    %v3281 = vadd.f32 %v1686, %v3280
    %v3282 = vpop.f32.mrb[0].mxu0
    %v3283 = vadd.f32 %v1682, %v3282
    %v3284 = vpop.f32.mrb[0].mxu0
    %v3285 = vadd.f32 %v1686, %v3284
    %3286 = vmatprep.mubr.bf16.mxu0 0
    %3287 = vmatmul.mubr.bf16.gmra.mrb[0].mxu0 %v1864
    %v3288 = vpop.f32.mrb[0].mxu0
    %v3289 = vadd.f32 %v1682, %v3288
    %v3290 = vpop.f32.mrb[0].mxu0
    %v3291 = vadd.f32 %v1686, %v3290
    %v3292 = vpop.f32.mrb[0].mxu0
    %v3293 = vadd.f32 %v1682, %v3292
    %v3294 = vpop.f32.mrb[0].mxu0
    %v3295 = vadd.f32 %v1686, %v3294
    %3296 = vmatprep.mubr.bf16.mxu0 0
    %3297 = vmatmul.mubr.bf16.gmra.mrb[0].mxu0 %v1865
    %v3298 = vpop.f32.mrb[0].mxu0
    %v3299 = vadd.f32 %v1682, %v3298
    %v3300 = vpop.f32.mrb[0].mxu0
    %v3301 = vadd.f32 %v1686, %v3300
    %v3302 = vpop.f32.mrb[0].mxu0
    %v3303 = vadd.f32 %v1682, %v3302
    %v3304 = vpop.f32.mrb[0].mxu0
    %v3305 = vadd.f32 %v1686, %v3304
    %3306 = vmatprep.mubr.bf16.mxu0 0
    %3307 = vmatmul.mubr.bf16.gmra.mrb[0].mxu0 %v1866
    %v3308 = vpop.f32.mrb[0].mxu0
    %v3309 = vadd.f32 %v1682, %v3308
    %v3310 = vpop.f32.mrb[0].mxu0
    %v3311 = vadd.f32 %v1686, %v3310
    %v3312 = vpop.f32.mrb[0].mxu0
    %v3313 = vadd.f32 %v1682, %v3312
    %v3314 = vpop.f32.mrb[0].mxu0
    %v3315 = vadd.f32 %v1686, %v3314
    %3316 = vmatprep.mubr.bf16.mxu0 0
    %3317 = vmatmul.mubr.bf16.gmra.mrb[0].mxu0 %v1867
    %v3318 = vpop.f32.mrb[0].mxu0
    %v3319 = vadd.f32 %v1682, %v3318
    %v3320 = vpop.f32.mrb[0].mxu0
    %v3321 = vadd.f32 %v1686, %v3320
    %v3322 = vpop.f32.mrb[0].mxu0
    %v3323 = vadd.f32 %v1682, %v3322
    %v3324 = vpop.f32.mrb[0].mxu0
    %v3325 = vadd.f32 %v1686, %v3324
    %3326 = vdwg.mxu0
    %3327 = vmatprep.subr.bf16.mxu0 %v2131
    %3328 = vmatpush1.bf16.msra.mxu0 %v2130
    %3329 = vmatprep.subr.bf16.mxu0 %v2140
    %3330 = vmatpush1.bf16.msra.mxu0 %v2139
    %3331 = vmatprep.subr.bf16.mxu0 %v2149
    %3332 = vmatpush1.bf16.msra.mxu0 %v2148
    %3333 = vmatprep.subr.bf16.mxu0 %v2158
    %3334 = vmatpush1.bf16.msra.mxu0 %v2157
    %3335 = vmatprep.subr.bf16.mxu0 %v2167
    %3336 = vmatpush1.bf16.msra.mxu0 %v2166
    %3337 = vmatprep.subr.bf16.mxu0 %v2176
    %3338 = vmatpush1.bf16.msra.mxu0 %v2175
    %3339 = vmatprep.subr.bf16.mxu0 %v2185
    %3340 = vmatpush1.bf16.msra.mxu0 %v2184
    %3341 = vmatprep.subr.bf16.mxu0 %v2194
    %3342 = vmatpush1.bf16.msra.mxu0 %v2193
    %3343 = vmatprep.subr.bf16.mxu0 0
    %3344 = vmatpush1.bf16.msra.mxu0 0
    %3345 = vmatprep.subr.bf16.mxu0 0
    %3346 = vmatpush1.bf16.msra.mxu0 0
    %3347 = vmatprep.subr.bf16.mxu0 0
    %3348 = vmatpush1.bf16.msra.mxu0 0
    %3349 = vmatprep.subr.bf16.mxu0 0
    %3350 = vmatpush1.bf16.msra.mxu0 0
    %3351 = vmatprep.subr.bf16.mxu0 0
    %3352 = vmatpush1.bf16.msra.mxu0 0
    %3353 = vmatprep.subr.bf16.mxu0 0
    %3354 = vmatpush1.bf16.msra.mxu0 0
    %3355 = vmatprep.subr.bf16.mxu0 0
    %3356 = vmatpush1.bf16.msra.mxu0 0
    %3357 = vmatprep.subr.bf16.mxu0 0
    %3358 = vmatpush1.bf16.msra.mxu0 0
    %3359 = vmatprep.mubr.bf16.mxu0 0
    %3360 = vmatmul.mubr.bf16.gmra.mrb[0].mxu0 %v1836
    %v3361 = vpop.f32.mrb[0].mxu0
    %v3362 = vadd.f32 %v1690, %v3361
    %v3363 = vpop.f32.mrb[0].mxu0
    %v3364 = vadd.f32 %v1694, %v3363
    %v3365 = vpop.f32.mrb[0].mxu0
    %v3366 = vadd.f32 %v1690, %v3365
    %v3367 = vpop.f32.mrb[0].mxu0
    %v3368 = vadd.f32 %v1694, %v3367
    %3369 = vmatprep.mubr.bf16.mxu0 0
    %3370 = vmatmul.mubr.bf16.gmra.mrb[0].mxu0 %v1837
    %v3371 = vpop.f32.mrb[0].mxu0
    %v3372 = vadd.f32 %v1690, %v3371
    %v3373 = vpop.f32.mrb[0].mxu0
    %v3374 = vadd.f32 %v1694, %v3373
    %v3375 = vpop.f32.mrb[0].mxu0
    %v3376 = vadd.f32 %v1690, %v3375
    %v3377 = vpop.f32.mrb[0].mxu0
    %v3378 = vadd.f32 %v1694, %v3377
    %3379 = vmatprep.mubr.bf16.mxu0 0
    %3380 = vmatmul.mubr.bf16.gmra.mrb[0].mxu0 %v1838
    %v3381 = vpop.f32.mrb[0].mxu0
    %v3382 = vadd.f32 %v1690, %v3381
    %v3383 = vpop.f32.mrb[0].mxu0
    %v3384 = vadd.f32 %v1694, %v3383
    %v3385 = vpop.f32.mrb[0].mxu0
    %v3386 = vadd.f32 %v1690, %v3385
    %v3387 = vpop.f32.mrb[0].mxu0
    %v3388 = vadd.f32 %v1694, %v3387
    %3389 = vmatprep.mubr.bf16.mxu0 0
    %3390 = vmatmul.mubr.bf16.gmra.mrb[0].mxu0 %v1839
    %v3391 = vpop.f32.mrb[0].mxu0
    %v3392 = vadd.f32 %v1690, %v3391
    %v3393 = vpop.f32.mrb[0].mxu0
    %v3394 = vadd.f32 %v1694, %v3393
    %v3395 = vpop.f32.mrb[0].mxu0
    %v3396 = vadd.f32 %v1690, %v3395
    %v3397 = vpop.f32.mrb[0].mxu0
    %v3398 = vadd.f32 %v1694, %v3397
    %3399 = vmatprep.mubr.bf16.mxu0 0
    %3400 = vmatmul.mubr.bf16.gmra.mrb[0].mxu0 %v1840
    %v3401 = vpop.f32.mrb[0].mxu0
    %v3402 = vadd.f32 %v1690, %v3401
    %v3403 = vpop.f32.mrb[0].mxu0
    %v3404 = vadd.f32 %v1694, %v3403
    %v3405 = vpop.f32.mrb[0].mxu0
    %v3406 = vadd.f32 %v1690, %v3405
    %v3407 = vpop.f32.mrb[0].mxu0
    %v3408 = vadd.f32 %v1694, %v3407
    %3409 = vmatprep.mubr.bf16.mxu0 0
    %3410 = vmatmul.mubr.bf16.gmra.mrb[0].mxu0 %v1841
    %v3411 = vpop.f32.mrb[0].mxu0
    %v3412 = vadd.f32 %v1690, %v3411
    %v3413 = vpop.f32.mrb[0].mxu0
    %v3414 = vadd.f32 %v1694, %v3413
    %v3415 = vpop.f32.mrb[0].mxu0
    %v3416 = vadd.f32 %v1690, %v3415
    %v3417 = vpop.f32.mrb[0].mxu0
    %v3418 = vadd.f32 %v1694, %v3417
    %3419 = vmatprep.mubr.bf16.mxu0 0
    %3420 = vmatmul.mubr.bf16.gmra.mrb[0].mxu0 %v1842
    %v3421 = vpop.f32.mrb[0].mxu0
    %v3422 = vadd.f32 %v1690, %v3421
    %v3423 = vpop.f32.mrb[0].mxu0
    %v3424 = vadd.f32 %v1694, %v3423
    %v3425 = vpop.f32.mrb[0].mxu0
    %v3426 = vadd.f32 %v1690, %v3425
    %v3427 = vpop.f32.mrb[0].mxu0
    %v3428 = vadd.f32 %v1694, %v3427
    %3429 = vmatprep.mubr.bf16.mxu0 0
    %3430 = vmatmul.mubr.bf16.gmra.mrb[0].mxu0 %v1843
    %v3431 = vpop.f32.mrb[0].mxu0
    %v3432 = vadd.f32 %v1690, %v3431
    %v3433 = vpop.f32.mrb[0].mxu0
    %v3434 = vadd.f32 %v1694, %v3433
    %v3435 = vpop.f32.mrb[0].mxu0
    %v3436 = vadd.f32 %v1690, %v3435
    %v3437 = vpop.f32.mrb[0].mxu0
    %v3438 = vadd.f32 %v1694, %v3437
    %3439 = vmatprep.mubr.bf16.mxu0 0
    %3440 = vmatmul.mubr.bf16.gmra.mrb[0].mxu0 %v1844
    %v3441 = vpop.f32.mrb[0].mxu0
    %v3442 = vadd.f32 %v1690, %v3441
    %v3443 = vpop.f32.mrb[0].mxu0
    %v3444 = vadd.f32 %v1694, %v3443
    %v3445 = vpop.f32.mrb[0].mxu0
    %v3446 = vadd.f32 %v1690, %v3445
    %v3447 = vpop.f32.mrb[0].mxu0
    %v3448 = vadd.f32 %v1694, %v3447
    %3449 = vmatprep.mubr.bf16.mxu0 0
    %3450 = vmatmul.mubr.bf16.gmra.mrb[0].mxu0 %v1845
    %v3451 = vpop.f32.mrb[0].mxu0
    %v3452 = vadd.f32 %v1690, %v3451
    %v3453 = vpop.f32.mrb[0].mxu0
    %v3454 = vadd.f32 %v1694, %v3453
    %v3455 = vpop.f32.mrb[0].mxu0
    %v3456 = vadd.f32 %v1690, %v3455
    %v3457 = vpop.f32.mrb[0].mxu0
    %v3458 = vadd.f32 %v1694, %v3457
    %3459 = vmatprep.mubr.bf16.mxu0 0
    %3460 = vmatmul.mubr.bf16.gmra.mrb[0].mxu0 %v1846
    %v3461 = vpop.f32.mrb[0].mxu0
    %v3462 = vadd.f32 %v1690, %v3461
    %v3463 = vpop.f32.mrb[0].mxu0
    %v3464 = vadd.f32 %v1694, %v3463
    %v3465 = vpop.f32.mrb[0].mxu0
    %v3466 = vadd.f32 %v1690, %v3465
    %v3467 = vpop.f32.mrb[0].mxu0
    %v3468 = vadd.f32 %v1694, %v3467
    %3469 = vmatprep.mubr.bf16.mxu0 0
    %3470 = vmatmul.mubr.bf16.gmra.mrb[0].mxu0 %v1847
    %v3471 = vpop.f32.mrb[0].mxu0
    %v3472 = vadd.f32 %v1690, %v3471
    %v3473 = vpop.f32.mrb[0].mxu0
    %v3474 = vadd.f32 %v1694, %v3473
    %v3475 = vpop.f32.mrb[0].mxu0
    %v3476 = vadd.f32 %v1690, %v3475
    %v3477 = vpop.f32.mrb[0].mxu0
    %v3478 = vadd.f32 %v1694, %v3477
    %3479 = vmatprep.mubr.bf16.mxu0 0
    %3480 = vmatmul.mubr.bf16.gmra.mrb[0].mxu0 %v1848
    %v3481 = vpop.f32.mrb[0].mxu0
    %v3482 = vadd.f32 %v1690, %v3481
    %v3483 = vpop.f32.mrb[0].mxu0
    %v3484 = vadd.f32 %v1694, %v3483
    %v3485 = vpop.f32.mrb[0].mxu0
    %v3486 = vadd.f32 %v1690, %v3485
    %v3487 = vpop.f32.mrb[0].mxu0
    %v3488 = vadd.f32 %v1694, %v3487
    %3489 = vmatprep.mubr.bf16.mxu0 0
    %3490 = vmatmul.mubr.bf16.gmra.mrb[0].mxu0 %v1849
    %v3491 = vpop.f32.mrb[0].mxu0
    %v3492 = vadd.f32 %v1690, %v3491
    %v3493 = vpop.f32.mrb[0].mxu0
    %v3494 = vadd.f32 %v1694, %v3493
    %v3495 = vpop.f32.mrb[0].mxu0
    %v3496 = vadd.f32 %v1690, %v3495
    %v3497 = vpop.f32.mrb[0].mxu0
    %v3498 = vadd.f32 %v1694, %v3497
    %3499 = vmatprep.mubr.bf16.mxu0 0
    %3500 = vmatmul.mubr.bf16.gmra.mrb[0].mxu0 %v1850
    %v3501 = vpop.f32.mrb[0].mxu0
    %v3502 = vadd.f32 %v1690, %v3501
    %v3503 = vpop.f32.mrb[0].mxu0
    %v3504 = vadd.f32 %v1694, %v3503
    %v3505 = vpop.f32.mrb[0].mxu0
    %v3506 = vadd.f32 %v1690, %v3505
    %v3507 = vpop.f32.mrb[0].mxu0
    %v3508 = vadd.f32 %v1694, %v3507
    %3509 = vmatprep.mubr.bf16.mxu0 0
    %3510 = vmatmul.mubr.bf16.gmra.mrb[0].mxu0 %v1851
    %v3511 = vpop.f32.mrb[0].mxu0
    %v3512 = vadd.f32 %v1690, %v3511
    %v3513 = vpop.f32.mrb[0].mxu0
    %v3514 = vadd.f32 %v1694, %v3513
    %v3515 = vpop.f32.mrb[0].mxu0
    %v3516 = vadd.f32 %v1690, %v3515
    %v3517 = vpop.f32.mrb[0].mxu0
    %v3518 = vadd.f32 %v1694, %v3517
    %3519 = vmatprep.mubr.bf16.mxu0 0
    %3520 = vmatmul.mubr.bf16.gmra.mrb[0].mxu0 %v1852
    %v3521 = vpop.f32.mrb[0].mxu0
    %v3522 = vadd.f32 %v1690, %v3521
    %v3523 = vpop.f32.mrb[0].mxu0
    %v3524 = vadd.f32 %v1694, %v3523
    %v3525 = vpop.f32.mrb[0].mxu0
    %v3526 = vadd.f32 %v1690, %v3525
    %v3527 = vpop.f32.mrb[0].mxu0
    %v3528 = vadd.f32 %v1694, %v3527
    %3529 = vmatprep.mubr.bf16.mxu0 0
    %3530 = vmatmul.mubr.bf16.gmra.mrb[0].mxu0 %v1853
    %v3531 = vpop.f32.mrb[0].mxu0
    %v3532 = vadd.f32 %v1690, %v3531
    %v3533 = vpop.f32.mrb[0].mxu0
    %v3534 = vadd.f32 %v1694, %v3533
    %v3535 = vpop.f32.mrb[0].mxu0
    %v3536 = vadd.f32 %v1690, %v3535
    %v3537 = vpop.f32.mrb[0].mxu0
    %v3538 = vadd.f32 %v1694, %v3537
    %3539 = vmatprep.mubr.bf16.mxu0 0
    %3540 = vmatmul.mubr.bf16.gmra.mrb[0].mxu0 %v1854
    %v3541 = vpop.f32.mrb[0].mxu0
    %v3542 = vadd.f32 %v1690, %v3541
    %v3543 = vpop.f32.mrb[0].mxu0
    %v3544 = vadd.f32 %v1694, %v3543
    %v3545 = vpop.f32.mrb[0].mxu0
    %v3546 = vadd.f32 %v1690, %v3545
    %v3547 = vpop.f32.mrb[0].mxu0
    %v3548 = vadd.f32 %v1694, %v3547
    %3549 = vmatprep.mubr.bf16.mxu0 0
    %3550 = vmatmul.mubr.bf16.gmra.mrb[0].mxu0 %v1855
    %v3551 = vpop.f32.mrb[0].mxu0
    %v3552 = vadd.f32 %v1690, %v3551
    %v3553 = vpop.f32.mrb[0].mxu0
    %v3554 = vadd.f32 %v1694, %v3553
    %v3555 = vpop.f32.mrb[0].mxu0
    %v3556 = vadd.f32 %v1690, %v3555
    %v3557 = vpop.f32.mrb[0].mxu0
    %v3558 = vadd.f32 %v1694, %v3557
    %3559 = vmatprep.mubr.bf16.mxu0 0
    %3560 = vmatmul.mubr.bf16.gmra.mrb[0].mxu0 %v1856
    %v3561 = vpop.f32.mrb[0].mxu0
    %v3562 = vadd.f32 %v1690, %v3561
    %v3563 = vpop.f32.mrb[0].mxu0
    %v3564 = vadd.f32 %v1694, %v3563
    %v3565 = vpop.f32.mrb[0].mxu0
    %v3566 = vadd.f32 %v1690, %v3565
    %v3567 = vpop.f32.mrb[0].mxu0
    %v3568 = vadd.f32 %v1694, %v3567
    %3569 = vmatprep.mubr.bf16.mxu0 0
    %3570 = vmatmul.mubr.bf16.gmra.mrb[0].mxu0 %v1857
    %v3571 = vpop.f32.mrb[0].mxu0
    %v3572 = vadd.f32 %v1690, %v3571
    %v3573 = vpop.f32.mrb[0].mxu0
    %v3574 = vadd.f32 %v1694, %v3573
    %v3575 = vpop.f32.mrb[0].mxu0
    %v3576 = vadd.f32 %v1690, %v3575
    %v3577 = vpop.f32.mrb[0].mxu0
    %v3578 = vadd.f32 %v1694, %v3577
    %3579 = vmatprep.mubr.bf16.mxu0 0
    %3580 = vmatmul.mubr.bf16.gmra.mrb[0].mxu0 %v1858
    %v3581 = vpop.f32.mrb[0].mxu0
    %v3582 = vadd.f32 %v1690, %v3581
    %v3583 = vpop.f32.mrb[0].mxu0
    %v3584 = vadd.f32 %v1694, %v3583
    %v3585 = vpop.f32.mrb[0].mxu0
    %v3586 = vadd.f32 %v1690, %v3585
    %v3587 = vpop.f32.mrb[0].mxu0
    %v3588 = vadd.f32 %v1694, %v3587
    %3589 = vmatprep.mubr.bf16.mxu0 0
    %3590 = vmatmul.mubr.bf16.gmra.mrb[0].mxu0 %v1859
    %v3591 = vpop.f32.mrb[0].mxu0
    %v3592 = vadd.f32 %v1690, %v3591
    %v3593 = vpop.f32.mrb[0].mxu0
    %v3594 = vadd.f32 %v1694, %v3593
    %v3595 = vpop.f32.mrb[0].mxu0
    %v3596 = vadd.f32 %v1690, %v3595
    %v3597 = vpop.f32.mrb[0].mxu0
    %v3598 = vadd.f32 %v1694, %v3597
    %3599 = vmatprep.mubr.bf16.mxu0 0
    %3600 = vmatmul.mubr.bf16.gmra.mrb[0].mxu0 %v1860
    %v3601 = vpop.f32.mrb[0].mxu0
    %v3602 = vadd.f32 %v1690, %v3601
    %v3603 = vpop.f32.mrb[0].mxu0
    %v3604 = vadd.f32 %v1694, %v3603
    %v3605 = vpop.f32.mrb[0].mxu0
    %v3606 = vadd.f32 %v1690, %v3605
    %v3607 = vpop.f32.mrb[0].mxu0
    %v3608 = vadd.f32 %v1694, %v3607
    %3609 = vmatprep.mubr.bf16.mxu0 0
    %3610 = vmatmul.mubr.bf16.gmra.mrb[0].mxu0 %v1861
    %v3611 = vpop.f32.mrb[0].mxu0
    %v3612 = vadd.f32 %v1690, %v3611
    %v3613 = vpop.f32.mrb[0].mxu0
    %v3614 = vadd.f32 %v1694, %v3613
    %v3615 = vpop.f32.mrb[0].mxu0
    %v3616 = vadd.f32 %v1690, %v3615
    %v3617 = vpop.f32.mrb[0].mxu0
    %v3618 = vadd.f32 %v1694, %v3617
    %3619 = vmatprep.mubr.bf16.mxu0 0
    %3620 = vmatmul.mubr.bf16.gmra.mrb[0].mxu0 %v1862
    %v3621 = vpop.f32.mrb[0].mxu0
    %v3622 = vadd.f32 %v1690, %v3621
    %v3623 = vpop.f32.mrb[0].mxu0
    %v3624 = vadd.f32 %v1694, %v3623
    %v3625 = vpop.f32.mrb[0].mxu0
    %v3626 = vadd.f32 %v1690, %v3625
    %v3627 = vpop.f32.mrb[0].mxu0
    %v3628 = vadd.f32 %v1694, %v3627
    %3629 = vmatprep.mubr.bf16.mxu0 0
    %3630 = vmatmul.mubr.bf16.gmra.mrb[0].mxu0 %v1863
    %v3631 = vpop.f32.mrb[0].mxu0
    %v3632 = vadd.f32 %v1690, %v3631
    %v3633 = vpop.f32.mrb[0].mxu0
    %v3634 = vadd.f32 %v1694, %v3633
    %v3635 = vpop.f32.mrb[0].mxu0
    %v3636 = vadd.f32 %v1690, %v3635
    %v3637 = vpop.f32.mrb[0].mxu0
    %v3638 = vadd.f32 %v1694, %v3637
    %3639 = vmatprep.mubr.bf16.mxu0 0
    %3640 = vmatmul.mubr.bf16.gmra.mrb[0].mxu0 %v1864
    %v3641 = vpop.f32.mrb[0].mxu0
    %v3642 = vadd.f32 %v1690, %v3641
    %v3643 = vpop.f32.mrb[0].mxu0
    %v3644 = vadd.f32 %v1694, %v3643
    %v3645 = vpop.f32.mrb[0].mxu0
    %v3646 = vadd.f32 %v1690, %v3645
    %v3647 = vpop.f32.mrb[0].mxu0
    %v3648 = vadd.f32 %v1694, %v3647
    %3649 = vmatprep.mubr.bf16.mxu0 0
    %3650 = vmatmul.mubr.bf16.gmra.mrb[0].mxu0 %v1865
    %v3651 = vpop.f32.mrb[0].mxu0
    %v3652 = vadd.f32 %v1690, %v3651
    %v3653 = vpop.f32.mrb[0].mxu0
    %v3654 = vadd.f32 %v1694, %v3653
    %v3655 = vpop.f32.mrb[0].mxu0
    %v3656 = vadd.f32 %v1690, %v3655
    %v3657 = vpop.f32.mrb[0].mxu0
    %v3658 = vadd.f32 %v1694, %v3657
    %3659 = vmatprep.mubr.bf16.mxu0 0
    %3660 = vmatmul.mubr.bf16.gmra.mrb[0].mxu0 %v1866
    %v3661 = vpop.f32.mrb[0].mxu0
    %v3662 = vadd.f32 %v1690, %v3661
    %v3663 = vpop.f32.mrb[0].mxu0
    %v3664 = vadd.f32 %v1694, %v3663
    %v3665 = vpop.f32.mrb[0].mxu0
    %v3666 = vadd.f32 %v1690, %v3665
    %v3667 = vpop.f32.mrb[0].mxu0
    %v3668 = vadd.f32 %v1694, %v3667
    %3669 = vmatprep.mubr.bf16.mxu0 0
    %3670 = vmatmul.mubr.bf16.gmra.mrb[0].mxu0 %v1867
    %v3671 = vpop.f32.mrb[0].mxu0
    %v3672 = vadd.f32 %v1690, %v3671
    %v3673 = vpop.f32.mrb[0].mxu0
    %v3674 = vadd.f32 %v1694, %v3673
    %v3675 = vpop.f32.mrb[0].mxu0
    %v3676 = vadd.f32 %v1690, %v3675
    %v3677 = vpop.f32.mrb[0].mxu0
    %v3678 = vadd.f32 %v1694, %v3677
    %3679 = vdwg.mxu0
    %3680 = vmatprep.subr.bf16.mxu0 0
    %3681 = vmatpush1.bf16.msra.mxu0 %v2132
    %3682 = vmatprep.subr.bf16.mxu0 0
    %3683 = vmatpush1.bf16.msra.mxu0 %v2141
    %3684 = vmatprep.subr.bf16.mxu0 0
    %3685 = vmatpush1.bf16.msra.mxu0 %v2150
    %3686 = vmatprep.subr.bf16.mxu0 0
    %3687 = vmatpush1.bf16.msra.mxu0 %v2159
    %3688 = vmatprep.subr.bf16.mxu0 0
    %3689 = vmatpush1.bf16.msra.mxu0 %v2168
    %3690 = vmatprep.subr.bf16.mxu0 0
    %3691 = vmatpush1.bf16.msra.mxu0 %v2177
    %3692 = vmatprep.subr.bf16.mxu0 0
    %3693 = vmatpush1.bf16.msra.mxu0 %v2186
    %3694 = vmatprep.subr.bf16.mxu0 0
    %3695 = vmatpush1.bf16.msra.mxu0 %v2195
    %3696 = vmatprep.subr.bf16.mxu0 0
    %3697 = vmatpush1.bf16.msra.mxu0 0
    %3698 = vmatprep.subr.bf16.mxu0 0
    %3699 = vmatpush1.bf16.msra.mxu0 0
    %3700 = vmatprep.subr.bf16.mxu0 0
    %3701 = vmatpush1.bf16.msra.mxu0 0
    %3702 = vmatprep.subr.bf16.mxu0 0
    %3703 = vmatpush1.bf16.msra.mxu0 0
    %3704 = vmatprep.subr.bf16.mxu0 0
    %3705 = vmatpush1.bf16.msra.mxu0 0
    %3706 = vmatprep.subr.bf16.mxu0 0
    %3707 = vmatpush1.bf16.msra.mxu0 0
    %3708 = vmatprep.subr.bf16.mxu0 0
    %3709 = vmatpush1.bf16.msra.mxu0 0
    %3710 = vmatprep.subr.bf16.mxu0 0
    %3711 = vmatpush1.bf16.msra.mxu0 0
    %3712 = vmatprep.mubr.bf16.mxu0 0
    %3713 = vmatmul.mubr.bf16.gmra.mrb[0].mxu0 %v1836
    %v3714 = vpop.f32.mrb[0].mxu0
    %v3715 = vadd.f32 %v1698, %v3714
    %v3716 = vpop.f32.mrb[0].mxu0
    %v3717 = vpop.f32.mrb[0].mxu0
    %v3718 = vadd.f32 %v1698, %v3717
    %v3719 = vpop.f32.mrb[0].mxu0
    %3720 = vmatprep.mubr.bf16.mxu0 0
    %3721 = vmatmul.mubr.bf16.gmra.mrb[0].mxu0 %v1837
    %v3722 = vpop.f32.mrb[0].mxu0
    %v3723 = vadd.f32 %v1698, %v3722
    %v3724 = vpop.f32.mrb[0].mxu0
    %v3725 = vpop.f32.mrb[0].mxu0
    %v3726 = vadd.f32 %v1698, %v3725
    %v3727 = vpop.f32.mrb[0].mxu0
    %3728 = vmatprep.mubr.bf16.mxu0 0
    %3729 = vmatmul.mubr.bf16.gmra.mrb[0].mxu0 %v1838
    %v3730 = vpop.f32.mrb[0].mxu0
    %v3731 = vadd.f32 %v1698, %v3730
    %v3732 = vpop.f32.mrb[0].mxu0
    %v3733 = vpop.f32.mrb[0].mxu0
    %v3734 = vadd.f32 %v1698, %v3733
    %v3735 = vpop.f32.mrb[0].mxu0
    %3736 = vmatprep.mubr.bf16.mxu0 0
    %3737 = vmatmul.mubr.bf16.gmra.mrb[0].mxu0 %v1839
    %v3738 = vpop.f32.mrb[0].mxu0
    %v3739 = vadd.f32 %v1698, %v3738
    %v3740 = vpop.f32.mrb[0].mxu0
    %v3741 = vpop.f32.mrb[0].mxu0
    %v3742 = vadd.f32 %v1698, %v3741
    %v3743 = vpop.f32.mrb[0].mxu0
    %3744 = vmatprep.mubr.bf16.mxu0 0
    %3745 = vmatmul.mubr.bf16.gmra.mrb[0].mxu0 %v1840
    %v3746 = vpop.f32.mrb[0].mxu0
    %v3747 = vadd.f32 %v1698, %v3746
    %v3748 = vpop.f32.mrb[0].mxu0
    %v3749 = vpop.f32.mrb[0].mxu0
    %v3750 = vadd.f32 %v1698, %v3749
    %v3751 = vpop.f32.mrb[0].mxu0
    %3752 = vmatprep.mubr.bf16.mxu0 0
    %3753 = vmatmul.mubr.bf16.gmra.mrb[0].mxu0 %v1841
    %v3754 = vpop.f32.mrb[0].mxu0
    %v3755 = vadd.f32 %v1698, %v3754
    %v3756 = vpop.f32.mrb[0].mxu0
    %v3757 = vpop.f32.mrb[0].mxu0
    %v3758 = vadd.f32 %v1698, %v3757
    %v3759 = vpop.f32.mrb[0].mxu0
    %3760 = vmatprep.mubr.bf16.mxu0 0
    %3761 = vmatmul.mubr.bf16.gmra.mrb[0].mxu0 %v1842
    %v3762 = vpop.f32.mrb[0].mxu0
    %v3763 = vadd.f32 %v1698, %v3762
    %v3764 = vpop.f32.mrb[0].mxu0
    %v3765 = vpop.f32.mrb[0].mxu0
    %v3766 = vadd.f32 %v1698, %v3765
    %v3767 = vpop.f32.mrb[0].mxu0
    %3768 = vmatprep.mubr.bf16.mxu0 0
    %3769 = vmatmul.mubr.bf16.gmra.mrb[0].mxu0 %v1843
    %v3770 = vpop.f32.mrb[0].mxu0
    %v3771 = vadd.f32 %v1698, %v3770
    %v3772 = vpop.f32.mrb[0].mxu0
    %v3773 = vpop.f32.mrb[0].mxu0
    %v3774 = vadd.f32 %v1698, %v3773
    %v3775 = vpop.f32.mrb[0].mxu0
    %3776 = vmatprep.mubr.bf16.mxu0 0
    %3777 = vmatmul.mubr.bf16.gmra.mrb[0].mxu0 %v1844
    %v3778 = vpop.f32.mrb[0].mxu0
    %v3779 = vadd.f32 %v1698, %v3778
    %v3780 = vpop.f32.mrb[0].mxu0
    %v3781 = vpop.f32.mrb[0].mxu0
    %v3782 = vadd.f32 %v1698, %v3781
    %v3783 = vpop.f32.mrb[0].mxu0
    %3784 = vmatprep.mubr.bf16.mxu0 0
    %3785 = vmatmul.mubr.bf16.gmra.mrb[0].mxu0 %v1845
    %v3786 = vpop.f32.mrb[0].mxu0
    %v3787 = vadd.f32 %v1698, %v3786
    %v3788 = vpop.f32.mrb[0].mxu0
    %v3789 = vpop.f32.mrb[0].mxu0
    %v3790 = vadd.f32 %v1698, %v3789
    %v3791 = vpop.f32.mrb[0].mxu0
    %3792 = vmatprep.mubr.bf16.mxu0 0
    %3793 = vmatmul.mubr.bf16.gmra.mrb[0].mxu0 %v1846
    %v3794 = vpop.f32.mrb[0].mxu0
    %v3795 = vadd.f32 %v1698, %v3794
    %v3796 = vpop.f32.mrb[0].mxu0
    %v3797 = vpop.f32.mrb[0].mxu0
    %v3798 = vadd.f32 %v1698, %v3797
    %v3799 = vpop.f32.mrb[0].mxu0
    %3800 = vmatprep.mubr.bf16.mxu0 0
    %3801 = vmatmul.mubr.bf16.gmra.mrb[0].mxu0 %v1847
    %v3802 = vpop.f32.mrb[0].mxu0
    %v3803 = vadd.f32 %v1698, %v3802
    %v3804 = vpop.f32.mrb[0].mxu0
    %v3805 = vpop.f32.mrb[0].mxu0
    %v3806 = vadd.f32 %v1698, %v3805
    %v3807 = vpop.f32.mrb[0].mxu0
    %3808 = vmatprep.mubr.bf16.mxu0 0
    %3809 = vmatmul.mubr.bf16.gmra.mrb[0].mxu0 %v1848
    %v3810 = vpop.f32.mrb[0].mxu0
    %v3811 = vadd.f32 %v1698, %v3810
    %v3812 = vpop.f32.mrb[0].mxu0
    %v3813 = vpop.f32.mrb[0].mxu0
    %v3814 = vadd.f32 %v1698, %v3813
    %v3815 = vpop.f32.mrb[0].mxu0
    %3816 = vmatprep.mubr.bf16.mxu0 0
    %3817 = vmatmul.mubr.bf16.gmra.mrb[0].mxu0 %v1849
    %v3818 = vpop.f32.mrb[0].mxu0
    %v3819 = vadd.f32 %v1698, %v3818
    %v3820 = vpop.f32.mrb[0].mxu0
    %v3821 = vpop.f32.mrb[0].mxu0
    %v3822 = vadd.f32 %v1698, %v3821
    %v3823 = vpop.f32.mrb[0].mxu0
    %3824 = vmatprep.mubr.bf16.mxu0 0
    %3825 = vmatmul.mubr.bf16.gmra.mrb[0].mxu0 %v1850
    %v3826 = vpop.f32.mrb[0].mxu0
    %v3827 = vadd.f32 %v1698, %v3826
    %v3828 = vpop.f32.mrb[0].mxu0
    %v3829 = vpop.f32.mrb[0].mxu0
    %v3830 = vadd.f32 %v1698, %v3829
    %v3831 = vpop.f32.mrb[0].mxu0
    %3832 = vmatprep.mubr.bf16.mxu0 0
    %3833 = vmatmul.mubr.bf16.gmra.mrb[0].mxu0 %v1851
    %v3834 = vpop.f32.mrb[0].mxu0
    %v3835 = vadd.f32 %v1698, %v3834
    %v3836 = vpop.f32.mrb[0].mxu0
    %v3837 = vpop.f32.mrb[0].mxu0
    %v3838 = vadd.f32 %v1698, %v3837
    %v3839 = vpop.f32.mrb[0].mxu0
    %3840 = vmatprep.mubr.bf16.mxu0 0
    %3841 = vmatmul.mubr.bf16.gmra.mrb[0].mxu0 %v1852
    %v3842 = vpop.f32.mrb[0].mxu0
    %v3843 = vadd.f32 %v1698, %v3842
    %v3844 = vpop.f32.mrb[0].mxu0
    %v3845 = vpop.f32.mrb[0].mxu0
    %v3846 = vadd.f32 %v1698, %v3845
    %v3847 = vpop.f32.mrb[0].mxu0
    %3848 = vmatprep.mubr.bf16.mxu0 0
    %3849 = vmatmul.mubr.bf16.gmra.mrb[0].mxu0 %v1853
    %v3850 = vpop.f32.mrb[0].mxu0
    %v3851 = vadd.f32 %v1698, %v3850
    %v3852 = vpop.f32.mrb[0].mxu0
    %v3853 = vpop.f32.mrb[0].mxu0
    %v3854 = vadd.f32 %v1698, %v3853
    %v3855 = vpop.f32.mrb[0].mxu0
    %3856 = vmatprep.mubr.bf16.mxu0 0
    %3857 = vmatmul.mubr.bf16.gmra.mrb[0].mxu0 %v1854
    %v3858 = vpop.f32.mrb[0].mxu0
    %v3859 = vadd.f32 %v1698, %v3858
    %v3860 = vpop.f32.mrb[0].mxu0
    %v3861 = vpop.f32.mrb[0].mxu0
    %v3862 = vadd.f32 %v1698, %v3861
    %v3863 = vpop.f32.mrb[0].mxu0
    %3864 = vmatprep.mubr.bf16.mxu0 0
    %3865 = vmatmul.mubr.bf16.gmra.mrb[0].mxu0 %v1855
    %v3866 = vpop.f32.mrb[0].mxu0
    %v3867 = vadd.f32 %v1698, %v3866
    %v3868 = vpop.f32.mrb[0].mxu0
    %v3869 = vpop.f32.mrb[0].mxu0
    %v3870 = vadd.f32 %v1698, %v3869
    %v3871 = vpop.f32.mrb[0].mxu0
    %3872 = vmatprep.mubr.bf16.mxu0 0
    %3873 = vmatmul.mubr.bf16.gmra.mrb[0].mxu0 %v1856
    %v3874 = vpop.f32.mrb[0].mxu0
    %v3875 = vadd.f32 %v1698, %v3874
    %v3876 = vpop.f32.mrb[0].mxu0
    %v3877 = vpop.f32.mrb[0].mxu0
    %v3878 = vadd.f32 %v1698, %v3877
    %v3879 = vpop.f32.mrb[0].mxu0
    %3880 = vmatprep.mubr.bf16.mxu0 0
    %3881 = vmatmul.mubr.bf16.gmra.mrb[0].mxu0 %v1857
    %v3882 = vpop.f32.mrb[0].mxu0
    %v3883 = vadd.f32 %v1698, %v3882
    %v3884 = vpop.f32.mrb[0].mxu0
    %v3885 = vpop.f32.mrb[0].mxu0
    %v3886 = vadd.f32 %v1698, %v3885
    %v3887 = vpop.f32.mrb[0].mxu0
    %3888 = vmatprep.mubr.bf16.mxu0 0
    %3889 = vmatmul.mubr.bf16.gmra.mrb[0].mxu0 %v1858
    %v3890 = vpop.f32.mrb[0].mxu0
    %v3891 = vadd.f32 %v1698, %v3890
    %v3892 = vpop.f32.mrb[0].mxu0
    %v3893 = vpop.f32.mrb[0].mxu0
    %v3894 = vadd.f32 %v1698, %v3893
    %v3895 = vpop.f32.mrb[0].mxu0
    %3896 = vmatprep.mubr.bf16.mxu0 0
    %3897 = vmatmul.mubr.bf16.gmra.mrb[0].mxu0 %v1859
    %v3898 = vpop.f32.mrb[0].mxu0
    %v3899 = vadd.f32 %v1698, %v3898
    %v3900 = vpop.f32.mrb[0].mxu0
    %v3901 = vpop.f32.mrb[0].mxu0
    %v3902 = vadd.f32 %v1698, %v3901
    %v3903 = vpop.f32.mrb[0].mxu0
    %3904 = vmatprep.mubr.bf16.mxu0 0
    %3905 = vmatmul.mubr.bf16.gmra.mrb[0].mxu0 %v1860
    %v3906 = vpop.f32.mrb[0].mxu0
    %v3907 = vadd.f32 %v1698, %v3906
    %v3908 = vpop.f32.mrb[0].mxu0
    %v3909 = vpop.f32.mrb[0].mxu0
    %v3910 = vadd.f32 %v1698, %v3909
    %v3911 = vpop.f32.mrb[0].mxu0
    %3912 = vmatprep.mubr.bf16.mxu0 0
    %3913 = vmatmul.mubr.bf16.gmra.mrb[0].mxu0 %v1861
    %v3914 = vpop.f32.mrb[0].mxu0
    %v3915 = vadd.f32 %v1698, %v3914
    %v3916 = vpop.f32.mrb[0].mxu0
    %v3917 = vpop.f32.mrb[0].mxu0
    %v3918 = vadd.f32 %v1698, %v3917
    %v3919 = vpop.f32.mrb[0].mxu0
    %3920 = vmatprep.mubr.bf16.mxu0 0
    %3921 = vmatmul.mubr.bf16.gmra.mrb[0].mxu0 %v1862
    %v3922 = vpop.f32.mrb[0].mxu0
    %v3923 = vadd.f32 %v1698, %v3922
    %v3924 = vpop.f32.mrb[0].mxu0
    %v3925 = vpop.f32.mrb[0].mxu0
    %v3926 = vadd.f32 %v1698, %v3925
    %v3927 = vpop.f32.mrb[0].mxu0
    %3928 = vmatprep.mubr.bf16.mxu0 0
    %3929 = vmatmul.mubr.bf16.gmra.mrb[0].mxu0 %v1863
    %v3930 = vpop.f32.mrb[0].mxu0
    %v3931 = vadd.f32 %v1698, %v3930
    %v3932 = vpop.f32.mrb[0].mxu0
    %v3933 = vpop.f32.mrb[0].mxu0
    %v3934 = vadd.f32 %v1698, %v3933
    %v3935 = vpop.f32.mrb[0].mxu0
    %3936 = vmatprep.mubr.bf16.mxu0 0
    %3937 = vmatmul.mubr.bf16.gmra.mrb[0].mxu0 %v1864
    %v3938 = vpop.f32.mrb[0].mxu0
    %v3939 = vadd.f32 %v1698, %v3938
    %v3940 = vpop.f32.mrb[0].mxu0
    %v3941 = vpop.f32.mrb[0].mxu0
    %v3942 = vadd.f32 %v1698, %v3941
    %v3943 = vpop.f32.mrb[0].mxu0
    %3944 = vmatprep.mubr.bf16.mxu0 0
    %3945 = vmatmul.mubr.bf16.gmra.mrb[0].mxu0 %v1865
    %v3946 = vpop.f32.mrb[0].mxu0
    %v3947 = vadd.f32 %v1698, %v3946
    %v3948 = vpop.f32.mrb[0].mxu0
    %v3949 = vpop.f32.mrb[0].mxu0
    %v3950 = vadd.f32 %v1698, %v3949
    %v3951 = vpop.f32.mrb[0].mxu0
    %3952 = vmatprep.mubr.bf16.mxu0 0
    %3953 = vmatmul.mubr.bf16.gmra.mrb[0].mxu0 %v1866
    %v3954 = vpop.f32.mrb[0].mxu0
    %v3955 = vadd.f32 %v1698, %v3954
    %v3956 = vpop.f32.mrb[0].mxu0
    %v3957 = vpop.f32.mrb[0].mxu0
    %v3958 = vadd.f32 %v1698, %v3957
    %v3959 = vpop.f32.mrb[0].mxu0
    %3960 = vmatprep.mubr.bf16.mxu0 0
    %3961 = vmatmul.mubr.bf16.gmra.mrb[0].mxu0 %v1867
    %v3962 = vpop.f32.mrb[0].mxu0
    %v3963 = vadd.f32 %v1698, %v3962
    %v3964 = vpop.f32.mrb[0].mxu0
    %v3965 = vpop.f32.mrb[0].mxu0
    %v3966 = vadd.f32 %v1698, %v3965
    %v3967 = vpop.f32.mrb[0].mxu0
    %3968 = vdwg.mxu0
    %v3969 = vmax.f32 %v2303, 0.0
    %v3970 = vmax.f32 %v2305, 0.0
    %v3971 = vmax.f32 %v2656, 0.0
    %v3972 = vmax.f32 %v2658, 0.0
    %v3973 = vmax.f32 %v3009, 0.0
    %v3974 = vmax.f32 %v3011, 0.0
    %v3975 = vmax.f32 %v3362, 0.0
    %v3976 = vmax.f32 %v3364, 0.0
    %v3977 = vmax.f32 %v3715, 0.0
    %v3978 = vmax.f32 %v2307, 0.0
    %v3979 = vmax.f32 %v2309, 0.0
    %v3980 = vmax.f32 %v2660, 0.0
    %v3981 = vmax.f32 %v2662, 0.0
    %v3982 = vmax.f32 %v3013, 0.0
    %v3983 = vmax.f32 %v3015, 0.0
    %v3984 = vmax.f32 %v3366, 0.0
    %v3985 = vmax.f32 %v3368, 0.0
    %v3986 = vmax.f32 %v3718, 0.0
    %v3987 = vmax.f32 %v2313, 0.0
    %v3988 = vmax.f32 %v2315, 0.0
    %v3989 = vmax.f32 %v2666, 0.0
    %v3990 = vmax.f32 %v2668, 0.0
    %v3991 = vmax.f32 %v3019, 0.0
    %v3992 = vmax.f32 %v3021, 0.0
    %v3993 = vmax.f32 %v3372, 0.0
    %v3994 = vmax.f32 %v3374, 0.0
    %v3995 = vmax.f32 %v3723, 0.0
    %v3996 = vmax.f32 %v2317, 0.0
    %v3997 = vmax.f32 %v2319, 0.0
    %v3998 = vmax.f32 %v2670, 0.0
    %v3999 = vmax.f32 %v2672, 0.0
    %v4000 = vmax.f32 %v3023, 0.0
    %v4001 = vmax.f32 %v3025, 0.0
    %v4002 = vmax.f32 %v3376, 0.0
    %v4003 = vmax.f32 %v3378, 0.0
    %v4004 = vmax.f32 %v3726, 0.0
    %v4005 = vmax.f32 %v2323, 0.0
    %v4006 = vmax.f32 %v2325, 0.0
    %v4007 = vmax.f32 %v2676, 0.0
    %v4008 = vmax.f32 %v2678, 0.0
    %v4009 = vmax.f32 %v3029, 0.0
    %v4010 = vmax.f32 %v3031, 0.0
    %v4011 = vmax.f32 %v3382, 0.0
    %v4012 = vmax.f32 %v3384, 0.0
    %v4013 = vmax.f32 %v3731, 0.0
    %v4014 = vmax.f32 %v2327, 0.0
    %v4015 = vmax.f32 %v2329, 0.0
    %v4016 = vmax.f32 %v2680, 0.0
    %v4017 = vmax.f32 %v2682, 0.0
    %v4018 = vmax.f32 %v3033, 0.0
    %v4019 = vmax.f32 %v3035, 0.0
    %v4020 = vmax.f32 %v3386, 0.0
    %v4021 = vmax.f32 %v3388, 0.0
    %v4022 = vmax.f32 %v3734, 0.0
    %v4023 = vmax.f32 %v2333, 0.0
    %v4024 = vmax.f32 %v2335, 0.0
    %v4025 = vmax.f32 %v2686, 0.0
    %v4026 = vmax.f32 %v2688, 0.0
    %v4027 = vmax.f32 %v3039, 0.0
    %v4028 = vmax.f32 %v3041, 0.0
    %v4029 = vmax.f32 %v3392, 0.0
    %v4030 = vmax.f32 %v3394, 0.0
    %v4031 = vmax.f32 %v3739, 0.0
    %v4032 = vmax.f32 %v2337, 0.0
    %v4033 = vmax.f32 %v2339, 0.0
    %v4034 = vmax.f32 %v2690, 0.0
    %v4035 = vmax.f32 %v2692, 0.0
    %v4036 = vmax.f32 %v3043, 0.0
    %v4037 = vmax.f32 %v3045, 0.0
    %v4038 = vmax.f32 %v3396, 0.0
    %v4039 = vmax.f32 %v3398, 0.0
    %v4040 = vmax.f32 %v3742, 0.0
    %v4041 = vmax.f32 %v2343, 0.0
    %v4042 = vmax.f32 %v2345, 0.0
    %v4043 = vmax.f32 %v2696, 0.0
    %v4044 = vmax.f32 %v2698, 0.0
    %v4045 = vmax.f32 %v3049, 0.0
    %v4046 = vmax.f32 %v3051, 0.0
    %v4047 = vmax.f32 %v3402, 0.0
    %v4048 = vmax.f32 %v3404, 0.0
    %v4049 = vmax.f32 %v3747, 0.0
    %v4050 = vmax.f32 %v2347, 0.0
    %v4051 = vmax.f32 %v2349, 0.0
    %v4052 = vmax.f32 %v2700, 0.0
    %v4053 = vmax.f32 %v2702, 0.0
    %v4054 = vmax.f32 %v3053, 0.0
    %v4055 = vmax.f32 %v3055, 0.0
    %v4056 = vmax.f32 %v3406, 0.0
    %v4057 = vmax.f32 %v3408, 0.0
    %v4058 = vmax.f32 %v3750, 0.0
    %v4059 = vmax.f32 %v2353, 0.0
    %v4060 = vmax.f32 %v2355, 0.0
    %v4061 = vmax.f32 %v2706, 0.0
    %v4062 = vmax.f32 %v2708, 0.0
    %v4063 = vmax.f32 %v3059, 0.0
    %v4064 = vmax.f32 %v3061, 0.0
    %v4065 = vmax.f32 %v3412, 0.0
    %v4066 = vmax.f32 %v3414, 0.0
    %v4067 = vmax.f32 %v3755, 0.0
    %v4068 = vmax.f32 %v2357, 0.0
    %v4069 = vmax.f32 %v2359, 0.0
    %v4070 = vmax.f32 %v2710, 0.0
    %v4071 = vmax.f32 %v2712, 0.0
    %v4072 = vmax.f32 %v3063, 0.0
    %v4073 = vmax.f32 %v3065, 0.0
    %v4074 = vmax.f32 %v3416, 0.0
    %v4075 = vmax.f32 %v3418, 0.0
    %v4076 = vmax.f32 %v3758, 0.0
    %v4077 = vmax.f32 %v2363, 0.0
    %v4078 = vmax.f32 %v2365, 0.0
    %v4079 = vmax.f32 %v2716, 0.0
    %v4080 = vmax.f32 %v2718, 0.0
    %v4081 = vmax.f32 %v3069, 0.0
    %v4082 = vmax.f32 %v3071, 0.0
    %v4083 = vmax.f32 %v3422, 0.0
    %v4084 = vmax.f32 %v3424, 0.0
    %v4085 = vmax.f32 %v3763, 0.0
    %v4086 = vmax.f32 %v2367, 0.0
    %v4087 = vmax.f32 %v2369, 0.0
    %v4088 = vmax.f32 %v2720, 0.0
    %v4089 = vmax.f32 %v2722, 0.0
    %v4090 = vmax.f32 %v3073, 0.0
    %v4091 = vmax.f32 %v3075, 0.0
    %v4092 = vmax.f32 %v3426, 0.0
    %v4093 = vmax.f32 %v3428, 0.0
    %v4094 = vmax.f32 %v3766, 0.0
    %v4095 = vmax.f32 %v2373, 0.0
    %v4096 = vmax.f32 %v2375, 0.0
    %v4097 = vmax.f32 %v2726, 0.0
    %v4098 = vmax.f32 %v2728, 0.0
    %v4099 = vmax.f32 %v3079, 0.0
    %v4100 = vmax.f32 %v3081, 0.0
    %v4101 = vmax.f32 %v3432, 0.0
    %v4102 = vmax.f32 %v3434, 0.0
    %v4103 = vmax.f32 %v3771, 0.0
    %v4104 = vmax.f32 %v2377, 0.0
    %v4105 = vmax.f32 %v2379, 0.0
    %v4106 = vmax.f32 %v2730, 0.0
    %v4107 = vmax.f32 %v2732, 0.0
    %v4108 = vmax.f32 %v3083, 0.0
    %v4109 = vmax.f32 %v3085, 0.0
    %v4110 = vmax.f32 %v3436, 0.0
    %v4111 = vmax.f32 %v3438, 0.0
    %v4112 = vmax.f32 %v3774, 0.0
    %v4113 = vmax.f32 %v2383, 0.0
    %v4114 = vmax.f32 %v2385, 0.0
    %v4115 = vmax.f32 %v2736, 0.0
    %v4116 = vmax.f32 %v2738, 0.0
    %v4117 = vmax.f32 %v3089, 0.0
    %v4118 = vmax.f32 %v3091, 0.0
    %v4119 = vmax.f32 %v3442, 0.0
    %v4120 = vmax.f32 %v3444, 0.0
    %v4121 = vmax.f32 %v3779, 0.0
    %v4122 = vmax.f32 %v2387, 0.0
    %v4123 = vmax.f32 %v2389, 0.0
    %v4124 = vmax.f32 %v2740, 0.0
    %v4125 = vmax.f32 %v2742, 0.0
    %v4126 = vmax.f32 %v3093, 0.0
    %v4127 = vmax.f32 %v3095, 0.0
    %v4128 = vmax.f32 %v3446, 0.0
    %v4129 = vmax.f32 %v3448, 0.0
    %v4130 = vmax.f32 %v3782, 0.0
    %v4131 = vmax.f32 %v2393, 0.0
    %v4132 = vmax.f32 %v2395, 0.0
    %v4133 = vmax.f32 %v2746, 0.0
    %v4134 = vmax.f32 %v2748, 0.0
    %v4135 = vmax.f32 %v3099, 0.0
    %v4136 = vmax.f32 %v3101, 0.0
    %v4137 = vmax.f32 %v3452, 0.0
    %v4138 = vmax.f32 %v3454, 0.0
    %v4139 = vmax.f32 %v3787, 0.0
    %v4140 = vmax.f32 %v2397, 0.0
    %v4141 = vmax.f32 %v2399, 0.0
    %v4142 = vmax.f32 %v2750, 0.0
    %v4143 = vmax.f32 %v2752, 0.0
    %v4144 = vmax.f32 %v3103, 0.0
    %v4145 = vmax.f32 %v3105, 0.0
    %v4146 = vmax.f32 %v3456, 0.0
    %v4147 = vmax.f32 %v3458, 0.0
    %v4148 = vmax.f32 %v3790, 0.0
    %v4149 = vmax.f32 %v2403, 0.0
    %v4150 = vmax.f32 %v2405, 0.0
    %v4151 = vmax.f32 %v2756, 0.0
    %v4152 = vmax.f32 %v2758, 0.0
    %v4153 = vmax.f32 %v3109, 0.0
    %v4154 = vmax.f32 %v3111, 0.0
    %v4155 = vmax.f32 %v3462, 0.0
    %v4156 = vmax.f32 %v3464, 0.0
    %v4157 = vmax.f32 %v3795, 0.0
    %v4158 = vmax.f32 %v2407, 0.0
    %v4159 = vmax.f32 %v2409, 0.0
    %v4160 = vmax.f32 %v2760, 0.0
    %v4161 = vmax.f32 %v2762, 0.0
    %v4162 = vmax.f32 %v3113, 0.0
    %v4163 = vmax.f32 %v3115, 0.0
    %v4164 = vmax.f32 %v3466, 0.0
    %v4165 = vmax.f32 %v3468, 0.0
    %v4166 = vmax.f32 %v3798, 0.0
    %v4167 = vmax.f32 %v2413, 0.0
    %v4168 = vmax.f32 %v2415, 0.0
    %v4169 = vmax.f32 %v2766, 0.0
    %v4170 = vmax.f32 %v2768, 0.0
    %v4171 = vmax.f32 %v3119, 0.0
    %v4172 = vmax.f32 %v3121, 0.0
    %v4173 = vmax.f32 %v3472, 0.0
    %v4174 = vmax.f32 %v3474, 0.0
    %v4175 = vmax.f32 %v3803, 0.0
    %v4176 = vmax.f32 %v2417, 0.0
    %v4177 = vmax.f32 %v2419, 0.0
    %v4178 = vmax.f32 %v2770, 0.0
    %v4179 = vmax.f32 %v2772, 0.0
    %v4180 = vmax.f32 %v3123, 0.0
    %v4181 = vmax.f32 %v3125, 0.0
    %v4182 = vmax.f32 %v3476, 0.0
    %v4183 = vmax.f32 %v3478, 0.0
    %v4184 = vmax.f32 %v3806, 0.0
    %v4185 = vmax.f32 %v2423, 0.0
    %v4186 = vmax.f32 %v2425, 0.0
    %v4187 = vmax.f32 %v2776, 0.0
    %v4188 = vmax.f32 %v2778, 0.0
    %v4189 = vmax.f32 %v3129, 0.0
    %v4190 = vmax.f32 %v3131, 0.0
    %v4191 = vmax.f32 %v3482, 0.0
    %v4192 = vmax.f32 %v3484, 0.0
    %v4193 = vmax.f32 %v3811, 0.0
    %v4194 = vmax.f32 %v2427, 0.0
    %v4195 = vmax.f32 %v2429, 0.0
    %v4196 = vmax.f32 %v2780, 0.0
    %v4197 = vmax.f32 %v2782, 0.0
    %v4198 = vmax.f32 %v3133, 0.0
    %v4199 = vmax.f32 %v3135, 0.0
    %v4200 = vmax.f32 %v3486, 0.0
    %v4201 = vmax.f32 %v3488, 0.0
    %v4202 = vmax.f32 %v3814, 0.0
    %v4203 = vmax.f32 %v2433, 0.0
    %v4204 = vmax.f32 %v2435, 0.0
    %v4205 = vmax.f32 %v2786, 0.0
    %v4206 = vmax.f32 %v2788, 0.0
    %v4207 = vmax.f32 %v3139, 0.0
    %v4208 = vmax.f32 %v3141, 0.0
    %v4209 = vmax.f32 %v3492, 0.0
    %v4210 = vmax.f32 %v3494, 0.0
    %v4211 = vmax.f32 %v3819, 0.0
    %v4212 = vmax.f32 %v2437, 0.0
    %v4213 = vmax.f32 %v2439, 0.0
    %v4214 = vmax.f32 %v2790, 0.0
    %v4215 = vmax.f32 %v2792, 0.0
    %v4216 = vmax.f32 %v3143, 0.0
    %v4217 = vmax.f32 %v3145, 0.0
    %v4218 = vmax.f32 %v3496, 0.0
    %v4219 = vmax.f32 %v3498, 0.0
    %v4220 = vmax.f32 %v3822, 0.0
    %v4221 = vmax.f32 %v2443, 0.0
    %v4222 = vmax.f32 %v2445, 0.0
    %v4223 = vmax.f32 %v2796, 0.0
    %v4224 = vmax.f32 %v2798, 0.0
    %v4225 = vmax.f32 %v3149, 0.0
    %v4226 = vmax.f32 %v3151, 0.0
    %v4227 = vmax.f32 %v3502, 0.0
    %v4228 = vmax.f32 %v3504, 0.0
    %v4229 = vmax.f32 %v3827, 0.0
    %v4230 = vmax.f32 %v2447, 0.0
    %v4231 = vmax.f32 %v2449, 0.0
    %v4232 = vmax.f32 %v2800, 0.0
    %v4233 = vmax.f32 %v2802, 0.0
    %v4234 = vmax.f32 %v3153, 0.0
    %v4235 = vmax.f32 %v3155, 0.0
    %v4236 = vmax.f32 %v3506, 0.0
    %v4237 = vmax.f32 %v3508, 0.0
    %v4238 = vmax.f32 %v3830, 0.0
    %v4239 = vmax.f32 %v2453, 0.0
    %v4240 = vmax.f32 %v2455, 0.0
    %v4241 = vmax.f32 %v2806, 0.0
    %v4242 = vmax.f32 %v2808, 0.0
    %v4243 = vmax.f32 %v3159, 0.0
    %v4244 = vmax.f32 %v3161, 0.0
    %v4245 = vmax.f32 %v3512, 0.0
    %v4246 = vmax.f32 %v3514, 0.0
    %v4247 = vmax.f32 %v3835, 0.0
    %v4248 = vmax.f32 %v2457, 0.0
    %v4249 = vmax.f32 %v2459, 0.0
    %v4250 = vmax.f32 %v2810, 0.0
    %v4251 = vmax.f32 %v2812, 0.0
    %v4252 = vmax.f32 %v3163, 0.0
    %v4253 = vmax.f32 %v3165, 0.0
    %v4254 = vmax.f32 %v3516, 0.0
    %v4255 = vmax.f32 %v3518, 0.0
    %v4256 = vmax.f32 %v3838, 0.0
    %v4257 = vmax.f32 %v2463, 0.0
    %v4258 = vmax.f32 %v2465, 0.0
    %v4259 = vmax.f32 %v2816, 0.0
    %v4260 = vmax.f32 %v2818, 0.0
    %v4261 = vmax.f32 %v3169, 0.0
    %v4262 = vmax.f32 %v3171, 0.0
    %v4263 = vmax.f32 %v3522, 0.0
    %v4264 = vmax.f32 %v3524, 0.0
    %v4265 = vmax.f32 %v3843, 0.0
    %v4266 = vmax.f32 %v2467, 0.0
    %v4267 = vmax.f32 %v2469, 0.0
    %v4268 = vmax.f32 %v2820, 0.0
    %v4269 = vmax.f32 %v2822, 0.0
    %v4270 = vmax.f32 %v3173, 0.0
    %v4271 = vmax.f32 %v3175, 0.0
    %v4272 = vmax.f32 %v3526, 0.0
    %v4273 = vmax.f32 %v3528, 0.0
    %v4274 = vmax.f32 %v3846, 0.0
    %v4275 = vmax.f32 %v2473, 0.0
    %v4276 = vmax.f32 %v2475, 0.0
    %v4277 = vmax.f32 %v2826, 0.0
    %v4278 = vmax.f32 %v2828, 0.0
    %v4279 = vmax.f32 %v3179, 0.0
    %v4280 = vmax.f32 %v3181, 0.0
    %v4281 = vmax.f32 %v3532, 0.0
    %v4282 = vmax.f32 %v3534, 0.0
    %v4283 = vmax.f32 %v3851, 0.0
    %v4284 = vmax.f32 %v2477, 0.0
    %v4285 = vmax.f32 %v2479, 0.0
    %v4286 = vmax.f32 %v2830, 0.0
    %v4287 = vmax.f32 %v2832, 0.0
    %v4288 = vmax.f32 %v3183, 0.0
    %v4289 = vmax.f32 %v3185, 0.0
    %v4290 = vmax.f32 %v3536, 0.0
    %v4291 = vmax.f32 %v3538, 0.0
    %v4292 = vmax.f32 %v3854, 0.0
    %v4293 = vmax.f32 %v2483, 0.0
    %v4294 = vmax.f32 %v2485, 0.0
    %v4295 = vmax.f32 %v2836, 0.0
    %v4296 = vmax.f32 %v2838, 0.0
    %v4297 = vmax.f32 %v3189, 0.0
    %v4298 = vmax.f32 %v3191, 0.0
    %v4299 = vmax.f32 %v3542, 0.0
    %v4300 = vmax.f32 %v3544, 0.0
    %v4301 = vmax.f32 %v3859, 0.0
    %v4302 = vmax.f32 %v2487, 0.0
    %v4303 = vmax.f32 %v2489, 0.0
    %v4304 = vmax.f32 %v2840, 0.0
    %v4305 = vmax.f32 %v2842, 0.0
    %v4306 = vmax.f32 %v3193, 0.0
    %v4307 = vmax.f32 %v3195, 0.0
    %v4308 = vmax.f32 %v3546, 0.0
    %v4309 = vmax.f32 %v3548, 0.0
    %v4310 = vmax.f32 %v3862, 0.0
    %v4311 = vmax.f32 %v2493, 0.0
    %v4312 = vmax.f32 %v2495, 0.0
    %v4313 = vmax.f32 %v2846, 0.0
    %v4314 = vmax.f32 %v2848, 0.0
    %v4315 = vmax.f32 %v3199, 0.0
    %v4316 = vmax.f32 %v3201, 0.0
    %v4317 = vmax.f32 %v3552, 0.0
    %v4318 = vmax.f32 %v3554, 0.0
    %v4319 = vmax.f32 %v3867, 0.0
    %v4320 = vmax.f32 %v2497, 0.0
    %v4321 = vmax.f32 %v2499, 0.0
    %v4322 = vmax.f32 %v2850, 0.0
    %v4323 = vmax.f32 %v2852, 0.0
    %v4324 = vmax.f32 %v3203, 0.0
    %v4325 = vmax.f32 %v3205, 0.0
    %v4326 = vmax.f32 %v3556, 0.0
    %v4327 = vmax.f32 %v3558, 0.0
    %v4328 = vmax.f32 %v3870, 0.0
    %v4329 = vmax.f32 %v2503, 0.0
    %v4330 = vmax.f32 %v2505, 0.0
    %v4331 = vmax.f32 %v2856, 0.0
    %v4332 = vmax.f32 %v2858, 0.0
    %v4333 = vmax.f32 %v3209, 0.0
    %v4334 = vmax.f32 %v3211, 0.0
    %v4335 = vmax.f32 %v3562, 0.0
    %v4336 = vmax.f32 %v3564, 0.0
    %v4337 = vmax.f32 %v3875, 0.0
    %v4338 = vmax.f32 %v2507, 0.0
    %v4339 = vmax.f32 %v2509, 0.0
    %v4340 = vmax.f32 %v2860, 0.0
    %v4341 = vmax.f32 %v2862, 0.0
    %v4342 = vmax.f32 %v3213, 0.0
    %v4343 = vmax.f32 %v3215, 0.0
    %v4344 = vmax.f32 %v3566, 0.0
    %v4345 = vmax.f32 %v3568, 0.0
    %v4346 = vmax.f32 %v3878, 0.0
    %v4347 = vmax.f32 %v2513, 0.0
    %v4348 = vmax.f32 %v2515, 0.0
    %v4349 = vmax.f32 %v2866, 0.0
    %v4350 = vmax.f32 %v2868, 0.0
    %v4351 = vmax.f32 %v3219, 0.0
    %v4352 = vmax.f32 %v3221, 0.0
    %v4353 = vmax.f32 %v3572, 0.0
    %v4354 = vmax.f32 %v3574, 0.0
    %v4355 = vmax.f32 %v3883, 0.0
    %v4356 = vmax.f32 %v2517, 0.0
    %v4357 = vmax.f32 %v2519, 0.0
    %v4358 = vmax.f32 %v2870, 0.0
    %v4359 = vmax.f32 %v2872, 0.0
    %v4360 = vmax.f32 %v3223, 0.0
    %v4361 = vmax.f32 %v3225, 0.0
    %v4362 = vmax.f32 %v3576, 0.0
    %v4363 = vmax.f32 %v3578, 0.0
    %v4364 = vmax.f32 %v3886, 0.0
    %v4365 = vmax.f32 %v2523, 0.0
    %v4366 = vmax.f32 %v2525, 0.0
    %v4367 = vmax.f32 %v2876, 0.0
    %v4368 = vmax.f32 %v2878, 0.0
    %v4369 = vmax.f32 %v3229, 0.0
    %v4370 = vmax.f32 %v3231, 0.0
    %v4371 = vmax.f32 %v3582, 0.0
    %v4372 = vmax.f32 %v3584, 0.0
    %v4373 = vmax.f32 %v3891, 0.0
    %v4374 = vmax.f32 %v2527, 0.0
    %v4375 = vmax.f32 %v2529, 0.0
    %v4376 = vmax.f32 %v2880, 0.0
    %v4377 = vmax.f32 %v2882, 0.0
    %v4378 = vmax.f32 %v3233, 0.0
    %v4379 = vmax.f32 %v3235, 0.0
    %v4380 = vmax.f32 %v3586, 0.0
    %v4381 = vmax.f32 %v3588, 0.0
    %v4382 = vmax.f32 %v3894, 0.0
    %v4383 = vmax.f32 %v2533, 0.0
    %v4384 = vmax.f32 %v2535, 0.0
    %v4385 = vmax.f32 %v2886, 0.0
    %v4386 = vmax.f32 %v2888, 0.0
    %v4387 = vmax.f32 %v3239, 0.0
    %v4388 = vmax.f32 %v3241, 0.0
    %v4389 = vmax.f32 %v3592, 0.0
    %v4390 = vmax.f32 %v3594, 0.0
    %v4391 = vmax.f32 %v3899, 0.0
    %v4392 = vmax.f32 %v2537, 0.0
    %v4393 = vmax.f32 %v2539, 0.0
    %v4394 = vmax.f32 %v2890, 0.0
    %v4395 = vmax.f32 %v2892, 0.0
    %v4396 = vmax.f32 %v3243, 0.0
    %v4397 = vmax.f32 %v3245, 0.0
    %v4398 = vmax.f32 %v3596, 0.0
    %v4399 = vmax.f32 %v3598, 0.0
    %v4400 = vmax.f32 %v3902, 0.0
    %v4401 = vmax.f32 %v2543, 0.0
    %v4402 = vmax.f32 %v2545, 0.0
    %v4403 = vmax.f32 %v2896, 0.0
    %v4404 = vmax.f32 %v2898, 0.0
    %v4405 = vmax.f32 %v3249, 0.0
    %v4406 = vmax.f32 %v3251, 0.0
    %v4407 = vmax.f32 %v3602, 0.0
    %v4408 = vmax.f32 %v3604, 0.0
    %v4409 = vmax.f32 %v3907, 0.0
    %v4410 = vmax.f32 %v2547, 0.0
    %v4411 = vmax.f32 %v2549, 0.0
    %v4412 = vmax.f32 %v2900, 0.0
    %v4413 = vmax.f32 %v2902, 0.0
    %v4414 = vmax.f32 %v3253, 0.0
    %v4415 = vmax.f32 %v3255, 0.0
    %v4416 = vmax.f32 %v3606, 0.0
    %v4417 = vmax.f32 %v3608, 0.0
    %v4418 = vmax.f32 %v3910, 0.0
    %v4419 = vmax.f32 %v2553, 0.0
    %v4420 = vmax.f32 %v2555, 0.0
    %v4421 = vmax.f32 %v2906, 0.0
    %v4422 = vmax.f32 %v2908, 0.0
    %v4423 = vmax.f32 %v3259, 0.0
    %v4424 = vmax.f32 %v3261, 0.0
    %v4425 = vmax.f32 %v3612, 0.0
    %v4426 = vmax.f32 %v3614, 0.0
    %v4427 = vmax.f32 %v3915, 0.0
    %v4428 = vmax.f32 %v2557, 0.0
    %v4429 = vmax.f32 %v2559, 0.0
    %v4430 = vmax.f32 %v2910, 0.0
    %v4431 = vmax.f32 %v2912, 0.0
    %v4432 = vmax.f32 %v3263, 0.0
    %v4433 = vmax.f32 %v3265, 0.0
    %v4434 = vmax.f32 %v3616, 0.0
    %v4435 = vmax.f32 %v3618, 0.0
    %v4436 = vmax.f32 %v3918, 0.0
    %v4437 = vmax.f32 %v2563, 0.0
    %v4438 = vmax.f32 %v2565, 0.0
    %v4439 = vmax.f32 %v2916, 0.0
    %v4440 = vmax.f32 %v2918, 0.0
    %v4441 = vmax.f32 %v3269, 0.0
    %v4442 = vmax.f32 %v3271, 0.0
    %v4443 = vmax.f32 %v3622, 0.0
    %v4444 = vmax.f32 %v3624, 0.0
    %v4445 = vmax.f32 %v3923, 0.0
    %v4446 = vmax.f32 %v2567, 0.0
    %v4447 = vmax.f32 %v2569, 0.0
    %v4448 = vmax.f32 %v2920, 0.0
    %v4449 = vmax.f32 %v2922, 0.0
    %v4450 = vmax.f32 %v3273, 0.0
    %v4451 = vmax.f32 %v3275, 0.0
    %v4452 = vmax.f32 %v3626, 0.0
    %v4453 = vmax.f32 %v3628, 0.0
    %v4454 = vmax.f32 %v3926, 0.0
    %v4455 = vmax.f32 %v2573, 0.0
    %v4456 = vmax.f32 %v2575, 0.0
    %v4457 = vmax.f32 %v2926, 0.0
    %v4458 = vmax.f32 %v2928, 0.0
    %v4459 = vmax.f32 %v3279, 0.0
    %v4460 = vmax.f32 %v3281, 0.0
    %v4461 = vmax.f32 %v3632, 0.0
    %v4462 = vmax.f32 %v3634, 0.0
    %v4463 = vmax.f32 %v3931, 0.0
    %v4464 = vmax.f32 %v2577, 0.0
    %v4465 = vmax.f32 %v2579, 0.0
    %v4466 = vmax.f32 %v2930, 0.0
    %v4467 = vmax.f32 %v2932, 0.0
    %v4468 = vmax.f32 %v3283, 0.0
    %v4469 = vmax.f32 %v3285, 0.0
    %v4470 = vmax.f32 %v3636, 0.0
    %v4471 = vmax.f32 %v3638, 0.0
    %v4472 = vmax.f32 %v3934, 0.0
    %v4473 = vmax.f32 %v2583, 0.0
    %v4474 = vmax.f32 %v2585, 0.0
    %v4475 = vmax.f32 %v2936, 0.0
    %v4476 = vmax.f32 %v2938, 0.0
    %v4477 = vmax.f32 %v3289, 0.0
    %v4478 = vmax.f32 %v3291, 0.0
    %v4479 = vmax.f32 %v3642, 0.0
    %v4480 = vmax.f32 %v3644, 0.0
    %v4481 = vmax.f32 %v3939, 0.0
    %v4482 = vmax.f32 %v2587, 0.0
    %v4483 = vmax.f32 %v2589, 0.0
    %v4484 = vmax.f32 %v2940, 0.0
    %v4485 = vmax.f32 %v2942, 0.0
    %v4486 = vmax.f32 %v3293, 0.0
    %v4487 = vmax.f32 %v3295, 0.0
    %v4488 = vmax.f32 %v3646, 0.0
    %v4489 = vmax.f32 %v3648, 0.0
    %v4490 = vmax.f32 %v3942, 0.0
    %v4491 = vmax.f32 %v2593, 0.0
    %v4492 = vmax.f32 %v2595, 0.0
    %v4493 = vmax.f32 %v2946, 0.0
    %v4494 = vmax.f32 %v2948, 0.0
    %v4495 = vmax.f32 %v3299, 0.0
    %v4496 = vmax.f32 %v3301, 0.0
    %v4497 = vmax.f32 %v3652, 0.0
    %v4498 = vmax.f32 %v3654, 0.0
    %v4499 = vmax.f32 %v3947, 0.0
    %v4500 = vmax.f32 %v2597, 0.0
    %v4501 = vmax.f32 %v2599, 0.0
    %v4502 = vmax.f32 %v2950, 0.0
    %v4503 = vmax.f32 %v2952, 0.0
    %v4504 = vmax.f32 %v3303, 0.0
    %v4505 = vmax.f32 %v3305, 0.0
    %v4506 = vmax.f32 %v3656, 0.0
    %v4507 = vmax.f32 %v3658, 0.0
    %v4508 = vmax.f32 %v3950, 0.0
    %v4509 = vmax.f32 %v2603, 0.0
    %v4510 = vmax.f32 %v2605, 0.0
    %v4511 = vmax.f32 %v2956, 0.0
    %v4512 = vmax.f32 %v2958, 0.0
    %v4513 = vmax.f32 %v3309, 0.0
    %v4514 = vmax.f32 %v3311, 0.0
    %v4515 = vmax.f32 %v3662, 0.0
    %v4516 = vmax.f32 %v3664, 0.0
    %v4517 = vmax.f32 %v3955, 0.0
    %v4518 = vmax.f32 %v2607, 0.0
    %v4519 = vmax.f32 %v2609, 0.0
    %v4520 = vmax.f32 %v2960, 0.0
    %v4521 = vmax.f32 %v2962, 0.0
    %v4522 = vmax.f32 %v3313, 0.0
    %v4523 = vmax.f32 %v3315, 0.0
    %v4524 = vmax.f32 %v3666, 0.0
    %v4525 = vmax.f32 %v3668, 0.0
    %v4526 = vmax.f32 %v3958, 0.0
    %v4527 = vmax.f32 %v2613, 0.0
    %v4528 = vmax.f32 %v2615, 0.0
    %v4529 = vmax.f32 %v2966, 0.0
    %v4530 = vmax.f32 %v2968, 0.0
    %v4531 = vmax.f32 %v3319, 0.0
    %v4532 = vmax.f32 %v3321, 0.0
    %v4533 = vmax.f32 %v3672, 0.0
    %v4534 = vmax.f32 %v3674, 0.0
    %v4535 = vmax.f32 %v3963, 0.0
    %v4536 = vmax.f32 %v2617, 0.0
    %v4537 = vmax.f32 %v2619, 0.0
    %v4538 = vmax.f32 %v2970, 0.0
    %v4539 = vmax.f32 %v2972, 0.0
    %v4540 = vmax.f32 %v3323, 0.0
    %v4541 = vmax.f32 %v3325, 0.0
    %v4542 = vmax.f32 %v3676, 0.0
    %v4543 = vmax.f32 %v3678, 0.0
    %v4544 = vmax.f32 %v3966, 0.0
    %v4545 = vpack.c.bf16 %v3978, %v3969
    %v4546 = vpack.c.bf16 %v3979, %v3970
    %v4547 = vpack.c.bf16 %v3980, %v3971
    %v4548 = vpack.c.bf16 %v3981, %v3972
    %v4549 = vpack.c.bf16 %v3982, %v3973
    %v4550 = vpack.c.bf16 %v3983, %v3974
    %v4551 = vpack.c.bf16 %v3984, %v3975
    %v4552 = vpack.c.bf16 %v3985, %v3976
    %v4553 = vpack.c.bf16 %v3986, %v3977
    %v4554 = vpack.c.bf16 %v3996, %v3987
    %v4555 = vpack.c.bf16 %v3997, %v3988
    %v4556 = vpack.c.bf16 %v3998, %v3989
    %v4557 = vpack.c.bf16 %v3999, %v3990
    %v4558 = vpack.c.bf16 %v4000, %v3991
    %v4559 = vpack.c.bf16 %v4001, %v3992
    %v4560 = vpack.c.bf16 %v4002, %v3993
    %v4561 = vpack.c.bf16 %v4003, %v3994
    %v4562 = vpack.c.bf16 %v4004, %v3995
    %v4563 = vpack.c.bf16 %v4014, %v4005
    %v4564 = vpack.c.bf16 %v4015, %v4006
    %v4565 = vpack.c.bf16 %v4016, %v4007
    %v4566 = vpack.c.bf16 %v4017, %v4008
    %v4567 = vpack.c.bf16 %v4018, %v4009
    %v4568 = vpack.c.bf16 %v4019, %v4010
    %v4569 = vpack.c.bf16 %v4020, %v4011
    %v4570 = vpack.c.bf16 %v4021, %v4012
    %v4571 = vpack.c.bf16 %v4022, %v4013
    %v4572 = vpack.c.bf16 %v4032, %v4023
    %v4573 = vpack.c.bf16 %v4033, %v4024
    %v4574 = vpack.c.bf16 %v4034, %v4025
    %v4575 = vpack.c.bf16 %v4035, %v4026
    %v4576 = vpack.c.bf16 %v4036, %v4027
    %v4577 = vpack.c.bf16 %v4037, %v4028
    %v4578 = vpack.c.bf16 %v4038, %v4029
    %v4579 = vpack.c.bf16 %v4039, %v4030
    %v4580 = vpack.c.bf16 %v4040, %v4031
    %v4581 = vpack.c.bf16 %v4050, %v4041
    %v4582 = vpack.c.bf16 %v4051, %v4042
    %v4583 = vpack.c.bf16 %v4052, %v4043
    %v4584 = vpack.c.bf16 %v4053, %v4044
    %v4585 = vpack.c.bf16 %v4054, %v4045
    %v4586 = vpack.c.bf16 %v4055, %v4046
    %v4587 = vpack.c.bf16 %v4056, %v4047
    %v4588 = vpack.c.bf16 %v4057, %v4048
    %v4589 = vpack.c.bf16 %v4058, %v4049
    %v4590 = vpack.c.bf16 %v4068, %v4059
    %v4591 = vpack.c.bf16 %v4069, %v4060
    %v4592 = vpack.c.bf16 %v4070, %v4061
    %v4593 = vpack.c.bf16 %v4071, %v4062
    %v4594 = vpack.c.bf16 %v4072, %v4063
    %v4595 = vpack.c.bf16 %v4073, %v4064
    %v4596 = vpack.c.bf16 %v4074, %v4065
    %v4597 = vpack.c.bf16 %v4075, %v4066
    %v4598 = vpack.c.bf16 %v4076, %v4067
    %v4599 = vpack.c.bf16 %v4086, %v4077
    %v4600 = vpack.c.bf16 %v4087, %v4078
    %v4601 = vpack.c.bf16 %v4088, %v4079
    %v4602 = vpack.c.bf16 %v4089, %v4080
    %v4603 = vpack.c.bf16 %v4090, %v4081
    %v4604 = vpack.c.bf16 %v4091, %v4082
    %v4605 = vpack.c.bf16 %v4092, %v4083
    %v4606 = vpack.c.bf16 %v4093, %v4084
    %v4607 = vpack.c.bf16 %v4094, %v4085
    %v4608 = vpack.c.bf16 %v4104, %v4095
    %v4609 = vpack.c.bf16 %v4105, %v4096
    %v4610 = vpack.c.bf16 %v4106, %v4097
    %v4611 = vpack.c.bf16 %v4107, %v4098
    %v4612 = vpack.c.bf16 %v4108, %v4099
    %v4613 = vpack.c.bf16 %v4109, %v4100
    %v4614 = vpack.c.bf16 %v4110, %v4101
    %v4615 = vpack.c.bf16 %v4111, %v4102
    %v4616 = vpack.c.bf16 %v4112, %v4103
    %v4617 = vpack.c.bf16 %v4122, %v4113
    %v4618 = vpack.c.bf16 %v4123, %v4114
    %v4619 = vpack.c.bf16 %v4124, %v4115
    %v4620 = vpack.c.bf16 %v4125, %v4116
    %v4621 = vpack.c.bf16 %v4126, %v4117
    %v4622 = vpack.c.bf16 %v4127, %v4118
    %v4623 = vpack.c.bf16 %v4128, %v4119
    %v4624 = vpack.c.bf16 %v4129, %v4120
    %v4625 = vpack.c.bf16 %v4130, %v4121
    %v4626 = vpack.c.bf16 %v4140, %v4131
    %v4627 = vpack.c.bf16 %v4141, %v4132
    %v4628 = vpack.c.bf16 %v4142, %v4133
    %v4629 = vpack.c.bf16 %v4143, %v4134
    %v4630 = vpack.c.bf16 %v4144, %v4135
    %v4631 = vpack.c.bf16 %v4145, %v4136
    %v4632 = vpack.c.bf16 %v4146, %v4137
    %v4633 = vpack.c.bf16 %v4147, %v4138
    %v4634 = vpack.c.bf16 %v4148, %v4139
    %v4635 = vpack.c.bf16 %v4158, %v4149
    %v4636 = vpack.c.bf16 %v4159, %v4150
    %v4637 = vpack.c.bf16 %v4160, %v4151
    %v4638 = vpack.c.bf16 %v4161, %v4152
    %v4639 = vpack.c.bf16 %v4162, %v4153
    %v4640 = vpack.c.bf16 %v4163, %v4154
    %v4641 = vpack.c.bf16 %v4164, %v4155
    %v4642 = vpack.c.bf16 %v4165, %v4156
    %v4643 = vpack.c.bf16 %v4166, %v4157
    %v4644 = vpack.c.bf16 %v4176, %v4167
    %v4645 = vpack.c.bf16 %v4177, %v4168
    %v4646 = vpack.c.bf16 %v4178, %v4169
    %v4647 = vpack.c.bf16 %v4179, %v4170
    %v4648 = vpack.c.bf16 %v4180, %v4171
    %v4649 = vpack.c.bf16 %v4181, %v4172
    %v4650 = vpack.c.bf16 %v4182, %v4173
    %v4651 = vpack.c.bf16 %v4183, %v4174
    %v4652 = vpack.c.bf16 %v4184, %v4175
    %v4653 = vpack.c.bf16 %v4194, %v4185
    %v4654 = vpack.c.bf16 %v4195, %v4186
    %v4655 = vpack.c.bf16 %v4196, %v4187
    %v4656 = vpack.c.bf16 %v4197, %v4188
    %v4657 = vpack.c.bf16 %v4198, %v4189
    %v4658 = vpack.c.bf16 %v4199, %v4190
    %v4659 = vpack.c.bf16 %v4200, %v4191
    %v4660 = vpack.c.bf16 %v4201, %v4192
    %v4661 = vpack.c.bf16 %v4202, %v4193
    %v4662 = vpack.c.bf16 %v4212, %v4203
    %v4663 = vpack.c.bf16 %v4213, %v4204
    %v4664 = vpack.c.bf16 %v4214, %v4205
    %v4665 = vpack.c.bf16 %v4215, %v4206
    %v4666 = vpack.c.bf16 %v4216, %v4207
    %v4667 = vpack.c.bf16 %v4217, %v4208
    %v4668 = vpack.c.bf16 %v4218, %v4209
    %v4669 = vpack.c.bf16 %v4219, %v4210
    %v4670 = vpack.c.bf16 %v4220, %v4211
    %v4671 = vpack.c.bf16 %v4230, %v4221
    %v4672 = vpack.c.bf16 %v4231, %v4222
    %v4673 = vpack.c.bf16 %v4232, %v4223
    %v4674 = vpack.c.bf16 %v4233, %v4224
    %v4675 = vpack.c.bf16 %v4234, %v4225
    %v4676 = vpack.c.bf16 %v4235, %v4226
    %v4677 = vpack.c.bf16 %v4236, %v4227
    %v4678 = vpack.c.bf16 %v4237, %v4228
    %v4679 = vpack.c.bf16 %v4238, %v4229
    %v4680 = vpack.c.bf16 %v4248, %v4239
    %v4681 = vpack.c.bf16 %v4249, %v4240
    %v4682 = vpack.c.bf16 %v4250, %v4241
    %v4683 = vpack.c.bf16 %v4251, %v4242
    %v4684 = vpack.c.bf16 %v4252, %v4243
    %v4685 = vpack.c.bf16 %v4253, %v4244
    %v4686 = vpack.c.bf16 %v4254, %v4245
    %v4687 = vpack.c.bf16 %v4255, %v4246
    %v4688 = vpack.c.bf16 %v4256, %v4247
    %v4689 = vpack.c.bf16 %v4266, %v4257
    %v4690 = vpack.c.bf16 %v4267, %v4258
    %v4691 = vpack.c.bf16 %v4268, %v4259
    %v4692 = vpack.c.bf16 %v4269, %v4260
    %v4693 = vpack.c.bf16 %v4270, %v4261
    %v4694 = vpack.c.bf16 %v4271, %v4262
    %v4695 = vpack.c.bf16 %v4272, %v4263
    %v4696 = vpack.c.bf16 %v4273, %v4264
    %v4697 = vpack.c.bf16 %v4274, %v4265
    %v4698 = vpack.c.bf16 %v4284, %v4275
    %v4699 = vpack.c.bf16 %v4285, %v4276
    %v4700 = vpack.c.bf16 %v4286, %v4277
    %v4701 = vpack.c.bf16 %v4287, %v4278
    %v4702 = vpack.c.bf16 %v4288, %v4279
    %v4703 = vpack.c.bf16 %v4289, %v4280
    %v4704 = vpack.c.bf16 %v4290, %v4281
    %v4705 = vpack.c.bf16 %v4291, %v4282
    %v4706 = vpack.c.bf16 %v4292, %v4283
    %v4707 = vpack.c.bf16 %v4302, %v4293
    %v4708 = vpack.c.bf16 %v4303, %v4294
    %v4709 = vpack.c.bf16 %v4304, %v4295
    %v4710 = vpack.c.bf16 %v4305, %v4296
    %v4711 = vpack.c.bf16 %v4306, %v4297
    %v4712 = vpack.c.bf16 %v4307, %v4298
    %v4713 = vpack.c.bf16 %v4308, %v4299
    %v4714 = vpack.c.bf16 %v4309, %v4300
    %v4715 = vpack.c.bf16 %v4310, %v4301
    %v4716 = vpack.c.bf16 %v4320, %v4311
    %v4717 = vpack.c.bf16 %v4321, %v4312
    %v4718 = vpack.c.bf16 %v4322, %v4313
    %v4719 = vpack.c.bf16 %v4323, %v4314
    %v4720 = vpack.c.bf16 %v4324, %v4315
    %v4721 = vpack.c.bf16 %v4325, %v4316
    %v4722 = vpack.c.bf16 %v4326, %v4317
    %v4723 = vpack.c.bf16 %v4327, %v4318
    %v4724 = vpack.c.bf16 %v4328, %v4319
    %v4725 = vpack.c.bf16 %v4338, %v4329
    %v4726 = vpack.c.bf16 %v4339, %v4330
    %v4727 = vpack.c.bf16 %v4340, %v4331
    %v4728 = vpack.c.bf16 %v4341, %v4332
    %v4729 = vpack.c.bf16 %v4342, %v4333
    %v4730 = vpack.c.bf16 %v4343, %v4334
    %v4731 = vpack.c.bf16 %v4344, %v4335
    %v4732 = vpack.c.bf16 %v4345, %v4336
    %v4733 = vpack.c.bf16 %v4346, %v4337
    %v4734 = vpack.c.bf16 %v4356, %v4347
    %v4735 = vpack.c.bf16 %v4357, %v4348
    %v4736 = vpack.c.bf16 %v4358, %v4349
    %v4737 = vpack.c.bf16 %v4359, %v4350
    %v4738 = vpack.c.bf16 %v4360, %v4351
    %v4739 = vpack.c.bf16 %v4361, %v4352
    %v4740 = vpack.c.bf16 %v4362, %v4353
    %v4741 = vpack.c.bf16 %v4363, %v4354
    %v4742 = vpack.c.bf16 %v4364, %v4355
    %v4743 = vpack.c.bf16 %v4374, %v4365
    %v4744 = vpack.c.bf16 %v4375, %v4366
    %v4745 = vpack.c.bf16 %v4376, %v4367
    %v4746 = vpack.c.bf16 %v4377, %v4368
    %v4747 = vpack.c.bf16 %v4378, %v4369
    %v4748 = vpack.c.bf16 %v4379, %v4370
    %v4749 = vpack.c.bf16 %v4380, %v4371
    %v4750 = vpack.c.bf16 %v4381, %v4372
    %v4751 = vpack.c.bf16 %v4382, %v4373
    %v4752 = vpack.c.bf16 %v4392, %v4383
    %v4753 = vpack.c.bf16 %v4393, %v4384
    %v4754 = vpack.c.bf16 %v4394, %v4385
    %v4755 = vpack.c.bf16 %v4395, %v4386
    %v4756 = vpack.c.bf16 %v4396, %v4387
    %v4757 = vpack.c.bf16 %v4397, %v4388
    %v4758 = vpack.c.bf16 %v4398, %v4389
    %v4759 = vpack.c.bf16 %v4399, %v4390
    %v4760 = vpack.c.bf16 %v4400, %v4391
    %v4761 = vpack.c.bf16 %v4410, %v4401
    %v4762 = vpack.c.bf16 %v4411, %v4402
    %v4763 = vpack.c.bf16 %v4412, %v4403
    %v4764 = vpack.c.bf16 %v4413, %v4404
    %v4765 = vpack.c.bf16 %v4414, %v4405
    %v4766 = vpack.c.bf16 %v4415, %v4406
    %v4767 = vpack.c.bf16 %v4416, %v4407
    %v4768 = vpack.c.bf16 %v4417, %v4408
    %v4769 = vpack.c.bf16 %v4418, %v4409
    %v4770 = vpack.c.bf16 %v4428, %v4419
    %v4771 = vpack.c.bf16 %v4429, %v4420
    %v4772 = vpack.c.bf16 %v4430, %v4421
    %v4773 = vpack.c.bf16 %v4431, %v4422
    %v4774 = vpack.c.bf16 %v4432, %v4423
    %v4775 = vpack.c.bf16 %v4433, %v4424
    %v4776 = vpack.c.bf16 %v4434, %v4425
    %v4777 = vpack.c.bf16 %v4435, %v4426
    %v4778 = vpack.c.bf16 %v4436, %v4427
    %v4779 = vpack.c.bf16 %v4446, %v4437
    %v4780 = vpack.c.bf16 %v4447, %v4438
    %v4781 = vpack.c.bf16 %v4448, %v4439
    %v4782 = vpack.c.bf16 %v4449, %v4440
    %v4783 = vpack.c.bf16 %v4450, %v4441
    %v4784 = vpack.c.bf16 %v4451, %v4442
    %v4785 = vpack.c.bf16 %v4452, %v4443
    %v4786 = vpack.c.bf16 %v4453, %v4444
    %v4787 = vpack.c.bf16 %v4454, %v4445
    %v4788 = vpack.c.bf16 %v4464, %v4455
    %v4789 = vpack.c.bf16 %v4465, %v4456
    %v4790 = vpack.c.bf16 %v4466, %v4457
    %v4791 = vpack.c.bf16 %v4467, %v4458
    %v4792 = vpack.c.bf16 %v4468, %v4459
    %v4793 = vpack.c.bf16 %v4469, %v4460
    %v4794 = vpack.c.bf16 %v4470, %v4461
    %v4795 = vpack.c.bf16 %v4471, %v4462
    %v4796 = vpack.c.bf16 %v4472, %v4463
    %v4797 = vpack.c.bf16 %v4482, %v4473
    %v4798 = vpack.c.bf16 %v4483, %v4474
    %v4799 = vpack.c.bf16 %v4484, %v4475
    %v4800 = vpack.c.bf16 %v4485, %v4476
    %v4801 = vpack.c.bf16 %v4486, %v4477
    %v4802 = vpack.c.bf16 %v4487, %v4478
    %v4803 = vpack.c.bf16 %v4488, %v4479
    %v4804 = vpack.c.bf16 %v4489, %v4480
    %v4805 = vpack.c.bf16 %v4490, %v4481
    %v4806 = vpack.c.bf16 %v4500, %v4491
    %v4807 = vpack.c.bf16 %v4501, %v4492
    %v4808 = vpack.c.bf16 %v4502, %v4493
    %v4809 = vpack.c.bf16 %v4503, %v4494
    %v4810 = vpack.c.bf16 %v4504, %v4495
    %v4811 = vpack.c.bf16 %v4505, %v4496
    %v4812 = vpack.c.bf16 %v4506, %v4497
    %v4813 = vpack.c.bf16 %v4507, %v4498
    %v4814 = vpack.c.bf16 %v4508, %v4499
    %v4815 = vpack.c.bf16 %v4518, %v4509
    %v4816 = vpack.c.bf16 %v4519, %v4510
    %v4817 = vpack.c.bf16 %v4520, %v4511
    %v4818 = vpack.c.bf16 %v4521, %v4512
    %v4819 = vpack.c.bf16 %v4522, %v4513
    %v4820 = vpack.c.bf16 %v4523, %v4514
    %v4821 = vpack.c.bf16 %v4524, %v4515
    %v4822 = vpack.c.bf16 %v4525, %v4516
    %v4823 = vpack.c.bf16 %v4526, %v4517
    %v4824 = vpack.c.bf16 %v4536, %v4527
    %v4825 = vpack.c.bf16 %v4537, %v4528
    %v4826 = vpack.c.bf16 %v4538, %v4529
    %v4827 = vpack.c.bf16 %v4539, %v4530
    %v4828 = vpack.c.bf16 %v4540, %v4531
    %v4829 = vpack.c.bf16 %v4541, %v4532
    %v4830 = vpack.c.bf16 %v4542, %v4533
    %v4831 = vpack.c.bf16 %v4543, %v4534
    %v4832 = vpack.c.bf16 %v4544, %v4535
    %v4833 = vld [vmem:[#allocation11] sm:$0xff]
    %v4834 = vld [vmem:[#allocation11 + $0x8] sm:$0xff]
    %v4835 = vld [vmem:[#allocation11 + $0x10] sm:$0xff]
    %v4836 = vld [vmem:[#allocation11 + $0x18] sm:$0xff]
    %v4837 = vld [vmem:[#allocation11 + $0x20] sm:$0xff]
    %v4838 = vld [vmem:[#allocation11 + $0x28] sm:$0xff]
    %v4839 = vld [vmem:[#allocation11 + $0x30] sm:$0xff]
    %v4840 = vld [vmem:[#allocation11 + $0x38] sm:$0xff]
    %v4841 = vld [vmem:[#allocation11 + $0x40] sm:$0xff]
    %v4842 = vld [vmem:[#allocation11 + $0x48] sm:$0xff]
    %v4843 = vld [vmem:[#allocation11 + $0x50] sm:$0xff]
    %v4844 = vld [vmem:[#allocation11 + $0x58] sm:$0xff]
    %v4845 = vld [vmem:[#allocation11 + $0x60] sm:$0xff]
    %v4846 = vld [vmem:[#allocation11 + $0x68] sm:$0xff]
    %v4847 = vld [vmem:[#allocation11 + $0x70] sm:$0xff]
    %v4848 = vld [vmem:[#allocation11 + $0x78] sm:$0xff]
    %v4849 = vld [vmem:[#allocation11 + $0x80] sm:$0xff]
    %v4850 = vld [vmem:[#allocation11 + $0x88] sm:$0xff]
    %v4851 = vld [vmem:[#allocation11 + $0x90] sm:$0xff]
    %v4852 = vld [vmem:[#allocation11 + $0x98] sm:$0xff]
    %v4853 = vld [vmem:[#allocation11 + $0xa0] sm:$0xff]
    %v4854 = vld [vmem:[#allocation11 + $0xa8] sm:$0xff]
    %v4855 = vld [vmem:[#allocation11 + $0xb0] sm:$0xff]
    %v4856 = vld [vmem:[#allocation11 + $0xb8] sm:$0xff]
    %v4857 = vld [vmem:[#allocation11 + $0xc0] sm:$0xff]
    %v4858 = vld [vmem:[#allocation11 + $0xc8] sm:$0xff]
    %v4859 = vld [vmem:[#allocation11 + $0xd0] sm:$0xff]
    %v4860 = vld [vmem:[#allocation11 + $0xd8] sm:$0xff]
    %v4861 = vld [vmem:[#allocation11 + $0xe0] sm:$0xff]
    %v4862 = vld [vmem:[#allocation11 + $0xe8] sm:$0xff]
    %v4863 = vld [vmem:[#allocation11 + $0xf0] sm:$0xff]
    %v4864 = vld [vmem:[#allocation11 + $0xf8] sm:$0xff]
    %v4865 = vld [vmem:[#allocation11 + $0x100] sm:$0xff]
    %v4866 = vld [vmem:[#allocation11 + $0x108] sm:$0xff]
    %v4867 = vld [vmem:[#allocation11 + $0x110] sm:$0xff]
    %v4868 = vld [vmem:[#allocation11 + $0x118] sm:$0xff]
    %v4869 = vld [vmem:[#allocation11 + $0x120] sm:$0xff]
    %v4870 = vld [vmem:[#allocation11 + $0x128] sm:$0xff]
    %v4871 = vld [vmem:[#allocation11 + $0x130] sm:$0xff]
    %v4872 = vld [vmem:[#allocation11 + $0x138] sm:$0xff]
    %v4873 = vld [vmem:[#allocation11 + $0x140] sm:$0xff]
    %v4874 = vld [vmem:[#allocation11 + $0x148] sm:$0xff]
    %v4875 = vld [vmem:[#allocation11 + $0x150] sm:$0xff]
    %v4876 = vld [vmem:[#allocation11 + $0x158] sm:$0xff]
    %v4877 = vld [vmem:[#allocation11 + $0x160] sm:$0xff]
    %v4878 = vld [vmem:[#allocation11 + $0x168] sm:$0xff]
    %v4879 = vld [vmem:[#allocation11 + $0x170] sm:$0xff]
    %v4880 = vld [vmem:[#allocation11 + $0x178] sm:$0xff]
    %v4881 = vld [vmem:[#allocation11 + $0x180] sm:$0xff]
    %v4882 = vld [vmem:[#allocation11 + $0x188] sm:$0xff]
    %v4883 = vld [vmem:[#allocation11 + $0x190] sm:$0xff]
    %v4884 = vld [vmem:[#allocation11 + $0x198] sm:$0xff]
    %v4885 = vld [vmem:[#allocation11 + $0x1a0] sm:$0xff]
    %v4886 = vld [vmem:[#allocation11 + $0x1a8] sm:$0xff]
    %v4887 = vld [vmem:[#allocation11 + $0x1b0] sm:$0xff]
    %v4888 = vld [vmem:[#allocation11 + $0x1b8] sm:$0xff]
    %v4889 = vld [vmem:[#allocation11 + $0x1c0] sm:$0xff]
    %v4890 = vld [vmem:[#allocation11 + $0x1c8] sm:$0xff]
    %v4891 = vld [vmem:[#allocation11 + $0x1d0] sm:$0xff]
    %v4892 = vld [vmem:[#allocation11 + $0x1d8] sm:$0xff]
    %v4893 = vld [vmem:[#allocation11 + $0x1e0] sm:$0xff]
    %v4894 = vld [vmem:[#allocation11 + $0x1e8] sm:$0xff]
    %v4895 = vld [vmem:[#allocation11 + $0x1f0] sm:$0xff]
    %v4896 = vld [vmem:[#allocation11 + $0x1f8] sm:$0xff]
    %v4897 = vld [vmem:[#allocation11 + $0x200] sm:$0xff]
    %v4898 = vld [vmem:[#allocation11 + $0x208] sm:$0xff]
    %v4899 = vld [vmem:[#allocation11 + $0x210] sm:$0xff]
    %v4900 = vld [vmem:[#allocation11 + $0x218] sm:$0xff]
    %v4901 = vld [vmem:[#allocation11 + $0x220] sm:$0xff]
    %v4902 = vld [vmem:[#allocation11 + $0x228] sm:$0xff]
    %v4903 = vld [vmem:[#allocation11 + $0x230] sm:$0xff]
    %v4904 = vld [vmem:[#allocation11 + $0x238] sm:$0xff]
    %v4905 = vld [vmem:[#allocation11 + $0x240] sm:$0xff]
    %v4906 = vld [vmem:[#allocation11 + $0x248] sm:$0xff]
    %v4907 = vld [vmem:[#allocation11 + $0x250] sm:$0xff]
    %v4908 = vld [vmem:[#allocation11 + $0x258] sm:$0xff]
    %v4909 = vld [vmem:[#allocation11 + $0x260] sm:$0xff]
    %v4910 = vld [vmem:[#allocation11 + $0x268] sm:$0xff]
    %v4911 = vld [vmem:[#allocation11 + $0x270] sm:$0xff]
    %v4912 = vld [vmem:[#allocation11 + $0x278] sm:$0xff]
    %v4913 = vld [vmem:[#allocation11 + $0x280] sm:$0xff]
    %v4914 = vld [vmem:[#allocation11 + $0x288] sm:$0xff]
    %v4915 = vld [vmem:[#allocation11 + $0x290] sm:$0xff]
    %v4916 = vld [vmem:[#allocation11 + $0x298] sm:$0xff]
    %v4917 = vld [vmem:[#allocation11 + $0x2a0] sm:$0xff]
    %v4918 = vld [vmem:[#allocation11 + $0x2a8] sm:$0xff]
    %v4919 = vld [vmem:[#allocation11 + $0x2b0] sm:$0xff]
    %v4920 = vld [vmem:[#allocation11 + $0x2b8] sm:$0xff]
    %v4921 = vld [vmem:[#allocation11 + $0x2c0] sm:$0xff]
    %v4922 = vld [vmem:[#allocation11 + $0x2c8] sm:$0xff]
    %v4923 = vld [vmem:[#allocation11 + $0x2d0] sm:$0xff]
    %v4924 = vld [vmem:[#allocation11 + $0x2d8] sm:$0xff]
    %v4925 = vld [vmem:[#allocation11 + $0x2e0] sm:$0xff]
    %v4926 = vld [vmem:[#allocation11 + $0x2e8] sm:$0xff]
    %v4927 = vld [vmem:[#allocation11 + $0x2f0] sm:$0xff]
    %v4928 = vld [vmem:[#allocation11 + $0x2f8] sm:$0xff]
    %v4929 = vld [vmem:[#allocation11 + $0x300] sm:$0xff]
    %v4930 = vld [vmem:[#allocation11 + $0x308] sm:$0xff]
    %v4931 = vld [vmem:[#allocation11 + $0x310] sm:$0xff]
    %v4932 = vld [vmem:[#allocation11 + $0x318] sm:$0xff]
    %v4933 = vld [vmem:[#allocation11 + $0x320] sm:$0xff]
    %v4934 = vld [vmem:[#allocation11 + $0x328] sm:$0xff]
    %v4935 = vld [vmem:[#allocation11 + $0x330] sm:$0xff]
    %v4936 = vld [vmem:[#allocation11 + $0x338] sm:$0xff]
    %v4937 = vld [vmem:[#allocation11 + $0x340] sm:$0xff]
    %v4938 = vld [vmem:[#allocation11 + $0x348] sm:$0xff]
    %v4939 = vld [vmem:[#allocation11 + $0x350] sm:$0xff]
    %v4940 = vld [vmem:[#allocation11 + $0x358] sm:$0xff]
    %v4941 = vld [vmem:[#allocation11 + $0x360] sm:$0xff]
    %v4942 = vld [vmem:[#allocation11 + $0x368] sm:$0xff]
    %v4943 = vld [vmem:[#allocation11 + $0x370] sm:$0xff]
    %v4944 = vld [vmem:[#allocation11 + $0x378] sm:$0xff]
    %v4945 = vld [vmem:[#allocation11 + $0x380] sm:$0xff]
    %v4946 = vld [vmem:[#allocation11 + $0x388] sm:$0xff]
    %v4947 = vld [vmem:[#allocation11 + $0x390] sm:$0xff]
    %v4948 = vld [vmem:[#allocation11 + $0x398] sm:$0xff]
    %v4949 = vld [vmem:[#allocation11 + $0x3a0] sm:$0xff]
    %v4950 = vld [vmem:[#allocation11 + $0x3a8] sm:$0xff]
    %v4951 = vld [vmem:[#allocation11 + $0x3b0] sm:$0xff]
    %v4952 = vld [vmem:[#allocation11 + $0x3b8] sm:$0xff]
    %v4953 = vld [vmem:[#allocation11 + $0x3c0] sm:$0xff]
    %v4954 = vld [vmem:[#allocation11 + $0x3c8] sm:$0xff]
    %v4955 = vld [vmem:[#allocation11 + $0x3d0] sm:$0xff]
    %v4956 = vld [vmem:[#allocation11 + $0x3d8] sm:$0xff]
    %v4957 = vld [vmem:[#allocation11 + $0x3e0] sm:$0xff]
    %v4958 = vld [vmem:[#allocation11 + $0x3e8] sm:$0xff]
    %v4959 = vld [vmem:[#allocation11 + $0x3f0] sm:$0xff]
    %v4960 = vld [vmem:[#allocation11 + $0x3f8] sm:$0xff]
    %v4961 = vld [vmem:[#allocation11 + $0x400] sm:$0xff]
    %v4962 = vld [vmem:[#allocation11 + $0x408] sm:$0xff]
    %v4963 = vld [vmem:[#allocation11 + $0x410] sm:$0xff]
    %v4964 = vld [vmem:[#allocation11 + $0x418] sm:$0xff]
    %v4965 = vld [vmem:[#allocation11 + $0x420] sm:$0xff]
    %v4966 = vld [vmem:[#allocation11 + $0x428] sm:$0xff]
    %v4967 = vld [vmem:[#allocation11 + $0x430] sm:$0xff]
    %v4968 = vld [vmem:[#allocation11 + $0x438] sm:$0xff]
    %v4969 = vld [vmem:[#allocation11 + $0x440] sm:$0xff]
    %v4970 = vld [vmem:[#allocation11 + $0x448] sm:$0xff]
    %v4971 = vld [vmem:[#allocation11 + $0x450] sm:$0xff]
    %v4972 = vld [vmem:[#allocation11 + $0x458] sm:$0xff]
    %v4973 = vld [vmem:[#allocation11 + $0x460] sm:$0xff]
    %v4974 = vld [vmem:[#allocation11 + $0x468] sm:$0xff]
    %v4975 = vld [vmem:[#allocation11 + $0x470] sm:$0xff]
    %v4976 = vld [vmem:[#allocation11 + $0x478] sm:$0xff]
    %v4977 = vld [vmem:[#allocation11 + $0x480] sm:$0xff]
    %v4978 = vld [vmem:[#allocation11 + $0x488] sm:$0xff]
    %v4979 = vld [vmem:[#allocation11 + $0x490] sm:$0xff]
    %v4980 = vld [vmem:[#allocation11 + $0x498] sm:$0xff]
    %v4981 = vld [vmem:[#allocation11 + $0x4a0] sm:$0xff]
    %v4982 = vld [vmem:[#allocation11 + $0x4a8] sm:$0xff]
    %v4983 = vld [vmem:[#allocation11 + $0x4b0] sm:$0xff]
    %v4984 = vld [vmem:[#allocation11 + $0x4b8] sm:$0xff]
    %v4985 = vld [vmem:[#allocation11 + $0x4c0] sm:$0xff]
    %v4986 = vld [vmem:[#allocation11 + $0x4c8] sm:$0xff]
    %v4987 = vld [vmem:[#allocation11 + $0x4d0] sm:$0xff]
    %v4988 = vld [vmem:[#allocation11 + $0x4d8] sm:$0xff]
    %v4989 = vld [vmem:[#allocation11 + $0x4e0] sm:$0xff]
    %v4990 = vld [vmem:[#allocation11 + $0x4e8] sm:$0xff]
    %v4991 = vld [vmem:[#allocation11 + $0x4f0] sm:$0xff]
    %v4992 = vld [vmem:[#allocation11 + $0x4f8] sm:$0xff]
    %v4993 = vld [vmem:[#allocation11 + $0x500] sm:$0xff]
    %v4994 = vld [vmem:[#allocation11 + $0x508] sm:$0xff]
    %v4995 = vld [vmem:[#allocation11 + $0x510] sm:$0xff]
    %v4996 = vld [vmem:[#allocation11 + $0x518] sm:$0xff]
    %v4997 = vld [vmem:[#allocation11 + $0x520] sm:$0xff]
    %v4998 = vld [vmem:[#allocation11 + $0x528] sm:$0xff]
    %v4999 = vld [vmem:[#allocation11 + $0x530] sm:$0xff]
    %v5000 = vld [vmem:[#allocation11 + $0x538] sm:$0xff]
    %v5001 = vld [vmem:[#allocation11 + $0x540] sm:$0xff]
    %v5002 = vld [vmem:[#allocation11 + $0x548] sm:$0xff]
    %v5003 = vld [vmem:[#allocation11 + $0x550] sm:$0xff]
    %v5004 = vld [vmem:[#allocation11 + $0x558] sm:$0xff]
    %v5005 = vld [vmem:[#allocation11 + $0x560] sm:$0xff]
    %v5006 = vld [vmem:[#allocation11 + $0x568] sm:$0xff]
    %v5007 = vld [vmem:[#allocation11 + $0x570] sm:$0xff]
    %v5008 = vld [vmem:[#allocation11 + $0x578] sm:$0xff]
    %v5009 = vld [vmem:[#allocation11 + $0x580] sm:$0xff]
    %v5010 = vld [vmem:[#allocation11 + $0x588] sm:$0xff]
    %v5011 = vld [vmem:[#allocation11 + $0x590] sm:$0xff]
    %v5012 = vld [vmem:[#allocation11 + $0x598] sm:$0xff]
    %v5013 = vld [vmem:[#allocation11 + $0x5a0] sm:$0xff]
    %v5014 = vld [vmem:[#allocation11 + $0x5a8] sm:$0xff]
    %v5015 = vld [vmem:[#allocation11 + $0x5b0] sm:$0xff]
    %v5016 = vld [vmem:[#allocation11 + $0x5b8] sm:$0xff]
    %v5017 = vld [vmem:[#allocation11 + $0x5c0] sm:$0xff]
    %v5018 = vld [vmem:[#allocation11 + $0x5c8] sm:$0xff]
    %v5019 = vld [vmem:[#allocation11 + $0x5d0] sm:$0xff]
    %v5020 = vld [vmem:[#allocation11 + $0x5d8] sm:$0xff]
    %v5021 = vld [vmem:[#allocation11 + $0x5e0] sm:$0xff]
    %v5022 = vld [vmem:[#allocation11 + $0x5e8] sm:$0xff]
    %v5023 = vld [vmem:[#allocation11 + $0x5f0] sm:$0xff]
    %v5024 = vld [vmem:[#allocation11 + $0x5f8] sm:$0xff]
    %v5025 = vld [vmem:[#allocation11 + $0x600] sm:$0xff]
    %v5026 = vld [vmem:[#allocation11 + $0x608] sm:$0xff]
    %v5027 = vld [vmem:[#allocation11 + $0x610] sm:$0xff]
    %v5028 = vld [vmem:[#allocation11 + $0x618] sm:$0xff]
    %v5029 = vld [vmem:[#allocation11 + $0x620] sm:$0xff]
    %v5030 = vld [vmem:[#allocation11 + $0x628] sm:$0xff]
    %v5031 = vld [vmem:[#allocation11 + $0x630] sm:$0xff]
    %v5032 = vld [vmem:[#allocation11 + $0x638] sm:$0xff]
    %v5033 = vld [vmem:[#allocation11 + $0x640] sm:$0xff]
    %v5034 = vld [vmem:[#allocation11 + $0x648] sm:$0xff]
    %v5035 = vld [vmem:[#allocation11 + $0x650] sm:$0xff]
    %v5036 = vld [vmem:[#allocation11 + $0x658] sm:$0xff]
    %v5037 = vld [vmem:[#allocation11 + $0x660] sm:$0xff]
    %v5038 = vld [vmem:[#allocation11 + $0x668] sm:$0xff]
    %v5039 = vld [vmem:[#allocation11 + $0x670] sm:$0xff]
    %v5040 = vld [vmem:[#allocation11 + $0x678] sm:$0xff]
    %v5041 = vld [vmem:[#allocation11 + $0x680] sm:$0xff]
    %v5042 = vld [vmem:[#allocation11 + $0x688] sm:$0xff]
    %v5043 = vld [vmem:[#allocation11 + $0x690] sm:$0xff]
    %v5044 = vld [vmem:[#allocation11 + $0x698] sm:$0xff]
    %v5045 = vld [vmem:[#allocation11 + $0x6a0] sm:$0xff]
    %v5046 = vld [vmem:[#allocation11 + $0x6a8] sm:$0xff]
    %v5047 = vld [vmem:[#allocation11 + $0x6b0] sm:$0xff]
    %v5048 = vld [vmem:[#allocation11 + $0x6b8] sm:$0xff]
    %v5049 = vld [vmem:[#allocation11 + $0x6c0] sm:$0xff]
    %v5050 = vld [vmem:[#allocation11 + $0x6c8] sm:$0xff]
    %v5051 = vld [vmem:[#allocation11 + $0x6d0] sm:$0xff]
    %v5052 = vld [vmem:[#allocation11 + $0x6d8] sm:$0xff]
    %v5053 = vld [vmem:[#allocation11 + $0x6e0] sm:$0xff]
    %v5054 = vld [vmem:[#allocation11 + $0x6e8] sm:$0xff]
    %v5055 = vld [vmem:[#allocation11 + $0x6f0] sm:$0xff]
    %v5056 = vld [vmem:[#allocation11 + $0x6f8] sm:$0xff]
    %v5057 = vld [vmem:[#allocation11 + $0x700] sm:$0xff]
    %v5058 = vld [vmem:[#allocation11 + $0x708] sm:$0xff]
    %v5059 = vld [vmem:[#allocation11 + $0x710] sm:$0xff]
    %v5060 = vld [vmem:[#allocation11 + $0x718] sm:$0xff]
    %v5061 = vld [vmem:[#allocation11 + $0x720] sm:$0xff]
    %v5062 = vld [vmem:[#allocation11 + $0x728] sm:$0xff]
    %v5063 = vld [vmem:[#allocation11 + $0x730] sm:$0xff]
    %v5064 = vld [vmem:[#allocation11 + $0x738] sm:$0xff]
    %v5065 = vld [vmem:[#allocation11 + $0x740] sm:$0xff]
    %v5066 = vld [vmem:[#allocation11 + $0x748] sm:$0xff]
    %v5067 = vld [vmem:[#allocation11 + $0x750] sm:$0xff]
    %v5068 = vld [vmem:[#allocation11 + $0x758] sm:$0xff]
    %v5069 = vld [vmem:[#allocation11 + $0x760] sm:$0xff]
    %v5070 = vld [vmem:[#allocation11 + $0x768] sm:$0xff]
    %v5071 = vld [vmem:[#allocation11 + $0x770] sm:$0xff]
    %v5072 = vld [vmem:[#allocation11 + $0x778] sm:$0xff]
    %v5073 = vld [vmem:[#allocation11 + $0x780] sm:$0xff]
    %v5074 = vld [vmem:[#allocation11 + $0x788] sm:$0xff]
    %v5075 = vld [vmem:[#allocation11 + $0x790] sm:$0xff]
    %v5076 = vld [vmem:[#allocation11 + $0x798] sm:$0xff]
    %v5077 = vld [vmem:[#allocation11 + $0x7a0] sm:$0xff]
    %v5078 = vld [vmem:[#allocation11 + $0x7a8] sm:$0xff]
    %v5079 = vld [vmem:[#allocation11 + $0x7b0] sm:$0xff]
    %v5080 = vld [vmem:[#allocation11 + $0x7b8] sm:$0xff]
    %v5081 = vld [vmem:[#allocation11 + $0x7c0] sm:$0xff]
    %v5082 = vld [vmem:[#allocation11 + $0x7c8] sm:$0xff]
    %v5083 = vld [vmem:[#allocation11 + $0x7d0] sm:$0xff]
    %v5084 = vld [vmem:[#allocation11 + $0x7d8] sm:$0xff]
    %v5085 = vld [vmem:[#allocation11 + $0x7e0] sm:$0xff]
    %v5086 = vld [vmem:[#allocation11 + $0x7e8] sm:$0xff]
    %v5087 = vld [vmem:[#allocation11 + $0x7f0] sm:$0xff]
    %v5088 = vld [vmem:[#allocation11 + $0x7f8] sm:$0xff]
    %v5089 = vld [vmem:[#allocation11 + $0x800] sm:$0xff]
    %v5090 = vld [vmem:[#allocation11 + $0x808] sm:$0xff]
    %v5091 = vld [vmem:[#allocation11 + $0x810] sm:$0xff]
    %v5092 = vld [vmem:[#allocation11 + $0x818] sm:$0xff]
    %v5093 = vld [vmem:[#allocation11 + $0x820] sm:$0xff]
    %v5094 = vld [vmem:[#allocation11 + $0x828] sm:$0xff]
    %v5095 = vld [vmem:[#allocation11 + $0x830] sm:$0xff]
    %v5096 = vld [vmem:[#allocation11 + $0x838] sm:$0xff]
    %v5097 = vld [vmem:[#allocation11 + $0x840] sm:$0xff]
    %v5098 = vld [vmem:[#allocation11 + $0x848] sm:$0xff]
    %v5099 = vld [vmem:[#allocation11 + $0x850] sm:$0xff]
    %v5100 = vld [vmem:[#allocation11 + $0x858] sm:$0xff]
    %v5101 = vld [vmem:[#allocation11 + $0x860] sm:$0xff]
    %v5102 = vld [vmem:[#allocation11 + $0x868] sm:$0xff]
    %v5103 = vld [vmem:[#allocation11 + $0x870] sm:$0xff]
    %v5104 = vld [vmem:[#allocation11 + $0x878] sm:$0xff]
    %v5105 = vld [vmem:[#allocation11 + $0x880] sm:$0xff]
    %v5106 = vld [vmem:[#allocation11 + $0x888] sm:$0xff]
    %v5107 = vld [vmem:[#allocation11 + $0x890] sm:$0xff]
    %v5108 = vld [vmem:[#allocation11 + $0x898] sm:$0xff]
    %v5109 = vld [vmem:[#allocation11 + $0x8a0] sm:$0xff]
    %v5110 = vld [vmem:[#allocation11 + $0x8a8] sm:$0xff]
    %v5111 = vld [vmem:[#allocation11 + $0x8b0] sm:$0xff]
    %v5112 = vld [vmem:[#allocation11 + $0x8b8] sm:$0xff]
    %v5113 = vld [vmem:[#allocation11 + $0x8c0] sm:$0xff]
    %v5114 = vld [vmem:[#allocation11 + $0x8c8] sm:$0xff]
    %v5115 = vld [vmem:[#allocation11 + $0x8d0] sm:$0xff]
    %v5116 = vld [vmem:[#allocation11 + $0x8d8] sm:$0xff]
    %v5117 = vld [vmem:[#allocation11 + $0x8e0] sm:$0xff]
    %v5118 = vld [vmem:[#allocation11 + $0x8e8] sm:$0xff]
    %v5119 = vld [vmem:[#allocation11 + $0x8f0] sm:$0xff]
    %v5120 = vld [vmem:[#allocation11 + $0x8f8] sm:$0xff]
    %v5121 = vld [vmem:[#allocation12] sm:$0xf]
    %v5123 = vlaneseq
    %v5124 = vshrl.u32 %v5123, 7
    %v5125 = vsub.s32 0, %v5124
    %v5126 = vrot.slane %v5121, %v5125
    %v5127 = vlaneseq
    %v5128 = vshrl.u32 %v5127, 7
    %v5129 = vsub.s32 1, %v5128
    %v5130 = vrot.slane %v5121, %v5129
    %v5131 = vlaneseq
    %v5132 = vshrl.u32 %v5131, 7
    %v5133 = vsub.s32 2, %v5132
    %v5134 = vrot.slane %v5121, %v5133
    %v5135 = vlaneseq
    %v5136 = vshrl.u32 %v5135, 7
    %v5137 = vsub.s32 3, %v5136
    %v5138 = vrot.slane %v5121, %v5137
    %v5431 = vunpack.c.l.b16 %v4833
    %v5432 = vunpack.c.h.b16 %v4833
    %v5433 = vunpack.c.l.b16 %v4834
    %v5434 = vunpack.c.h.b16 %v4834
    %v5435 = vunpack.c.l.b16 %v4835
    %v5436 = vunpack.c.h.b16 %v4835
    %v5437 = vunpack.c.l.b16 %v4836
    %v5438 = vunpack.c.h.b16 %v4836
    %v5439 = vunpack.c.l.b16 %v4837
    %v5440 = vunpack.c.h.b16 %v4837
    %v5441 = vunpack.c.l.b16 %v4838
    %v5442 = vunpack.c.h.b16 %v4838
    %v5443 = vunpack.c.l.b16 %v4839
    %v5444 = vunpack.c.h.b16 %v4839
    %v5445 = vunpack.c.l.b16 %v4840
    %v5446 = vunpack.c.h.b16 %v4840
    %v5447 = vunpack.c.l.b16 %v4841
    %v5448 = vunpack.c.h.b16 %v4841
    %v5449 = vunpack.c.l.b16 %v4842
    %v5450 = vunpack.c.h.b16 %v4842
    %v5451 = vunpack.c.l.b16 %v4843
    %v5452 = vunpack.c.h.b16 %v4843
    %v5453 = vunpack.c.l.b16 %v4844
    %v5454 = vunpack.c.h.b16 %v4844
    %v5455 = vunpack.c.l.b16 %v4845
    %v5456 = vunpack.c.h.b16 %v4845
    %v5457 = vunpack.c.l.b16 %v4846
    %v5458 = vunpack.c.h.b16 %v4846
    %v5459 = vunpack.c.l.b16 %v4847
    %v5460 = vunpack.c.h.b16 %v4847
    %v5461 = vunpack.c.l.b16 %v4848
    %v5462 = vunpack.c.h.b16 %v4848
    %v5463 = vunpack.c.l.b16 %v4849
    %v5464 = vunpack.c.h.b16 %v4849
    %v5465 = vunpack.c.l.b16 %v4850
    %v5466 = vunpack.c.h.b16 %v4850
    %v5467 = vunpack.c.l.b16 %v4851
    %v5468 = vunpack.c.h.b16 %v4851
    %v5469 = vunpack.c.l.b16 %v4852
    %v5470 = vunpack.c.h.b16 %v4852
    %v5471 = vunpack.c.l.b16 %v4853
    %v5472 = vunpack.c.h.b16 %v4853
    %v5473 = vunpack.c.l.b16 %v4854
    %v5474 = vunpack.c.h.b16 %v4854
    %v5475 = vunpack.c.l.b16 %v4855
    %v5476 = vunpack.c.h.b16 %v4855
    %v5477 = vunpack.c.l.b16 %v4856
    %v5478 = vunpack.c.h.b16 %v4856
    %v5479 = vunpack.c.l.b16 %v4857
    %v5480 = vunpack.c.h.b16 %v4857
    %v5481 = vunpack.c.l.b16 %v4858
    %v5482 = vunpack.c.h.b16 %v4858
    %v5483 = vunpack.c.l.b16 %v4859
    %v5484 = vunpack.c.h.b16 %v4859
    %v5485 = vunpack.c.l.b16 %v4860
    %v5486 = vunpack.c.h.b16 %v4860
    %v5487 = vunpack.c.l.b16 %v4861
    %v5488 = vunpack.c.h.b16 %v4861
    %v5489 = vunpack.c.l.b16 %v4862
    %v5490 = vunpack.c.h.b16 %v4862
    %v5491 = vunpack.c.l.b16 %v4863
    %v5492 = vunpack.c.h.b16 %v4863
    %v5493 = vunpack.c.l.b16 %v4864
    %v5494 = vunpack.c.h.b16 %v4864
    %v5495 = vunpack.c.l.b16 %v4865
    %v5496 = vunpack.c.h.b16 %v4865
    %v5497 = vunpack.c.l.b16 %v4866
    %v5498 = vunpack.c.h.b16 %v4866
    %v5499 = vunpack.c.l.b16 %v4867
    %v5500 = vunpack.c.h.b16 %v4867
    %v5501 = vunpack.c.l.b16 %v4868
    %v5502 = vunpack.c.h.b16 %v4868
    %v5503 = vunpack.c.l.b16 %v4869
    %v5504 = vunpack.c.h.b16 %v4869
    %v5505 = vunpack.c.l.b16 %v4870
    %v5506 = vunpack.c.h.b16 %v4870
    %v5507 = vunpack.c.l.b16 %v4871
    %v5508 = vunpack.c.h.b16 %v4871
    %v5509 = vunpack.c.l.b16 %v4872
    %v5510 = vunpack.c.h.b16 %v4872
    %v5511 = vunpack.c.l.b16 %v4873
    %v5512 = vunpack.c.h.b16 %v4873
    %v5513 = vunpack.c.l.b16 %v4874
    %v5514 = vunpack.c.h.b16 %v4874
    %v5515 = vunpack.c.l.b16 %v4875
    %v5516 = vunpack.c.h.b16 %v4875
    %v5517 = vunpack.c.l.b16 %v4876
    %v5518 = vunpack.c.h.b16 %v4876
    %v5519 = vunpack.c.l.b16 %v4877
    %v5520 = vunpack.c.h.b16 %v4877
    %v5521 = vunpack.c.l.b16 %v4878
    %v5522 = vunpack.c.h.b16 %v4878
    %v5523 = vunpack.c.l.b16 %v4879
    %v5524 = vunpack.c.h.b16 %v4879
    %v5525 = vunpack.c.l.b16 %v4880
    %v5526 = vunpack.c.h.b16 %v4880
    %v5527 = vunpack.c.l.b16 %v4881
    %v5528 = vunpack.c.h.b16 %v4881
    %v5529 = vunpack.c.l.b16 %v4882
    %v5530 = vunpack.c.h.b16 %v4882
    %v5531 = vunpack.c.l.b16 %v4883
    %v5532 = vunpack.c.h.b16 %v4883
    %v5533 = vunpack.c.l.b16 %v4884
    %v5534 = vunpack.c.h.b16 %v4884
    %v5535 = vunpack.c.l.b16 %v4885
    %v5536 = vunpack.c.h.b16 %v4885
    %v5537 = vunpack.c.l.b16 %v4886
    %v5538 = vunpack.c.h.b16 %v4886
    %v5539 = vunpack.c.l.b16 %v4887
    %v5540 = vunpack.c.h.b16 %v4887
    %v5541 = vunpack.c.l.b16 %v4888
    %v5542 = vunpack.c.h.b16 %v4888
    %v5543 = vunpack.c.l.b16 %v4889
    %v5544 = vunpack.c.h.b16 %v4889
    %v5545 = vunpack.c.l.b16 %v4890
    %v5546 = vunpack.c.h.b16 %v4890
    %v5547 = vunpack.c.l.b16 %v4891
    %v5548 = vunpack.c.h.b16 %v4891
    %v5549 = vunpack.c.l.b16 %v4892
    %v5550 = vunpack.c.h.b16 %v4892
    %v5551 = vunpack.c.l.b16 %v4893
    %v5552 = vunpack.c.h.b16 %v4893
    %v5553 = vunpack.c.l.b16 %v4894
    %v5554 = vunpack.c.h.b16 %v4894
    %v5555 = vunpack.c.l.b16 %v4895
    %v5556 = vunpack.c.h.b16 %v4895
    %v5557 = vunpack.c.l.b16 %v4896
    %v5558 = vunpack.c.h.b16 %v4896
    %v5559 = vunpack.c.l.b16 %v4897
    %v5560 = vunpack.c.h.b16 %v4897
    %v5561 = vunpack.c.l.b16 %v4898
    %v5562 = vunpack.c.h.b16 %v4898
    %v5563 = vunpack.c.l.b16 %v4899
    %v5564 = vunpack.c.h.b16 %v4899
    %v5565 = vunpack.c.l.b16 %v4900
    %v5566 = vunpack.c.h.b16 %v4900
    %v5567 = vunpack.c.l.b16 %v4901
    %v5568 = vunpack.c.h.b16 %v4901
    %v5569 = vunpack.c.l.b16 %v4902
    %v5570 = vunpack.c.h.b16 %v4902
    %v5571 = vunpack.c.l.b16 %v4903
    %v5572 = vunpack.c.h.b16 %v4903
    %v5573 = vunpack.c.l.b16 %v4904
    %v5574 = vunpack.c.h.b16 %v4904
    %v5575 = vunpack.c.l.b16 %v4905
    %v5576 = vunpack.c.h.b16 %v4905
    %v5577 = vunpack.c.l.b16 %v4906
    %v5578 = vunpack.c.h.b16 %v4906
    %v5579 = vunpack.c.l.b16 %v4907
    %v5580 = vunpack.c.h.b16 %v4907
    %v5581 = vunpack.c.l.b16 %v4908
    %v5582 = vunpack.c.h.b16 %v4908
    %v5583 = vunpack.c.l.b16 %v4909
    %v5584 = vunpack.c.h.b16 %v4909
    %v5585 = vunpack.c.l.b16 %v4910
    %v5586 = vunpack.c.h.b16 %v4910
    %v5587 = vunpack.c.l.b16 %v4911
    %v5588 = vunpack.c.h.b16 %v4911
    %v5589 = vunpack.c.l.b16 %v4912
    %v5590 = vunpack.c.h.b16 %v4912
    %v5591 = vunpack.c.l.b16 %v4913
    %v5592 = vunpack.c.h.b16 %v4913
    %v5593 = vunpack.c.l.b16 %v4914
    %v5594 = vunpack.c.h.b16 %v4914
    %v5595 = vunpack.c.l.b16 %v4915
    %v5596 = vunpack.c.h.b16 %v4915
    %v5597 = vunpack.c.l.b16 %v4916
    %v5598 = vunpack.c.h.b16 %v4916
    %v5599 = vunpack.c.l.b16 %v4917
    %v5600 = vunpack.c.h.b16 %v4917
    %v5601 = vunpack.c.l.b16 %v4918
    %v5602 = vunpack.c.h.b16 %v4918
    %v5603 = vunpack.c.l.b16 %v4919
    %v5604 = vunpack.c.h.b16 %v4919
    %v5605 = vunpack.c.l.b16 %v4920
    %v5606 = vunpack.c.h.b16 %v4920
    %v5607 = vunpack.c.l.b16 %v4921
    %v5608 = vunpack.c.h.b16 %v4921
    %v5609 = vunpack.c.l.b16 %v4922
    %v5610 = vunpack.c.h.b16 %v4922
    %v5611 = vunpack.c.l.b16 %v4923
    %v5612 = vunpack.c.h.b16 %v4923
    %v5613 = vunpack.c.l.b16 %v4924
    %v5614 = vunpack.c.h.b16 %v4924
    %v5615 = vunpack.c.l.b16 %v4925
    %v5616 = vunpack.c.h.b16 %v4925
    %v5617 = vunpack.c.l.b16 %v4926
    %v5618 = vunpack.c.h.b16 %v4926
    %v5619 = vunpack.c.l.b16 %v4927
    %v5620 = vunpack.c.h.b16 %v4927
    %v5621 = vunpack.c.l.b16 %v4928
    %v5622 = vunpack.c.h.b16 %v4928
    %v5623 = vunpack.c.l.b16 %v4929
    %v5624 = vunpack.c.h.b16 %v4929
    %v5625 = vunpack.c.l.b16 %v4930
    %v5626 = vunpack.c.h.b16 %v4930
    %v5627 = vunpack.c.l.b16 %v4931
    %v5628 = vunpack.c.h.b16 %v4931
    %v5629 = vunpack.c.l.b16 %v4932
    %v5630 = vunpack.c.h.b16 %v4932
    %v5631 = vunpack.c.l.b16 %v4933
    %v5632 = vunpack.c.h.b16 %v4933
    %v5633 = vunpack.c.l.b16 %v4934
    %v5634 = vunpack.c.h.b16 %v4934
    %v5635 = vunpack.c.l.b16 %v4935
    %v5636 = vunpack.c.h.b16 %v4935
    %v5637 = vunpack.c.l.b16 %v4936
    %v5638 = vunpack.c.h.b16 %v4936
    %v5639 = vunpack.c.l.b16 %v4937
    %v5640 = vunpack.c.h.b16 %v4937
    %v5641 = vunpack.c.l.b16 %v4938
    %v5642 = vunpack.c.h.b16 %v4938
    %v5643 = vunpack.c.l.b16 %v4939
    %v5644 = vunpack.c.h.b16 %v4939
    %v5645 = vunpack.c.l.b16 %v4940
    %v5646 = vunpack.c.h.b16 %v4940
    %v5647 = vunpack.c.l.b16 %v4941
    %v5648 = vunpack.c.h.b16 %v4941
    %v5649 = vunpack.c.l.b16 %v4942
    %v5650 = vunpack.c.h.b16 %v4942
    %v5651 = vunpack.c.l.b16 %v4943
    %v5652 = vunpack.c.h.b16 %v4943
    %v5653 = vunpack.c.l.b16 %v4944
    %v5654 = vunpack.c.h.b16 %v4944
    %v5655 = vunpack.c.l.b16 %v4945
    %v5656 = vunpack.c.h.b16 %v4945
    %v5657 = vunpack.c.l.b16 %v4946
    %v5658 = vunpack.c.h.b16 %v4946
    %v5659 = vunpack.c.l.b16 %v4947
    %v5660 = vunpack.c.h.b16 %v4947
    %v5661 = vunpack.c.l.b16 %v4948
    %v5662 = vunpack.c.h.b16 %v4948
    %v5663 = vunpack.c.l.b16 %v4949
    %v5664 = vunpack.c.h.b16 %v4949
    %v5665 = vunpack.c.l.b16 %v4950
    %v5666 = vunpack.c.h.b16 %v4950
    %v5667 = vunpack.c.l.b16 %v4951
    %v5668 = vunpack.c.h.b16 %v4951
    %v5669 = vunpack.c.l.b16 %v4952
    %v5670 = vunpack.c.h.b16 %v4952
    %v5671 = vunpack.c.l.b16 %v4953
    %v5672 = vunpack.c.h.b16 %v4953
    %v5673 = vunpack.c.l.b16 %v4954
    %v5674 = vunpack.c.h.b16 %v4954
    %v5675 = vunpack.c.l.b16 %v4955
    %v5676 = vunpack.c.h.b16 %v4955
    %v5677 = vunpack.c.l.b16 %v4956
    %v5678 = vunpack.c.h.b16 %v4956
    %v5679 = vunpack.c.l.b16 %v4957
    %v5680 = vunpack.c.h.b16 %v4957
    %v5681 = vunpack.c.l.b16 %v4958
    %v5682 = vunpack.c.h.b16 %v4958
    %v5683 = vunpack.c.l.b16 %v4959
    %v5684 = vunpack.c.h.b16 %v4959
    %v5685 = vunpack.c.l.b16 %v4960
    %v5686 = vunpack.c.h.b16 %v4960
    %v5687 = vunpack.c.l.b16 %v4961
    %v5688 = vunpack.c.h.b16 %v4961
    %v5689 = vunpack.c.l.b16 %v4962
    %v5690 = vunpack.c.h.b16 %v4962
    %v5691 = vunpack.c.l.b16 %v4963
    %v5692 = vunpack.c.h.b16 %v4963
    %v5693 = vunpack.c.l.b16 %v4964
    %v5694 = vunpack.c.h.b16 %v4964
    %v5695 = vunpack.c.l.b16 %v4965
    %v5696 = vunpack.c.h.b16 %v4965
    %v5697 = vunpack.c.l.b16 %v4966
    %v5698 = vunpack.c.h.b16 %v4966
    %v5699 = vunpack.c.l.b16 %v4967
    %v5700 = vunpack.c.h.b16 %v4967
    %v5701 = vunpack.c.l.b16 %v4968
    %v5702 = vunpack.c.h.b16 %v4968
    %v5703 = vunpack.c.l.b16 %v4969
    %v5704 = vunpack.c.h.b16 %v4969
    %v5705 = vunpack.c.l.b16 %v4970
    %v5706 = vunpack.c.h.b16 %v4970
    %v5707 = vunpack.c.l.b16 %v4971
    %v5708 = vunpack.c.h.b16 %v4971
    %v5709 = vunpack.c.l.b16 %v4972
    %v5710 = vunpack.c.h.b16 %v4972
    %v5711 = vunpack.c.l.b16 %v4973
    %v5712 = vunpack.c.h.b16 %v4973
    %v5713 = vunpack.c.l.b16 %v4974
    %v5714 = vunpack.c.h.b16 %v4974
    %v5715 = vunpack.c.l.b16 %v4975
    %v5716 = vunpack.c.h.b16 %v4975
    %v5717 = vunpack.c.l.b16 %v4976
    %v5718 = vunpack.c.h.b16 %v4976
    %v5719 = vunpack.c.l.b16 %v4977
    %v5720 = vunpack.c.h.b16 %v4977
    %v5721 = vunpack.c.l.b16 %v4978
    %v5722 = vunpack.c.h.b16 %v4978
    %v5723 = vunpack.c.l.b16 %v4979
    %v5724 = vunpack.c.h.b16 %v4979
    %v5725 = vunpack.c.l.b16 %v4980
    %v5726 = vunpack.c.h.b16 %v4980
    %v5727 = vunpack.c.l.b16 %v4981
    %v5728 = vunpack.c.h.b16 %v4981
    %v5729 = vunpack.c.l.b16 %v4982
    %v5730 = vunpack.c.h.b16 %v4982
    %v5731 = vunpack.c.l.b16 %v4983
    %v5732 = vunpack.c.h.b16 %v4983
    %v5733 = vunpack.c.l.b16 %v4984
    %v5734 = vunpack.c.h.b16 %v4984
    %v5735 = vunpack.c.l.b16 %v4985
    %v5736 = vunpack.c.h.b16 %v4985
    %v5737 = vunpack.c.l.b16 %v4986
    %v5738 = vunpack.c.h.b16 %v4986
    %v5739 = vunpack.c.l.b16 %v4987
    %v5740 = vunpack.c.h.b16 %v4987
    %v5741 = vunpack.c.l.b16 %v4988
    %v5742 = vunpack.c.h.b16 %v4988
    %v5743 = vunpack.c.l.b16 %v4989
    %v5744 = vunpack.c.h.b16 %v4989
    %v5745 = vunpack.c.l.b16 %v4990
    %v5746 = vunpack.c.h.b16 %v4990
    %v5747 = vunpack.c.l.b16 %v4991
    %v5748 = vunpack.c.h.b16 %v4991
    %v5749 = vunpack.c.l.b16 %v4992
    %v5750 = vunpack.c.h.b16 %v4992
    %v5751 = vunpack.c.l.b16 %v4993
    %v5752 = vunpack.c.h.b16 %v4993
    %v5753 = vunpack.c.l.b16 %v4994
    %v5754 = vunpack.c.h.b16 %v4994
    %v5755 = vunpack.c.l.b16 %v4995
    %v5756 = vunpack.c.h.b16 %v4995
    %v5757 = vunpack.c.l.b16 %v4996
    %v5758 = vunpack.c.h.b16 %v4996
    %v5759 = vunpack.c.l.b16 %v4997
    %v5760 = vunpack.c.h.b16 %v4997
    %v5761 = vunpack.c.l.b16 %v4998
    %v5762 = vunpack.c.h.b16 %v4998
    %v5763 = vunpack.c.l.b16 %v4999
    %v5764 = vunpack.c.h.b16 %v4999
    %v5765 = vunpack.c.l.b16 %v5000
    %v5766 = vunpack.c.h.b16 %v5000
    %v5767 = vunpack.c.l.b16 %v5001
    %v5768 = vunpack.c.h.b16 %v5001
    %v5769 = vunpack.c.l.b16 %v5002
    %v5770 = vunpack.c.h.b16 %v5002
    %v5771 = vunpack.c.l.b16 %v5003
    %v5772 = vunpack.c.h.b16 %v5003
    %v5773 = vunpack.c.l.b16 %v5004
    %v5774 = vunpack.c.h.b16 %v5004
    %v5775 = vunpack.c.l.b16 %v5005
    %v5776 = vunpack.c.h.b16 %v5005
    %v5777 = vunpack.c.l.b16 %v5006
    %v5778 = vunpack.c.h.b16 %v5006
    %v5779 = vunpack.c.l.b16 %v5007
    %v5780 = vunpack.c.h.b16 %v5007
    %v5781 = vunpack.c.l.b16 %v5008
    %v5782 = vunpack.c.h.b16 %v5008
    %v5783 = vunpack.c.l.b16 %v5009
    %v5784 = vunpack.c.h.b16 %v5009
    %v5785 = vunpack.c.l.b16 %v5010
    %v5786 = vunpack.c.h.b16 %v5010
    %v5787 = vunpack.c.l.b16 %v5011
    %v5788 = vunpack.c.h.b16 %v5011
    %v5789 = vunpack.c.l.b16 %v5012
    %v5790 = vunpack.c.h.b16 %v5012
    %v5791 = vunpack.c.l.b16 %v5013
    %v5792 = vunpack.c.h.b16 %v5013
    %v5793 = vunpack.c.l.b16 %v5014
    %v5794 = vunpack.c.h.b16 %v5014
    %v5795 = vunpack.c.l.b16 %v5015
    %v5796 = vunpack.c.h.b16 %v5015
    %v5797 = vunpack.c.l.b16 %v5016
    %v5798 = vunpack.c.h.b16 %v5016
    %v5799 = vunpack.c.l.b16 %v5017
    %v5800 = vunpack.c.h.b16 %v5017
    %v5801 = vunpack.c.l.b16 %v5018
    %v5802 = vunpack.c.h.b16 %v5018
    %v5803 = vunpack.c.l.b16 %v5019
    %v5804 = vunpack.c.h.b16 %v5019
    %v5805 = vunpack.c.l.b16 %v5020
    %v5806 = vunpack.c.h.b16 %v5020
    %v5807 = vunpack.c.l.b16 %v5021
    %v5808 = vunpack.c.h.b16 %v5021
    %v5809 = vunpack.c.l.b16 %v5022
    %v5810 = vunpack.c.h.b16 %v5022
    %v5811 = vunpack.c.l.b16 %v5023
    %v5812 = vunpack.c.h.b16 %v5023
    %v5813 = vunpack.c.l.b16 %v5024
    %v5814 = vunpack.c.h.b16 %v5024
    %v5815 = vunpack.c.l.b16 %v5025
    %v5816 = vunpack.c.h.b16 %v5025
    %v5817 = vunpack.c.l.b16 %v5026
    %v5818 = vunpack.c.h.b16 %v5026
    %v5819 = vunpack.c.l.b16 %v5027
    %v5820 = vunpack.c.h.b16 %v5027
    %v5821 = vunpack.c.l.b16 %v5028
    %v5822 = vunpack.c.h.b16 %v5028
    %v5823 = vunpack.c.l.b16 %v5029
    %v5824 = vunpack.c.h.b16 %v5029
    %v5825 = vunpack.c.l.b16 %v5030
    %v5826 = vunpack.c.h.b16 %v5030
    %v5827 = vunpack.c.l.b16 %v5031
    %v5828 = vunpack.c.h.b16 %v5031
    %v5829 = vunpack.c.l.b16 %v5032
    %v5830 = vunpack.c.h.b16 %v5032
    %v5831 = vunpack.c.l.b16 %v5033
    %v5832 = vunpack.c.h.b16 %v5033
    %v5833 = vunpack.c.l.b16 %v5034
    %v5834 = vunpack.c.h.b16 %v5034
    %v5835 = vunpack.c.l.b16 %v5035
    %v5836 = vunpack.c.h.b16 %v5035
    %v5837 = vunpack.c.l.b16 %v5036
    %v5838 = vunpack.c.h.b16 %v5036
    %v5839 = vunpack.c.l.b16 %v5037
    %v5840 = vunpack.c.h.b16 %v5037
    %v5841 = vunpack.c.l.b16 %v5038
    %v5842 = vunpack.c.h.b16 %v5038
    %v5843 = vunpack.c.l.b16 %v5039
    %v5844 = vunpack.c.h.b16 %v5039
    %v5845 = vunpack.c.l.b16 %v5040
    %v5846 = vunpack.c.h.b16 %v5040
    %v5847 = vunpack.c.l.b16 %v5041
    %v5848 = vunpack.c.h.b16 %v5041
    %v5849 = vunpack.c.l.b16 %v5042
    %v5850 = vunpack.c.h.b16 %v5042
    %v5851 = vunpack.c.l.b16 %v5043
    %v5852 = vunpack.c.h.b16 %v5043
    %v5853 = vunpack.c.l.b16 %v5044
    %v5854 = vunpack.c.h.b16 %v5044
    %v5855 = vunpack.c.l.b16 %v5045
    %v5856 = vunpack.c.h.b16 %v5045
    %v5857 = vunpack.c.l.b16 %v5046
    %v5858 = vunpack.c.h.b16 %v5046
    %v5859 = vunpack.c.l.b16 %v5047
    %v5860 = vunpack.c.h.b16 %v5047
    %v5861 = vunpack.c.l.b16 %v5048
    %v5862 = vunpack.c.h.b16 %v5048
    %v5863 = vunpack.c.l.b16 %v5049
    %v5864 = vunpack.c.h.b16 %v5049
    %v5865 = vunpack.c.l.b16 %v5050
    %v5866 = vunpack.c.h.b16 %v5050
    %v5867 = vunpack.c.l.b16 %v5051
    %v5868 = vunpack.c.h.b16 %v5051
    %v5869 = vunpack.c.l.b16 %v5052
    %v5870 = vunpack.c.h.b16 %v5052
    %v5871 = vunpack.c.l.b16 %v5053
    %v5872 = vunpack.c.h.b16 %v5053
    %v5873 = vunpack.c.l.b16 %v5054
    %v5874 = vunpack.c.h.b16 %v5054
    %v5875 = vunpack.c.l.b16 %v5055
    %v5876 = vunpack.c.h.b16 %v5055
    %v5877 = vunpack.c.l.b16 %v5056
    %v5878 = vunpack.c.h.b16 %v5056
    %v5879 = vunpack.c.l.b16 %v5057
    %v5880 = vunpack.c.h.b16 %v5057
    %v5881 = vunpack.c.l.b16 %v5058
    %v5882 = vunpack.c.h.b16 %v5058
    %v5883 = vunpack.c.l.b16 %v5059
    %v5884 = vunpack.c.h.b16 %v5059
    %v5885 = vunpack.c.l.b16 %v5060
    %v5886 = vunpack.c.h.b16 %v5060
    %v5887 = vunpack.c.l.b16 %v5061
    %v5888 = vunpack.c.h.b16 %v5061
    %v5889 = vunpack.c.l.b16 %v5062
    %v5890 = vunpack.c.h.b16 %v5062
    %v5891 = vunpack.c.l.b16 %v5063
    %v5892 = vunpack.c.h.b16 %v5063
    %v5893 = vunpack.c.l.b16 %v5064
    %v5894 = vunpack.c.h.b16 %v5064
    %v5895 = vunpack.c.l.b16 %v5065
    %v5896 = vunpack.c.h.b16 %v5065
    %v5897 = vunpack.c.l.b16 %v5066
    %v5898 = vunpack.c.h.b16 %v5066
    %v5899 = vunpack.c.l.b16 %v5067
    %v5900 = vunpack.c.h.b16 %v5067
    %v5901 = vunpack.c.l.b16 %v5068
    %v5902 = vunpack.c.h.b16 %v5068
    %v5903 = vunpack.c.l.b16 %v5069
    %v5904 = vunpack.c.h.b16 %v5069
    %v5905 = vunpack.c.l.b16 %v5070
    %v5906 = vunpack.c.h.b16 %v5070
    %v5907 = vunpack.c.l.b16 %v5071
    %v5908 = vunpack.c.h.b16 %v5071
    %v5909 = vunpack.c.l.b16 %v5072
    %v5910 = vunpack.c.h.b16 %v5072
    %v5911 = vunpack.c.l.b16 %v5073
    %v5912 = vunpack.c.h.b16 %v5073
    %v5913 = vunpack.c.l.b16 %v5074
    %v5914 = vunpack.c.h.b16 %v5074
    %v5915 = vunpack.c.l.b16 %v5075
    %v5916 = vunpack.c.h.b16 %v5075
    %v5917 = vunpack.c.l.b16 %v5076
    %v5918 = vunpack.c.h.b16 %v5076
    %v5919 = vunpack.c.l.b16 %v5077
    %v5920 = vunpack.c.h.b16 %v5077
    %v5921 = vunpack.c.l.b16 %v5078
    %v5922 = vunpack.c.h.b16 %v5078
    %v5923 = vunpack.c.l.b16 %v5079
    %v5924 = vunpack.c.h.b16 %v5079
    %v5925 = vunpack.c.l.b16 %v5080
    %v5926 = vunpack.c.h.b16 %v5080
    %v5927 = vunpack.c.l.b16 %v5081
    %v5928 = vunpack.c.h.b16 %v5081
    %v5929 = vunpack.c.l.b16 %v5082
    %v5930 = vunpack.c.h.b16 %v5082
    %v5931 = vunpack.c.l.b16 %v5083
    %v5932 = vunpack.c.h.b16 %v5083
    %v5933 = vunpack.c.l.b16 %v5084
    %v5934 = vunpack.c.h.b16 %v5084
    %v5935 = vunpack.c.l.b16 %v5085
    %v5936 = vunpack.c.h.b16 %v5085
    %v5937 = vunpack.c.l.b16 %v5086
    %v5938 = vunpack.c.h.b16 %v5086
    %v5939 = vunpack.c.l.b16 %v5087
    %v5940 = vunpack.c.h.b16 %v5087
    %v5941 = vunpack.c.l.b16 %v5088
    %v5942 = vunpack.c.h.b16 %v5088
    %v5943 = vunpack.c.l.b16 %v5089
    %v5944 = vunpack.c.h.b16 %v5089
    %v5945 = vunpack.c.l.b16 %v5090
    %v5946 = vunpack.c.h.b16 %v5090
    %v5947 = vunpack.c.l.b16 %v5091
    %v5948 = vunpack.c.h.b16 %v5091
    %v5949 = vunpack.c.l.b16 %v5092
    %v5950 = vunpack.c.h.b16 %v5092
    %v5951 = vunpack.c.l.b16 %v5093
    %v5952 = vunpack.c.h.b16 %v5093
    %v5953 = vunpack.c.l.b16 %v5094
    %v5954 = vunpack.c.h.b16 %v5094
    %v5955 = vunpack.c.l.b16 %v5095
    %v5956 = vunpack.c.h.b16 %v5095
    %v5957 = vunpack.c.l.b16 %v5096
    %v5958 = vunpack.c.h.b16 %v5096
    %v5959 = vunpack.c.l.b16 %v5097
    %v5960 = vunpack.c.h.b16 %v5097
    %v5961 = vunpack.c.l.b16 %v5098
    %v5962 = vunpack.c.h.b16 %v5098
    %v5963 = vunpack.c.l.b16 %v5099
    %v5964 = vunpack.c.h.b16 %v5099
    %v5965 = vunpack.c.l.b16 %v5100
    %v5966 = vunpack.c.h.b16 %v5100
    %v5967 = vunpack.c.l.b16 %v5101
    %v5968 = vunpack.c.h.b16 %v5101
    %v5969 = vunpack.c.l.b16 %v5102
    %v5970 = vunpack.c.h.b16 %v5102
    %v5971 = vunpack.c.l.b16 %v5103
    %v5972 = vunpack.c.h.b16 %v5103
    %v5973 = vunpack.c.l.b16 %v5104
    %v5974 = vunpack.c.h.b16 %v5104
    %v5975 = vunpack.c.l.b16 %v5105
    %v5976 = vunpack.c.h.b16 %v5105
    %v5977 = vunpack.c.l.b16 %v5106
    %v5978 = vunpack.c.h.b16 %v5106
    %v5979 = vunpack.c.l.b16 %v5107
    %v5980 = vunpack.c.h.b16 %v5107
    %v5981 = vunpack.c.l.b16 %v5108
    %v5982 = vunpack.c.h.b16 %v5108
    %v5983 = vunpack.c.l.b16 %v5109
    %v5984 = vunpack.c.h.b16 %v5109
    %v5985 = vunpack.c.l.b16 %v5110
    %v5986 = vunpack.c.h.b16 %v5110
    %v5987 = vunpack.c.l.b16 %v5111
    %v5988 = vunpack.c.h.b16 %v5111
    %v5989 = vunpack.c.l.b16 %v5112
    %v5990 = vunpack.c.h.b16 %v5112
    %v5991 = vunpack.c.l.b16 %v5113
    %v5992 = vunpack.c.h.b16 %v5113
    %v5993 = vunpack.c.l.b16 %v5114
    %v5994 = vunpack.c.h.b16 %v5114
    %v5995 = vunpack.c.l.b16 %v5115
    %v5996 = vunpack.c.h.b16 %v5115
    %v5997 = vunpack.c.l.b16 %v5116
    %v5998 = vunpack.c.h.b16 %v5116
    %v5999 = vunpack.c.l.b16 %v5117
    %v6000 = vunpack.c.h.b16 %v5117
    %v6001 = vunpack.c.l.b16 %v5118
    %v6002 = vunpack.c.h.b16 %v5118
    %v6003 = vunpack.c.l.b16 %v5119
    %v6004 = vunpack.c.h.b16 %v5119
    %v6005 = vunpack.c.l.b16 %v5120
    %v6006 = vunpack.c.h.b16 %v5120
    %v6007 = vpack.c.b16 %v5435, %v5431
    %v6008 = vpack.c.b16 %v5436, %v5432
    %v6009 = vpack.c.b16 %v5437, %v5433
    %v6010 = vpack.c.b16 %v5438, %v5434
    %v6011 = vpack.c.b16 %v5443, %v5439
    %v6012 = vpack.c.b16 %v5444, %v5440
    %v6013 = vpack.c.b16 %v5445, %v5441
    %v6014 = vpack.c.b16 %v5446, %v5442
    %v6015 = vpack.c.b16 %v5451, %v5447
    %v6016 = vpack.c.b16 %v5452, %v5448
    %v6017 = vpack.c.b16 %v5453, %v5449
    %v6018 = vpack.c.b16 %v5454, %v5450
    %v6019 = vpack.c.b16 %v5459, %v5455
    %v6020 = vpack.c.b16 %v5460, %v5456
    %v6021 = vpack.c.b16 %v5461, %v5457
    %v6022 = vpack.c.b16 %v5462, %v5458
    %v6023 = vpack.c.b16 %v5467, %v5463
    %v6024 = vpack.c.b16 %v5468, %v5464
    %v6025 = vpack.c.b16 %v5469, %v5465
    %v6026 = vpack.c.b16 %v5470, %v5466
    %v6027 = vpack.c.b16 %v5475, %v5471
    %v6028 = vpack.c.b16 %v5476, %v5472
    %v6029 = vpack.c.b16 %v5477, %v5473
    %v6030 = vpack.c.b16 %v5478, %v5474
    %v6031 = vpack.c.b16 %v5483, %v5479
    %v6032 = vpack.c.b16 %v5484, %v5480
    %v6033 = vpack.c.b16 %v5485, %v5481
    %v6034 = vpack.c.b16 %v5486, %v5482
    %v6035 = vpack.c.b16 %v5491, %v5487
    %v6036 = vpack.c.b16 %v5492, %v5488
    %v6037 = vpack.c.b16 %v5493, %v5489
    %v6038 = vpack.c.b16 %v5494, %v5490
    %v6039 = vpack.c.b16 %v5499, %v5495
    %v6040 = vpack.c.b16 %v5500, %v5496
    %v6041 = vpack.c.b16 %v5501, %v5497
    %v6042 = vpack.c.b16 %v5502, %v5498
    %v6043 = vpack.c.b16 %v5507, %v5503
    %v6044 = vpack.c.b16 %v5508, %v5504
    %v6045 = vpack.c.b16 %v5509, %v5505
    %v6046 = vpack.c.b16 %v5510, %v5506
    %v6047 = vpack.c.b16 %v5515, %v5511
    %v6048 = vpack.c.b16 %v5516, %v5512
    %v6049 = vpack.c.b16 %v5517, %v5513
    %v6050 = vpack.c.b16 %v5518, %v5514
    %v6051 = vpack.c.b16 %v5523, %v5519
    %v6052 = vpack.c.b16 %v5524, %v5520
    %v6053 = vpack.c.b16 %v5525, %v5521
    %v6054 = vpack.c.b16 %v5526, %v5522
    %v6055 = vpack.c.b16 %v5531, %v5527
    %v6056 = vpack.c.b16 %v5532, %v5528
    %v6057 = vpack.c.b16 %v5533, %v5529
    %v6058 = vpack.c.b16 %v5534, %v5530
    %v6059 = vpack.c.b16 %v5539, %v5535
    %v6060 = vpack.c.b16 %v5540, %v5536
    %v6061 = vpack.c.b16 %v5541, %v5537
    %v6062 = vpack.c.b16 %v5542, %v5538
    %v6063 = vpack.c.b16 %v5547, %v5543
    %v6064 = vpack.c.b16 %v5548, %v5544
    %v6065 = vpack.c.b16 %v5549, %v5545
    %v6066 = vpack.c.b16 %v5550, %v5546
    %v6067 = vpack.c.b16 %v5555, %v5551
    %v6068 = vpack.c.b16 %v5556, %v5552
    %v6069 = vpack.c.b16 %v5557, %v5553
    %v6070 = vpack.c.b16 %v5558, %v5554
    %v6071 = vpack.c.b16 %v5563, %v5559
    %v6072 = vpack.c.b16 %v5564, %v5560
    %v6073 = vpack.c.b16 %v5565, %v5561
    %v6074 = vpack.c.b16 %v5566, %v5562
    %v6075 = vpack.c.b16 %v5571, %v5567
    %v6076 = vpack.c.b16 %v5572, %v5568
    %v6077 = vpack.c.b16 %v5573, %v5569
    %v6078 = vpack.c.b16 %v5574, %v5570
    %v6079 = vpack.c.b16 %v5579, %v5575
    %v6080 = vpack.c.b16 %v5580, %v5576
    %v6081 = vpack.c.b16 %v5581, %v5577
    %v6082 = vpack.c.b16 %v5582, %v5578
    %v6083 = vpack.c.b16 %v5587, %v5583
    %v6084 = vpack.c.b16 %v5588, %v5584
    %v6085 = vpack.c.b16 %v5589, %v5585
    %v6086 = vpack.c.b16 %v5590, %v5586
    %v6087 = vpack.c.b16 %v5595, %v5591
    %v6088 = vpack.c.b16 %v5596, %v5592
    %v6089 = vpack.c.b16 %v5597, %v5593
    %v6090 = vpack.c.b16 %v5598, %v5594
    %v6091 = vpack.c.b16 %v5603, %v5599
    %v6092 = vpack.c.b16 %v5604, %v5600
    %v6093 = vpack.c.b16 %v5605, %v5601
    %v6094 = vpack.c.b16 %v5606, %v5602
    %v6095 = vpack.c.b16 %v5611, %v5607
    %v6096 = vpack.c.b16 %v5612, %v5608
    %v6097 = vpack.c.b16 %v5613, %v5609
    %v6098 = vpack.c.b16 %v5614, %v5610
    %v6099 = vpack.c.b16 %v5619, %v5615
    %v6100 = vpack.c.b16 %v5620, %v5616
    %v6101 = vpack.c.b16 %v5621, %v5617
    %v6102 = vpack.c.b16 %v5622, %v5618
    %v6103 = vpack.c.b16 %v5627, %v5623
    %v6104 = vpack.c.b16 %v5628, %v5624
    %v6105 = vpack.c.b16 %v5629, %v5625
    %v6106 = vpack.c.b16 %v5630, %v5626
    %v6107 = vpack.c.b16 %v5635, %v5631
    %v6108 = vpack.c.b16 %v5636, %v5632
    %v6109 = vpack.c.b16 %v5637, %v5633
    %v6110 = vpack.c.b16 %v5638, %v5634
    %v6111 = vpack.c.b16 %v5643, %v5639
    %v6112 = vpack.c.b16 %v5644, %v5640
    %v6113 = vpack.c.b16 %v5645, %v5641
    %v6114 = vpack.c.b16 %v5646, %v5642
    %v6115 = vpack.c.b16 %v5651, %v5647
    %v6116 = vpack.c.b16 %v5652, %v5648
    %v6117 = vpack.c.b16 %v5653, %v5649
    %v6118 = vpack.c.b16 %v5654, %v5650
    %v6119 = vpack.c.b16 %v5659, %v5655
    %v6120 = vpack.c.b16 %v5660, %v5656
    %v6121 = vpack.c.b16 %v5661, %v5657
    %v6122 = vpack.c.b16 %v5662, %v5658
    %v6123 = vpack.c.b16 %v5667, %v5663
    %v6124 = vpack.c.b16 %v5668, %v5664
    %v6125 = vpack.c.b16 %v5669, %v5665
    %v6126 = vpack.c.b16 %v5670, %v5666
    %v6127 = vpack.c.b16 %v5675, %v5671
    %v6128 = vpack.c.b16 %v5676, %v5672
    %v6129 = vpack.c.b16 %v5677, %v5673
    %v6130 = vpack.c.b16 %v5678, %v5674
    %v6131 = vpack.c.b16 %v5683, %v5679
    %v6132 = vpack.c.b16 %v5684, %v5680
    %v6133 = vpack.c.b16 %v5685, %v5681
    %v6134 = vpack.c.b16 %v5686, %v5682
    %v6135 = vpack.c.b16 %v5691, %v5687
    %v6136 = vpack.c.b16 %v5692, %v5688
    %v6137 = vpack.c.b16 %v5693, %v5689
    %v6138 = vpack.c.b16 %v5694, %v5690
    %v6139 = vpack.c.b16 %v5699, %v5695
    %v6140 = vpack.c.b16 %v5700, %v5696
    %v6141 = vpack.c.b16 %v5701, %v5697
    %v6142 = vpack.c.b16 %v5702, %v5698
    %v6143 = vpack.c.b16 %v5707, %v5703
    %v6144 = vpack.c.b16 %v5708, %v5704
    %v6145 = vpack.c.b16 %v5709, %v5705
    %v6146 = vpack.c.b16 %v5710, %v5706
    %v6147 = vpack.c.b16 %v5715, %v5711
    %v6148 = vpack.c.b16 %v5716, %v5712
    %v6149 = vpack.c.b16 %v5717, %v5713
    %v6150 = vpack.c.b16 %v5718, %v5714
    %v6151 = vpack.c.b16 %v5723, %v5719
    %v6152 = vpack.c.b16 %v5724, %v5720
    %v6153 = vpack.c.b16 %v5725, %v5721
    %v6154 = vpack.c.b16 %v5726, %v5722
    %v6155 = vpack.c.b16 %v5731, %v5727
    %v6156 = vpack.c.b16 %v5732, %v5728
    %v6157 = vpack.c.b16 %v5733, %v5729
    %v6158 = vpack.c.b16 %v5734, %v5730
    %v6159 = vpack.c.b16 %v5739, %v5735
    %v6160 = vpack.c.b16 %v5740, %v5736
    %v6161 = vpack.c.b16 %v5741, %v5737
    %v6162 = vpack.c.b16 %v5742, %v5738
    %v6163 = vpack.c.b16 %v5747, %v5743
    %v6164 = vpack.c.b16 %v5748, %v5744
    %v6165 = vpack.c.b16 %v5749, %v5745
    %v6166 = vpack.c.b16 %v5750, %v5746
    %v6167 = vpack.c.b16 %v5755, %v5751
    %v6168 = vpack.c.b16 %v5756, %v5752
    %v6169 = vpack.c.b16 %v5757, %v5753
    %v6170 = vpack.c.b16 %v5758, %v5754
    %v6171 = vpack.c.b16 %v5763, %v5759
    %v6172 = vpack.c.b16 %v5764, %v5760
    %v6173 = vpack.c.b16 %v5765, %v5761
    %v6174 = vpack.c.b16 %v5766, %v5762
    %v6175 = vpack.c.b16 %v5771, %v5767
    %v6176 = vpack.c.b16 %v5772, %v5768
    %v6177 = vpack.c.b16 %v5773, %v5769
    %v6178 = vpack.c.b16 %v5774, %v5770
    %v6179 = vpack.c.b16 %v5779, %v5775
    %v6180 = vpack.c.b16 %v5780, %v5776
    %v6181 = vpack.c.b16 %v5781, %v5777
    %v6182 = vpack.c.b16 %v5782, %v5778
    %v6183 = vpack.c.b16 %v5787, %v5783
    %v6184 = vpack.c.b16 %v5788, %v5784
    %v6185 = vpack.c.b16 %v5789, %v5785
    %v6186 = vpack.c.b16 %v5790, %v5786
    %v6187 = vpack.c.b16 %v5795, %v5791
    %v6188 = vpack.c.b16 %v5796, %v5792
    %v6189 = vpack.c.b16 %v5797, %v5793
    %v6190 = vpack.c.b16 %v5798, %v5794
    %v6191 = vpack.c.b16 %v5803, %v5799
    %v6192 = vpack.c.b16 %v5804, %v5800
    %v6193 = vpack.c.b16 %v5805, %v5801
    %v6194 = vpack.c.b16 %v5806, %v5802
    %v6195 = vpack.c.b16 %v5811, %v5807
    %v6196 = vpack.c.b16 %v5812, %v5808
    %v6197 = vpack.c.b16 %v5813, %v5809
    %v6198 = vpack.c.b16 %v5814, %v5810
    %v6199 = vpack.c.b16 %v5819, %v5815
    %v6200 = vpack.c.b16 %v5820, %v5816
    %v6201 = vpack.c.b16 %v5821, %v5817
    %v6202 = vpack.c.b16 %v5822, %v5818
    %v6203 = vpack.c.b16 %v5827, %v5823
    %v6204 = vpack.c.b16 %v5828, %v5824
    %v6205 = vpack.c.b16 %v5829, %v5825
    %v6206 = vpack.c.b16 %v5830, %v5826
    %v6207 = vpack.c.b16 %v5835, %v5831
    %v6208 = vpack.c.b16 %v5836, %v5832
    %v6209 = vpack.c.b16 %v5837, %v5833
    %v6210 = vpack.c.b16 %v5838, %v5834
    %v6211 = vpack.c.b16 %v5843, %v5839
    %v6212 = vpack.c.b16 %v5844, %v5840
    %v6213 = vpack.c.b16 %v5845, %v5841
    %v6214 = vpack.c.b16 %v5846, %v5842
    %v6215 = vpack.c.b16 %v5851, %v5847
    %v6216 = vpack.c.b16 %v5852, %v5848
    %v6217 = vpack.c.b16 %v5853, %v5849
    %v6218 = vpack.c.b16 %v5854, %v5850
    %v6219 = vpack.c.b16 %v5859, %v5855
    %v6220 = vpack.c.b16 %v5860, %v5856
    %v6221 = vpack.c.b16 %v5861, %v5857
    %v6222 = vpack.c.b16 %v5862, %v5858
    %v6223 = vpack.c.b16 %v5867, %v5863
    %v6224 = vpack.c.b16 %v5868, %v5864
    %v6225 = vpack.c.b16 %v5869, %v5865
    %v6226 = vpack.c.b16 %v5870, %v5866
    %v6227 = vpack.c.b16 %v5875, %v5871
    %v6228 = vpack.c.b16 %v5876, %v5872
    %v6229 = vpack.c.b16 %v5877, %v5873
    %v6230 = vpack.c.b16 %v5878, %v5874
    %v6231 = vpack.c.b16 %v5883, %v5879
    %v6232 = vpack.c.b16 %v5884, %v5880
    %v6233 = vpack.c.b16 %v5885, %v5881
    %v6234 = vpack.c.b16 %v5886, %v5882
    %v6235 = vpack.c.b16 %v5891, %v5887
    %v6236 = vpack.c.b16 %v5892, %v5888
    %v6237 = vpack.c.b16 %v5893, %v5889
    %v6238 = vpack.c.b16 %v5894, %v5890
    %v6239 = vpack.c.b16 %v5899, %v5895
    %v6240 = vpack.c.b16 %v5900, %v5896
    %v6241 = vpack.c.b16 %v5901, %v5897
    %v6242 = vpack.c.b16 %v5902, %v5898
    %v6243 = vpack.c.b16 %v5907, %v5903
    %v6244 = vpack.c.b16 %v5908, %v5904
    %v6245 = vpack.c.b16 %v5909, %v5905
    %v6246 = vpack.c.b16 %v5910, %v5906
    %v6247 = vpack.c.b16 %v5915, %v5911
    %v6248 = vpack.c.b16 %v5916, %v5912
    %v6249 = vpack.c.b16 %v5917, %v5913
    %v6250 = vpack.c.b16 %v5918, %v5914
    %v6251 = vpack.c.b16 %v5923, %v5919
    %v6252 = vpack.c.b16 %v5924, %v5920
    %v6253 = vpack.c.b16 %v5925, %v5921
    %v6254 = vpack.c.b16 %v5926, %v5922
    %v6255 = vpack.c.b16 %v5931, %v5927
    %v6256 = vpack.c.b16 %v5932, %v5928
    %v6257 = vpack.c.b16 %v5933, %v5929
    %v6258 = vpack.c.b16 %v5934, %v5930
    %v6259 = vpack.c.b16 %v5939, %v5935
    %v6260 = vpack.c.b16 %v5940, %v5936
    %v6261 = vpack.c.b16 %v5941, %v5937
    %v6262 = vpack.c.b16 %v5942, %v5938
    %v6263 = vpack.c.b16 %v5947, %v5943
    %v6264 = vpack.c.b16 %v5948, %v5944
    %v6265 = vpack.c.b16 %v5949, %v5945
    %v6266 = vpack.c.b16 %v5950, %v5946
    %v6267 = vpack.c.b16 %v5955, %v5951
    %v6268 = vpack.c.b16 %v5956, %v5952
    %v6269 = vpack.c.b16 %v5957, %v5953
    %v6270 = vpack.c.b16 %v5958, %v5954
    %v6271 = vpack.c.b16 %v5963, %v5959
    %v6272 = vpack.c.b16 %v5964, %v5960
    %v6273 = vpack.c.b16 %v5965, %v5961
    %v6274 = vpack.c.b16 %v5966, %v5962
    %v6275 = vpack.c.b16 %v5971, %v5967
    %v6276 = vpack.c.b16 %v5972, %v5968
    %v6277 = vpack.c.b16 %v5973, %v5969
    %v6278 = vpack.c.b16 %v5974, %v5970
    %v6279 = vpack.c.b16 %v5979, %v5975
    %v6280 = vpack.c.b16 %v5980, %v5976
    %v6281 = vpack.c.b16 %v5981, %v5977
    %v6282 = vpack.c.b16 %v5982, %v5978
    %v6283 = vpack.c.b16 %v5987, %v5983
    %v6284 = vpack.c.b16 %v5988, %v5984
    %v6285 = vpack.c.b16 %v5989, %v5985
    %v6286 = vpack.c.b16 %v5990, %v5986
    %v6287 = vpack.c.b16 %v5995, %v5991
    %v6288 = vpack.c.b16 %v5996, %v5992
    %v6289 = vpack.c.b16 %v5997, %v5993
    %v6290 = vpack.c.b16 %v5998, %v5994
    %v6291 = vpack.c.b16 %v6003, %v5999
    %v6292 = vpack.c.b16 %v6004, %v6000
    %v6293 = vpack.c.b16 %v6005, %v6001
    %v6294 = vpack.c.b16 %v6006, %v6002
    %6583 = vmatprep.subr.bf16.mxu0 %v6008
    %6584 = vmatpush1.bf16.msra.mxu0 %v6007
    %6585 = vmatprep.subr.bf16.mxu0 %v6012
    %6586 = vmatpush1.bf16.msra.mxu0 %v6011
    %6587 = vmatprep.subr.bf16.mxu0 %v6016
    %6588 = vmatpush1.bf16.msra.mxu0 %v6015
    %6589 = vmatprep.subr.bf16.mxu0 %v6020
    %6590 = vmatpush1.bf16.msra.mxu0 %v6019
    %6591 = vmatprep.subr.bf16.mxu0 %v6024
    %6592 = vmatpush1.bf16.msra.mxu0 %v6023
    %6593 = vmatprep.subr.bf16.mxu0 %v6028
    %6594 = vmatpush1.bf16.msra.mxu0 %v6027
    %6595 = vmatprep.subr.bf16.mxu0 %v6032
    %6596 = vmatpush1.bf16.msra.mxu0 %v6031
    %6597 = vmatprep.subr.bf16.mxu0 %v6036
    %6598 = vmatpush1.bf16.msra.mxu0 %v6035
    %6599 = vmatprep.subr.bf16.mxu0 %v6040
    %6600 = vmatpush1.bf16.msra.mxu0 %v6039
    %6601 = vmatprep.subr.bf16.mxu0 %v6044
    %6602 = vmatpush1.bf16.msra.mxu0 %v6043
    %6603 = vmatprep.subr.bf16.mxu0 %v6048
    %6604 = vmatpush1.bf16.msra.mxu0 %v6047
    %6605 = vmatprep.subr.bf16.mxu0 %v6052
    %6606 = vmatpush1.bf16.msra.mxu0 %v6051
    %6607 = vmatprep.subr.bf16.mxu0 %v6056
    %6608 = vmatpush1.bf16.msra.mxu0 %v6055
    %6609 = vmatprep.subr.bf16.mxu0 %v6060
    %6610 = vmatpush1.bf16.msra.mxu0 %v6059
    %6611 = vmatprep.subr.bf16.mxu0 %v6064
    %6612 = vmatpush1.bf16.msra.mxu0 %v6063
    %6613 = vmatprep.subr.bf16.mxu0 %v6068
    %6614 = vmatpush1.bf16.msra.mxu0 %v6067
    %6615 = vmatprep.mubr.bf16.mxu0 %v4546
    %6616 = vmatmul.mubr.bf16.gmra.mrb[0].mxu0 %v4545
    %v6617 = vpop.f32.mrb[0].mxu0
    %v6618 = vadd.f32 %v5126, %v6617
    %v6619 = vpop.f32.mrb[0].mxu0
    %v6620 = vadd.f32 %v5130, %v6619
    %v6621 = vpop.f32.mrb[0].mxu0
    %v6622 = vadd.f32 %v5126, %v6621
    %v6623 = vpop.f32.mrb[0].mxu0
    %v6624 = vadd.f32 %v5130, %v6623
    %6625 = vmatprep.mubr.bf16.mxu0 %v4555
    %6626 = vmatmul.mubr.bf16.gmra.mrb[0].mxu0 %v4554
    %v6627 = vpop.f32.mrb[0].mxu0
    %v6628 = vadd.f32 %v5126, %v6627
    %v6629 = vpop.f32.mrb[0].mxu0
    %v6630 = vadd.f32 %v5130, %v6629
    %v6631 = vpop.f32.mrb[0].mxu0
    %v6632 = vadd.f32 %v5126, %v6631
    %v6633 = vpop.f32.mrb[0].mxu0
    %v6634 = vadd.f32 %v5130, %v6633
    %6635 = vmatprep.mubr.bf16.mxu0 %v4564
    %6636 = vmatmul.mubr.bf16.gmra.mrb[0].mxu0 %v4563
    %v6637 = vpop.f32.mrb[0].mxu0
    %v6638 = vadd.f32 %v5126, %v6637
    %v6639 = vpop.f32.mrb[0].mxu0
    %v6640 = vadd.f32 %v5130, %v6639
    %v6641 = vpop.f32.mrb[0].mxu0
    %v6642 = vadd.f32 %v5126, %v6641
    %v6643 = vpop.f32.mrb[0].mxu0
    %v6644 = vadd.f32 %v5130, %v6643
    %6645 = vmatprep.mubr.bf16.mxu0 %v4573
    %6646 = vmatmul.mubr.bf16.gmra.mrb[0].mxu0 %v4572
    %v6647 = vpop.f32.mrb[0].mxu0
    %v6648 = vadd.f32 %v5126, %v6647
    %v6649 = vpop.f32.mrb[0].mxu0
    %v6650 = vadd.f32 %v5130, %v6649
    %v6651 = vpop.f32.mrb[0].mxu0
    %v6652 = vadd.f32 %v5126, %v6651
    %v6653 = vpop.f32.mrb[0].mxu0
    %v6654 = vadd.f32 %v5130, %v6653
    %6655 = vmatprep.mubr.bf16.mxu0 %v4582
    %6656 = vmatmul.mubr.bf16.gmra.mrb[0].mxu0 %v4581
    %v6657 = vpop.f32.mrb[0].mxu0
    %v6658 = vadd.f32 %v5126, %v6657
    %v6659 = vpop.f32.mrb[0].mxu0
    %v6660 = vadd.f32 %v5130, %v6659
    %v6661 = vpop.f32.mrb[0].mxu0
    %v6662 = vadd.f32 %v5126, %v6661
    %v6663 = vpop.f32.mrb[0].mxu0
    %v6664 = vadd.f32 %v5130, %v6663
    %6665 = vmatprep.mubr.bf16.mxu0 %v4591
    %6666 = vmatmul.mubr.bf16.gmra.mrb[0].mxu0 %v4590
    %v6667 = vpop.f32.mrb[0].mxu0
    %v6668 = vadd.f32 %v5126, %v6667
    %v6669 = vpop.f32.mrb[0].mxu0
    %v6670 = vadd.f32 %v5130, %v6669
    %v6671 = vpop.f32.mrb[0].mxu0
    %v6672 = vadd.f32 %v5126, %v6671
    %v6673 = vpop.f32.mrb[0].mxu0
    %v6674 = vadd.f32 %v5130, %v6673
    %6675 = vmatprep.mubr.bf16.mxu0 %v4600
    %6676 = vmatmul.mubr.bf16.gmra.mrb[0].mxu0 %v4599
    %v6677 = vpop.f32.mrb[0].mxu0
    %v6678 = vadd.f32 %v5126, %v6677
    %v6679 = vpop.f32.mrb[0].mxu0
    %v6680 = vadd.f32 %v5130, %v6679
    %v6681 = vpop.f32.mrb[0].mxu0
    %v6682 = vadd.f32 %v5126, %v6681
    %v6683 = vpop.f32.mrb[0].mxu0
    %v6684 = vadd.f32 %v5130, %v6683
    %6685 = vmatprep.mubr.bf16.mxu0 %v4609
    %6686 = vmatmul.mubr.bf16.gmra.mrb[0].mxu0 %v4608
    %v6687 = vpop.f32.mrb[0].mxu0
    %v6688 = vadd.f32 %v5126, %v6687
    %v6689 = vpop.f32.mrb[0].mxu0
    %v6690 = vadd.f32 %v5130, %v6689
    %v6691 = vpop.f32.mrb[0].mxu0
    %v6692 = vadd.f32 %v5126, %v6691
    %v6693 = vpop.f32.mrb[0].mxu0
    %v6694 = vadd.f32 %v5130, %v6693
    %6695 = vmatprep.mubr.bf16.mxu0 %v4618
    %6696 = vmatmul.mubr.bf16.gmra.mrb[0].mxu0 %v4617
    %v6697 = vpop.f32.mrb[0].mxu0
    %v6698 = vadd.f32 %v5126, %v6697
    %v6699 = vpop.f32.mrb[0].mxu0
    %v6700 = vadd.f32 %v5130, %v6699
    %v6701 = vpop.f32.mrb[0].mxu0
    %v6702 = vadd.f32 %v5126, %v6701
    %v6703 = vpop.f32.mrb[0].mxu0
    %v6704 = vadd.f32 %v5130, %v6703
    %6705 = vmatprep.mubr.bf16.mxu0 %v4627
    %6706 = vmatmul.mubr.bf16.gmra.mrb[0].mxu0 %v4626
    %v6707 = vpop.f32.mrb[0].mxu0
    %v6708 = vadd.f32 %v5126, %v6707
    %v6709 = vpop.f32.mrb[0].mxu0
    %v6710 = vadd.f32 %v5130, %v6709
    %v6711 = vpop.f32.mrb[0].mxu0
    %v6712 = vadd.f32 %v5126, %v6711
    %v6713 = vpop.f32.mrb[0].mxu0
    %v6714 = vadd.f32 %v5130, %v6713
    %6715 = vmatprep.mubr.bf16.mxu0 %v4636
    %6716 = vmatmul.mubr.bf16.gmra.mrb[0].mxu0 %v4635
    %v6717 = vpop.f32.mrb[0].mxu0
    %v6718 = vadd.f32 %v5126, %v6717
    %v6719 = vpop.f32.mrb[0].mxu0
    %v6720 = vadd.f32 %v5130, %v6719
    %v6721 = vpop.f32.mrb[0].mxu0
    %v6722 = vadd.f32 %v5126, %v6721
    %v6723 = vpop.f32.mrb[0].mxu0
    %v6724 = vadd.f32 %v5130, %v6723
    %6725 = vmatprep.mubr.bf16.mxu0 %v4645
    %6726 = vmatmul.mubr.bf16.gmra.mrb[0].mxu0 %v4644
    %v6727 = vpop.f32.mrb[0].mxu0
    %v6728 = vadd.f32 %v5126, %v6727
    %v6729 = vpop.f32.mrb[0].mxu0
    %v6730 = vadd.f32 %v5130, %v6729
    %v6731 = vpop.f32.mrb[0].mxu0
    %v6732 = vadd.f32 %v5126, %v6731
    %v6733 = vpop.f32.mrb[0].mxu0
    %v6734 = vadd.f32 %v5130, %v6733
    %6735 = vmatprep.mubr.bf16.mxu0 %v4654
    %6736 = vmatmul.mubr.bf16.gmra.mrb[0].mxu0 %v4653
    %v6737 = vpop.f32.mrb[0].mxu0
    %v6738 = vadd.f32 %v5126, %v6737
    %v6739 = vpop.f32.mrb[0].mxu0
    %v6740 = vadd.f32 %v5130, %v6739
    %v6741 = vpop.f32.mrb[0].mxu0
    %v6742 = vadd.f32 %v5126, %v6741
    %v6743 = vpop.f32.mrb[0].mxu0
    %v6744 = vadd.f32 %v5130, %v6743
    %6745 = vmatprep.mubr.bf16.mxu0 %v4663
    %6746 = vmatmul.mubr.bf16.gmra.mrb[0].mxu0 %v4662
    %v6747 = vpop.f32.mrb[0].mxu0
    %v6748 = vadd.f32 %v5126, %v6747
    %v6749 = vpop.f32.mrb[0].mxu0
    %v6750 = vadd.f32 %v5130, %v6749
    %v6751 = vpop.f32.mrb[0].mxu0
    %v6752 = vadd.f32 %v5126, %v6751
    %v6753 = vpop.f32.mrb[0].mxu0
    %v6754 = vadd.f32 %v5130, %v6753
    %6755 = vmatprep.mubr.bf16.mxu0 %v4672
    %6756 = vmatmul.mubr.bf16.gmra.mrb[0].mxu0 %v4671
    %v6757 = vpop.f32.mrb[0].mxu0
    %v6758 = vadd.f32 %v5126, %v6757
    %v6759 = vpop.f32.mrb[0].mxu0
    %v6760 = vadd.f32 %v5130, %v6759
    %v6761 = vpop.f32.mrb[0].mxu0
    %v6762 = vadd.f32 %v5126, %v6761
    %v6763 = vpop.f32.mrb[0].mxu0
    %v6764 = vadd.f32 %v5130, %v6763
    %6765 = vmatprep.mubr.bf16.mxu0 %v4681
    %6766 = vmatmul.mubr.bf16.gmra.mrb[0].mxu0 %v4680
    %v6767 = vpop.f32.mrb[0].mxu0
    %v6768 = vadd.f32 %v5126, %v6767
    %v6769 = vpop.f32.mrb[0].mxu0
    %v6770 = vadd.f32 %v5130, %v6769
    %v6771 = vpop.f32.mrb[0].mxu0
    %v6772 = vadd.f32 %v5126, %v6771
    %v6773 = vpop.f32.mrb[0].mxu0
    %v6774 = vadd.f32 %v5130, %v6773
    %6775 = vmatprep.mubr.bf16.mxu0 %v4690
    %6776 = vmatmul.mubr.bf16.gmra.mrb[0].mxu0 %v4689
    %v6777 = vpop.f32.mrb[0].mxu0
    %v6778 = vadd.f32 %v5126, %v6777
    %v6779 = vpop.f32.mrb[0].mxu0
    %v6780 = vadd.f32 %v5130, %v6779
    %v6781 = vpop.f32.mrb[0].mxu0
    %v6782 = vadd.f32 %v5126, %v6781
    %v6783 = vpop.f32.mrb[0].mxu0
    %v6784 = vadd.f32 %v5130, %v6783
    %6785 = vmatprep.mubr.bf16.mxu0 %v4699
    %6786 = vmatmul.mubr.bf16.gmra.mrb[0].mxu0 %v4698
    %v6787 = vpop.f32.mrb[0].mxu0
    %v6788 = vadd.f32 %v5126, %v6787
    %v6789 = vpop.f32.mrb[0].mxu0
    %v6790 = vadd.f32 %v5130, %v6789
    %v6791 = vpop.f32.mrb[0].mxu0
    %v6792 = vadd.f32 %v5126, %v6791
    %v6793 = vpop.f32.mrb[0].mxu0
    %v6794 = vadd.f32 %v5130, %v6793
    %6795 = vmatprep.mubr.bf16.mxu0 %v4708
    %6796 = vmatmul.mubr.bf16.gmra.mrb[0].mxu0 %v4707
    %v6797 = vpop.f32.mrb[0].mxu0
    %v6798 = vadd.f32 %v5126, %v6797
    %v6799 = vpop.f32.mrb[0].mxu0
    %v6800 = vadd.f32 %v5130, %v6799
    %v6801 = vpop.f32.mrb[0].mxu0
    %v6802 = vadd.f32 %v5126, %v6801
    %v6803 = vpop.f32.mrb[0].mxu0
    %v6804 = vadd.f32 %v5130, %v6803
    %6805 = vmatprep.mubr.bf16.mxu0 %v4717
    %6806 = vmatmul.mubr.bf16.gmra.mrb[0].mxu0 %v4716
    %v6807 = vpop.f32.mrb[0].mxu0
    %v6808 = vadd.f32 %v5126, %v6807
    %v6809 = vpop.f32.mrb[0].mxu0
    %v6810 = vadd.f32 %v5130, %v6809
    %v6811 = vpop.f32.mrb[0].mxu0
    %v6812 = vadd.f32 %v5126, %v6811
    %v6813 = vpop.f32.mrb[0].mxu0
    %v6814 = vadd.f32 %v5130, %v6813
    %6815 = vmatprep.mubr.bf16.mxu0 %v4726
    %6816 = vmatmul.mubr.bf16.gmra.mrb[0].mxu0 %v4725
    %v6817 = vpop.f32.mrb[0].mxu0
    %v6818 = vadd.f32 %v5126, %v6817
    %v6819 = vpop.f32.mrb[0].mxu0
    %v6820 = vadd.f32 %v5130, %v6819
    %v6821 = vpop.f32.mrb[0].mxu0
    %v6822 = vadd.f32 %v5126, %v6821
    %v6823 = vpop.f32.mrb[0].mxu0
    %v6824 = vadd.f32 %v5130, %v6823
    %6825 = vmatprep.mubr.bf16.mxu0 %v4735
    %6826 = vmatmul.mubr.bf16.gmra.mrb[0].mxu0 %v4734
    %v6827 = vpop.f32.mrb[0].mxu0
    %v6828 = vadd.f32 %v5126, %v6827
    %v6829 = vpop.f32.mrb[0].mxu0
    %v6830 = vadd.f32 %v5130, %v6829
    %v6831 = vpop.f32.mrb[0].mxu0
    %v6832 = vadd.f32 %v5126, %v6831
    %v6833 = vpop.f32.mrb[0].mxu0
    %v6834 = vadd.f32 %v5130, %v6833
    %6835 = vmatprep.mubr.bf16.mxu0 %v4744
    %6836 = vmatmul.mubr.bf16.gmra.mrb[0].mxu0 %v4743
    %v6837 = vpop.f32.mrb[0].mxu0
    %v6838 = vadd.f32 %v5126, %v6837
    %v6839 = vpop.f32.mrb[0].mxu0
    %v6840 = vadd.f32 %v5130, %v6839
    %v6841 = vpop.f32.mrb[0].mxu0
    %v6842 = vadd.f32 %v5126, %v6841
    %v6843 = vpop.f32.mrb[0].mxu0
    %v6844 = vadd.f32 %v5130, %v6843
    %6845 = vmatprep.mubr.bf16.mxu0 %v4753
    %6846 = vmatmul.mubr.bf16.gmra.mrb[0].mxu0 %v4752
    %v6847 = vpop.f32.mrb[0].mxu0
    %v6848 = vadd.f32 %v5126, %v6847
    %v6849 = vpop.f32.mrb[0].mxu0
    %v6850 = vadd.f32 %v5130, %v6849
    %v6851 = vpop.f32.mrb[0].mxu0
    %v6852 = vadd.f32 %v5126, %v6851
    %v6853 = vpop.f32.mrb[0].mxu0
    %v6854 = vadd.f32 %v5130, %v6853
    %6855 = vmatprep.mubr.bf16.mxu0 %v4762
    %6856 = vmatmul.mubr.bf16.gmra.mrb[0].mxu0 %v4761
    %v6857 = vpop.f32.mrb[0].mxu0
    %v6858 = vadd.f32 %v5126, %v6857
    %v6859 = vpop.f32.mrb[0].mxu0
    %v6860 = vadd.f32 %v5130, %v6859
    %v6861 = vpop.f32.mrb[0].mxu0
    %v6862 = vadd.f32 %v5126, %v6861
    %v6863 = vpop.f32.mrb[0].mxu0
    %v6864 = vadd.f32 %v5130, %v6863
    %6865 = vmatprep.mubr.bf16.mxu0 %v4771
    %6866 = vmatmul.mubr.bf16.gmra.mrb[0].mxu0 %v4770
    %v6867 = vpop.f32.mrb[0].mxu0
    %v6868 = vadd.f32 %v5126, %v6867
    %v6869 = vpop.f32.mrb[0].mxu0
    %v6870 = vadd.f32 %v5130, %v6869
    %v6871 = vpop.f32.mrb[0].mxu0
    %v6872 = vadd.f32 %v5126, %v6871
    %v6873 = vpop.f32.mrb[0].mxu0
    %v6874 = vadd.f32 %v5130, %v6873
    %6875 = vmatprep.mubr.bf16.mxu0 %v4780
    %6876 = vmatmul.mubr.bf16.gmra.mrb[0].mxu0 %v4779
    %v6877 = vpop.f32.mrb[0].mxu0
    %v6878 = vadd.f32 %v5126, %v6877
    %v6879 = vpop.f32.mrb[0].mxu0
    %v6880 = vadd.f32 %v5130, %v6879
    %v6881 = vpop.f32.mrb[0].mxu0
    %v6882 = vadd.f32 %v5126, %v6881
    %v6883 = vpop.f32.mrb[0].mxu0
    %v6884 = vadd.f32 %v5130, %v6883
    %6885 = vmatprep.mubr.bf16.mxu0 %v4789
    %6886 = vmatmul.mubr.bf16.gmra.mrb[0].mxu0 %v4788
    %v6887 = vpop.f32.mrb[0].mxu0
    %v6888 = vadd.f32 %v5126, %v6887
    %v6889 = vpop.f32.mrb[0].mxu0
    %v6890 = vadd.f32 %v5130, %v6889
    %v6891 = vpop.f32.mrb[0].mxu0
    %v6892 = vadd.f32 %v5126, %v6891
    %v6893 = vpop.f32.mrb[0].mxu0
    %v6894 = vadd.f32 %v5130, %v6893
    %6895 = vmatprep.mubr.bf16.mxu0 %v4798
    %6896 = vmatmul.mubr.bf16.gmra.mrb[0].mxu0 %v4797
    %v6897 = vpop.f32.mrb[0].mxu0
    %v6898 = vadd.f32 %v5126, %v6897
    %v6899 = vpop.f32.mrb[0].mxu0
    %v6900 = vadd.f32 %v5130, %v6899
    %v6901 = vpop.f32.mrb[0].mxu0
    %v6902 = vadd.f32 %v5126, %v6901
    %v6903 = vpop.f32.mrb[0].mxu0
    %v6904 = vadd.f32 %v5130, %v6903
    %6905 = vmatprep.mubr.bf16.mxu0 %v4807
    %6906 = vmatmul.mubr.bf16.gmra.mrb[0].mxu0 %v4806
    %v6907 = vpop.f32.mrb[0].mxu0
    %v6908 = vadd.f32 %v5126, %v6907
    %v6909 = vpop.f32.mrb[0].mxu0
    %v6910 = vadd.f32 %v5130, %v6909
    %v6911 = vpop.f32.mrb[0].mxu0
    %v6912 = vadd.f32 %v5126, %v6911
    %v6913 = vpop.f32.mrb[0].mxu0
    %v6914 = vadd.f32 %v5130, %v6913
    %6915 = vmatprep.mubr.bf16.mxu0 %v4816
    %6916 = vmatmul.mubr.bf16.gmra.mrb[0].mxu0 %v4815
    %v6917 = vpop.f32.mrb[0].mxu0
    %v6918 = vadd.f32 %v5126, %v6917
    %v6919 = vpop.f32.mrb[0].mxu0
    %v6920 = vadd.f32 %v5130, %v6919
    %v6921 = vpop.f32.mrb[0].mxu0
    %v6922 = vadd.f32 %v5126, %v6921
    %v6923 = vpop.f32.mrb[0].mxu0
    %v6924 = vadd.f32 %v5130, %v6923
    %6925 = vmatprep.mubr.bf16.mxu0 %v4825
    %6926 = vmatmul.mubr.bf16.gmra.mrb[0].mxu0 %v4824
    %v6927 = vpop.f32.mrb[0].mxu0
    %v6928 = vadd.f32 %v5126, %v6927
    %v6929 = vpop.f32.mrb[0].mxu0
    %v6930 = vadd.f32 %v5130, %v6929
    %v6931 = vpop.f32.mrb[0].mxu0
    %v6932 = vadd.f32 %v5126, %v6931
    %v6933 = vpop.f32.mrb[0].mxu0
    %v6934 = vadd.f32 %v5130, %v6933
    %6935 = vdwg.mxu0
    %6936 = vmatprep.subr.bf16.mxu0 %v6072
    %6937 = vmatpush1.bf16.msra.mxu0 %v6071
    %6938 = vmatprep.subr.bf16.mxu0 %v6076
    %6939 = vmatpush1.bf16.msra.mxu0 %v6075
    %6940 = vmatprep.subr.bf16.mxu0 %v6080
    %6941 = vmatpush1.bf16.msra.mxu0 %v6079
    %6942 = vmatprep.subr.bf16.mxu0 %v6084
    %6943 = vmatpush1.bf16.msra.mxu0 %v6083
    %6944 = vmatprep.subr.bf16.mxu0 %v6088
    %6945 = vmatpush1.bf16.msra.mxu0 %v6087
    %6946 = vmatprep.subr.bf16.mxu0 %v6092
    %6947 = vmatpush1.bf16.msra.mxu0 %v6091
    %6948 = vmatprep.subr.bf16.mxu0 %v6096
    %6949 = vmatpush1.bf16.msra.mxu0 %v6095
    %6950 = vmatprep.subr.bf16.mxu0 %v6100
    %6951 = vmatpush1.bf16.msra.mxu0 %v6099
    %6952 = vmatprep.subr.bf16.mxu0 %v6104
    %6953 = vmatpush1.bf16.msra.mxu0 %v6103
    %6954 = vmatprep.subr.bf16.mxu0 %v6108
    %6955 = vmatpush1.bf16.msra.mxu0 %v6107
    %6956 = vmatprep.subr.bf16.mxu0 %v6112
    %6957 = vmatpush1.bf16.msra.mxu0 %v6111
    %6958 = vmatprep.subr.bf16.mxu0 %v6116
    %6959 = vmatpush1.bf16.msra.mxu0 %v6115
    %6960 = vmatprep.subr.bf16.mxu0 %v6120
    %6961 = vmatpush1.bf16.msra.mxu0 %v6119
    %6962 = vmatprep.subr.bf16.mxu0 %v6124
    %6963 = vmatpush1.bf16.msra.mxu0 %v6123
    %6964 = vmatprep.subr.bf16.mxu0 %v6128
    %6965 = vmatpush1.bf16.msra.mxu0 %v6127
    %6966 = vmatprep.subr.bf16.mxu0 %v6132
    %6967 = vmatpush1.bf16.msra.mxu0 %v6131
    %6968 = vmatprep.mubr.bf16.mxu0 %v4548
    %6969 = vmatmul.mubr.bf16.gmra.mrb[0].mxu0 %v4547
    %v6970 = vpop.f32.mrb[0].mxu0
    %v6971 = vadd.f32 %v6618, %v6970
    %v6972 = vpop.f32.mrb[0].mxu0
    %v6973 = vadd.f32 %v6620, %v6972
    %v6974 = vpop.f32.mrb[0].mxu0
    %v6975 = vadd.f32 %v6622, %v6974
    %v6976 = vpop.f32.mrb[0].mxu0
    %v6977 = vadd.f32 %v6624, %v6976
    %6978 = vmatprep.mubr.bf16.mxu0 %v4557
    %6979 = vmatmul.mubr.bf16.gmra.mrb[0].mxu0 %v4556
    %v6980 = vpop.f32.mrb[0].mxu0
    %v6981 = vadd.f32 %v6628, %v6980
    %v6982 = vpop.f32.mrb[0].mxu0
    %v6983 = vadd.f32 %v6630, %v6982
    %v6984 = vpop.f32.mrb[0].mxu0
    %v6985 = vadd.f32 %v6632, %v6984
    %v6986 = vpop.f32.mrb[0].mxu0
    %v6987 = vadd.f32 %v6634, %v6986
    %6988 = vmatprep.mubr.bf16.mxu0 %v4566
    %6989 = vmatmul.mubr.bf16.gmra.mrb[0].mxu0 %v4565
    %v6990 = vpop.f32.mrb[0].mxu0
    %v6991 = vadd.f32 %v6638, %v6990
    %v6992 = vpop.f32.mrb[0].mxu0
    %v6993 = vadd.f32 %v6640, %v6992
    %v6994 = vpop.f32.mrb[0].mxu0
    %v6995 = vadd.f32 %v6642, %v6994
    %v6996 = vpop.f32.mrb[0].mxu0
    %v6997 = vadd.f32 %v6644, %v6996
    %6998 = vmatprep.mubr.bf16.mxu0 %v4575
    %6999 = vmatmul.mubr.bf16.gmra.mrb[0].mxu0 %v4574
    %v7000 = vpop.f32.mrb[0].mxu0
    %v7001 = vadd.f32 %v6648, %v7000
    %v7002 = vpop.f32.mrb[0].mxu0
    %v7003 = vadd.f32 %v6650, %v7002
    %v7004 = vpop.f32.mrb[0].mxu0
    %v7005 = vadd.f32 %v6652, %v7004
    %v7006 = vpop.f32.mrb[0].mxu0
    %v7007 = vadd.f32 %v6654, %v7006
    %7008 = vmatprep.mubr.bf16.mxu0 %v4584
    %7009 = vmatmul.mubr.bf16.gmra.mrb[0].mxu0 %v4583
    %v7010 = vpop.f32.mrb[0].mxu0
    %v7011 = vadd.f32 %v6658, %v7010
    %v7012 = vpop.f32.mrb[0].mxu0
    %v7013 = vadd.f32 %v6660, %v7012
    %v7014 = vpop.f32.mrb[0].mxu0
    %v7015 = vadd.f32 %v6662, %v7014
    %v7016 = vpop.f32.mrb[0].mxu0
    %v7017 = vadd.f32 %v6664, %v7016
    %7018 = vmatprep.mubr.bf16.mxu0 %v4593
    %7019 = vmatmul.mubr.bf16.gmra.mrb[0].mxu0 %v4592
    %v7020 = vpop.f32.mrb[0].mxu0
    %v7021 = vadd.f32 %v6668, %v7020
    %v7022 = vpop.f32.mrb[0].mxu0
    %v7023 = vadd.f32 %v6670, %v7022
    %v7024 = vpop.f32.mrb[0].mxu0
    %v7025 = vadd.f32 %v6672, %v7024
    %v7026 = vpop.f32.mrb[0].mxu0
    %v7027 = vadd.f32 %v6674, %v7026
    %7028 = vmatprep.mubr.bf16.mxu0 %v4602
    %7029 = vmatmul.mubr.bf16.gmra.mrb[0].mxu0 %v4601
    %v7030 = vpop.f32.mrb[0].mxu0
    %v7031 = vadd.f32 %v6678, %v7030
    %v7032 = vpop.f32.mrb[0].mxu0
    %v7033 = vadd.f32 %v6680, %v7032
    %v7034 = vpop.f32.mrb[0].mxu0
    %v7035 = vadd.f32 %v6682, %v7034
    %v7036 = vpop.f32.mrb[0].mxu0
    %v7037 = vadd.f32 %v6684, %v7036
    %7038 = vmatprep.mubr.bf16.mxu0 %v4611
    %7039 = vmatmul.mubr.bf16.gmra.mrb[0].mxu0 %v4610
    %v7040 = vpop.f32.mrb[0].mxu0
    %v7041 = vadd.f32 %v6688, %v7040
    %v7042 = vpop.f32.mrb[0].mxu0
    %v7043 = vadd.f32 %v6690, %v7042
    %v7044 = vpop.f32.mrb[0].mxu0
    %v7045 = vadd.f32 %v6692, %v7044
    %v7046 = vpop.f32.mrb[0].mxu0
    %v7047 = vadd.f32 %v6694, %v7046
    %7048 = vmatprep.mubr.bf16.mxu0 %v4620
    %7049 = vmatmul.mubr.bf16.gmra.mrb[0].mxu0 %v4619
    %v7050 = vpop.f32.mrb[0].mxu0
    %v7051 = vadd.f32 %v6698, %v7050
    %v7052 = vpop.f32.mrb[0].mxu0
    %v7053 = vadd.f32 %v6700, %v7052
    %v7054 = vpop.f32.mrb[0].mxu0
    %v7055 = vadd.f32 %v6702, %v7054
    %v7056 = vpop.f32.mrb[0].mxu0
    %v7057 = vadd.f32 %v6704, %v7056
    %7058 = vmatprep.mubr.bf16.mxu0 %v4629
    %7059 = vmatmul.mubr.bf16.gmra.mrb[0].mxu0 %v4628
    %v7060 = vpop.f32.mrb[0].mxu0
    %v7061 = vadd.f32 %v6708, %v7060
    %v7062 = vpop.f32.mrb[0].mxu0
    %v7063 = vadd.f32 %v6710, %v7062
    %v7064 = vpop.f32.mrb[0].mxu0
    %v7065 = vadd.f32 %v6712, %v7064
    %v7066 = vpop.f32.mrb[0].mxu0
    %v7067 = vadd.f32 %v6714, %v7066
    %7068 = vmatprep.mubr.bf16.mxu0 %v4638
    %7069 = vmatmul.mubr.bf16.gmra.mrb[0].mxu0 %v4637
    %v7070 = vpop.f32.mrb[0].mxu0
    %v7071 = vadd.f32 %v6718, %v7070
    %v7072 = vpop.f32.mrb[0].mxu0
    %v7073 = vadd.f32 %v6720, %v7072
    %v7074 = vpop.f32.mrb[0].mxu0
    %v7075 = vadd.f32 %v6722, %v7074
    %v7076 = vpop.f32.mrb[0].mxu0
    %v7077 = vadd.f32 %v6724, %v7076
    %7078 = vmatprep.mubr.bf16.mxu0 %v4647
    %7079 = vmatmul.mubr.bf16.gmra.mrb[0].mxu0 %v4646
    %v7080 = vpop.f32.mrb[0].mxu0
    %v7081 = vadd.f32 %v6728, %v7080
    %v7082 = vpop.f32.mrb[0].mxu0
    %v7083 = vadd.f32 %v6730, %v7082
    %v7084 = vpop.f32.mrb[0].mxu0
    %v7085 = vadd.f32 %v6732, %v7084
    %v7086 = vpop.f32.mrb[0].mxu0
    %v7087 = vadd.f32 %v6734, %v7086
    %7088 = vmatprep.mubr.bf16.mxu0 %v4656
    %7089 = vmatmul.mubr.bf16.gmra.mrb[0].mxu0 %v4655
    %v7090 = vpop.f32.mrb[0].mxu0
    %v7091 = vadd.f32 %v6738, %v7090
    %v7092 = vpop.f32.mrb[0].mxu0
    %v7093 = vadd.f32 %v6740, %v7092
    %v7094 = vpop.f32.mrb[0].mxu0
    %v7095 = vadd.f32 %v6742, %v7094
    %v7096 = vpop.f32.mrb[0].mxu0
    %v7097 = vadd.f32 %v6744, %v7096
    %7098 = vmatprep.mubr.bf16.mxu0 %v4665
    %7099 = vmatmul.mubr.bf16.gmra.mrb[0].mxu0 %v4664
    %v7100 = vpop.f32.mrb[0].mxu0
    %v7101 = vadd.f32 %v6748, %v7100
    %v7102 = vpop.f32.mrb[0].mxu0
    %v7103 = vadd.f32 %v6750, %v7102
    %v7104 = vpop.f32.mrb[0].mxu0
    %v7105 = vadd.f32 %v6752, %v7104
    %v7106 = vpop.f32.mrb[0].mxu0
    %v7107 = vadd.f32 %v6754, %v7106
    %7108 = vmatprep.mubr.bf16.mxu0 %v4674
    %7109 = vmatmul.mubr.bf16.gmra.mrb[0].mxu0 %v4673
    %v7110 = vpop.f32.mrb[0].mxu0
    %v7111 = vadd.f32 %v6758, %v7110
    %v7112 = vpop.f32.mrb[0].mxu0
    %v7113 = vadd.f32 %v6760, %v7112
    %v7114 = vpop.f32.mrb[0].mxu0
    %v7115 = vadd.f32 %v6762, %v7114
    %v7116 = vpop.f32.mrb[0].mxu0
    %v7117 = vadd.f32 %v6764, %v7116
    %7118 = vmatprep.mubr.bf16.mxu0 %v4683
    %7119 = vmatmul.mubr.bf16.gmra.mrb[0].mxu0 %v4682
    %v7120 = vpop.f32.mrb[0].mxu0
    %v7121 = vadd.f32 %v6768, %v7120
    %v7122 = vpop.f32.mrb[0].mxu0
    %v7123 = vadd.f32 %v6770, %v7122
    %v7124 = vpop.f32.mrb[0].mxu0
    %v7125 = vadd.f32 %v6772, %v7124
    %v7126 = vpop.f32.mrb[0].mxu0
    %v7127 = vadd.f32 %v6774, %v7126
    %7128 = vmatprep.mubr.bf16.mxu0 %v4692
    %7129 = vmatmul.mubr.bf16.gmra.mrb[0].mxu0 %v4691
    %v7130 = vpop.f32.mrb[0].mxu0
    %v7131 = vadd.f32 %v6778, %v7130
    %v7132 = vpop.f32.mrb[0].mxu0
    %v7133 = vadd.f32 %v6780, %v7132
    %v7134 = vpop.f32.mrb[0].mxu0
    %v7135 = vadd.f32 %v6782, %v7134
    %v7136 = vpop.f32.mrb[0].mxu0
    %v7137 = vadd.f32 %v6784, %v7136
    %7138 = vmatprep.mubr.bf16.mxu0 %v4701
    %7139 = vmatmul.mubr.bf16.gmra.mrb[0].mxu0 %v4700
    %v7140 = vpop.f32.mrb[0].mxu0
    %v7141 = vadd.f32 %v6788, %v7140
    %v7142 = vpop.f32.mrb[0].mxu0
    %v7143 = vadd.f32 %v6790, %v7142
    %v7144 = vpop.f32.mrb[0].mxu0
    %v7145 = vadd.f32 %v6792, %v7144
    %v7146 = vpop.f32.mrb[0].mxu0
    %v7147 = vadd.f32 %v6794, %v7146
    %7148 = vmatprep.mubr.bf16.mxu0 %v4710
    %7149 = vmatmul.mubr.bf16.gmra.mrb[0].mxu0 %v4709
    %v7150 = vpop.f32.mrb[0].mxu0
    %v7151 = vadd.f32 %v6798, %v7150
    %v7152 = vpop.f32.mrb[0].mxu0
    %v7153 = vadd.f32 %v6800, %v7152
    %v7154 = vpop.f32.mrb[0].mxu0
    %v7155 = vadd.f32 %v6802, %v7154
    %v7156 = vpop.f32.mrb[0].mxu0
    %v7157 = vadd.f32 %v6804, %v7156
    %7158 = vmatprep.mubr.bf16.mxu0 %v4719
    %7159 = vmatmul.mubr.bf16.gmra.mrb[0].mxu0 %v4718
    %v7160 = vpop.f32.mrb[0].mxu0
    %v7161 = vadd.f32 %v6808, %v7160
    %v7162 = vpop.f32.mrb[0].mxu0
    %v7163 = vadd.f32 %v6810, %v7162
    %v7164 = vpop.f32.mrb[0].mxu0
    %v7165 = vadd.f32 %v6812, %v7164
    %v7166 = vpop.f32.mrb[0].mxu0
    %v7167 = vadd.f32 %v6814, %v7166
    %7168 = vmatprep.mubr.bf16.mxu0 %v4728
    %7169 = vmatmul.mubr.bf16.gmra.mrb[0].mxu0 %v4727
    %v7170 = vpop.f32.mrb[0].mxu0
    %v7171 = vadd.f32 %v6818, %v7170
    %v7172 = vpop.f32.mrb[0].mxu0
    %v7173 = vadd.f32 %v6820, %v7172
    %v7174 = vpop.f32.mrb[0].mxu0
    %v7175 = vadd.f32 %v6822, %v7174
    %v7176 = vpop.f32.mrb[0].mxu0
    %v7177 = vadd.f32 %v6824, %v7176
    %7178 = vmatprep.mubr.bf16.mxu0 %v4737
    %7179 = vmatmul.mubr.bf16.gmra.mrb[0].mxu0 %v4736
    %v7180 = vpop.f32.mrb[0].mxu0
    %v7181 = vadd.f32 %v6828, %v7180
    %v7182 = vpop.f32.mrb[0].mxu0
    %v7183 = vadd.f32 %v6830, %v7182
    %v7184 = vpop.f32.mrb[0].mxu0
    %v7185 = vadd.f32 %v6832, %v7184
    %v7186 = vpop.f32.mrb[0].mxu0
    %v7187 = vadd.f32 %v6834, %v7186
    %7188 = vmatprep.mubr.bf16.mxu0 %v4746
    %7189 = vmatmul.mubr.bf16.gmra.mrb[0].mxu0 %v4745
    %v7190 = vpop.f32.mrb[0].mxu0
    %v7191 = vadd.f32 %v6838, %v7190
    %v7192 = vpop.f32.mrb[0].mxu0
    %v7193 = vadd.f32 %v6840, %v7192
    %v7194 = vpop.f32.mrb[0].mxu0
    %v7195 = vadd.f32 %v6842, %v7194
    %v7196 = vpop.f32.mrb[0].mxu0
    %v7197 = vadd.f32 %v6844, %v7196
    %7198 = vmatprep.mubr.bf16.mxu0 %v4755
    %7199 = vmatmul.mubr.bf16.gmra.mrb[0].mxu0 %v4754
    %v7200 = vpop.f32.mrb[0].mxu0
    %v7201 = vadd.f32 %v6848, %v7200
    %v7202 = vpop.f32.mrb[0].mxu0
    %v7203 = vadd.f32 %v6850, %v7202
    %v7204 = vpop.f32.mrb[0].mxu0
    %v7205 = vadd.f32 %v6852, %v7204
    %v7206 = vpop.f32.mrb[0].mxu0
    %v7207 = vadd.f32 %v6854, %v7206
    %7208 = vmatprep.mubr.bf16.mxu0 %v4764
    %7209 = vmatmul.mubr.bf16.gmra.mrb[0].mxu0 %v4763
    %v7210 = vpop.f32.mrb[0].mxu0
    %v7211 = vadd.f32 %v6858, %v7210
    %v7212 = vpop.f32.mrb[0].mxu0
    %v7213 = vadd.f32 %v6860, %v7212
    %v7214 = vpop.f32.mrb[0].mxu0
    %v7215 = vadd.f32 %v6862, %v7214
    %v7216 = vpop.f32.mrb[0].mxu0
    %v7217 = vadd.f32 %v6864, %v7216
    %7218 = vmatprep.mubr.bf16.mxu0 %v4773
    %7219 = vmatmul.mubr.bf16.gmra.mrb[0].mxu0 %v4772
    %v7220 = vpop.f32.mrb[0].mxu0
    %v7221 = vadd.f32 %v6868, %v7220
    %v7222 = vpop.f32.mrb[0].mxu0
    %v7223 = vadd.f32 %v6870, %v7222
    %v7224 = vpop.f32.mrb[0].mxu0
    %v7225 = vadd.f32 %v6872, %v7224
    %v7226 = vpop.f32.mrb[0].mxu0
    %v7227 = vadd.f32 %v6874, %v7226
    %7228 = vmatprep.mubr.bf16.mxu0 %v4782
    %7229 = vmatmul.mubr.bf16.gmra.mrb[0].mxu0 %v4781
    %v7230 = vpop.f32.mrb[0].mxu0
    %v7231 = vadd.f32 %v6878, %v7230
    %v7232 = vpop.f32.mrb[0].mxu0
    %v7233 = vadd.f32 %v6880, %v7232
    %v7234 = vpop.f32.mrb[0].mxu0
    %v7235 = vadd.f32 %v6882, %v7234
    %v7236 = vpop.f32.mrb[0].mxu0
    %v7237 = vadd.f32 %v6884, %v7236
    %7238 = vmatprep.mubr.bf16.mxu0 %v4791
    %7239 = vmatmul.mubr.bf16.gmra.mrb[0].mxu0 %v4790
    %v7240 = vpop.f32.mrb[0].mxu0
    %v7241 = vadd.f32 %v6888, %v7240
    %v7242 = vpop.f32.mrb[0].mxu0
    %v7243 = vadd.f32 %v6890, %v7242
    %v7244 = vpop.f32.mrb[0].mxu0
    %v7245 = vadd.f32 %v6892, %v7244
    %v7246 = vpop.f32.mrb[0].mxu0
    %v7247 = vadd.f32 %v6894, %v7246
    %7248 = vmatprep.mubr.bf16.mxu0 %v4800
    %7249 = vmatmul.mubr.bf16.gmra.mrb[0].mxu0 %v4799
    %v7250 = vpop.f32.mrb[0].mxu0
    %v7251 = vadd.f32 %v6898, %v7250
    %v7252 = vpop.f32.mrb[0].mxu0
    %v7253 = vadd.f32 %v6900, %v7252
    %v7254 = vpop.f32.mrb[0].mxu0
    %v7255 = vadd.f32 %v6902, %v7254
    %v7256 = vpop.f32.mrb[0].mxu0
    %v7257 = vadd.f32 %v6904, %v7256
    %7258 = vmatprep.mubr.bf16.mxu0 %v4809
    %7259 = vmatmul.mubr.bf16.gmra.mrb[0].mxu0 %v4808
    %v7260 = vpop.f32.mrb[0].mxu0
    %v7261 = vadd.f32 %v6908, %v7260
    %v7262 = vpop.f32.mrb[0].mxu0
    %v7263 = vadd.f32 %v6910, %v7262
    %v7264 = vpop.f32.mrb[0].mxu0
    %v7265 = vadd.f32 %v6912, %v7264
    %v7266 = vpop.f32.mrb[0].mxu0
    %v7267 = vadd.f32 %v6914, %v7266
    %7268 = vmatprep.mubr.bf16.mxu0 %v4818
    %7269 = vmatmul.mubr.bf16.gmra.mrb[0].mxu0 %v4817
    %v7270 = vpop.f32.mrb[0].mxu0
    %v7271 = vadd.f32 %v6918, %v7270
    %v7272 = vpop.f32.mrb[0].mxu0
    %v7273 = vadd.f32 %v6920, %v7272
    %v7274 = vpop.f32.mrb[0].mxu0
    %v7275 = vadd.f32 %v6922, %v7274
    %v7276 = vpop.f32.mrb[0].mxu0
    %v7277 = vadd.f32 %v6924, %v7276
    %7278 = vmatprep.mubr.bf16.mxu0 %v4827
    %7279 = vmatmul.mubr.bf16.gmra.mrb[0].mxu0 %v4826
    %v7280 = vpop.f32.mrb[0].mxu0
    %v7281 = vadd.f32 %v6928, %v7280
    %v7282 = vpop.f32.mrb[0].mxu0
    %v7283 = vadd.f32 %v6930, %v7282
    %v7284 = vpop.f32.mrb[0].mxu0
    %v7285 = vadd.f32 %v6932, %v7284
    %v7286 = vpop.f32.mrb[0].mxu0
    %v7287 = vadd.f32 %v6934, %v7286
    %7288 = vdwg.mxu0
    %7289 = vmatprep.subr.bf16.mxu0 %v6136
    %7290 = vmatpush1.bf16.msra.mxu0 %v6135
    %7291 = vmatprep.subr.bf16.mxu0 %v6140
    %7292 = vmatpush1.bf16.msra.mxu0 %v6139
    %7293 = vmatprep.subr.bf16.mxu0 %v6144
    %7294 = vmatpush1.bf16.msra.mxu0 %v6143
    %7295 = vmatprep.subr.bf16.mxu0 %v6148
    %7296 = vmatpush1.bf16.msra.mxu0 %v6147
    %7297 = vmatprep.subr.bf16.mxu0 %v6152
    %7298 = vmatpush1.bf16.msra.mxu0 %v6151
    %7299 = vmatprep.subr.bf16.mxu0 %v6156
    %7300 = vmatpush1.bf16.msra.mxu0 %v6155
    %7301 = vmatprep.subr.bf16.mxu0 %v6160
    %7302 = vmatpush1.bf16.msra.mxu0 %v6159
    %7303 = vmatprep.subr.bf16.mxu0 %v6164
    %7304 = vmatpush1.bf16.msra.mxu0 %v6163
    %7305 = vmatprep.subr.bf16.mxu0 %v6168
    %7306 = vmatpush1.bf16.msra.mxu0 %v6167
    %7307 = vmatprep.subr.bf16.mxu0 %v6172
    %7308 = vmatpush1.bf16.msra.mxu0 %v6171
    %7309 = vmatprep.subr.bf16.mxu0 %v6176
    %7310 = vmatpush1.bf16.msra.mxu0 %v6175
    %7311 = vmatprep.subr.bf16.mxu0 %v6180
    %7312 = vmatpush1.bf16.msra.mxu0 %v6179
    %7313 = vmatprep.subr.bf16.mxu0 %v6184
    %7314 = vmatpush1.bf16.msra.mxu0 %v6183
    %7315 = vmatprep.subr.bf16.mxu0 %v6188
    %7316 = vmatpush1.bf16.msra.mxu0 %v6187
    %7317 = vmatprep.subr.bf16.mxu0 %v6192
    %7318 = vmatpush1.bf16.msra.mxu0 %v6191
    %7319 = vmatprep.subr.bf16.mxu0 %v6196
    %7320 = vmatpush1.bf16.msra.mxu0 %v6195
    %7321 = vmatprep.mubr.bf16.mxu0 %v4550
    %7322 = vmatmul.mubr.bf16.gmra.mrb[0].mxu0 %v4549
    %v7323 = vpop.f32.mrb[0].mxu0
    %v7324 = vadd.f32 %v6971, %v7323
    %v7325 = vpop.f32.mrb[0].mxu0
    %v7326 = vadd.f32 %v6973, %v7325
    %v7327 = vpop.f32.mrb[0].mxu0
    %v7328 = vadd.f32 %v6975, %v7327
    %v7329 = vpop.f32.mrb[0].mxu0
    %v7330 = vadd.f32 %v6977, %v7329
    %7331 = vmatprep.mubr.bf16.mxu0 %v4559
    %7332 = vmatmul.mubr.bf16.gmra.mrb[0].mxu0 %v4558
    %v7333 = vpop.f32.mrb[0].mxu0
    %v7334 = vadd.f32 %v6981, %v7333
    %v7335 = vpop.f32.mrb[0].mxu0
    %v7336 = vadd.f32 %v6983, %v7335
    %v7337 = vpop.f32.mrb[0].mxu0
    %v7338 = vadd.f32 %v6985, %v7337
    %v7339 = vpop.f32.mrb[0].mxu0
    %v7340 = vadd.f32 %v6987, %v7339
    %7341 = vmatprep.mubr.bf16.mxu0 %v4568
    %7342 = vmatmul.mubr.bf16.gmra.mrb[0].mxu0 %v4567
    %v7343 = vpop.f32.mrb[0].mxu0
    %v7344 = vadd.f32 %v6991, %v7343
    %v7345 = vpop.f32.mrb[0].mxu0
    %v7346 = vadd.f32 %v6993, %v7345
    %v7347 = vpop.f32.mrb[0].mxu0
    %v7348 = vadd.f32 %v6995, %v7347
    %v7349 = vpop.f32.mrb[0].mxu0
    %v7350 = vadd.f32 %v6997, %v7349
    %7351 = vmatprep.mubr.bf16.mxu0 %v4577
    %7352 = vmatmul.mubr.bf16.gmra.mrb[0].mxu0 %v4576
    %v7353 = vpop.f32.mrb[0].mxu0
    %v7354 = vadd.f32 %v7001, %v7353
    %v7355 = vpop.f32.mrb[0].mxu0
    %v7356 = vadd.f32 %v7003, %v7355
    %v7357 = vpop.f32.mrb[0].mxu0
    %v7358 = vadd.f32 %v7005, %v7357
    %v7359 = vpop.f32.mrb[0].mxu0
    %v7360 = vadd.f32 %v7007, %v7359
    %7361 = vmatprep.mubr.bf16.mxu0 %v4586
    %7362 = vmatmul.mubr.bf16.gmra.mrb[0].mxu0 %v4585
    %v7363 = vpop.f32.mrb[0].mxu0
    %v7364 = vadd.f32 %v7011, %v7363
    %v7365 = vpop.f32.mrb[0].mxu0
    %v7366 = vadd.f32 %v7013, %v7365
    %v7367 = vpop.f32.mrb[0].mxu0
    %v7368 = vadd.f32 %v7015, %v7367
    %v7369 = vpop.f32.mrb[0].mxu0
    %v7370 = vadd.f32 %v7017, %v7369
    %7371 = vmatprep.mubr.bf16.mxu0 %v4595
    %7372 = vmatmul.mubr.bf16.gmra.mrb[0].mxu0 %v4594
    %v7373 = vpop.f32.mrb[0].mxu0
    %v7374 = vadd.f32 %v7021, %v7373
    %v7375 = vpop.f32.mrb[0].mxu0
    %v7376 = vadd.f32 %v7023, %v7375
    %v7377 = vpop.f32.mrb[0].mxu0
    %v7378 = vadd.f32 %v7025, %v7377
    %v7379 = vpop.f32.mrb[0].mxu0
    %v7380 = vadd.f32 %v7027, %v7379
    %7381 = vmatprep.mubr.bf16.mxu0 %v4604
    %7382 = vmatmul.mubr.bf16.gmra.mrb[0].mxu0 %v4603
    %v7383 = vpop.f32.mrb[0].mxu0
    %v7384 = vadd.f32 %v7031, %v7383
    %v7385 = vpop.f32.mrb[0].mxu0
    %v7386 = vadd.f32 %v7033, %v7385
    %v7387 = vpop.f32.mrb[0].mxu0
    %v7388 = vadd.f32 %v7035, %v7387
    %v7389 = vpop.f32.mrb[0].mxu0
    %v7390 = vadd.f32 %v7037, %v7389
    %7391 = vmatprep.mubr.bf16.mxu0 %v4613
    %7392 = vmatmul.mubr.bf16.gmra.mrb[0].mxu0 %v4612
    %v7393 = vpop.f32.mrb[0].mxu0
    %v7394 = vadd.f32 %v7041, %v7393
    %v7395 = vpop.f32.mrb[0].mxu0
    %v7396 = vadd.f32 %v7043, %v7395
    %v7397 = vpop.f32.mrb[0].mxu0
    %v7398 = vadd.f32 %v7045, %v7397
    %v7399 = vpop.f32.mrb[0].mxu0
    %v7400 = vadd.f32 %v7047, %v7399
    %7401 = vmatprep.mubr.bf16.mxu0 %v4622
    %7402 = vmatmul.mubr.bf16.gmra.mrb[0].mxu0 %v4621
    %v7403 = vpop.f32.mrb[0].mxu0
    %v7404 = vadd.f32 %v7051, %v7403
    %v7405 = vpop.f32.mrb[0].mxu0
    %v7406 = vadd.f32 %v7053, %v7405
    %v7407 = vpop.f32.mrb[0].mxu0
    %v7408 = vadd.f32 %v7055, %v7407
    %v7409 = vpop.f32.mrb[0].mxu0
    %v7410 = vadd.f32 %v7057, %v7409
    %7411 = vmatprep.mubr.bf16.mxu0 %v4631
    %7412 = vmatmul.mubr.bf16.gmra.mrb[0].mxu0 %v4630
    %v7413 = vpop.f32.mrb[0].mxu0
    %v7414 = vadd.f32 %v7061, %v7413
    %v7415 = vpop.f32.mrb[0].mxu0
    %v7416 = vadd.f32 %v7063, %v7415
    %v7417 = vpop.f32.mrb[0].mxu0
    %v7418 = vadd.f32 %v7065, %v7417
    %v7419 = vpop.f32.mrb[0].mxu0
    %v7420 = vadd.f32 %v7067, %v7419
    %7421 = vmatprep.mubr.bf16.mxu0 %v4640
    %7422 = vmatmul.mubr.bf16.gmra.mrb[0].mxu0 %v4639
    %v7423 = vpop.f32.mrb[0].mxu0
    %v7424 = vadd.f32 %v7071, %v7423
    %v7425 = vpop.f32.mrb[0].mxu0
    %v7426 = vadd.f32 %v7073, %v7425
    %v7427 = vpop.f32.mrb[0].mxu0
    %v7428 = vadd.f32 %v7075, %v7427
    %v7429 = vpop.f32.mrb[0].mxu0
    %v7430 = vadd.f32 %v7077, %v7429
    %7431 = vmatprep.mubr.bf16.mxu0 %v4649
    %7432 = vmatmul.mubr.bf16.gmra.mrb[0].mxu0 %v4648
    %v7433 = vpop.f32.mrb[0].mxu0
    %v7434 = vadd.f32 %v7081, %v7433
    %v7435 = vpop.f32.mrb[0].mxu0
    %v7436 = vadd.f32 %v7083, %v7435
    %v7437 = vpop.f32.mrb[0].mxu0
    %v7438 = vadd.f32 %v7085, %v7437
    %v7439 = vpop.f32.mrb[0].mxu0
    %v7440 = vadd.f32 %v7087, %v7439
    %7441 = vmatprep.mubr.bf16.mxu0 %v4658
    %7442 = vmatmul.mubr.bf16.gmra.mrb[0].mxu0 %v4657
    %v7443 = vpop.f32.mrb[0].mxu0
    %v7444 = vadd.f32 %v7091, %v7443
    %v7445 = vpop.f32.mrb[0].mxu0
    %v7446 = vadd.f32 %v7093, %v7445
    %v7447 = vpop.f32.mrb[0].mxu0
    %v7448 = vadd.f32 %v7095, %v7447
    %v7449 = vpop.f32.mrb[0].mxu0
    %v7450 = vadd.f32 %v7097, %v7449
    %7451 = vmatprep.mubr.bf16.mxu0 %v4667
    %7452 = vmatmul.mubr.bf16.gmra.mrb[0].mxu0 %v4666
    %v7453 = vpop.f32.mrb[0].mxu0
    %v7454 = vadd.f32 %v7101, %v7453
    %v7455 = vpop.f32.mrb[0].mxu0
    %v7456 = vadd.f32 %v7103, %v7455
    %v7457 = vpop.f32.mrb[0].mxu0
    %v7458 = vadd.f32 %v7105, %v7457
    %v7459 = vpop.f32.mrb[0].mxu0
    %v7460 = vadd.f32 %v7107, %v7459
    %7461 = vmatprep.mubr.bf16.mxu0 %v4676
    %7462 = vmatmul.mubr.bf16.gmra.mrb[0].mxu0 %v4675
    %v7463 = vpop.f32.mrb[0].mxu0
    %v7464 = vadd.f32 %v7111, %v7463
    %v7465 = vpop.f32.mrb[0].mxu0
    %v7466 = vadd.f32 %v7113, %v7465
    %v7467 = vpop.f32.mrb[0].mxu0
    %v7468 = vadd.f32 %v7115, %v7467
    %v7469 = vpop.f32.mrb[0].mxu0
    %v7470 = vadd.f32 %v7117, %v7469
    %7471 = vmatprep.mubr.bf16.mxu0 %v4685
    %7472 = vmatmul.mubr.bf16.gmra.mrb[0].mxu0 %v4684
    %v7473 = vpop.f32.mrb[0].mxu0
    %v7474 = vadd.f32 %v7121, %v7473
    %v7475 = vpop.f32.mrb[0].mxu0
    %v7476 = vadd.f32 %v7123, %v7475
    %v7477 = vpop.f32.mrb[0].mxu0
    %v7478 = vadd.f32 %v7125, %v7477
    %v7479 = vpop.f32.mrb[0].mxu0
    %v7480 = vadd.f32 %v7127, %v7479
    %7481 = vmatprep.mubr.bf16.mxu0 %v4694
    %7482 = vmatmul.mubr.bf16.gmra.mrb[0].mxu0 %v4693
    %v7483 = vpop.f32.mrb[0].mxu0
    %v7484 = vadd.f32 %v7131, %v7483
    %v7485 = vpop.f32.mrb[0].mxu0
    %v7486 = vadd.f32 %v7133, %v7485
    %v7487 = vpop.f32.mrb[0].mxu0
    %v7488 = vadd.f32 %v7135, %v7487
    %v7489 = vpop.f32.mrb[0].mxu0
    %v7490 = vadd.f32 %v7137, %v7489
    %7491 = vmatprep.mubr.bf16.mxu0 %v4703
    %7492 = vmatmul.mubr.bf16.gmra.mrb[0].mxu0 %v4702
    %v7493 = vpop.f32.mrb[0].mxu0
    %v7494 = vadd.f32 %v7141, %v7493
    %v7495 = vpop.f32.mrb[0].mxu0
    %v7496 = vadd.f32 %v7143, %v7495
    %v7497 = vpop.f32.mrb[0].mxu0
    %v7498 = vadd.f32 %v7145, %v7497
    %v7499 = vpop.f32.mrb[0].mxu0
    %v7500 = vadd.f32 %v7147, %v7499
    %7501 = vmatprep.mubr.bf16.mxu0 %v4712
    %7502 = vmatmul.mubr.bf16.gmra.mrb[0].mxu0 %v4711
    %v7503 = vpop.f32.mrb[0].mxu0
    %v7504 = vadd.f32 %v7151, %v7503
    %v7505 = vpop.f32.mrb[0].mxu0
    %v7506 = vadd.f32 %v7153, %v7505
    %v7507 = vpop.f32.mrb[0].mxu0
    %v7508 = vadd.f32 %v7155, %v7507
    %v7509 = vpop.f32.mrb[0].mxu0
    %v7510 = vadd.f32 %v7157, %v7509
    %7511 = vmatprep.mubr.bf16.mxu0 %v4721
    %7512 = vmatmul.mubr.bf16.gmra.mrb[0].mxu0 %v4720
    %v7513 = vpop.f32.mrb[0].mxu0
    %v7514 = vadd.f32 %v7161, %v7513
    %v7515 = vpop.f32.mrb[0].mxu0
    %v7516 = vadd.f32 %v7163, %v7515
    %v7517 = vpop.f32.mrb[0].mxu0
    %v7518 = vadd.f32 %v7165, %v7517
    %v7519 = vpop.f32.mrb[0].mxu0
    %v7520 = vadd.f32 %v7167, %v7519
    %7521 = vmatprep.mubr.bf16.mxu0 %v4730
    %7522 = vmatmul.mubr.bf16.gmra.mrb[0].mxu0 %v4729
    %v7523 = vpop.f32.mrb[0].mxu0
    %v7524 = vadd.f32 %v7171, %v7523
    %v7525 = vpop.f32.mrb[0].mxu0
    %v7526 = vadd.f32 %v7173, %v7525
    %v7527 = vpop.f32.mrb[0].mxu0
    %v7528 = vadd.f32 %v7175, %v7527
    %v7529 = vpop.f32.mrb[0].mxu0
    %v7530 = vadd.f32 %v7177, %v7529
    %7531 = vmatprep.mubr.bf16.mxu0 %v4739
    %7532 = vmatmul.mubr.bf16.gmra.mrb[0].mxu0 %v4738
    %v7533 = vpop.f32.mrb[0].mxu0
    %v7534 = vadd.f32 %v7181, %v7533
    %v7535 = vpop.f32.mrb[0].mxu0
    %v7536 = vadd.f32 %v7183, %v7535
    %v7537 = vpop.f32.mrb[0].mxu0
    %v7538 = vadd.f32 %v7185, %v7537
    %v7539 = vpop.f32.mrb[0].mxu0
    %v7540 = vadd.f32 %v7187, %v7539
    %7541 = vmatprep.mubr.bf16.mxu0 %v4748
    %7542 = vmatmul.mubr.bf16.gmra.mrb[0].mxu0 %v4747
    %v7543 = vpop.f32.mrb[0].mxu0
    %v7544 = vadd.f32 %v7191, %v7543
    %v7545 = vpop.f32.mrb[0].mxu0
    %v7546 = vadd.f32 %v7193, %v7545
    %v7547 = vpop.f32.mrb[0].mxu0
    %v7548 = vadd.f32 %v7195, %v7547
    %v7549 = vpop.f32.mrb[0].mxu0
    %v7550 = vadd.f32 %v7197, %v7549
    %7551 = vmatprep.mubr.bf16.mxu0 %v4757
    %7552 = vmatmul.mubr.bf16.gmra.mrb[0].mxu0 %v4756
    %v7553 = vpop.f32.mrb[0].mxu0
    %v7554 = vadd.f32 %v7201, %v7553
    %v7555 = vpop.f32.mrb[0].mxu0
    %v7556 = vadd.f32 %v7203, %v7555
    %v7557 = vpop.f32.mrb[0].mxu0
    %v7558 = vadd.f32 %v7205, %v7557
    %v7559 = vpop.f32.mrb[0].mxu0
    %v7560 = vadd.f32 %v7207, %v7559
    %7561 = vmatprep.mubr.bf16.mxu0 %v4766
    %7562 = vmatmul.mubr.bf16.gmra.mrb[0].mxu0 %v4765
    %v7563 = vpop.f32.mrb[0].mxu0
    %v7564 = vadd.f32 %v7211, %v7563
    %v7565 = vpop.f32.mrb[0].mxu0
    %v7566 = vadd.f32 %v7213, %v7565
    %v7567 = vpop.f32.mrb[0].mxu0
    %v7568 = vadd.f32 %v7215, %v7567
    %v7569 = vpop.f32.mrb[0].mxu0
    %v7570 = vadd.f32 %v7217, %v7569
    %7571 = vmatprep.mubr.bf16.mxu0 %v4775
    %7572 = vmatmul.mubr.bf16.gmra.mrb[0].mxu0 %v4774
    %v7573 = vpop.f32.mrb[0].mxu0
    %v7574 = vadd.f32 %v7221, %v7573
    %v7575 = vpop.f32.mrb[0].mxu0
    %v7576 = vadd.f32 %v7223, %v7575
    %v7577 = vpop.f32.mrb[0].mxu0
    %v7578 = vadd.f32 %v7225, %v7577
    %v7579 = vpop.f32.mrb[0].mxu0
    %v7580 = vadd.f32 %v7227, %v7579
    %7581 = vmatprep.mubr.bf16.mxu0 %v4784
    %7582 = vmatmul.mubr.bf16.gmra.mrb[0].mxu0 %v4783
    %v7583 = vpop.f32.mrb[0].mxu0
    %v7584 = vadd.f32 %v7231, %v7583
    %v7585 = vpop.f32.mrb[0].mxu0
    %v7586 = vadd.f32 %v7233, %v7585
    %v7587 = vpop.f32.mrb[0].mxu0
    %v7588 = vadd.f32 %v7235, %v7587
    %v7589 = vpop.f32.mrb[0].mxu0
    %v7590 = vadd.f32 %v7237, %v7589
    %7591 = vmatprep.mubr.bf16.mxu0 %v4793
    %7592 = vmatmul.mubr.bf16.gmra.mrb[0].mxu0 %v4792
    %v7593 = vpop.f32.mrb[0].mxu0
    %v7594 = vadd.f32 %v7241, %v7593
    %v7595 = vpop.f32.mrb[0].mxu0
    %v7596 = vadd.f32 %v7243, %v7595
    %v7597 = vpop.f32.mrb[0].mxu0
    %v7598 = vadd.f32 %v7245, %v7597
    %v7599 = vpop.f32.mrb[0].mxu0
    %v7600 = vadd.f32 %v7247, %v7599
    %7601 = vmatprep.mubr.bf16.mxu0 %v4802
    %7602 = vmatmul.mubr.bf16.gmra.mrb[0].mxu0 %v4801
    %v7603 = vpop.f32.mrb[0].mxu0
    %v7604 = vadd.f32 %v7251, %v7603
    %v7605 = vpop.f32.mrb[0].mxu0
    %v7606 = vadd.f32 %v7253, %v7605
    %v7607 = vpop.f32.mrb[0].mxu0
    %v7608 = vadd.f32 %v7255, %v7607
    %v7609 = vpop.f32.mrb[0].mxu0
    %v7610 = vadd.f32 %v7257, %v7609
    %7611 = vmatprep.mubr.bf16.mxu0 %v4811
    %7612 = vmatmul.mubr.bf16.gmra.mrb[0].mxu0 %v4810
    %v7613 = vpop.f32.mrb[0].mxu0
    %v7614 = vadd.f32 %v7261, %v7613
    %v7615 = vpop.f32.mrb[0].mxu0
    %v7616 = vadd.f32 %v7263, %v7615
    %v7617 = vpop.f32.mrb[0].mxu0
    %v7618 = vadd.f32 %v7265, %v7617
    %v7619 = vpop.f32.mrb[0].mxu0
    %v7620 = vadd.f32 %v7267, %v7619
    %7621 = vmatprep.mubr.bf16.mxu0 %v4820
    %7622 = vmatmul.mubr.bf16.gmra.mrb[0].mxu0 %v4819
    %v7623 = vpop.f32.mrb[0].mxu0
    %v7624 = vadd.f32 %v7271, %v7623
    %v7625 = vpop.f32.mrb[0].mxu0
    %v7626 = vadd.f32 %v7273, %v7625
    %v7627 = vpop.f32.mrb[0].mxu0
    %v7628 = vadd.f32 %v7275, %v7627
    %v7629 = vpop.f32.mrb[0].mxu0
    %v7630 = vadd.f32 %v7277, %v7629
    %7631 = vmatprep.mubr.bf16.mxu0 %v4829
    %7632 = vmatmul.mubr.bf16.gmra.mrb[0].mxu0 %v4828
    %v7633 = vpop.f32.mrb[0].mxu0
    %v7634 = vadd.f32 %v7281, %v7633
    %v7635 = vpop.f32.mrb[0].mxu0
    %v7636 = vadd.f32 %v7283, %v7635
    %v7637 = vpop.f32.mrb[0].mxu0
    %v7638 = vadd.f32 %v7285, %v7637
    %v7639 = vpop.f32.mrb[0].mxu0
    %v7640 = vadd.f32 %v7287, %v7639
    %7641 = vdwg.mxu0
    %7642 = vmatprep.subr.bf16.mxu0 %v6200
    %7643 = vmatpush1.bf16.msra.mxu0 %v6199
    %7644 = vmatprep.subr.bf16.mxu0 %v6204
    %7645 = vmatpush1.bf16.msra.mxu0 %v6203
    %7646 = vmatprep.subr.bf16.mxu0 %v6208
    %7647 = vmatpush1.bf16.msra.mxu0 %v6207
    %7648 = vmatprep.subr.bf16.mxu0 %v6212
    %7649 = vmatpush1.bf16.msra.mxu0 %v6211
    %7650 = vmatprep.subr.bf16.mxu0 %v6216
    %7651 = vmatpush1.bf16.msra.mxu0 %v6215
    %7652 = vmatprep.subr.bf16.mxu0 %v6220
    %7653 = vmatpush1.bf16.msra.mxu0 %v6219
    %7654 = vmatprep.subr.bf16.mxu0 %v6224
    %7655 = vmatpush1.bf16.msra.mxu0 %v6223
    %7656 = vmatprep.subr.bf16.mxu0 %v6228
    %7657 = vmatpush1.bf16.msra.mxu0 %v6227
    %7658 = vmatprep.subr.bf16.mxu0 %v6232
    %7659 = vmatpush1.bf16.msra.mxu0 %v6231
    %7660 = vmatprep.subr.bf16.mxu0 %v6236
    %7661 = vmatpush1.bf16.msra.mxu0 %v6235
    %7662 = vmatprep.subr.bf16.mxu0 %v6240
    %7663 = vmatpush1.bf16.msra.mxu0 %v6239
    %7664 = vmatprep.subr.bf16.mxu0 %v6244
    %7665 = vmatpush1.bf16.msra.mxu0 %v6243
    %7666 = vmatprep.subr.bf16.mxu0 %v6248
    %7667 = vmatpush1.bf16.msra.mxu0 %v6247
    %7668 = vmatprep.subr.bf16.mxu0 %v6252
    %7669 = vmatpush1.bf16.msra.mxu0 %v6251
    %7670 = vmatprep.subr.bf16.mxu0 %v6256
    %7671 = vmatpush1.bf16.msra.mxu0 %v6255
    %7672 = vmatprep.subr.bf16.mxu0 %v6260
    %7673 = vmatpush1.bf16.msra.mxu0 %v6259
    %7674 = vmatprep.mubr.bf16.mxu0 %v4552
    %7675 = vmatmul.mubr.bf16.gmra.mrb[0].mxu0 %v4551
    %v7676 = vpop.f32.mrb[0].mxu0
    %v7677 = vadd.f32 %v7324, %v7676
    %v7678 = vpop.f32.mrb[0].mxu0
    %v7679 = vadd.f32 %v7326, %v7678
    %v7680 = vpop.f32.mrb[0].mxu0
    %v7681 = vadd.f32 %v7328, %v7680
    %v7682 = vpop.f32.mrb[0].mxu0
    %v7683 = vadd.f32 %v7330, %v7682
    %7684 = vmatprep.mubr.bf16.mxu0 %v4561
    %7685 = vmatmul.mubr.bf16.gmra.mrb[0].mxu0 %v4560
    %v7686 = vpop.f32.mrb[0].mxu0
    %v7687 = vadd.f32 %v7334, %v7686
    %v7688 = vpop.f32.mrb[0].mxu0
    %v7689 = vadd.f32 %v7336, %v7688
    %v7690 = vpop.f32.mrb[0].mxu0
    %v7691 = vadd.f32 %v7338, %v7690
    %v7692 = vpop.f32.mrb[0].mxu0
    %v7693 = vadd.f32 %v7340, %v7692
    %7694 = vmatprep.mubr.bf16.mxu0 %v4570
    %7695 = vmatmul.mubr.bf16.gmra.mrb[0].mxu0 %v4569
    %v7696 = vpop.f32.mrb[0].mxu0
    %v7697 = vadd.f32 %v7344, %v7696
    %v7698 = vpop.f32.mrb[0].mxu0
    %v7699 = vadd.f32 %v7346, %v7698
    %v7700 = vpop.f32.mrb[0].mxu0
    %v7701 = vadd.f32 %v7348, %v7700
    %v7702 = vpop.f32.mrb[0].mxu0
    %v7703 = vadd.f32 %v7350, %v7702
    %7704 = vmatprep.mubr.bf16.mxu0 %v4579
    %7705 = vmatmul.mubr.bf16.gmra.mrb[0].mxu0 %v4578
    %v7706 = vpop.f32.mrb[0].mxu0
    %v7707 = vadd.f32 %v7354, %v7706
    %v7708 = vpop.f32.mrb[0].mxu0
    %v7709 = vadd.f32 %v7356, %v7708
    %v7710 = vpop.f32.mrb[0].mxu0
    %v7711 = vadd.f32 %v7358, %v7710
    %v7712 = vpop.f32.mrb[0].mxu0
    %v7713 = vadd.f32 %v7360, %v7712
    %7714 = vmatprep.mubr.bf16.mxu0 %v4588
    %7715 = vmatmul.mubr.bf16.gmra.mrb[0].mxu0 %v4587
    %v7716 = vpop.f32.mrb[0].mxu0
    %v7717 = vadd.f32 %v7364, %v7716
    %v7718 = vpop.f32.mrb[0].mxu0
    %v7719 = vadd.f32 %v7366, %v7718
    %v7720 = vpop.f32.mrb[0].mxu0
    %v7721 = vadd.f32 %v7368, %v7720
    %v7722 = vpop.f32.mrb[0].mxu0
    %v7723 = vadd.f32 %v7370, %v7722
    %7724 = vmatprep.mubr.bf16.mxu0 %v4597
    %7725 = vmatmul.mubr.bf16.gmra.mrb[0].mxu0 %v4596
    %v7726 = vpop.f32.mrb[0].mxu0
    %v7727 = vadd.f32 %v7374, %v7726
    %v7728 = vpop.f32.mrb[0].mxu0
    %v7729 = vadd.f32 %v7376, %v7728
    %v7730 = vpop.f32.mrb[0].mxu0
    %v7731 = vadd.f32 %v7378, %v7730
    %v7732 = vpop.f32.mrb[0].mxu0
    %v7733 = vadd.f32 %v7380, %v7732
    %7734 = vmatprep.mubr.bf16.mxu0 %v4606
    %7735 = vmatmul.mubr.bf16.gmra.mrb[0].mxu0 %v4605
    %v7736 = vpop.f32.mrb[0].mxu0
    %v7737 = vadd.f32 %v7384, %v7736
    %v7738 = vpop.f32.mrb[0].mxu0
    %v7739 = vadd.f32 %v7386, %v7738
    %v7740 = vpop.f32.mrb[0].mxu0
    %v7741 = vadd.f32 %v7388, %v7740
    %v7742 = vpop.f32.mrb[0].mxu0
    %v7743 = vadd.f32 %v7390, %v7742
    %7744 = vmatprep.mubr.bf16.mxu0 %v4615
    %7745 = vmatmul.mubr.bf16.gmra.mrb[0].mxu0 %v4614
    %v7746 = vpop.f32.mrb[0].mxu0
    %v7747 = vadd.f32 %v7394, %v7746
    %v7748 = vpop.f32.mrb[0].mxu0
    %v7749 = vadd.f32 %v7396, %v7748
    %v7750 = vpop.f32.mrb[0].mxu0
    %v7751 = vadd.f32 %v7398, %v7750
    %v7752 = vpop.f32.mrb[0].mxu0
    %v7753 = vadd.f32 %v7400, %v7752
    %7754 = vmatprep.mubr.bf16.mxu0 %v4624
    %7755 = vmatmul.mubr.bf16.gmra.mrb[0].mxu0 %v4623
    %v7756 = vpop.f32.mrb[0].mxu0
    %v7757 = vadd.f32 %v7404, %v7756
    %v7758 = vpop.f32.mrb[0].mxu0
    %v7759 = vadd.f32 %v7406, %v7758
    %v7760 = vpop.f32.mrb[0].mxu0
    %v7761 = vadd.f32 %v7408, %v7760
    %v7762 = vpop.f32.mrb[0].mxu0
    %v7763 = vadd.f32 %v7410, %v7762
    %7764 = vmatprep.mubr.bf16.mxu0 %v4633
    %7765 = vmatmul.mubr.bf16.gmra.mrb[0].mxu0 %v4632
    %v7766 = vpop.f32.mrb[0].mxu0
    %v7767 = vadd.f32 %v7414, %v7766
    %v7768 = vpop.f32.mrb[0].mxu0
    %v7769 = vadd.f32 %v7416, %v7768
    %v7770 = vpop.f32.mrb[0].mxu0
    %v7771 = vadd.f32 %v7418, %v7770
    %v7772 = vpop.f32.mrb[0].mxu0
    %v7773 = vadd.f32 %v7420, %v7772
    %7774 = vmatprep.mubr.bf16.mxu0 %v4642
    %7775 = vmatmul.mubr.bf16.gmra.mrb[0].mxu0 %v4641
    %v7776 = vpop.f32.mrb[0].mxu0
    %v7777 = vadd.f32 %v7424, %v7776
    %v7778 = vpop.f32.mrb[0].mxu0
    %v7779 = vadd.f32 %v7426, %v7778
    %v7780 = vpop.f32.mrb[0].mxu0
    %v7781 = vadd.f32 %v7428, %v7780
    %v7782 = vpop.f32.mrb[0].mxu0
    %v7783 = vadd.f32 %v7430, %v7782
    %7784 = vmatprep.mubr.bf16.mxu0 %v4651
    %7785 = vmatmul.mubr.bf16.gmra.mrb[0].mxu0 %v4650
    %v7786 = vpop.f32.mrb[0].mxu0
    %v7787 = vadd.f32 %v7434, %v7786
    %v7788 = vpop.f32.mrb[0].mxu0
    %v7789 = vadd.f32 %v7436, %v7788
    %v7790 = vpop.f32.mrb[0].mxu0
    %v7791 = vadd.f32 %v7438, %v7790
    %v7792 = vpop.f32.mrb[0].mxu0
    %v7793 = vadd.f32 %v7440, %v7792
    %7794 = vmatprep.mubr.bf16.mxu0 %v4660
    %7795 = vmatmul.mubr.bf16.gmra.mrb[0].mxu0 %v4659
    %v7796 = vpop.f32.mrb[0].mxu0
    %v7797 = vadd.f32 %v7444, %v7796
    %v7798 = vpop.f32.mrb[0].mxu0
    %v7799 = vadd.f32 %v7446, %v7798
    %v7800 = vpop.f32.mrb[0].mxu0
    %v7801 = vadd.f32 %v7448, %v7800
    %v7802 = vpop.f32.mrb[0].mxu0
    %v7803 = vadd.f32 %v7450, %v7802
    %7804 = vmatprep.mubr.bf16.mxu0 %v4669
    %7805 = vmatmul.mubr.bf16.gmra.mrb[0].mxu0 %v4668
    %v7806 = vpop.f32.mrb[0].mxu0
    %v7807 = vadd.f32 %v7454, %v7806
    %v7808 = vpop.f32.mrb[0].mxu0
    %v7809 = vadd.f32 %v7456, %v7808
    %v7810 = vpop.f32.mrb[0].mxu0
    %v7811 = vadd.f32 %v7458, %v7810
    %v7812 = vpop.f32.mrb[0].mxu0
    %v7813 = vadd.f32 %v7460, %v7812
    %7814 = vmatprep.mubr.bf16.mxu0 %v4678
    %7815 = vmatmul.mubr.bf16.gmra.mrb[0].mxu0 %v4677
    %v7816 = vpop.f32.mrb[0].mxu0
    %v7817 = vadd.f32 %v7464, %v7816
    %v7818 = vpop.f32.mrb[0].mxu0
    %v7819 = vadd.f32 %v7466, %v7818
    %v7820 = vpop.f32.mrb[0].mxu0
    %v7821 = vadd.f32 %v7468, %v7820
    %v7822 = vpop.f32.mrb[0].mxu0
    %v7823 = vadd.f32 %v7470, %v7822
    %7824 = vmatprep.mubr.bf16.mxu0 %v4687
    %7825 = vmatmul.mubr.bf16.gmra.mrb[0].mxu0 %v4686
    %v7826 = vpop.f32.mrb[0].mxu0
    %v7827 = vadd.f32 %v7474, %v7826
    %v7828 = vpop.f32.mrb[0].mxu0
    %v7829 = vadd.f32 %v7476, %v7828
    %v7830 = vpop.f32.mrb[0].mxu0
    %v7831 = vadd.f32 %v7478, %v7830
    %v7832 = vpop.f32.mrb[0].mxu0
    %v7833 = vadd.f32 %v7480, %v7832
    %7834 = vmatprep.mubr.bf16.mxu0 %v4696
    %7835 = vmatmul.mubr.bf16.gmra.mrb[0].mxu0 %v4695
    %v7836 = vpop.f32.mrb[0].mxu0
    %v7837 = vadd.f32 %v7484, %v7836
    %v7838 = vpop.f32.mrb[0].mxu0
    %v7839 = vadd.f32 %v7486, %v7838
    %v7840 = vpop.f32.mrb[0].mxu0
    %v7841 = vadd.f32 %v7488, %v7840
    %v7842 = vpop.f32.mrb[0].mxu0
    %v7843 = vadd.f32 %v7490, %v7842
    %7844 = vmatprep.mubr.bf16.mxu0 %v4705
    %7845 = vmatmul.mubr.bf16.gmra.mrb[0].mxu0 %v4704
    %v7846 = vpop.f32.mrb[0].mxu0
    %v7847 = vadd.f32 %v7494, %v7846
    %v7848 = vpop.f32.mrb[0].mxu0
    %v7849 = vadd.f32 %v7496, %v7848
    %v7850 = vpop.f32.mrb[0].mxu0
    %v7851 = vadd.f32 %v7498, %v7850
    %v7852 = vpop.f32.mrb[0].mxu0
    %v7853 = vadd.f32 %v7500, %v7852
    %7854 = vmatprep.mubr.bf16.mxu0 %v4714
    %7855 = vmatmul.mubr.bf16.gmra.mrb[0].mxu0 %v4713
    %v7856 = vpop.f32.mrb[0].mxu0
    %v7857 = vadd.f32 %v7504, %v7856
    %v7858 = vpop.f32.mrb[0].mxu0
    %v7859 = vadd.f32 %v7506, %v7858
    %v7860 = vpop.f32.mrb[0].mxu0
    %v7861 = vadd.f32 %v7508, %v7860
    %v7862 = vpop.f32.mrb[0].mxu0
    %v7863 = vadd.f32 %v7510, %v7862
    %7864 = vmatprep.mubr.bf16.mxu0 %v4723
    %7865 = vmatmul.mubr.bf16.gmra.mrb[0].mxu0 %v4722
    %v7866 = vpop.f32.mrb[0].mxu0
    %v7867 = vadd.f32 %v7514, %v7866
    %v7868 = vpop.f32.mrb[0].mxu0
    %v7869 = vadd.f32 %v7516, %v7868
    %v7870 = vpop.f32.mrb[0].mxu0
    %v7871 = vadd.f32 %v7518, %v7870
    %v7872 = vpop.f32.mrb[0].mxu0
    %v7873 = vadd.f32 %v7520, %v7872
    %7874 = vmatprep.mubr.bf16.mxu0 %v4732
    %7875 = vmatmul.mubr.bf16.gmra.mrb[0].mxu0 %v4731
    %v7876 = vpop.f32.mrb[0].mxu0
    %v7877 = vadd.f32 %v7524, %v7876
    %v7878 = vpop.f32.mrb[0].mxu0
    %v7879 = vadd.f32 %v7526, %v7878
    %v7880 = vpop.f32.mrb[0].mxu0
    %v7881 = vadd.f32 %v7528, %v7880
    %v7882 = vpop.f32.mrb[0].mxu0
    %v7883 = vadd.f32 %v7530, %v7882
    %7884 = vmatprep.mubr.bf16.mxu0 %v4741
    %7885 = vmatmul.mubr.bf16.gmra.mrb[0].mxu0 %v4740
    %v7886 = vpop.f32.mrb[0].mxu0
    %v7887 = vadd.f32 %v7534, %v7886
    %v7888 = vpop.f32.mrb[0].mxu0
    %v7889 = vadd.f32 %v7536, %v7888
    %v7890 = vpop.f32.mrb[0].mxu0
    %v7891 = vadd.f32 %v7538, %v7890
    %v7892 = vpop.f32.mrb[0].mxu0
    %v7893 = vadd.f32 %v7540, %v7892
    %7894 = vmatprep.mubr.bf16.mxu0 %v4750
    %7895 = vmatmul.mubr.bf16.gmra.mrb[0].mxu0 %v4749
    %v7896 = vpop.f32.mrb[0].mxu0
    %v7897 = vadd.f32 %v7544, %v7896
    %v7898 = vpop.f32.mrb[0].mxu0
    %v7899 = vadd.f32 %v7546, %v7898
    %v7900 = vpop.f32.mrb[0].mxu0
    %v7901 = vadd.f32 %v7548, %v7900
    %v7902 = vpop.f32.mrb[0].mxu0
    %v7903 = vadd.f32 %v7550, %v7902
    %7904 = vmatprep.mubr.bf16.mxu0 %v4759
    %7905 = vmatmul.mubr.bf16.gmra.mrb[0].mxu0 %v4758
    %v7906 = vpop.f32.mrb[0].mxu0
    %v7907 = vadd.f32 %v7554, %v7906
    %v7908 = vpop.f32.mrb[0].mxu0
    %v7909 = vadd.f32 %v7556, %v7908
    %v7910 = vpop.f32.mrb[0].mxu0
    %v7911 = vadd.f32 %v7558, %v7910
    %v7912 = vpop.f32.mrb[0].mxu0
    %v7913 = vadd.f32 %v7560, %v7912
    %7914 = vmatprep.mubr.bf16.mxu0 %v4768
    %7915 = vmatmul.mubr.bf16.gmra.mrb[0].mxu0 %v4767
    %v7916 = vpop.f32.mrb[0].mxu0
    %v7917 = vadd.f32 %v7564, %v7916
    %v7918 = vpop.f32.mrb[0].mxu0
    %v7919 = vadd.f32 %v7566, %v7918
    %v7920 = vpop.f32.mrb[0].mxu0
    %v7921 = vadd.f32 %v7568, %v7920
    %v7922 = vpop.f32.mrb[0].mxu0
    %v7923 = vadd.f32 %v7570, %v7922
    %7924 = vmatprep.mubr.bf16.mxu0 %v4777
    %7925 = vmatmul.mubr.bf16.gmra.mrb[0].mxu0 %v4776
    %v7926 = vpop.f32.mrb[0].mxu0
    %v7927 = vadd.f32 %v7574, %v7926
    %v7928 = vpop.f32.mrb[0].mxu0
    %v7929 = vadd.f32 %v7576, %v7928
    %v7930 = vpop.f32.mrb[0].mxu0
    %v7931 = vadd.f32 %v7578, %v7930
    %v7932 = vpop.f32.mrb[0].mxu0
    %v7933 = vadd.f32 %v7580, %v7932
    %7934 = vmatprep.mubr.bf16.mxu0 %v4786
    %7935 = vmatmul.mubr.bf16.gmra.mrb[0].mxu0 %v4785
    %v7936 = vpop.f32.mrb[0].mxu0
    %v7937 = vadd.f32 %v7584, %v7936
    %v7938 = vpop.f32.mrb[0].mxu0
    %v7939 = vadd.f32 %v7586, %v7938
    %v7940 = vpop.f32.mrb[0].mxu0
    %v7941 = vadd.f32 %v7588, %v7940
    %v7942 = vpop.f32.mrb[0].mxu0
    %v7943 = vadd.f32 %v7590, %v7942
    %7944 = vmatprep.mubr.bf16.mxu0 %v4795
    %7945 = vmatmul.mubr.bf16.gmra.mrb[0].mxu0 %v4794
    %v7946 = vpop.f32.mrb[0].mxu0
    %v7947 = vadd.f32 %v7594, %v7946
    %v7948 = vpop.f32.mrb[0].mxu0
    %v7949 = vadd.f32 %v7596, %v7948
    %v7950 = vpop.f32.mrb[0].mxu0
    %v7951 = vadd.f32 %v7598, %v7950
    %v7952 = vpop.f32.mrb[0].mxu0
    %v7953 = vadd.f32 %v7600, %v7952
    %7954 = vmatprep.mubr.bf16.mxu0 %v4804
    %7955 = vmatmul.mubr.bf16.gmra.mrb[0].mxu0 %v4803
    %v7956 = vpop.f32.mrb[0].mxu0
    %v7957 = vadd.f32 %v7604, %v7956
    %v7958 = vpop.f32.mrb[0].mxu0
    %v7959 = vadd.f32 %v7606, %v7958
    %v7960 = vpop.f32.mrb[0].mxu0
    %v7961 = vadd.f32 %v7608, %v7960
    %v7962 = vpop.f32.mrb[0].mxu0
    %v7963 = vadd.f32 %v7610, %v7962
    %7964 = vmatprep.mubr.bf16.mxu0 %v4813
    %7965 = vmatmul.mubr.bf16.gmra.mrb[0].mxu0 %v4812
    %v7966 = vpop.f32.mrb[0].mxu0
    %v7967 = vadd.f32 %v7614, %v7966
    %v7968 = vpop.f32.mrb[0].mxu0
    %v7969 = vadd.f32 %v7616, %v7968
    %v7970 = vpop.f32.mrb[0].mxu0
    %v7971 = vadd.f32 %v7618, %v7970
    %v7972 = vpop.f32.mrb[0].mxu0
    %v7973 = vadd.f32 %v7620, %v7972
    %7974 = vmatprep.mubr.bf16.mxu0 %v4822
    %7975 = vmatmul.mubr.bf16.gmra.mrb[0].mxu0 %v4821
    %v7976 = vpop.f32.mrb[0].mxu0
    %v7977 = vadd.f32 %v7624, %v7976
    %v7978 = vpop.f32.mrb[0].mxu0
    %v7979 = vadd.f32 %v7626, %v7978
    %v7980 = vpop.f32.mrb[0].mxu0
    %v7981 = vadd.f32 %v7628, %v7980
    %v7982 = vpop.f32.mrb[0].mxu0
    %v7983 = vadd.f32 %v7630, %v7982
    %7984 = vmatprep.mubr.bf16.mxu0 %v4831
    %7985 = vmatmul.mubr.bf16.gmra.mrb[0].mxu0 %v4830
    %v7986 = vpop.f32.mrb[0].mxu0
    %v7987 = vadd.f32 %v7634, %v7986
    %v7988 = vpop.f32.mrb[0].mxu0
    %v7989 = vadd.f32 %v7636, %v7988
    %v7990 = vpop.f32.mrb[0].mxu0
    %v7991 = vadd.f32 %v7638, %v7990
    %v7992 = vpop.f32.mrb[0].mxu0
    %v7993 = vadd.f32 %v7640, %v7992
    %7994 = vdwg.mxu0
    %7995 = vmatprep.subr.bf16.mxu0 %v6264
    %7996 = vmatpush1.bf16.msra.mxu0 %v6263
    %7997 = vmatprep.subr.bf16.mxu0 %v6268
    %7998 = vmatpush1.bf16.msra.mxu0 %v6267
    %7999 = vmatprep.subr.bf16.mxu0 %v6272
    %8000 = vmatpush1.bf16.msra.mxu0 %v6271
    %8001 = vmatprep.subr.bf16.mxu0 %v6276
    %8002 = vmatpush1.bf16.msra.mxu0 %v6275
    %8003 = vmatprep.subr.bf16.mxu0 %v6280
    %8004 = vmatpush1.bf16.msra.mxu0 %v6279
    %8005 = vmatprep.subr.bf16.mxu0 %v6284
    %8006 = vmatpush1.bf16.msra.mxu0 %v6283
    %8007 = vmatprep.subr.bf16.mxu0 %v6288
    %8008 = vmatpush1.bf16.msra.mxu0 %v6287
    %8009 = vmatprep.subr.bf16.mxu0 %v6292
    %8010 = vmatpush1.bf16.msra.mxu0 %v6291
    %8011 = vmatprep.subr.bf16.mxu0 0
    %8012 = vmatpush1.bf16.msra.mxu0 0
    %8013 = vmatprep.subr.bf16.mxu0 0
    %8014 = vmatpush1.bf16.msra.mxu0 0
    %8015 = vmatprep.subr.bf16.mxu0 0
    %8016 = vmatpush1.bf16.msra.mxu0 0
    %8017 = vmatprep.subr.bf16.mxu0 0
    %8018 = vmatpush1.bf16.msra.mxu0 0
    %8019 = vmatprep.subr.bf16.mxu0 0
    %8020 = vmatpush1.bf16.msra.mxu0 0
    %8021 = vmatprep.subr.bf16.mxu0 0
    %8022 = vmatpush1.bf16.msra.mxu0 0
    %8023 = vmatprep.subr.bf16.mxu0 0
    %8024 = vmatpush1.bf16.msra.mxu0 0
    %8025 = vmatprep.subr.bf16.mxu0 0
    %8026 = vmatpush1.bf16.msra.mxu0 0
    %8027 = vmatprep.mubr.bf16.mxu0 0
    %8028 = vmatmul.mubr.bf16.gmra.mrb[0].mxu0 %v4553
    %v8029 = vpop.f32.mrb[0].mxu0
    %v8030 = vadd.f32 %v7677, %v8029
    %v8031 = vpop.f32.mrb[0].mxu0
    %v8032 = vadd.f32 %v7679, %v8031
    %v8033 = vpop.f32.mrb[0].mxu0
    %v8034 = vadd.f32 %v7681, %v8033
    %v8035 = vpop.f32.mrb[0].mxu0
    %v8036 = vadd.f32 %v7683, %v8035
    %8037 = vmatprep.mubr.bf16.mxu0 0
    %8038 = vmatmul.mubr.bf16.gmra.mrb[0].mxu0 %v4562
    %v8039 = vpop.f32.mrb[0].mxu0
    %v8040 = vadd.f32 %v7687, %v8039
    %v8041 = vpop.f32.mrb[0].mxu0
    %v8042 = vadd.f32 %v7689, %v8041
    %v8043 = vpop.f32.mrb[0].mxu0
    %v8044 = vadd.f32 %v7691, %v8043
    %v8045 = vpop.f32.mrb[0].mxu0
    %v8046 = vadd.f32 %v7693, %v8045
    %8047 = vmatprep.mubr.bf16.mxu0 0
    %8048 = vmatmul.mubr.bf16.gmra.mrb[0].mxu0 %v4571
    %v8049 = vpop.f32.mrb[0].mxu0
    %v8050 = vadd.f32 %v7697, %v8049
    %v8051 = vpop.f32.mrb[0].mxu0
    %v8052 = vadd.f32 %v7699, %v8051
    %v8053 = vpop.f32.mrb[0].mxu0
    %v8054 = vadd.f32 %v7701, %v8053
    %v8055 = vpop.f32.mrb[0].mxu0
    %v8056 = vadd.f32 %v7703, %v8055
    %8057 = vmatprep.mubr.bf16.mxu0 0
    %8058 = vmatmul.mubr.bf16.gmra.mrb[0].mxu0 %v4580
    %v8059 = vpop.f32.mrb[0].mxu0
    %v8060 = vadd.f32 %v7707, %v8059
    %v8061 = vpop.f32.mrb[0].mxu0
    %v8062 = vadd.f32 %v7709, %v8061
    %v8063 = vpop.f32.mrb[0].mxu0
    %v8064 = vadd.f32 %v7711, %v8063
    %v8065 = vpop.f32.mrb[0].mxu0
    %v8066 = vadd.f32 %v7713, %v8065
    %8067 = vmatprep.mubr.bf16.mxu0 0
    %8068 = vmatmul.mubr.bf16.gmra.mrb[0].mxu0 %v4589
    %v8069 = vpop.f32.mrb[0].mxu0
    %v8070 = vadd.f32 %v7717, %v8069
    %v8071 = vpop.f32.mrb[0].mxu0
    %v8072 = vadd.f32 %v7719, %v8071
    %v8073 = vpop.f32.mrb[0].mxu0
    %v8074 = vadd.f32 %v7721, %v8073
    %v8075 = vpop.f32.mrb[0].mxu0
    %v8076 = vadd.f32 %v7723, %v8075
    %8077 = vmatprep.mubr.bf16.mxu0 0
    %8078 = vmatmul.mubr.bf16.gmra.mrb[0].mxu0 %v4598
    %v8079 = vpop.f32.mrb[0].mxu0
    %v8080 = vadd.f32 %v7727, %v8079
    %v8081 = vpop.f32.mrb[0].mxu0
    %v8082 = vadd.f32 %v7729, %v8081
    %v8083 = vpop.f32.mrb[0].mxu0
    %v8084 = vadd.f32 %v7731, %v8083
    %v8085 = vpop.f32.mrb[0].mxu0
    %v8086 = vadd.f32 %v7733, %v8085
    %8087 = vmatprep.mubr.bf16.mxu0 0
    %8088 = vmatmul.mubr.bf16.gmra.mrb[0].mxu0 %v4607
    %v8089 = vpop.f32.mrb[0].mxu0
    %v8090 = vadd.f32 %v7737, %v8089
    %v8091 = vpop.f32.mrb[0].mxu0
    %v8092 = vadd.f32 %v7739, %v8091
    %v8093 = vpop.f32.mrb[0].mxu0
    %v8094 = vadd.f32 %v7741, %v8093
    %v8095 = vpop.f32.mrb[0].mxu0
    %v8096 = vadd.f32 %v7743, %v8095
    %8097 = vmatprep.mubr.bf16.mxu0 0
    %8098 = vmatmul.mubr.bf16.gmra.mrb[0].mxu0 %v4616
    %v8099 = vpop.f32.mrb[0].mxu0
    %v8100 = vadd.f32 %v7747, %v8099
    %v8101 = vpop.f32.mrb[0].mxu0
    %v8102 = vadd.f32 %v7749, %v8101
    %v8103 = vpop.f32.mrb[0].mxu0
    %v8104 = vadd.f32 %v7751, %v8103
    %v8105 = vpop.f32.mrb[0].mxu0
    %v8106 = vadd.f32 %v7753, %v8105
    %8107 = vmatprep.mubr.bf16.mxu0 0
    %8108 = vmatmul.mubr.bf16.gmra.mrb[0].mxu0 %v4625
    %v8109 = vpop.f32.mrb[0].mxu0
    %v8110 = vadd.f32 %v7757, %v8109
    %v8111 = vpop.f32.mrb[0].mxu0
    %v8112 = vadd.f32 %v7759, %v8111
    %v8113 = vpop.f32.mrb[0].mxu0
    %v8114 = vadd.f32 %v7761, %v8113
    %v8115 = vpop.f32.mrb[0].mxu0
    %v8116 = vadd.f32 %v7763, %v8115
    %8117 = vmatprep.mubr.bf16.mxu0 0
    %8118 = vmatmul.mubr.bf16.gmra.mrb[0].mxu0 %v4634
    %v8119 = vpop.f32.mrb[0].mxu0
    %v8120 = vadd.f32 %v7767, %v8119
    %v8121 = vpop.f32.mrb[0].mxu0
    %v8122 = vadd.f32 %v7769, %v8121
    %v8123 = vpop.f32.mrb[0].mxu0
    %v8124 = vadd.f32 %v7771, %v8123
    %v8125 = vpop.f32.mrb[0].mxu0
    %v8126 = vadd.f32 %v7773, %v8125
    %8127 = vmatprep.mubr.bf16.mxu0 0
    %8128 = vmatmul.mubr.bf16.gmra.mrb[0].mxu0 %v4643
    %v8129 = vpop.f32.mrb[0].mxu0
    %v8130 = vadd.f32 %v7777, %v8129
    %v8131 = vpop.f32.mrb[0].mxu0
    %v8132 = vadd.f32 %v7779, %v8131
    %v8133 = vpop.f32.mrb[0].mxu0
    %v8134 = vadd.f32 %v7781, %v8133
    %v8135 = vpop.f32.mrb[0].mxu0
    %v8136 = vadd.f32 %v7783, %v8135
    %8137 = vmatprep.mubr.bf16.mxu0 0
    %8138 = vmatmul.mubr.bf16.gmra.mrb[0].mxu0 %v4652
    %v8139 = vpop.f32.mrb[0].mxu0
    %v8140 = vadd.f32 %v7787, %v8139
    %v8141 = vpop.f32.mrb[0].mxu0
    %v8142 = vadd.f32 %v7789, %v8141
    %v8143 = vpop.f32.mrb[0].mxu0
    %v8144 = vadd.f32 %v7791, %v8143
    %v8145 = vpop.f32.mrb[0].mxu0
    %v8146 = vadd.f32 %v7793, %v8145
    %8147 = vmatprep.mubr.bf16.mxu0 0
    %8148 = vmatmul.mubr.bf16.gmra.mrb[0].mxu0 %v4661
    %v8149 = vpop.f32.mrb[0].mxu0
    %v8150 = vadd.f32 %v7797, %v8149
    %v8151 = vpop.f32.mrb[0].mxu0
    %v8152 = vadd.f32 %v7799, %v8151
    %v8153 = vpop.f32.mrb[0].mxu0
    %v8154 = vadd.f32 %v7801, %v8153
    %v8155 = vpop.f32.mrb[0].mxu0
    %v8156 = vadd.f32 %v7803, %v8155
    %8157 = vmatprep.mubr.bf16.mxu0 0
    %8158 = vmatmul.mubr.bf16.gmra.mrb[0].mxu0 %v4670
    %v8159 = vpop.f32.mrb[0].mxu0
    %v8160 = vadd.f32 %v7807, %v8159
    %v8161 = vpop.f32.mrb[0].mxu0
    %v8162 = vadd.f32 %v7809, %v8161
    %v8163 = vpop.f32.mrb[0].mxu0
    %v8164 = vadd.f32 %v7811, %v8163
    %v8165 = vpop.f32.mrb[0].mxu0
    %v8166 = vadd.f32 %v7813, %v8165
    %8167 = vmatprep.mubr.bf16.mxu0 0
    %8168 = vmatmul.mubr.bf16.gmra.mrb[0].mxu0 %v4679
    %v8169 = vpop.f32.mrb[0].mxu0
    %v8170 = vadd.f32 %v7817, %v8169
    %v8171 = vpop.f32.mrb[0].mxu0
    %v8172 = vadd.f32 %v7819, %v8171
    %v8173 = vpop.f32.mrb[0].mxu0
    %v8174 = vadd.f32 %v7821, %v8173
    %v8175 = vpop.f32.mrb[0].mxu0
    %v8176 = vadd.f32 %v7823, %v8175
    %8177 = vmatprep.mubr.bf16.mxu0 0
    %8178 = vmatmul.mubr.bf16.gmra.mrb[0].mxu0 %v4688
    %v8179 = vpop.f32.mrb[0].mxu0
    %v8180 = vadd.f32 %v7827, %v8179
    %v8181 = vpop.f32.mrb[0].mxu0
    %v8182 = vadd.f32 %v7829, %v8181
    %v8183 = vpop.f32.mrb[0].mxu0
    %v8184 = vadd.f32 %v7831, %v8183
    %v8185 = vpop.f32.mrb[0].mxu0
    %v8186 = vadd.f32 %v7833, %v8185
    %8187 = vmatprep.mubr.bf16.mxu0 0
    %8188 = vmatmul.mubr.bf16.gmra.mrb[0].mxu0 %v4697
    %v8189 = vpop.f32.mrb[0].mxu0
    %v8190 = vadd.f32 %v7837, %v8189
    %v8191 = vpop.f32.mrb[0].mxu0
    %v8192 = vadd.f32 %v7839, %v8191
    %v8193 = vpop.f32.mrb[0].mxu0
    %v8194 = vadd.f32 %v7841, %v8193
    %v8195 = vpop.f32.mrb[0].mxu0
    %v8196 = vadd.f32 %v7843, %v8195
    %8197 = vmatprep.mubr.bf16.mxu0 0
    %8198 = vmatmul.mubr.bf16.gmra.mrb[0].mxu0 %v4706
    %v8199 = vpop.f32.mrb[0].mxu0
    %v8200 = vadd.f32 %v7847, %v8199
    %v8201 = vpop.f32.mrb[0].mxu0
    %v8202 = vadd.f32 %v7849, %v8201
    %v8203 = vpop.f32.mrb[0].mxu0
    %v8204 = vadd.f32 %v7851, %v8203
    %v8205 = vpop.f32.mrb[0].mxu0
    %v8206 = vadd.f32 %v7853, %v8205
    %8207 = vmatprep.mubr.bf16.mxu0 0
    %8208 = vmatmul.mubr.bf16.gmra.mrb[0].mxu0 %v4715
    %v8209 = vpop.f32.mrb[0].mxu0
    %v8210 = vadd.f32 %v7857, %v8209
    %v8211 = vpop.f32.mrb[0].mxu0
    %v8212 = vadd.f32 %v7859, %v8211
    %v8213 = vpop.f32.mrb[0].mxu0
    %v8214 = vadd.f32 %v7861, %v8213
    %v8215 = vpop.f32.mrb[0].mxu0
    %v8216 = vadd.f32 %v7863, %v8215
    %8217 = vmatprep.mubr.bf16.mxu0 0
    %8218 = vmatmul.mubr.bf16.gmra.mrb[0].mxu0 %v4724
    %v8219 = vpop.f32.mrb[0].mxu0
    %v8220 = vadd.f32 %v7867, %v8219
    %v8221 = vpop.f32.mrb[0].mxu0
    %v8222 = vadd.f32 %v7869, %v8221
    %v8223 = vpop.f32.mrb[0].mxu0
    %v8224 = vadd.f32 %v7871, %v8223
    %v8225 = vpop.f32.mrb[0].mxu0
    %v8226 = vadd.f32 %v7873, %v8225
    %8227 = vmatprep.mubr.bf16.mxu0 0
    %8228 = vmatmul.mubr.bf16.gmra.mrb[0].mxu0 %v4733
    %v8229 = vpop.f32.mrb[0].mxu0
    %v8230 = vadd.f32 %v7877, %v8229
    %v8231 = vpop.f32.mrb[0].mxu0
    %v8232 = vadd.f32 %v7879, %v8231
    %v8233 = vpop.f32.mrb[0].mxu0
    %v8234 = vadd.f32 %v7881, %v8233
    %v8235 = vpop.f32.mrb[0].mxu0
    %v8236 = vadd.f32 %v7883, %v8235
    %8237 = vmatprep.mubr.bf16.mxu0 0
    %8238 = vmatmul.mubr.bf16.gmra.mrb[0].mxu0 %v4742
    %v8239 = vpop.f32.mrb[0].mxu0
    %v8240 = vadd.f32 %v7887, %v8239
    %v8241 = vpop.f32.mrb[0].mxu0
    %v8242 = vadd.f32 %v7889, %v8241
    %v8243 = vpop.f32.mrb[0].mxu0
    %v8244 = vadd.f32 %v7891, %v8243
    %v8245 = vpop.f32.mrb[0].mxu0
    %v8246 = vadd.f32 %v7893, %v8245
    %8247 = vmatprep.mubr.bf16.mxu0 0
    %8248 = vmatmul.mubr.bf16.gmra.mrb[0].mxu0 %v4751
    %v8249 = vpop.f32.mrb[0].mxu0
    %v8250 = vadd.f32 %v7897, %v8249
    %v8251 = vpop.f32.mrb[0].mxu0
    %v8252 = vadd.f32 %v7899, %v8251
    %v8253 = vpop.f32.mrb[0].mxu0
    %v8254 = vadd.f32 %v7901, %v8253
    %v8255 = vpop.f32.mrb[0].mxu0
    %v8256 = vadd.f32 %v7903, %v8255
    %8257 = vmatprep.mubr.bf16.mxu0 0
    %8258 = vmatmul.mubr.bf16.gmra.mrb[0].mxu0 %v4760
    %v8259 = vpop.f32.mrb[0].mxu0
    %v8260 = vadd.f32 %v7907, %v8259
    %v8261 = vpop.f32.mrb[0].mxu0
    %v8262 = vadd.f32 %v7909, %v8261
    %v8263 = vpop.f32.mrb[0].mxu0
    %v8264 = vadd.f32 %v7911, %v8263
    %v8265 = vpop.f32.mrb[0].mxu0
    %v8266 = vadd.f32 %v7913, %v8265
    %8267 = vmatprep.mubr.bf16.mxu0 0
    %8268 = vmatmul.mubr.bf16.gmra.mrb[0].mxu0 %v4769
    %v8269 = vpop.f32.mrb[0].mxu0
    %v8270 = vadd.f32 %v7917, %v8269
    %v8271 = vpop.f32.mrb[0].mxu0
    %v8272 = vadd.f32 %v7919, %v8271
    %v8273 = vpop.f32.mrb[0].mxu0
    %v8274 = vadd.f32 %v7921, %v8273
    %v8275 = vpop.f32.mrb[0].mxu0
    %v8276 = vadd.f32 %v7923, %v8275
    %8277 = vmatprep.mubr.bf16.mxu0 0
    %8278 = vmatmul.mubr.bf16.gmra.mrb[0].mxu0 %v4778
    %v8279 = vpop.f32.mrb[0].mxu0
    %v8280 = vadd.f32 %v7927, %v8279
    %v8281 = vpop.f32.mrb[0].mxu0
    %v8282 = vadd.f32 %v7929, %v8281
    %v8283 = vpop.f32.mrb[0].mxu0
    %v8284 = vadd.f32 %v7931, %v8283
    %v8285 = vpop.f32.mrb[0].mxu0
    %v8286 = vadd.f32 %v7933, %v8285
    %8287 = vmatprep.mubr.bf16.mxu0 0
    %8288 = vmatmul.mubr.bf16.gmra.mrb[0].mxu0 %v4787
    %v8289 = vpop.f32.mrb[0].mxu0
    %v8290 = vadd.f32 %v7937, %v8289
    %v8291 = vpop.f32.mrb[0].mxu0
    %v8292 = vadd.f32 %v7939, %v8291
    %v8293 = vpop.f32.mrb[0].mxu0
    %v8294 = vadd.f32 %v7941, %v8293
    %v8295 = vpop.f32.mrb[0].mxu0
    %v8296 = vadd.f32 %v7943, %v8295
    %8297 = vmatprep.mubr.bf16.mxu0 0
    %8298 = vmatmul.mubr.bf16.gmra.mrb[0].mxu0 %v4796
    %v8299 = vpop.f32.mrb[0].mxu0
    %v8300 = vadd.f32 %v7947, %v8299
    %v8301 = vpop.f32.mrb[0].mxu0
    %v8302 = vadd.f32 %v7949, %v8301
    %v8303 = vpop.f32.mrb[0].mxu0
    %v8304 = vadd.f32 %v7951, %v8303
    %v8305 = vpop.f32.mrb[0].mxu0
    %v8306 = vadd.f32 %v7953, %v8305
    %8307 = vmatprep.mubr.bf16.mxu0 0
    %8308 = vmatmul.mubr.bf16.gmra.mrb[0].mxu0 %v4805
    %v8309 = vpop.f32.mrb[0].mxu0
    %v8310 = vadd.f32 %v7957, %v8309
    %v8311 = vpop.f32.mrb[0].mxu0
    %v8312 = vadd.f32 %v7959, %v8311
    %v8313 = vpop.f32.mrb[0].mxu0
    %v8314 = vadd.f32 %v7961, %v8313
    %v8315 = vpop.f32.mrb[0].mxu0
    %v8316 = vadd.f32 %v7963, %v8315
    %8317 = vmatprep.mubr.bf16.mxu0 0
    %8318 = vmatmul.mubr.bf16.gmra.mrb[0].mxu0 %v4814
    %v8319 = vpop.f32.mrb[0].mxu0
    %v8320 = vadd.f32 %v7967, %v8319
    %v8321 = vpop.f32.mrb[0].mxu0
    %v8322 = vadd.f32 %v7969, %v8321
    %v8323 = vpop.f32.mrb[0].mxu0
    %v8324 = vadd.f32 %v7971, %v8323
    %v8325 = vpop.f32.mrb[0].mxu0
    %v8326 = vadd.f32 %v7973, %v8325
    %8327 = vmatprep.mubr.bf16.mxu0 0
    %8328 = vmatmul.mubr.bf16.gmra.mrb[0].mxu0 %v4823
    %v8329 = vpop.f32.mrb[0].mxu0
    %v8330 = vadd.f32 %v7977, %v8329
    %v8331 = vpop.f32.mrb[0].mxu0
    %v8332 = vadd.f32 %v7979, %v8331
    %v8333 = vpop.f32.mrb[0].mxu0
    %v8334 = vadd.f32 %v7981, %v8333
    %v8335 = vpop.f32.mrb[0].mxu0
    %v8336 = vadd.f32 %v7983, %v8335
    %8337 = vmatprep.mubr.bf16.mxu0 0
    %8338 = vmatmul.mubr.bf16.gmra.mrb[0].mxu0 %v4832
    %v8339 = vpop.f32.mrb[0].mxu0
    %v8340 = vadd.f32 %v7987, %v8339
    %v8341 = vpop.f32.mrb[0].mxu0
    %v8342 = vadd.f32 %v7989, %v8341
    %v8343 = vpop.f32.mrb[0].mxu0
    %v8344 = vadd.f32 %v7991, %v8343
    %v8345 = vpop.f32.mrb[0].mxu0
    %v8346 = vadd.f32 %v7993, %v8345
    %8347 = vdwg.mxu0
    %8348 = vmatprep.subr.bf16.mxu0 %v6010
    %8349 = vmatpush1.bf16.msra.mxu0 %v6009
    %8350 = vmatprep.subr.bf16.mxu0 %v6014
    %8351 = vmatpush1.bf16.msra.mxu0 %v6013
    %8352 = vmatprep.subr.bf16.mxu0 %v6018
    %8353 = vmatpush1.bf16.msra.mxu0 %v6017
    %8354 = vmatprep.subr.bf16.mxu0 %v6022
    %8355 = vmatpush1.bf16.msra.mxu0 %v6021
    %8356 = vmatprep.subr.bf16.mxu0 %v6026
    %8357 = vmatpush1.bf16.msra.mxu0 %v6025
    %8358 = vmatprep.subr.bf16.mxu0 %v6030
    %8359 = vmatpush1.bf16.msra.mxu0 %v6029
    %8360 = vmatprep.subr.bf16.mxu0 %v6034
    %8361 = vmatpush1.bf16.msra.mxu0 %v6033
    %8362 = vmatprep.subr.bf16.mxu0 %v6038
    %8363 = vmatpush1.bf16.msra.mxu0 %v6037
    %8364 = vmatprep.subr.bf16.mxu0 %v6042
    %8365 = vmatpush1.bf16.msra.mxu0 %v6041
    %8366 = vmatprep.subr.bf16.mxu0 %v6046
    %8367 = vmatpush1.bf16.msra.mxu0 %v6045
    %8368 = vmatprep.subr.bf16.mxu0 %v6050
    %8369 = vmatpush1.bf16.msra.mxu0 %v6049
    %8370 = vmatprep.subr.bf16.mxu0 %v6054
    %8371 = vmatpush1.bf16.msra.mxu0 %v6053
    %8372 = vmatprep.subr.bf16.mxu0 %v6058
    %8373 = vmatpush1.bf16.msra.mxu0 %v6057
    %8374 = vmatprep.subr.bf16.mxu0 %v6062
    %8375 = vmatpush1.bf16.msra.mxu0 %v6061
    %8376 = vmatprep.subr.bf16.mxu0 %v6066
    %8377 = vmatpush1.bf16.msra.mxu0 %v6065
    %8378 = vmatprep.subr.bf16.mxu0 %v6070
    %8379 = vmatpush1.bf16.msra.mxu0 %v6069
    %8380 = vmatprep.mubr.bf16.mxu0 %v4546
    %8381 = vmatmul.mubr.bf16.gmra.mrb[0].mxu0 %v4545
    %v8382 = vpop.f32.mrb[0].mxu0
    %v8383 = vadd.f32 %v5134, %v8382
    %v8384 = vpop.f32.mrb[0].mxu0
    %v8385 = vadd.f32 %v5138, %v8384
    %v8386 = vpop.f32.mrb[0].mxu0
    %v8387 = vadd.f32 %v5134, %v8386
    %v8388 = vpop.f32.mrb[0].mxu0
    %v8389 = vadd.f32 %v5138, %v8388
    %8390 = vmatprep.mubr.bf16.mxu0 %v4555
    %8391 = vmatmul.mubr.bf16.gmra.mrb[0].mxu0 %v4554
    %v8392 = vpop.f32.mrb[0].mxu0
    %v8393 = vadd.f32 %v5134, %v8392
    %v8394 = vpop.f32.mrb[0].mxu0
    %v8395 = vadd.f32 %v5138, %v8394
    %v8396 = vpop.f32.mrb[0].mxu0
    %v8397 = vadd.f32 %v5134, %v8396
    %v8398 = vpop.f32.mrb[0].mxu0
    %v8399 = vadd.f32 %v5138, %v8398
    %8400 = vmatprep.mubr.bf16.mxu0 %v4564
    %8401 = vmatmul.mubr.bf16.gmra.mrb[0].mxu0 %v4563
    %v8402 = vpop.f32.mrb[0].mxu0
    %v8403 = vadd.f32 %v5134, %v8402
    %v8404 = vpop.f32.mrb[0].mxu0
    %v8405 = vadd.f32 %v5138, %v8404
    %v8406 = vpop.f32.mrb[0].mxu0
    %v8407 = vadd.f32 %v5134, %v8406
    %v8408 = vpop.f32.mrb[0].mxu0
    %v8409 = vadd.f32 %v5138, %v8408
    %8410 = vmatprep.mubr.bf16.mxu0 %v4573
    %8411 = vmatmul.mubr.bf16.gmra.mrb[0].mxu0 %v4572
    %v8412 = vpop.f32.mrb[0].mxu0
    %v8413 = vadd.f32 %v5134, %v8412
    %v8414 = vpop.f32.mrb[0].mxu0
    %v8415 = vadd.f32 %v5138, %v8414
    %v8416 = vpop.f32.mrb[0].mxu0
    %v8417 = vadd.f32 %v5134, %v8416
    %v8418 = vpop.f32.mrb[0].mxu0
    %v8419 = vadd.f32 %v5138, %v8418
    %8420 = vmatprep.mubr.bf16.mxu0 %v4582
    %8421 = vmatmul.mubr.bf16.gmra.mrb[0].mxu0 %v4581
    %v8422 = vpop.f32.mrb[0].mxu0
    %v8423 = vadd.f32 %v5134, %v8422
    %v8424 = vpop.f32.mrb[0].mxu0
    %v8425 = vadd.f32 %v5138, %v8424
    %v8426 = vpop.f32.mrb[0].mxu0
    %v8427 = vadd.f32 %v5134, %v8426
    %v8428 = vpop.f32.mrb[0].mxu0
    %v8429 = vadd.f32 %v5138, %v8428
    %8430 = vmatprep.mubr.bf16.mxu0 %v4591
    %8431 = vmatmul.mubr.bf16.gmra.mrb[0].mxu0 %v4590
    %v8432 = vpop.f32.mrb[0].mxu0
    %v8433 = vadd.f32 %v5134, %v8432
    %v8434 = vpop.f32.mrb[0].mxu0
    %v8435 = vadd.f32 %v5138, %v8434
    %v8436 = vpop.f32.mrb[0].mxu0
    %v8437 = vadd.f32 %v5134, %v8436
    %v8438 = vpop.f32.mrb[0].mxu0
    %v8439 = vadd.f32 %v5138, %v8438
    %8440 = vmatprep.mubr.bf16.mxu0 %v4600
    %8441 = vmatmul.mubr.bf16.gmra.mrb[0].mxu0 %v4599
    %v8442 = vpop.f32.mrb[0].mxu0
    %v8443 = vadd.f32 %v5134, %v8442
    %v8444 = vpop.f32.mrb[0].mxu0
    %v8445 = vadd.f32 %v5138, %v8444
    %v8446 = vpop.f32.mrb[0].mxu0
    %v8447 = vadd.f32 %v5134, %v8446
    %v8448 = vpop.f32.mrb[0].mxu0
    %v8449 = vadd.f32 %v5138, %v8448
    %8450 = vmatprep.mubr.bf16.mxu0 %v4609
    %8451 = vmatmul.mubr.bf16.gmra.mrb[0].mxu0 %v4608
    %v8452 = vpop.f32.mrb[0].mxu0
    %v8453 = vadd.f32 %v5134, %v8452
    %v8454 = vpop.f32.mrb[0].mxu0
    %v8455 = vadd.f32 %v5138, %v8454
    %v8456 = vpop.f32.mrb[0].mxu0
    %v8457 = vadd.f32 %v5134, %v8456
    %v8458 = vpop.f32.mrb[0].mxu0
    %v8459 = vadd.f32 %v5138, %v8458
    %8460 = vmatprep.mubr.bf16.mxu0 %v4618
    %8461 = vmatmul.mubr.bf16.gmra.mrb[0].mxu0 %v4617
    %v8462 = vpop.f32.mrb[0].mxu0
    %v8463 = vadd.f32 %v5134, %v8462
    %v8464 = vpop.f32.mrb[0].mxu0
    %v8465 = vadd.f32 %v5138, %v8464
    %v8466 = vpop.f32.mrb[0].mxu0
    %v8467 = vadd.f32 %v5134, %v8466
    %v8468 = vpop.f32.mrb[0].mxu0
    %v8469 = vadd.f32 %v5138, %v8468
    %8470 = vmatprep.mubr.bf16.mxu0 %v4627
    %8471 = vmatmul.mubr.bf16.gmra.mrb[0].mxu0 %v4626
    %v8472 = vpop.f32.mrb[0].mxu0
    %v8473 = vadd.f32 %v5134, %v8472
    %v8474 = vpop.f32.mrb[0].mxu0
    %v8475 = vadd.f32 %v5138, %v8474
    %v8476 = vpop.f32.mrb[0].mxu0
    %v8477 = vadd.f32 %v5134, %v8476
    %v8478 = vpop.f32.mrb[0].mxu0
    %v8479 = vadd.f32 %v5138, %v8478
    %8480 = vmatprep.mubr.bf16.mxu0 %v4636
    %8481 = vmatmul.mubr.bf16.gmra.mrb[0].mxu0 %v4635
    %v8482 = vpop.f32.mrb[0].mxu0
    %v8483 = vadd.f32 %v5134, %v8482
    %v8484 = vpop.f32.mrb[0].mxu0
    %v8485 = vadd.f32 %v5138, %v8484
    %v8486 = vpop.f32.mrb[0].mxu0
    %v8487 = vadd.f32 %v5134, %v8486
    %v8488 = vpop.f32.mrb[0].mxu0
    %v8489 = vadd.f32 %v5138, %v8488
    %8490 = vmatprep.mubr.bf16.mxu0 %v4645
    %8491 = vmatmul.mubr.bf16.gmra.mrb[0].mxu0 %v4644
    %v8492 = vpop.f32.mrb[0].mxu0
    %v8493 = vadd.f32 %v5134, %v8492
    %v8494 = vpop.f32.mrb[0].mxu0
    %v8495 = vadd.f32 %v5138, %v8494
    %v8496 = vpop.f32.mrb[0].mxu0
    %v8497 = vadd.f32 %v5134, %v8496
    %v8498 = vpop.f32.mrb[0].mxu0
    %v8499 = vadd.f32 %v5138, %v8498
    %8500 = vmatprep.mubr.bf16.mxu0 %v4654
    %8501 = vmatmul.mubr.bf16.gmra.mrb[0].mxu0 %v4653
    %v8502 = vpop.f32.mrb[0].mxu0
    %v8503 = vadd.f32 %v5134, %v8502
    %v8504 = vpop.f32.mrb[0].mxu0
    %v8505 = vadd.f32 %v5138, %v8504
    %v8506 = vpop.f32.mrb[0].mxu0
    %v8507 = vadd.f32 %v5134, %v8506
    %v8508 = vpop.f32.mrb[0].mxu0
    %v8509 = vadd.f32 %v5138, %v8508
    %8510 = vmatprep.mubr.bf16.mxu0 %v4663
    %8511 = vmatmul.mubr.bf16.gmra.mrb[0].mxu0 %v4662
    %v8512 = vpop.f32.mrb[0].mxu0
    %v8513 = vadd.f32 %v5134, %v8512
    %v8514 = vpop.f32.mrb[0].mxu0
    %v8515 = vadd.f32 %v5138, %v8514
    %v8516 = vpop.f32.mrb[0].mxu0
    %v8517 = vadd.f32 %v5134, %v8516
    %v8518 = vpop.f32.mrb[0].mxu0
    %v8519 = vadd.f32 %v5138, %v8518
    %8520 = vmatprep.mubr.bf16.mxu0 %v4672
    %8521 = vmatmul.mubr.bf16.gmra.mrb[0].mxu0 %v4671
    %v8522 = vpop.f32.mrb[0].mxu0
    %v8523 = vadd.f32 %v5134, %v8522
    %v8524 = vpop.f32.mrb[0].mxu0
    %v8525 = vadd.f32 %v5138, %v8524
    %v8526 = vpop.f32.mrb[0].mxu0
    %v8527 = vadd.f32 %v5134, %v8526
    %v8528 = vpop.f32.mrb[0].mxu0
    %v8529 = vadd.f32 %v5138, %v8528
    %8530 = vmatprep.mubr.bf16.mxu0 %v4681
    %8531 = vmatmul.mubr.bf16.gmra.mrb[0].mxu0 %v4680
    %v8532 = vpop.f32.mrb[0].mxu0
    %v8533 = vadd.f32 %v5134, %v8532
    %v8534 = vpop.f32.mrb[0].mxu0
    %v8535 = vadd.f32 %v5138, %v8534
    %v8536 = vpop.f32.mrb[0].mxu0
    %v8537 = vadd.f32 %v5134, %v8536
    %v8538 = vpop.f32.mrb[0].mxu0
    %v8539 = vadd.f32 %v5138, %v8538
    %8540 = vmatprep.mubr.bf16.mxu0 %v4690
    %8541 = vmatmul.mubr.bf16.gmra.mrb[0].mxu0 %v4689
    %v8542 = vpop.f32.mrb[0].mxu0
    %v8543 = vadd.f32 %v5134, %v8542
    %v8544 = vpop.f32.mrb[0].mxu0
    %v8545 = vadd.f32 %v5138, %v8544
    %v8546 = vpop.f32.mrb[0].mxu0
    %v8547 = vadd.f32 %v5134, %v8546
    %v8548 = vpop.f32.mrb[0].mxu0
    %v8549 = vadd.f32 %v5138, %v8548
    %8550 = vmatprep.mubr.bf16.mxu0 %v4699
    %8551 = vmatmul.mubr.bf16.gmra.mrb[0].mxu0 %v4698
    %v8552 = vpop.f32.mrb[0].mxu0
    %v8553 = vadd.f32 %v5134, %v8552
    %v8554 = vpop.f32.mrb[0].mxu0
    %v8555 = vadd.f32 %v5138, %v8554
    %v8556 = vpop.f32.mrb[0].mxu0
    %v8557 = vadd.f32 %v5134, %v8556
    %v8558 = vpop.f32.mrb[0].mxu0
    %v8559 = vadd.f32 %v5138, %v8558
    %8560 = vmatprep.mubr.bf16.mxu0 %v4708
    %8561 = vmatmul.mubr.bf16.gmra.mrb[0].mxu0 %v4707
    %v8562 = vpop.f32.mrb[0].mxu0
    %v8563 = vadd.f32 %v5134, %v8562
    %v8564 = vpop.f32.mrb[0].mxu0
    %v8565 = vadd.f32 %v5138, %v8564
    %v8566 = vpop.f32.mrb[0].mxu0
    %v8567 = vadd.f32 %v5134, %v8566
    %v8568 = vpop.f32.mrb[0].mxu0
    %v8569 = vadd.f32 %v5138, %v8568
    %8570 = vmatprep.mubr.bf16.mxu0 %v4717
    %8571 = vmatmul.mubr.bf16.gmra.mrb[0].mxu0 %v4716
    %v8572 = vpop.f32.mrb[0].mxu0
    %v8573 = vadd.f32 %v5134, %v8572
    %v8574 = vpop.f32.mrb[0].mxu0
    %v8575 = vadd.f32 %v5138, %v8574
    %v8576 = vpop.f32.mrb[0].mxu0
    %v8577 = vadd.f32 %v5134, %v8576
    %v8578 = vpop.f32.mrb[0].mxu0
    %v8579 = vadd.f32 %v5138, %v8578
    %8580 = vmatprep.mubr.bf16.mxu0 %v4726
    %8581 = vmatmul.mubr.bf16.gmra.mrb[0].mxu0 %v4725
    %v8582 = vpop.f32.mrb[0].mxu0
    %v8583 = vadd.f32 %v5134, %v8582
    %v8584 = vpop.f32.mrb[0].mxu0
    %v8585 = vadd.f32 %v5138, %v8584
    %v8586 = vpop.f32.mrb[0].mxu0
    %v8587 = vadd.f32 %v5134, %v8586
    %v8588 = vpop.f32.mrb[0].mxu0
    %v8589 = vadd.f32 %v5138, %v8588
    %8590 = vmatprep.mubr.bf16.mxu0 %v4735
    %8591 = vmatmul.mubr.bf16.gmra.mrb[0].mxu0 %v4734
    %v8592 = vpop.f32.mrb[0].mxu0
    %v8593 = vadd.f32 %v5134, %v8592
    %v8594 = vpop.f32.mrb[0].mxu0
    %v8595 = vadd.f32 %v5138, %v8594
    %v8596 = vpop.f32.mrb[0].mxu0
    %v8597 = vadd.f32 %v5134, %v8596
    %v8598 = vpop.f32.mrb[0].mxu0
    %v8599 = vadd.f32 %v5138, %v8598
    %8600 = vmatprep.mubr.bf16.mxu0 %v4744
    %8601 = vmatmul.mubr.bf16.gmra.mrb[0].mxu0 %v4743
    %v8602 = vpop.f32.mrb[0].mxu0
    %v8603 = vadd.f32 %v5134, %v8602
    %v8604 = vpop.f32.mrb[0].mxu0
    %v8605 = vadd.f32 %v5138, %v8604
    %v8606 = vpop.f32.mrb[0].mxu0
    %v8607 = vadd.f32 %v5134, %v8606
    %v8608 = vpop.f32.mrb[0].mxu0
    %v8609 = vadd.f32 %v5138, %v8608
    %8610 = vmatprep.mubr.bf16.mxu0 %v4753
    %8611 = vmatmul.mubr.bf16.gmra.mrb[0].mxu0 %v4752
    %v8612 = vpop.f32.mrb[0].mxu0
    %v8613 = vadd.f32 %v5134, %v8612
    %v8614 = vpop.f32.mrb[0].mxu0
    %v8615 = vadd.f32 %v5138, %v8614
    %v8616 = vpop.f32.mrb[0].mxu0
    %v8617 = vadd.f32 %v5134, %v8616
    %v8618 = vpop.f32.mrb[0].mxu0
    %v8619 = vadd.f32 %v5138, %v8618
    %8620 = vmatprep.mubr.bf16.mxu0 %v4762
    %8621 = vmatmul.mubr.bf16.gmra.mrb[0].mxu0 %v4761
    %v8622 = vpop.f32.mrb[0].mxu0
    %v8623 = vadd.f32 %v5134, %v8622
    %v8624 = vpop.f32.mrb[0].mxu0
    %v8625 = vadd.f32 %v5138, %v8624
    %v8626 = vpop.f32.mrb[0].mxu0
    %v8627 = vadd.f32 %v5134, %v8626
    %v8628 = vpop.f32.mrb[0].mxu0
    %v8629 = vadd.f32 %v5138, %v8628
    %8630 = vmatprep.mubr.bf16.mxu0 %v4771
    %8631 = vmatmul.mubr.bf16.gmra.mrb[0].mxu0 %v4770
    %v8632 = vpop.f32.mrb[0].mxu0
    %v8633 = vadd.f32 %v5134, %v8632
    %v8634 = vpop.f32.mrb[0].mxu0
    %v8635 = vadd.f32 %v5138, %v8634
    %v8636 = vpop.f32.mrb[0].mxu0
    %v8637 = vadd.f32 %v5134, %v8636
    %v8638 = vpop.f32.mrb[0].mxu0
    %v8639 = vadd.f32 %v5138, %v8638
    %8640 = vmatprep.mubr.bf16.mxu0 %v4780
    %8641 = vmatmul.mubr.bf16.gmra.mrb[0].mxu0 %v4779
    %v8642 = vpop.f32.mrb[0].mxu0
    %v8643 = vadd.f32 %v5134, %v8642
    %v8644 = vpop.f32.mrb[0].mxu0
    %v8645 = vadd.f32 %v5138, %v8644
    %v8646 = vpop.f32.mrb[0].mxu0
    %v8647 = vadd.f32 %v5134, %v8646
    %v8648 = vpop.f32.mrb[0].mxu0
    %v8649 = vadd.f32 %v5138, %v8648
    %8650 = vmatprep.mubr.bf16.mxu0 %v4789
    %8651 = vmatmul.mubr.bf16.gmra.mrb[0].mxu0 %v4788
    %v8652 = vpop.f32.mrb[0].mxu0
    %v8653 = vadd.f32 %v5134, %v8652
    %v8654 = vpop.f32.mrb[0].mxu0
    %v8655 = vadd.f32 %v5138, %v8654
    %v8656 = vpop.f32.mrb[0].mxu0
    %v8657 = vadd.f32 %v5134, %v8656
    %v8658 = vpop.f32.mrb[0].mxu0
    %v8659 = vadd.f32 %v5138, %v8658
    %8660 = vmatprep.mubr.bf16.mxu0 %v4798
    %8661 = vmatmul.mubr.bf16.gmra.mrb[0].mxu0 %v4797
    %v8662 = vpop.f32.mrb[0].mxu0
    %v8663 = vadd.f32 %v5134, %v8662
    %v8664 = vpop.f32.mrb[0].mxu0
    %v8665 = vadd.f32 %v5138, %v8664
    %v8666 = vpop.f32.mrb[0].mxu0
    %v8667 = vadd.f32 %v5134, %v8666
    %v8668 = vpop.f32.mrb[0].mxu0
    %v8669 = vadd.f32 %v5138, %v8668
    %8670 = vmatprep.mubr.bf16.mxu0 %v4807
    %8671 = vmatmul.mubr.bf16.gmra.mrb[0].mxu0 %v4806
    %v8672 = vpop.f32.mrb[0].mxu0
    %v8673 = vadd.f32 %v5134, %v8672
    %v8674 = vpop.f32.mrb[0].mxu0
    %v8675 = vadd.f32 %v5138, %v8674
    %v8676 = vpop.f32.mrb[0].mxu0
    %v8677 = vadd.f32 %v5134, %v8676
    %v8678 = vpop.f32.mrb[0].mxu0
    %v8679 = vadd.f32 %v5138, %v8678
    %8680 = vmatprep.mubr.bf16.mxu0 %v4816
    %8681 = vmatmul.mubr.bf16.gmra.mrb[0].mxu0 %v4815
    %v8682 = vpop.f32.mrb[0].mxu0
    %v8683 = vadd.f32 %v5134, %v8682
    %v8684 = vpop.f32.mrb[0].mxu0
    %v8685 = vadd.f32 %v5138, %v8684
    %v8686 = vpop.f32.mrb[0].mxu0
    %v8687 = vadd.f32 %v5134, %v8686
    %v8688 = vpop.f32.mrb[0].mxu0
    %v8689 = vadd.f32 %v5138, %v8688
    %8690 = vmatprep.mubr.bf16.mxu0 %v4825
    %8691 = vmatmul.mubr.bf16.gmra.mrb[0].mxu0 %v4824
    %v8692 = vpop.f32.mrb[0].mxu0
    %v8693 = vadd.f32 %v5134, %v8692
    %v8694 = vpop.f32.mrb[0].mxu0
    %v8695 = vadd.f32 %v5138, %v8694
    %v8696 = vpop.f32.mrb[0].mxu0
    %v8697 = vadd.f32 %v5134, %v8696
    %v8698 = vpop.f32.mrb[0].mxu0
    %v8699 = vadd.f32 %v5138, %v8698
    %8700 = vdwg.mxu0
    %8701 = vmatprep.subr.bf16.mxu0 %v6074
    %8702 = vmatpush1.bf16.msra.mxu0 %v6073
    %8703 = vmatprep.subr.bf16.mxu0 %v6078
    %8704 = vmatpush1.bf16.msra.mxu0 %v6077
    %8705 = vmatprep.subr.bf16.mxu0 %v6082
    %8706 = vmatpush1.bf16.msra.mxu0 %v6081
    %8707 = vmatprep.subr.bf16.mxu0 %v6086
    %8708 = vmatpush1.bf16.msra.mxu0 %v6085
    %8709 = vmatprep.subr.bf16.mxu0 %v6090
    %8710 = vmatpush1.bf16.msra.mxu0 %v6089
    %8711 = vmatprep.subr.bf16.mxu0 %v6094
    %8712 = vmatpush1.bf16.msra.mxu0 %v6093
    %8713 = vmatprep.subr.bf16.mxu0 %v6098
    %8714 = vmatpush1.bf16.msra.mxu0 %v6097
    %8715 = vmatprep.subr.bf16.mxu0 %v6102
    %8716 = vmatpush1.bf16.msra.mxu0 %v6101
    %8717 = vmatprep.subr.bf16.mxu0 %v6106
    %8718 = vmatpush1.bf16.msra.mxu0 %v6105
    %8719 = vmatprep.subr.bf16.mxu0 %v6110
    %8720 = vmatpush1.bf16.msra.mxu0 %v6109
    %8721 = vmatprep.subr.bf16.mxu0 %v6114
    %8722 = vmatpush1.bf16.msra.mxu0 %v6113
    %8723 = vmatprep.subr.bf16.mxu0 %v6118
    %8724 = vmatpush1.bf16.msra.mxu0 %v6117
    %8725 = vmatprep.subr.bf16.mxu0 %v6122
    %8726 = vmatpush1.bf16.msra.mxu0 %v6121
    %8727 = vmatprep.subr.bf16.mxu0 %v6126
    %8728 = vmatpush1.bf16.msra.mxu0 %v6125
    %8729 = vmatprep.subr.bf16.mxu0 %v6130
    %8730 = vmatpush1.bf16.msra.mxu0 %v6129
    %8731 = vmatprep.subr.bf16.mxu0 %v6134
    %8732 = vmatpush1.bf16.msra.mxu0 %v6133
    %8733 = vmatprep.mubr.bf16.mxu0 %v4548
    %8734 = vmatmul.mubr.bf16.gmra.mrb[0].mxu0 %v4547
    %v8735 = vpop.f32.mrb[0].mxu0
    %v8736 = vadd.f32 %v8383, %v8735
    %v8737 = vpop.f32.mrb[0].mxu0
    %v8738 = vadd.f32 %v8385, %v8737
    %v8739 = vpop.f32.mrb[0].mxu0
    %v8740 = vadd.f32 %v8387, %v8739
    %v8741 = vpop.f32.mrb[0].mxu0
    %v8742 = vadd.f32 %v8389, %v8741
    %8743 = vmatprep.mubr.bf16.mxu0 %v4557
    %8744 = vmatmul.mubr.bf16.gmra.mrb[0].mxu0 %v4556
    %v8745 = vpop.f32.mrb[0].mxu0
    %v8746 = vadd.f32 %v8393, %v8745
    %v8747 = vpop.f32.mrb[0].mxu0
    %v8748 = vadd.f32 %v8395, %v8747
    %v8749 = vpop.f32.mrb[0].mxu0
    %v8750 = vadd.f32 %v8397, %v8749
    %v8751 = vpop.f32.mrb[0].mxu0
    %v8752 = vadd.f32 %v8399, %v8751
    %8753 = vmatprep.mubr.bf16.mxu0 %v4566
    %8754 = vmatmul.mubr.bf16.gmra.mrb[0].mxu0 %v4565
    %v8755 = vpop.f32.mrb[0].mxu0
    %v8756 = vadd.f32 %v8403, %v8755
    %v8757 = vpop.f32.mrb[0].mxu0
    %v8758 = vadd.f32 %v8405, %v8757
    %v8759 = vpop.f32.mrb[0].mxu0
    %v8760 = vadd.f32 %v8407, %v8759
    %v8761 = vpop.f32.mrb[0].mxu0
    %v8762 = vadd.f32 %v8409, %v8761
    %8763 = vmatprep.mubr.bf16.mxu0 %v4575
    %8764 = vmatmul.mubr.bf16.gmra.mrb[0].mxu0 %v4574
    %v8765 = vpop.f32.mrb[0].mxu0
    %v8766 = vadd.f32 %v8413, %v8765
    %v8767 = vpop.f32.mrb[0].mxu0
    %v8768 = vadd.f32 %v8415, %v8767
    %v8769 = vpop.f32.mrb[0].mxu0
    %v8770 = vadd.f32 %v8417, %v8769
    %v8771 = vpop.f32.mrb[0].mxu0
    %v8772 = vadd.f32 %v8419, %v8771
    %8773 = vmatprep.mubr.bf16.mxu0 %v4584
    %8774 = vmatmul.mubr.bf16.gmra.mrb[0].mxu0 %v4583
    %v8775 = vpop.f32.mrb[0].mxu0
    %v8776 = vadd.f32 %v8423, %v8775
    %v8777 = vpop.f32.mrb[0].mxu0
    %v8778 = vadd.f32 %v8425, %v8777
    %v8779 = vpop.f32.mrb[0].mxu0
    %v8780 = vadd.f32 %v8427, %v8779
    %v8781 = vpop.f32.mrb[0].mxu0
    %v8782 = vadd.f32 %v8429, %v8781
    %8783 = vmatprep.mubr.bf16.mxu0 %v4593
    %8784 = vmatmul.mubr.bf16.gmra.mrb[0].mxu0 %v4592
    %v8785 = vpop.f32.mrb[0].mxu0
    %v8786 = vadd.f32 %v8433, %v8785
    %v8787 = vpop.f32.mrb[0].mxu0
    %v8788 = vadd.f32 %v8435, %v8787
    %v8789 = vpop.f32.mrb[0].mxu0
    %v8790 = vadd.f32 %v8437, %v8789
    %v8791 = vpop.f32.mrb[0].mxu0
    %v8792 = vadd.f32 %v8439, %v8791
    %8793 = vmatprep.mubr.bf16.mxu0 %v4602
    %8794 = vmatmul.mubr.bf16.gmra.mrb[0].mxu0 %v4601
    %v8795 = vpop.f32.mrb[0].mxu0
    %v8796 = vadd.f32 %v8443, %v8795
    %v8797 = vpop.f32.mrb[0].mxu0
    %v8798 = vadd.f32 %v8445, %v8797
    %v8799 = vpop.f32.mrb[0].mxu0
    %v8800 = vadd.f32 %v8447, %v8799
    %v8801 = vpop.f32.mrb[0].mxu0
    %v8802 = vadd.f32 %v8449, %v8801
    %8803 = vmatprep.mubr.bf16.mxu0 %v4611
    %8804 = vmatmul.mubr.bf16.gmra.mrb[0].mxu0 %v4610
    %v8805 = vpop.f32.mrb[0].mxu0
    %v8806 = vadd.f32 %v8453, %v8805
    %v8807 = vpop.f32.mrb[0].mxu0
    %v8808 = vadd.f32 %v8455, %v8807
    %v8809 = vpop.f32.mrb[0].mxu0
    %v8810 = vadd.f32 %v8457, %v8809
    %v8811 = vpop.f32.mrb[0].mxu0
    %v8812 = vadd.f32 %v8459, %v8811
    %8813 = vmatprep.mubr.bf16.mxu0 %v4620
    %8814 = vmatmul.mubr.bf16.gmra.mrb[0].mxu0 %v4619
    %v8815 = vpop.f32.mrb[0].mxu0
    %v8816 = vadd.f32 %v8463, %v8815
    %v8817 = vpop.f32.mrb[0].mxu0
    %v8818 = vadd.f32 %v8465, %v8817
    %v8819 = vpop.f32.mrb[0].mxu0
    %v8820 = vadd.f32 %v8467, %v8819
    %v8821 = vpop.f32.mrb[0].mxu0
    %v8822 = vadd.f32 %v8469, %v8821
    %8823 = vmatprep.mubr.bf16.mxu0 %v4629
    %8824 = vmatmul.mubr.bf16.gmra.mrb[0].mxu0 %v4628
    %v8825 = vpop.f32.mrb[0].mxu0
    %v8826 = vadd.f32 %v8473, %v8825
    %v8827 = vpop.f32.mrb[0].mxu0
    %v8828 = vadd.f32 %v8475, %v8827
    %v8829 = vpop.f32.mrb[0].mxu0
    %v8830 = vadd.f32 %v8477, %v8829
    %v8831 = vpop.f32.mrb[0].mxu0
    %v8832 = vadd.f32 %v8479, %v8831
    %8833 = vmatprep.mubr.bf16.mxu0 %v4638
    %8834 = vmatmul.mubr.bf16.gmra.mrb[0].mxu0 %v4637
    %v8835 = vpop.f32.mrb[0].mxu0
    %v8836 = vadd.f32 %v8483, %v8835
    %v8837 = vpop.f32.mrb[0].mxu0
    %v8838 = vadd.f32 %v8485, %v8837
    %v8839 = vpop.f32.mrb[0].mxu0
    %v8840 = vadd.f32 %v8487, %v8839
    %v8841 = vpop.f32.mrb[0].mxu0
    %v8842 = vadd.f32 %v8489, %v8841
    %8843 = vmatprep.mubr.bf16.mxu0 %v4647
    %8844 = vmatmul.mubr.bf16.gmra.mrb[0].mxu0 %v4646
    %v8845 = vpop.f32.mrb[0].mxu0
    %v8846 = vadd.f32 %v8493, %v8845
    %v8847 = vpop.f32.mrb[0].mxu0
    %v8848 = vadd.f32 %v8495, %v8847
    %v8849 = vpop.f32.mrb[0].mxu0
    %v8850 = vadd.f32 %v8497, %v8849
    %v8851 = vpop.f32.mrb[0].mxu0
    %v8852 = vadd.f32 %v8499, %v8851
    %8853 = vmatprep.mubr.bf16.mxu0 %v4656
    %8854 = vmatmul.mubr.bf16.gmra.mrb[0].mxu0 %v4655
    %v8855 = vpop.f32.mrb[0].mxu0
    %v8856 = vadd.f32 %v8503, %v8855
    %v8857 = vpop.f32.mrb[0].mxu0
    %v8858 = vadd.f32 %v8505, %v8857
    %v8859 = vpop.f32.mrb[0].mxu0
    %v8860 = vadd.f32 %v8507, %v8859
    %v8861 = vpop.f32.mrb[0].mxu0
    %v8862 = vadd.f32 %v8509, %v8861
    %8863 = vmatprep.mubr.bf16.mxu0 %v4665
    %8864 = vmatmul.mubr.bf16.gmra.mrb[0].mxu0 %v4664
    %v8865 = vpop.f32.mrb[0].mxu0
    %v8866 = vadd.f32 %v8513, %v8865
    %v8867 = vpop.f32.mrb[0].mxu0
    %v8868 = vadd.f32 %v8515, %v8867
    %v8869 = vpop.f32.mrb[0].mxu0
    %v8870 = vadd.f32 %v8517, %v8869
    %v8871 = vpop.f32.mrb[0].mxu0
    %v8872 = vadd.f32 %v8519, %v8871
    %8873 = vmatprep.mubr.bf16.mxu0 %v4674
    %8874 = vmatmul.mubr.bf16.gmra.mrb[0].mxu0 %v4673
    %v8875 = vpop.f32.mrb[0].mxu0
    %v8876 = vadd.f32 %v8523, %v8875
    %v8877 = vpop.f32.mrb[0].mxu0
    %v8878 = vadd.f32 %v8525, %v8877
    %v8879 = vpop.f32.mrb[0].mxu0
    %v8880 = vadd.f32 %v8527, %v8879
    %v8881 = vpop.f32.mrb[0].mxu0
    %v8882 = vadd.f32 %v8529, %v8881
    %8883 = vmatprep.mubr.bf16.mxu0 %v4683
    %8884 = vmatmul.mubr.bf16.gmra.mrb[0].mxu0 %v4682
    %v8885 = vpop.f32.mrb[0].mxu0
    %v8886 = vadd.f32 %v8533, %v8885
    %v8887 = vpop.f32.mrb[0].mxu0
    %v8888 = vadd.f32 %v8535, %v8887
    %v8889 = vpop.f32.mrb[0].mxu0
    %v8890 = vadd.f32 %v8537, %v8889
    %v8891 = vpop.f32.mrb[0].mxu0
    %v8892 = vadd.f32 %v8539, %v8891
    %8893 = vmatprep.mubr.bf16.mxu0 %v4692
    %8894 = vmatmul.mubr.bf16.gmra.mrb[0].mxu0 %v4691
    %v8895 = vpop.f32.mrb[0].mxu0
    %v8896 = vadd.f32 %v8543, %v8895
    %v8897 = vpop.f32.mrb[0].mxu0
    %v8898 = vadd.f32 %v8545, %v8897
    %v8899 = vpop.f32.mrb[0].mxu0
    %v8900 = vadd.f32 %v8547, %v8899
    %v8901 = vpop.f32.mrb[0].mxu0
    %v8902 = vadd.f32 %v8549, %v8901
    %8903 = vmatprep.mubr.bf16.mxu0 %v4701
    %8904 = vmatmul.mubr.bf16.gmra.mrb[0].mxu0 %v4700
    %v8905 = vpop.f32.mrb[0].mxu0
    %v8906 = vadd.f32 %v8553, %v8905
    %v8907 = vpop.f32.mrb[0].mxu0
    %v8908 = vadd.f32 %v8555, %v8907
    %v8909 = vpop.f32.mrb[0].mxu0
    %v8910 = vadd.f32 %v8557, %v8909
    %v8911 = vpop.f32.mrb[0].mxu0
    %v8912 = vadd.f32 %v8559, %v8911
    %8913 = vmatprep.mubr.bf16.mxu0 %v4710
    %8914 = vmatmul.mubr.bf16.gmra.mrb[0].mxu0 %v4709
    %v8915 = vpop.f32.mrb[0].mxu0
    %v8916 = vadd.f32 %v8563, %v8915
    %v8917 = vpop.f32.mrb[0].mxu0
    %v8918 = vadd.f32 %v8565, %v8917
    %v8919 = vpop.f32.mrb[0].mxu0
    %v8920 = vadd.f32 %v8567, %v8919
    %v8921 = vpop.f32.mrb[0].mxu0
    %v8922 = vadd.f32 %v8569, %v8921
    %8923 = vmatprep.mubr.bf16.mxu0 %v4719
    %8924 = vmatmul.mubr.bf16.gmra.mrb[0].mxu0 %v4718
    %v8925 = vpop.f32.mrb[0].mxu0
    %v8926 = vadd.f32 %v8573, %v8925
    %v8927 = vpop.f32.mrb[0].mxu0
    %v8928 = vadd.f32 %v8575, %v8927
    %v8929 = vpop.f32.mrb[0].mxu0
    %v8930 = vadd.f32 %v8577, %v8929
    %v8931 = vpop.f32.mrb[0].mxu0
    %v8932 = vadd.f32 %v8579, %v8931
    %8933 = vmatprep.mubr.bf16.mxu0 %v4728
    %8934 = vmatmul.mubr.bf16.gmra.mrb[0].mxu0 %v4727
    %v8935 = vpop.f32.mrb[0].mxu0
    %v8936 = vadd.f32 %v8583, %v8935
    %v8937 = vpop.f32.mrb[0].mxu0
    %v8938 = vadd.f32 %v8585, %v8937
    %v8939 = vpop.f32.mrb[0].mxu0
    %v8940 = vadd.f32 %v8587, %v8939
    %v8941 = vpop.f32.mrb[0].mxu0
    %v8942 = vadd.f32 %v8589, %v8941
    %8943 = vmatprep.mubr.bf16.mxu0 %v4737
    %8944 = vmatmul.mubr.bf16.gmra.mrb[0].mxu0 %v4736
    %v8945 = vpop.f32.mrb[0].mxu0
    %v8946 = vadd.f32 %v8593, %v8945
    %v8947 = vpop.f32.mrb[0].mxu0
    %v8948 = vadd.f32 %v8595, %v8947
    %v8949 = vpop.f32.mrb[0].mxu0
    %v8950 = vadd.f32 %v8597, %v8949
    %v8951 = vpop.f32.mrb[0].mxu0
    %v8952 = vadd.f32 %v8599, %v8951
    %8953 = vmatprep.mubr.bf16.mxu0 %v4746
    %8954 = vmatmul.mubr.bf16.gmra.mrb[0].mxu0 %v4745
    %v8955 = vpop.f32.mrb[0].mxu0
    %v8956 = vadd.f32 %v8603, %v8955
    %v8957 = vpop.f32.mrb[0].mxu0
    %v8958 = vadd.f32 %v8605, %v8957
    %v8959 = vpop.f32.mrb[0].mxu0
    %v8960 = vadd.f32 %v8607, %v8959
    %v8961 = vpop.f32.mrb[0].mxu0
    %v8962 = vadd.f32 %v8609, %v8961
    %8963 = vmatprep.mubr.bf16.mxu0 %v4755
    %8964 = vmatmul.mubr.bf16.gmra.mrb[0].mxu0 %v4754
    %v8965 = vpop.f32.mrb[0].mxu0
    %v8966 = vadd.f32 %v8613, %v8965
    %v8967 = vpop.f32.mrb[0].mxu0
    %v8968 = vadd.f32 %v8615, %v8967
    %v8969 = vpop.f32.mrb[0].mxu0
    %v8970 = vadd.f32 %v8617, %v8969
    %v8971 = vpop.f32.mrb[0].mxu0
    %v8972 = vadd.f32 %v8619, %v8971
    %8973 = vmatprep.mubr.bf16.mxu0 %v4764
    %8974 = vmatmul.mubr.bf16.gmra.mrb[0].mxu0 %v4763
    %v8975 = vpop.f32.mrb[0].mxu0
    %v8976 = vadd.f32 %v8623, %v8975
    %v8977 = vpop.f32.mrb[0].mxu0
    %v8978 = vadd.f32 %v8625, %v8977
    %v8979 = vpop.f32.mrb[0].mxu0
    %v8980 = vadd.f32 %v8627, %v8979
    %v8981 = vpop.f32.mrb[0].mxu0
    %v8982 = vadd.f32 %v8629, %v8981
    %8983 = vmatprep.mubr.bf16.mxu0 %v4773
    %8984 = vmatmul.mubr.bf16.gmra.mrb[0].mxu0 %v4772
    %v8985 = vpop.f32.mrb[0].mxu0
    %v8986 = vadd.f32 %v8633, %v8985
    %v8987 = vpop.f32.mrb[0].mxu0
    %v8988 = vadd.f32 %v8635, %v8987
    %v8989 = vpop.f32.mrb[0].mxu0
    %v8990 = vadd.f32 %v8637, %v8989
    %v8991 = vpop.f32.mrb[0].mxu0
    %v8992 = vadd.f32 %v8639, %v8991
    %8993 = vmatprep.mubr.bf16.mxu0 %v4782
    %8994 = vmatmul.mubr.bf16.gmra.mrb[0].mxu0 %v4781
    %v8995 = vpop.f32.mrb[0].mxu0
    %v8996 = vadd.f32 %v8643, %v8995
    %v8997 = vpop.f32.mrb[0].mxu0
    %v8998 = vadd.f32 %v8645, %v8997
    %v8999 = vpop.f32.mrb[0].mxu0
    %v9000 = vadd.f32 %v8647, %v8999
    %v9001 = vpop.f32.mrb[0].mxu0
    %v9002 = vadd.f32 %v8649, %v9001
    %9003 = vmatprep.mubr.bf16.mxu0 %v4791
    %9004 = vmatmul.mubr.bf16.gmra.mrb[0].mxu0 %v4790
    %v9005 = vpop.f32.mrb[0].mxu0
    %v9006 = vadd.f32 %v8653, %v9005
    %v9007 = vpop.f32.mrb[0].mxu0
    %v9008 = vadd.f32 %v8655, %v9007
    %v9009 = vpop.f32.mrb[0].mxu0
    %v9010 = vadd.f32 %v8657, %v9009
    %v9011 = vpop.f32.mrb[0].mxu0
    %v9012 = vadd.f32 %v8659, %v9011
    %9013 = vmatprep.mubr.bf16.mxu0 %v4800
    %9014 = vmatmul.mubr.bf16.gmra.mrb[0].mxu0 %v4799
    %v9015 = vpop.f32.mrb[0].mxu0
    %v9016 = vadd.f32 %v8663, %v9015
    %v9017 = vpop.f32.mrb[0].mxu0
    %v9018 = vadd.f32 %v8665, %v9017
    %v9019 = vpop.f32.mrb[0].mxu0
    %v9020 = vadd.f32 %v8667, %v9019
    %v9021 = vpop.f32.mrb[0].mxu0
    %v9022 = vadd.f32 %v8669, %v9021
    %9023 = vmatprep.mubr.bf16.mxu0 %v4809
    %9024 = vmatmul.mubr.bf16.gmra.mrb[0].mxu0 %v4808
    %v9025 = vpop.f32.mrb[0].mxu0
    %v9026 = vadd.f32 %v8673, %v9025
    %v9027 = vpop.f32.mrb[0].mxu0
    %v9028 = vadd.f32 %v8675, %v9027
    %v9029 = vpop.f32.mrb[0].mxu0
    %v9030 = vadd.f32 %v8677, %v9029
    %v9031 = vpop.f32.mrb[0].mxu0
    %v9032 = vadd.f32 %v8679, %v9031
    %9033 = vmatprep.mubr.bf16.mxu0 %v4818
    %9034 = vmatmul.mubr.bf16.gmra.mrb[0].mxu0 %v4817
    %v9035 = vpop.f32.mrb[0].mxu0
    %v9036 = vadd.f32 %v8683, %v9035
    %v9037 = vpop.f32.mrb[0].mxu0
    %v9038 = vadd.f32 %v8685, %v9037
    %v9039 = vpop.f32.mrb[0].mxu0
    %v9040 = vadd.f32 %v8687, %v9039
    %v9041 = vpop.f32.mrb[0].mxu0
    %v9042 = vadd.f32 %v8689, %v9041
    %9043 = vmatprep.mubr.bf16.mxu0 %v4827
    %9044 = vmatmul.mubr.bf16.gmra.mrb[0].mxu0 %v4826
    %v9045 = vpop.f32.mrb[0].mxu0
    %v9046 = vadd.f32 %v8693, %v9045
    %v9047 = vpop.f32.mrb[0].mxu0
    %v9048 = vadd.f32 %v8695, %v9047
    %v9049 = vpop.f32.mrb[0].mxu0
    %v9050 = vadd.f32 %v8697, %v9049
    %v9051 = vpop.f32.mrb[0].mxu0
    %v9052 = vadd.f32 %v8699, %v9051
    %9053 = vdwg.mxu0
    %9054 = vmatprep.subr.bf16.mxu0 %v6138
    %9055 = vmatpush1.bf16.msra.mxu0 %v6137
    %9056 = vmatprep.subr.bf16.mxu0 %v6142
    %9057 = vmatpush1.bf16.msra.mxu0 %v6141
    %9058 = vmatprep.subr.bf16.mxu0 %v6146
    %9059 = vmatpush1.bf16.msra.mxu0 %v6145
    %9060 = vmatprep.subr.bf16.mxu0 %v6150
    %9061 = vmatpush1.bf16.msra.mxu0 %v6149
    %9062 = vmatprep.subr.bf16.mxu0 %v6154
    %9063 = vmatpush1.bf16.msra.mxu0 %v6153
    %9064 = vmatprep.subr.bf16.mxu0 %v6158
    %9065 = vmatpush1.bf16.msra.mxu0 %v6157
    %9066 = vmatprep.subr.bf16.mxu0 %v6162
    %9067 = vmatpush1.bf16.msra.mxu0 %v6161
    %9068 = vmatprep.subr.bf16.mxu0 %v6166
    %9069 = vmatpush1.bf16.msra.mxu0 %v6165
    %9070 = vmatprep.subr.bf16.mxu0 %v6170
    %9071 = vmatpush1.bf16.msra.mxu0 %v6169
    %9072 = vmatprep.subr.bf16.mxu0 %v6174
    %9073 = vmatpush1.bf16.msra.mxu0 %v6173
    %9074 = vmatprep.subr.bf16.mxu0 %v6178
    %9075 = vmatpush1.bf16.msra.mxu0 %v6177
    %9076 = vmatprep.subr.bf16.mxu0 %v6182
    %9077 = vmatpush1.bf16.msra.mxu0 %v6181
    %9078 = vmatprep.subr.bf16.mxu0 %v6186
    %9079 = vmatpush1.bf16.msra.mxu0 %v6185
    %9080 = vmatprep.subr.bf16.mxu0 %v6190
    %9081 = vmatpush1.bf16.msra.mxu0 %v6189
    %9082 = vmatprep.subr.bf16.mxu0 %v6194
    %9083 = vmatpush1.bf16.msra.mxu0 %v6193
    %9084 = vmatprep.subr.bf16.mxu0 %v6198
    %9085 = vmatpush1.bf16.msra.mxu0 %v6197
    %9086 = vmatprep.mubr.bf16.mxu0 %v4550
    %9087 = vmatmul.mubr.bf16.gmra.mrb[0].mxu0 %v4549
    %v9088 = vpop.f32.mrb[0].mxu0
    %v9089 = vadd.f32 %v8736, %v9088
    %v9090 = vpop.f32.mrb[0].mxu0
    %v9091 = vadd.f32 %v8738, %v9090
    %v9092 = vpop.f32.mrb[0].mxu0
    %v9093 = vadd.f32 %v8740, %v9092
    %v9094 = vpop.f32.mrb[0].mxu0
    %v9095 = vadd.f32 %v8742, %v9094
    %9096 = vmatprep.mubr.bf16.mxu0 %v4559
    %9097 = vmatmul.mubr.bf16.gmra.mrb[0].mxu0 %v4558
    %v9098 = vpop.f32.mrb[0].mxu0
    %v9099 = vadd.f32 %v8746, %v9098
    %v9100 = vpop.f32.mrb[0].mxu0
    %v9101 = vadd.f32 %v8748, %v9100
    %v9102 = vpop.f32.mrb[0].mxu0
    %v9103 = vadd.f32 %v8750, %v9102
    %v9104 = vpop.f32.mrb[0].mxu0
    %v9105 = vadd.f32 %v8752, %v9104
    %9106 = vmatprep.mubr.bf16.mxu0 %v4568
    %9107 = vmatmul.mubr.bf16.gmra.mrb[0].mxu0 %v4567
    %v9108 = vpop.f32.mrb[0].mxu0
    %v9109 = vadd.f32 %v8756, %v9108
    %v9110 = vpop.f32.mrb[0].mxu0
    %v9111 = vadd.f32 %v8758, %v9110
    %v9112 = vpop.f32.mrb[0].mxu0
    %v9113 = vadd.f32 %v8760, %v9112
    %v9114 = vpop.f32.mrb[0].mxu0
    %v9115 = vadd.f32 %v8762, %v9114
    %9116 = vmatprep.mubr.bf16.mxu0 %v4577
    %9117 = vmatmul.mubr.bf16.gmra.mrb[0].mxu0 %v4576
    %v9118 = vpop.f32.mrb[0].mxu0
    %v9119 = vadd.f32 %v8766, %v9118
    %v9120 = vpop.f32.mrb[0].mxu0
    %v9121 = vadd.f32 %v8768, %v9120
    %v9122 = vpop.f32.mrb[0].mxu0
    %v9123 = vadd.f32 %v8770, %v9122
    %v9124 = vpop.f32.mrb[0].mxu0
    %v9125 = vadd.f32 %v8772, %v9124
    %9126 = vmatprep.mubr.bf16.mxu0 %v4586
    %9127 = vmatmul.mubr.bf16.gmra.mrb[0].mxu0 %v4585
    %v9128 = vpop.f32.mrb[0].mxu0
    %v9129 = vadd.f32 %v8776, %v9128
    %v9130 = vpop.f32.mrb[0].mxu0
    %v9131 = vadd.f32 %v8778, %v9130
    %v9132 = vpop.f32.mrb[0].mxu0
    %v9133 = vadd.f32 %v8780, %v9132
    %v9134 = vpop.f32.mrb[0].mxu0
    %v9135 = vadd.f32 %v8782, %v9134
    %9136 = vmatprep.mubr.bf16.mxu0 %v4595
    %9137 = vmatmul.mubr.bf16.gmra.mrb[0].mxu0 %v4594
    %v9138 = vpop.f32.mrb[0].mxu0
    %v9139 = vadd.f32 %v8786, %v9138
    %v9140 = vpop.f32.mrb[0].mxu0
    %v9141 = vadd.f32 %v8788, %v9140
    %v9142 = vpop.f32.mrb[0].mxu0
    %v9143 = vadd.f32 %v8790, %v9142
    %v9144 = vpop.f32.mrb[0].mxu0
    %v9145 = vadd.f32 %v8792, %v9144
    %9146 = vmatprep.mubr.bf16.mxu0 %v4604
    %9147 = vmatmul.mubr.bf16.gmra.mrb[0].mxu0 %v4603
    %v9148 = vpop.f32.mrb[0].mxu0
    %v9149 = vadd.f32 %v8796, %v9148
    %v9150 = vpop.f32.mrb[0].mxu0
    %v9151 = vadd.f32 %v8798, %v9150
    %v9152 = vpop.f32.mrb[0].mxu0
    %v9153 = vadd.f32 %v8800, %v9152
    %v9154 = vpop.f32.mrb[0].mxu0
    %v9155 = vadd.f32 %v8802, %v9154
    %9156 = vmatprep.mubr.bf16.mxu0 %v4613
    %9157 = vmatmul.mubr.bf16.gmra.mrb[0].mxu0 %v4612
    %v9158 = vpop.f32.mrb[0].mxu0
    %v9159 = vadd.f32 %v8806, %v9158
    %v9160 = vpop.f32.mrb[0].mxu0
    %v9161 = vadd.f32 %v8808, %v9160
    %v9162 = vpop.f32.mrb[0].mxu0
    %v9163 = vadd.f32 %v8810, %v9162
    %v9164 = vpop.f32.mrb[0].mxu0
    %v9165 = vadd.f32 %v8812, %v9164
    %9166 = vmatprep.mubr.bf16.mxu0 %v4622
    %9167 = vmatmul.mubr.bf16.gmra.mrb[0].mxu0 %v4621
    %v9168 = vpop.f32.mrb[0].mxu0
    %v9169 = vadd.f32 %v8816, %v9168
    %v9170 = vpop.f32.mrb[0].mxu0
    %v9171 = vadd.f32 %v8818, %v9170
    %v9172 = vpop.f32.mrb[0].mxu0
    %v9173 = vadd.f32 %v8820, %v9172
    %v9174 = vpop.f32.mrb[0].mxu0
    %v9175 = vadd.f32 %v8822, %v9174
    %9176 = vmatprep.mubr.bf16.mxu0 %v4631
    %9177 = vmatmul.mubr.bf16.gmra.mrb[0].mxu0 %v4630
    %v9178 = vpop.f32.mrb[0].mxu0
    %v9179 = vadd.f32 %v8826, %v9178
    %v9180 = vpop.f32.mrb[0].mxu0
    %v9181 = vadd.f32 %v8828, %v9180
    %v9182 = vpop.f32.mrb[0].mxu0
    %v9183 = vadd.f32 %v8830, %v9182
    %v9184 = vpop.f32.mrb[0].mxu0
    %v9185 = vadd.f32 %v8832, %v9184
    %9186 = vmatprep.mubr.bf16.mxu0 %v4640
    %9187 = vmatmul.mubr.bf16.gmra.mrb[0].mxu0 %v4639
    %v9188 = vpop.f32.mrb[0].mxu0
    %v9189 = vadd.f32 %v8836, %v9188
    %v9190 = vpop.f32.mrb[0].mxu0
    %v9191 = vadd.f32 %v8838, %v9190
    %v9192 = vpop.f32.mrb[0].mxu0
    %v9193 = vadd.f32 %v8840, %v9192
    %v9194 = vpop.f32.mrb[0].mxu0
    %v9195 = vadd.f32 %v8842, %v9194
    %9196 = vmatprep.mubr.bf16.mxu0 %v4649
    %9197 = vmatmul.mubr.bf16.gmra.mrb[0].mxu0 %v4648
    %v9198 = vpop.f32.mrb[0].mxu0
    %v9199 = vadd.f32 %v8846, %v9198
    %v9200 = vpop.f32.mrb[0].mxu0
    %v9201 = vadd.f32 %v8848, %v9200
    %v9202 = vpop.f32.mrb[0].mxu0
    %v9203 = vadd.f32 %v8850, %v9202
    %v9204 = vpop.f32.mrb[0].mxu0
    %v9205 = vadd.f32 %v8852, %v9204
    %9206 = vmatprep.mubr.bf16.mxu0 %v4658
    %9207 = vmatmul.mubr.bf16.gmra.mrb[0].mxu0 %v4657
    %v9208 = vpop.f32.mrb[0].mxu0
    %v9209 = vadd.f32 %v8856, %v9208
    %v9210 = vpop.f32.mrb[0].mxu0
    %v9211 = vadd.f32 %v8858, %v9210
    %v9212 = vpop.f32.mrb[0].mxu0
    %v9213 = vadd.f32 %v8860, %v9212
    %v9214 = vpop.f32.mrb[0].mxu0
    %v9215 = vadd.f32 %v8862, %v9214
    %9216 = vmatprep.mubr.bf16.mxu0 %v4667
    %9217 = vmatmul.mubr.bf16.gmra.mrb[0].mxu0 %v4666
    %v9218 = vpop.f32.mrb[0].mxu0
    %v9219 = vadd.f32 %v8866, %v9218
    %v9220 = vpop.f32.mrb[0].mxu0
    %v9221 = vadd.f32 %v8868, %v9220
    %v9222 = vpop.f32.mrb[0].mxu0
    %v9223 = vadd.f32 %v8870, %v9222
    %v9224 = vpop.f32.mrb[0].mxu0
    %v9225 = vadd.f32 %v8872, %v9224
    %9226 = vmatprep.mubr.bf16.mxu0 %v4676
    %9227 = vmatmul.mubr.bf16.gmra.mrb[0].mxu0 %v4675
    %v9228 = vpop.f32.mrb[0].mxu0
    %v9229 = vadd.f32 %v8876, %v9228
    %v9230 = vpop.f32.mrb[0].mxu0
    %v9231 = vadd.f32 %v8878, %v9230
    %v9232 = vpop.f32.mrb[0].mxu0
    %v9233 = vadd.f32 %v8880, %v9232
    %v9234 = vpop.f32.mrb[0].mxu0
    %v9235 = vadd.f32 %v8882, %v9234
    %9236 = vmatprep.mubr.bf16.mxu0 %v4685
    %9237 = vmatmul.mubr.bf16.gmra.mrb[0].mxu0 %v4684
    %v9238 = vpop.f32.mrb[0].mxu0
    %v9239 = vadd.f32 %v8886, %v9238
    %v9240 = vpop.f32.mrb[0].mxu0
    %v9241 = vadd.f32 %v8888, %v9240
    %v9242 = vpop.f32.mrb[0].mxu0
    %v9243 = vadd.f32 %v8890, %v9242
    %v9244 = vpop.f32.mrb[0].mxu0
    %v9245 = vadd.f32 %v8892, %v9244
    %9246 = vmatprep.mubr.bf16.mxu0 %v4694
    %9247 = vmatmul.mubr.bf16.gmra.mrb[0].mxu0 %v4693
    %v9248 = vpop.f32.mrb[0].mxu0
    %v9249 = vadd.f32 %v8896, %v9248
    %v9250 = vpop.f32.mrb[0].mxu0
    %v9251 = vadd.f32 %v8898, %v9250
    %v9252 = vpop.f32.mrb[0].mxu0
    %v9253 = vadd.f32 %v8900, %v9252
    %v9254 = vpop.f32.mrb[0].mxu0
    %v9255 = vadd.f32 %v8902, %v9254
    %9256 = vmatprep.mubr.bf16.mxu0 %v4703
    %9257 = vmatmul.mubr.bf16.gmra.mrb[0].mxu0 %v4702
    %v9258 = vpop.f32.mrb[0].mxu0
    %v9259 = vadd.f32 %v8906, %v9258
    %v9260 = vpop.f32.mrb[0].mxu0
    %v9261 = vadd.f32 %v8908, %v9260
    %v9262 = vpop.f32.mrb[0].mxu0
    %v9263 = vadd.f32 %v8910, %v9262
    %v9264 = vpop.f32.mrb[0].mxu0
    %v9265 = vadd.f32 %v8912, %v9264
    %9266 = vmatprep.mubr.bf16.mxu0 %v4712
    %9267 = vmatmul.mubr.bf16.gmra.mrb[0].mxu0 %v4711
    %v9268 = vpop.f32.mrb[0].mxu0
    %v9269 = vadd.f32 %v8916, %v9268
    %v9270 = vpop.f32.mrb[0].mxu0
    %v9271 = vadd.f32 %v8918, %v9270
    %v9272 = vpop.f32.mrb[0].mxu0
    %v9273 = vadd.f32 %v8920, %v9272
    %v9274 = vpop.f32.mrb[0].mxu0
    %v9275 = vadd.f32 %v8922, %v9274
    %9276 = vmatprep.mubr.bf16.mxu0 %v4721
    %9277 = vmatmul.mubr.bf16.gmra.mrb[0].mxu0 %v4720
    %v9278 = vpop.f32.mrb[0].mxu0
    %v9279 = vadd.f32 %v8926, %v9278
    %v9280 = vpop.f32.mrb[0].mxu0
    %v9281 = vadd.f32 %v8928, %v9280
    %v9282 = vpop.f32.mrb[0].mxu0
    %v9283 = vadd.f32 %v8930, %v9282
    %v9284 = vpop.f32.mrb[0].mxu0
    %v9285 = vadd.f32 %v8932, %v9284
    %9286 = vmatprep.mubr.bf16.mxu0 %v4730
    %9287 = vmatmul.mubr.bf16.gmra.mrb[0].mxu0 %v4729
    %v9288 = vpop.f32.mrb[0].mxu0
    %v9289 = vadd.f32 %v8936, %v9288
    %v9290 = vpop.f32.mrb[0].mxu0
    %v9291 = vadd.f32 %v8938, %v9290
    %v9292 = vpop.f32.mrb[0].mxu0
    %v9293 = vadd.f32 %v8940, %v9292
    %v9294 = vpop.f32.mrb[0].mxu0
    %v9295 = vadd.f32 %v8942, %v9294
    %9296 = vmatprep.mubr.bf16.mxu0 %v4739
    %9297 = vmatmul.mubr.bf16.gmra.mrb[0].mxu0 %v4738
    %v9298 = vpop.f32.mrb[0].mxu0
    %v9299 = vadd.f32 %v8946, %v9298
    %v9300 = vpop.f32.mrb[0].mxu0
    %v9301 = vadd.f32 %v8948, %v9300
    %v9302 = vpop.f32.mrb[0].mxu0
    %v9303 = vadd.f32 %v8950, %v9302
    %v9304 = vpop.f32.mrb[0].mxu0
    %v9305 = vadd.f32 %v8952, %v9304
    %9306 = vmatprep.mubr.bf16.mxu0 %v4748
    %9307 = vmatmul.mubr.bf16.gmra.mrb[0].mxu0 %v4747
    %v9308 = vpop.f32.mrb[0].mxu0
    %v9309 = vadd.f32 %v8956, %v9308
    %v9310 = vpop.f32.mrb[0].mxu0
    %v9311 = vadd.f32 %v8958, %v9310
    %v9312 = vpop.f32.mrb[0].mxu0
    %v9313 = vadd.f32 %v8960, %v9312
    %v9314 = vpop.f32.mrb[0].mxu0
    %v9315 = vadd.f32 %v8962, %v9314
    %9316 = vmatprep.mubr.bf16.mxu0 %v4757
    %9317 = vmatmul.mubr.bf16.gmra.mrb[0].mxu0 %v4756
    %v9318 = vpop.f32.mrb[0].mxu0
    %v9319 = vadd.f32 %v8966, %v9318
    %v9320 = vpop.f32.mrb[0].mxu0
    %v9321 = vadd.f32 %v8968, %v9320
    %v9322 = vpop.f32.mrb[0].mxu0
    %v9323 = vadd.f32 %v8970, %v9322
    %v9324 = vpop.f32.mrb[0].mxu0
    %v9325 = vadd.f32 %v8972, %v9324
    %9326 = vmatprep.mubr.bf16.mxu0 %v4766
    %9327 = vmatmul.mubr.bf16.gmra.mrb[0].mxu0 %v4765
    %v9328 = vpop.f32.mrb[0].mxu0
    %v9329 = vadd.f32 %v8976, %v9328
    %v9330 = vpop.f32.mrb[0].mxu0
    %v9331 = vadd.f32 %v8978, %v9330
    %v9332 = vpop.f32.mrb[0].mxu0
    %v9333 = vadd.f32 %v8980, %v9332
    %v9334 = vpop.f32.mrb[0].mxu0
    %v9335 = vadd.f32 %v8982, %v9334
    %9336 = vmatprep.mubr.bf16.mxu0 %v4775
    %9337 = vmatmul.mubr.bf16.gmra.mrb[0].mxu0 %v4774
    %v9338 = vpop.f32.mrb[0].mxu0
    %v9339 = vadd.f32 %v8986, %v9338
    %v9340 = vpop.f32.mrb[0].mxu0
    %v9341 = vadd.f32 %v8988, %v9340
    %v9342 = vpop.f32.mrb[0].mxu0
    %v9343 = vadd.f32 %v8990, %v9342
    %v9344 = vpop.f32.mrb[0].mxu0
    %v9345 = vadd.f32 %v8992, %v9344
    %9346 = vmatprep.mubr.bf16.mxu0 %v4784
    %9347 = vmatmul.mubr.bf16.gmra.mrb[0].mxu0 %v4783
    %v9348 = vpop.f32.mrb[0].mxu0
    %v9349 = vadd.f32 %v8996, %v9348
    %v9350 = vpop.f32.mrb[0].mxu0
    %v9351 = vadd.f32 %v8998, %v9350
    %v9352 = vpop.f32.mrb[0].mxu0
    %v9353 = vadd.f32 %v9000, %v9352
    %v9354 = vpop.f32.mrb[0].mxu0
    %v9355 = vadd.f32 %v9002, %v9354
    %9356 = vmatprep.mubr.bf16.mxu0 %v4793
    %9357 = vmatmul.mubr.bf16.gmra.mrb[0].mxu0 %v4792
    %v9358 = vpop.f32.mrb[0].mxu0
    %v9359 = vadd.f32 %v9006, %v9358
    %v9360 = vpop.f32.mrb[0].mxu0
    %v9361 = vadd.f32 %v9008, %v9360
    %v9362 = vpop.f32.mrb[0].mxu0
    %v9363 = vadd.f32 %v9010, %v9362
    %v9364 = vpop.f32.mrb[0].mxu0
    %v9365 = vadd.f32 %v9012, %v9364
    %9366 = vmatprep.mubr.bf16.mxu0 %v4802
    %9367 = vmatmul.mubr.bf16.gmra.mrb[0].mxu0 %v4801
    %v9368 = vpop.f32.mrb[0].mxu0
    %v9369 = vadd.f32 %v9016, %v9368
    %v9370 = vpop.f32.mrb[0].mxu0
    %v9371 = vadd.f32 %v9018, %v9370
    %v9372 = vpop.f32.mrb[0].mxu0
    %v9373 = vadd.f32 %v9020, %v9372
    %v9374 = vpop.f32.mrb[0].mxu0
    %v9375 = vadd.f32 %v9022, %v9374
    %9376 = vmatprep.mubr.bf16.mxu0 %v4811
    %9377 = vmatmul.mubr.bf16.gmra.mrb[0].mxu0 %v4810
    %v9378 = vpop.f32.mrb[0].mxu0
    %v9379 = vadd.f32 %v9026, %v9378
    %v9380 = vpop.f32.mrb[0].mxu0
    %v9381 = vadd.f32 %v9028, %v9380
    %v9382 = vpop.f32.mrb[0].mxu0
    %v9383 = vadd.f32 %v9030, %v9382
    %v9384 = vpop.f32.mrb[0].mxu0
    %v9385 = vadd.f32 %v9032, %v9384
    %9386 = vmatprep.mubr.bf16.mxu0 %v4820
    %9387 = vmatmul.mubr.bf16.gmra.mrb[0].mxu0 %v4819
    %v9388 = vpop.f32.mrb[0].mxu0
    %v9389 = vadd.f32 %v9036, %v9388
    %v9390 = vpop.f32.mrb[0].mxu0
    %v9391 = vadd.f32 %v9038, %v9390
    %v9392 = vpop.f32.mrb[0].mxu0
    %v9393 = vadd.f32 %v9040, %v9392
    %v9394 = vpop.f32.mrb[0].mxu0
    %v9395 = vadd.f32 %v9042, %v9394
    %9396 = vmatprep.mubr.bf16.mxu0 %v4829
    %9397 = vmatmul.mubr.bf16.gmra.mrb[0].mxu0 %v4828
    %v9398 = vpop.f32.mrb[0].mxu0
    %v9399 = vadd.f32 %v9046, %v9398
    %v9400 = vpop.f32.mrb[0].mxu0
    %v9401 = vadd.f32 %v9048, %v9400
    %v9402 = vpop.f32.mrb[0].mxu0
    %v9403 = vadd.f32 %v9050, %v9402
    %v9404 = vpop.f32.mrb[0].mxu0
    %v9405 = vadd.f32 %v9052, %v9404
    %9406 = vdwg.mxu0
    %9407 = vmatprep.subr.bf16.mxu0 %v6202
    %9408 = vmatpush1.bf16.msra.mxu0 %v6201
    %9409 = vmatprep.subr.bf16.mxu0 %v6206
    %9410 = vmatpush1.bf16.msra.mxu0 %v6205
    %9411 = vmatprep.subr.bf16.mxu0 %v6210
    %9412 = vmatpush1.bf16.msra.mxu0 %v6209
    %9413 = vmatprep.subr.bf16.mxu0 %v6214
    %9414 = vmatpush1.bf16.msra.mxu0 %v6213
    %9415 = vmatprep.subr.bf16.mxu0 %v6218
    %9416 = vmatpush1.bf16.msra.mxu0 %v6217
    %9417 = vmatprep.subr.bf16.mxu0 %v6222
    %9418 = vmatpush1.bf16.msra.mxu0 %v6221
    %9419 = vmatprep.subr.bf16.mxu0 %v6226
    %9420 = vmatpush1.bf16.msra.mxu0 %v6225
    %9421 = vmatprep.subr.bf16.mxu0 %v6230
    %9422 = vmatpush1.bf16.msra.mxu0 %v6229
    %9423 = vmatprep.subr.bf16.mxu0 %v6234
    %9424 = vmatpush1.bf16.msra.mxu0 %v6233
    %9425 = vmatprep.subr.bf16.mxu0 %v6238
    %9426 = vmatpush1.bf16.msra.mxu0 %v6237
    %9427 = vmatprep.subr.bf16.mxu0 %v6242
    %9428 = vmatpush1.bf16.msra.mxu0 %v6241
    %9429 = vmatprep.subr.bf16.mxu0 %v6246
    %9430 = vmatpush1.bf16.msra.mxu0 %v6245
    %9431 = vmatprep.subr.bf16.mxu0 %v6250
    %9432 = vmatpush1.bf16.msra.mxu0 %v6249
    %9433 = vmatprep.subr.bf16.mxu0 %v6254
    %9434 = vmatpush1.bf16.msra.mxu0 %v6253
    %9435 = vmatprep.subr.bf16.mxu0 %v6258
    %9436 = vmatpush1.bf16.msra.mxu0 %v6257
    %9437 = vmatprep.subr.bf16.mxu0 %v6262
    %9438 = vmatpush1.bf16.msra.mxu0 %v6261
    %9439 = vmatprep.mubr.bf16.mxu0 %v4552
    %9440 = vmatmul.mubr.bf16.gmra.mrb[0].mxu0 %v4551
    %v9441 = vpop.f32.mrb[0].mxu0
    %v9442 = vadd.f32 %v9089, %v9441
    %v9443 = vpop.f32.mrb[0].mxu0
    %v9444 = vadd.f32 %v9091, %v9443
    %v9445 = vpop.f32.mrb[0].mxu0
    %v9446 = vadd.f32 %v9093, %v9445
    %v9447 = vpop.f32.mrb[0].mxu0
    %v9448 = vadd.f32 %v9095, %v9447
    %9449 = vmatprep.mubr.bf16.mxu0 %v4561
    %9450 = vmatmul.mubr.bf16.gmra.mrb[0].mxu0 %v4560
    %v9451 = vpop.f32.mrb[0].mxu0
    %v9452 = vadd.f32 %v9099, %v9451
    %v9453 = vpop.f32.mrb[0].mxu0
    %v9454 = vadd.f32 %v9101, %v9453
    %v9455 = vpop.f32.mrb[0].mxu0
    %v9456 = vadd.f32 %v9103, %v9455
    %v9457 = vpop.f32.mrb[0].mxu0
    %v9458 = vadd.f32 %v9105, %v9457
    %9459 = vmatprep.mubr.bf16.mxu0 %v4570
    %9460 = vmatmul.mubr.bf16.gmra.mrb[0].mxu0 %v4569
    %v9461 = vpop.f32.mrb[0].mxu0
    %v9462 = vadd.f32 %v9109, %v9461
    %v9463 = vpop.f32.mrb[0].mxu0
    %v9464 = vadd.f32 %v9111, %v9463
    %v9465 = vpop.f32.mrb[0].mxu0
    %v9466 = vadd.f32 %v9113, %v9465
    %v9467 = vpop.f32.mrb[0].mxu0
    %v9468 = vadd.f32 %v9115, %v9467
    %9469 = vmatprep.mubr.bf16.mxu0 %v4579
    %9470 = vmatmul.mubr.bf16.gmra.mrb[0].mxu0 %v4578
    %v9471 = vpop.f32.mrb[0].mxu0
    %v9472 = vadd.f32 %v9119, %v9471
    %v9473 = vpop.f32.mrb[0].mxu0
    %v9474 = vadd.f32 %v9121, %v9473
    %v9475 = vpop.f32.mrb[0].mxu0
    %v9476 = vadd.f32 %v9123, %v9475
    %v9477 = vpop.f32.mrb[0].mxu0
    %v9478 = vadd.f32 %v9125, %v9477
    %9479 = vmatprep.mubr.bf16.mxu0 %v4588
    %9480 = vmatmul.mubr.bf16.gmra.mrb[0].mxu0 %v4587
    %v9481 = vpop.f32.mrb[0].mxu0
    %v9482 = vadd.f32 %v9129, %v9481
    %v9483 = vpop.f32.mrb[0].mxu0
    %v9484 = vadd.f32 %v9131, %v9483
    %v9485 = vpop.f32.mrb[0].mxu0
    %v9486 = vadd.f32 %v9133, %v9485
    %v9487 = vpop.f32.mrb[0].mxu0
    %v9488 = vadd.f32 %v9135, %v9487
    %9489 = vmatprep.mubr.bf16.mxu0 %v4597
    %9490 = vmatmul.mubr.bf16.gmra.mrb[0].mxu0 %v4596
    %v9491 = vpop.f32.mrb[0].mxu0
    %v9492 = vadd.f32 %v9139, %v9491
    %v9493 = vpop.f32.mrb[0].mxu0
    %v9494 = vadd.f32 %v9141, %v9493
    %v9495 = vpop.f32.mrb[0].mxu0
    %v9496 = vadd.f32 %v9143, %v9495
    %v9497 = vpop.f32.mrb[0].mxu0
    %v9498 = vadd.f32 %v9145, %v9497
    %9499 = vmatprep.mubr.bf16.mxu0 %v4606
    %9500 = vmatmul.mubr.bf16.gmra.mrb[0].mxu0 %v4605
    %v9501 = vpop.f32.mrb[0].mxu0
    %v9502 = vadd.f32 %v9149, %v9501
    %v9503 = vpop.f32.mrb[0].mxu0
    %v9504 = vadd.f32 %v9151, %v9503
    %v9505 = vpop.f32.mrb[0].mxu0
    %v9506 = vadd.f32 %v9153, %v9505
    %v9507 = vpop.f32.mrb[0].mxu0
    %v9508 = vadd.f32 %v9155, %v9507
    %9509 = vmatprep.mubr.bf16.mxu0 %v4615
    %9510 = vmatmul.mubr.bf16.gmra.mrb[0].mxu0 %v4614
    %v9511 = vpop.f32.mrb[0].mxu0
    %v9512 = vadd.f32 %v9159, %v9511
    %v9513 = vpop.f32.mrb[0].mxu0
    %v9514 = vadd.f32 %v9161, %v9513
    %v9515 = vpop.f32.mrb[0].mxu0
    %v9516 = vadd.f32 %v9163, %v9515
    %v9517 = vpop.f32.mrb[0].mxu0
    %v9518 = vadd.f32 %v9165, %v9517
    %9519 = vmatprep.mubr.bf16.mxu0 %v4624
    %9520 = vmatmul.mubr.bf16.gmra.mrb[0].mxu0 %v4623
    %v9521 = vpop.f32.mrb[0].mxu0
    %v9522 = vadd.f32 %v9169, %v9521
    %v9523 = vpop.f32.mrb[0].mxu0
    %v9524 = vadd.f32 %v9171, %v9523
    %v9525 = vpop.f32.mrb[0].mxu0
    %v9526 = vadd.f32 %v9173, %v9525
    %v9527 = vpop.f32.mrb[0].mxu0
    %v9528 = vadd.f32 %v9175, %v9527
    %9529 = vmatprep.mubr.bf16.mxu0 %v4633
    %9530 = vmatmul.mubr.bf16.gmra.mrb[0].mxu0 %v4632
    %v9531 = vpop.f32.mrb[0].mxu0
    %v9532 = vadd.f32 %v9179, %v9531
    %v9533 = vpop.f32.mrb[0].mxu0
    %v9534 = vadd.f32 %v9181, %v9533
    %v9535 = vpop.f32.mrb[0].mxu0
    %v9536 = vadd.f32 %v9183, %v9535
    %v9537 = vpop.f32.mrb[0].mxu0
    %v9538 = vadd.f32 %v9185, %v9537
    %9539 = vmatprep.mubr.bf16.mxu0 %v4642
    %9540 = vmatmul.mubr.bf16.gmra.mrb[0].mxu0 %v4641
    %v9541 = vpop.f32.mrb[0].mxu0
    %v9542 = vadd.f32 %v9189, %v9541
    %v9543 = vpop.f32.mrb[0].mxu0
    %v9544 = vadd.f32 %v9191, %v9543
    %v9545 = vpop.f32.mrb[0].mxu0
    %v9546 = vadd.f32 %v9193, %v9545
    %v9547 = vpop.f32.mrb[0].mxu0
    %v9548 = vadd.f32 %v9195, %v9547
    %9549 = vmatprep.mubr.bf16.mxu0 %v4651
    %9550 = vmatmul.mubr.bf16.gmra.mrb[0].mxu0 %v4650
    %v9551 = vpop.f32.mrb[0].mxu0
    %v9552 = vadd.f32 %v9199, %v9551
    %v9553 = vpop.f32.mrb[0].mxu0
    %v9554 = vadd.f32 %v9201, %v9553
    %v9555 = vpop.f32.mrb[0].mxu0
    %v9556 = vadd.f32 %v9203, %v9555
    %v9557 = vpop.f32.mrb[0].mxu0
    %v9558 = vadd.f32 %v9205, %v9557
    %9559 = vmatprep.mubr.bf16.mxu0 %v4660
    %9560 = vmatmul.mubr.bf16.gmra.mrb[0].mxu0 %v4659
    %v9561 = vpop.f32.mrb[0].mxu0
    %v9562 = vadd.f32 %v9209, %v9561
    %v9563 = vpop.f32.mrb[0].mxu0
    %v9564 = vadd.f32 %v9211, %v9563
    %v9565 = vpop.f32.mrb[0].mxu0
    %v9566 = vadd.f32 %v9213, %v9565
    %v9567 = vpop.f32.mrb[0].mxu0
    %v9568 = vadd.f32 %v9215, %v9567
    %9569 = vmatprep.mubr.bf16.mxu0 %v4669
    %9570 = vmatmul.mubr.bf16.gmra.mrb[0].mxu0 %v4668
    %v9571 = vpop.f32.mrb[0].mxu0
    %v9572 = vadd.f32 %v9219, %v9571
    %v9573 = vpop.f32.mrb[0].mxu0
    %v9574 = vadd.f32 %v9221, %v9573
    %v9575 = vpop.f32.mrb[0].mxu0
    %v9576 = vadd.f32 %v9223, %v9575
    %v9577 = vpop.f32.mrb[0].mxu0
    %v9578 = vadd.f32 %v9225, %v9577
    %9579 = vmatprep.mubr.bf16.mxu0 %v4678
    %9580 = vmatmul.mubr.bf16.gmra.mrb[0].mxu0 %v4677
    %v9581 = vpop.f32.mrb[0].mxu0
    %v9582 = vadd.f32 %v9229, %v9581
    %v9583 = vpop.f32.mrb[0].mxu0
    %v9584 = vadd.f32 %v9231, %v9583
    %v9585 = vpop.f32.mrb[0].mxu0
    %v9586 = vadd.f32 %v9233, %v9585
    %v9587 = vpop.f32.mrb[0].mxu0
    %v9588 = vadd.f32 %v9235, %v9587
    %9589 = vmatprep.mubr.bf16.mxu0 %v4687
    %9590 = vmatmul.mubr.bf16.gmra.mrb[0].mxu0 %v4686
    %v9591 = vpop.f32.mrb[0].mxu0
    %v9592 = vadd.f32 %v9239, %v9591
    %v9593 = vpop.f32.mrb[0].mxu0
    %v9594 = vadd.f32 %v9241, %v9593
    %v9595 = vpop.f32.mrb[0].mxu0
    %v9596 = vadd.f32 %v9243, %v9595
    %v9597 = vpop.f32.mrb[0].mxu0
    %v9598 = vadd.f32 %v9245, %v9597
    %9599 = vmatprep.mubr.bf16.mxu0 %v4696
    %9600 = vmatmul.mubr.bf16.gmra.mrb[0].mxu0 %v4695
    %v9601 = vpop.f32.mrb[0].mxu0
    %v9602 = vadd.f32 %v9249, %v9601
    %v9603 = vpop.f32.mrb[0].mxu0
    %v9604 = vadd.f32 %v9251, %v9603
    %v9605 = vpop.f32.mrb[0].mxu0
    %v9606 = vadd.f32 %v9253, %v9605
    %v9607 = vpop.f32.mrb[0].mxu0
    %v9608 = vadd.f32 %v9255, %v9607
    %9609 = vmatprep.mubr.bf16.mxu0 %v4705
    %9610 = vmatmul.mubr.bf16.gmra.mrb[0].mxu0 %v4704
    %v9611 = vpop.f32.mrb[0].mxu0
    %v9612 = vadd.f32 %v9259, %v9611
    %v9613 = vpop.f32.mrb[0].mxu0
    %v9614 = vadd.f32 %v9261, %v9613
    %v9615 = vpop.f32.mrb[0].mxu0
    %v9616 = vadd.f32 %v9263, %v9615
    %v9617 = vpop.f32.mrb[0].mxu0
    %v9618 = vadd.f32 %v9265, %v9617
    %9619 = vmatprep.mubr.bf16.mxu0 %v4714
    %9620 = vmatmul.mubr.bf16.gmra.mrb[0].mxu0 %v4713
    %v9621 = vpop.f32.mrb[0].mxu0
    %v9622 = vadd.f32 %v9269, %v9621
    %v9623 = vpop.f32.mrb[0].mxu0
    %v9624 = vadd.f32 %v9271, %v9623
    %v9625 = vpop.f32.mrb[0].mxu0
    %v9626 = vadd.f32 %v9273, %v9625
    %v9627 = vpop.f32.mrb[0].mxu0
    %v9628 = vadd.f32 %v9275, %v9627
    %9629 = vmatprep.mubr.bf16.mxu0 %v4723
    %9630 = vmatmul.mubr.bf16.gmra.mrb[0].mxu0 %v4722
    %v9631 = vpop.f32.mrb[0].mxu0
    %v9632 = vadd.f32 %v9279, %v9631
    %v9633 = vpop.f32.mrb[0].mxu0
    %v9634 = vadd.f32 %v9281, %v9633
    %v9635 = vpop.f32.mrb[0].mxu0
    %v9636 = vadd.f32 %v9283, %v9635
    %v9637 = vpop.f32.mrb[0].mxu0
    %v9638 = vadd.f32 %v9285, %v9637
    %9639 = vmatprep.mubr.bf16.mxu0 %v4732
    %9640 = vmatmul.mubr.bf16.gmra.mrb[0].mxu0 %v4731
    %v9641 = vpop.f32.mrb[0].mxu0
    %v9642 = vadd.f32 %v9289, %v9641
    %v9643 = vpop.f32.mrb[0].mxu0
    %v9644 = vadd.f32 %v9291, %v9643
    %v9645 = vpop.f32.mrb[0].mxu0
    %v9646 = vadd.f32 %v9293, %v9645
    %v9647 = vpop.f32.mrb[0].mxu0
    %v9648 = vadd.f32 %v9295, %v9647
    %9649 = vmatprep.mubr.bf16.mxu0 %v4741
    %9650 = vmatmul.mubr.bf16.gmra.mrb[0].mxu0 %v4740
    %v9651 = vpop.f32.mrb[0].mxu0
    %v9652 = vadd.f32 %v9299, %v9651
    %v9653 = vpop.f32.mrb[0].mxu0
    %v9654 = vadd.f32 %v9301, %v9653
    %v9655 = vpop.f32.mrb[0].mxu0
    %v9656 = vadd.f32 %v9303, %v9655
    %v9657 = vpop.f32.mrb[0].mxu0
    %v9658 = vadd.f32 %v9305, %v9657
    %9659 = vmatprep.mubr.bf16.mxu0 %v4750
    %9660 = vmatmul.mubr.bf16.gmra.mrb[0].mxu0 %v4749
    %v9661 = vpop.f32.mrb[0].mxu0
    %v9662 = vadd.f32 %v9309, %v9661
    %v9663 = vpop.f32.mrb[0].mxu0
    %v9664 = vadd.f32 %v9311, %v9663
    %v9665 = vpop.f32.mrb[0].mxu0
    %v9666 = vadd.f32 %v9313, %v9665
    %v9667 = vpop.f32.mrb[0].mxu0
    %v9668 = vadd.f32 %v9315, %v9667
    %9669 = vmatprep.mubr.bf16.mxu0 %v4759
    %9670 = vmatmul.mubr.bf16.gmra.mrb[0].mxu0 %v4758
    %v9671 = vpop.f32.mrb[0].mxu0
    %v9672 = vadd.f32 %v9319, %v9671
    %v9673 = vpop.f32.mrb[0].mxu0
    %v9674 = vadd.f32 %v9321, %v9673
    %v9675 = vpop.f32.mrb[0].mxu0
    %v9676 = vadd.f32 %v9323, %v9675
    %v9677 = vpop.f32.mrb[0].mxu0
    %v9678 = vadd.f32 %v9325, %v9677
    %9679 = vmatprep.mubr.bf16.mxu0 %v4768
    %9680 = vmatmul.mubr.bf16.gmra.mrb[0].mxu0 %v4767
    %v9681 = vpop.f32.mrb[0].mxu0
    %v9682 = vadd.f32 %v9329, %v9681
    %v9683 = vpop.f32.mrb[0].mxu0
    %v9684 = vadd.f32 %v9331, %v9683
    %v9685 = vpop.f32.mrb[0].mxu0
    %v9686 = vadd.f32 %v9333, %v9685
    %v9687 = vpop.f32.mrb[0].mxu0
    %v9688 = vadd.f32 %v9335, %v9687
    %9689 = vmatprep.mubr.bf16.mxu0 %v4777
    %9690 = vmatmul.mubr.bf16.gmra.mrb[0].mxu0 %v4776
    %v9691 = vpop.f32.mrb[0].mxu0
    %v9692 = vadd.f32 %v9339, %v9691
    %v9693 = vpop.f32.mrb[0].mxu0
    %v9694 = vadd.f32 %v9341, %v9693
    %v9695 = vpop.f32.mrb[0].mxu0
    %v9696 = vadd.f32 %v9343, %v9695
    %v9697 = vpop.f32.mrb[0].mxu0
    %v9698 = vadd.f32 %v9345, %v9697
    %9699 = vmatprep.mubr.bf16.mxu0 %v4786
    %9700 = vmatmul.mubr.bf16.gmra.mrb[0].mxu0 %v4785
    %v9701 = vpop.f32.mrb[0].mxu0
    %v9702 = vadd.f32 %v9349, %v9701
    %v9703 = vpop.f32.mrb[0].mxu0
    %v9704 = vadd.f32 %v9351, %v9703
    %v9705 = vpop.f32.mrb[0].mxu0
    %v9706 = vadd.f32 %v9353, %v9705
    %v9707 = vpop.f32.mrb[0].mxu0
    %v9708 = vadd.f32 %v9355, %v9707
    %9709 = vmatprep.mubr.bf16.mxu0 %v4795
    %9710 = vmatmul.mubr.bf16.gmra.mrb[0].mxu0 %v4794
    %v9711 = vpop.f32.mrb[0].mxu0
    %v9712 = vadd.f32 %v9359, %v9711
    %v9713 = vpop.f32.mrb[0].mxu0
    %v9714 = vadd.f32 %v9361, %v9713
    %v9715 = vpop.f32.mrb[0].mxu0
    %v9716 = vadd.f32 %v9363, %v9715
    %v9717 = vpop.f32.mrb[0].mxu0
    %v9718 = vadd.f32 %v9365, %v9717
    %9719 = vmatprep.mubr.bf16.mxu0 %v4804
    %9720 = vmatmul.mubr.bf16.gmra.mrb[0].mxu0 %v4803
    %v9721 = vpop.f32.mrb[0].mxu0
    %v9722 = vadd.f32 %v9369, %v9721
    %v9723 = vpop.f32.mrb[0].mxu0
    %v9724 = vadd.f32 %v9371, %v9723
    %v9725 = vpop.f32.mrb[0].mxu0
    %v9726 = vadd.f32 %v9373, %v9725
    %v9727 = vpop.f32.mrb[0].mxu0
    %v9728 = vadd.f32 %v9375, %v9727
    %9729 = vmatprep.mubr.bf16.mxu0 %v4813
    %9730 = vmatmul.mubr.bf16.gmra.mrb[0].mxu0 %v4812
    %v9731 = vpop.f32.mrb[0].mxu0
    %v9732 = vadd.f32 %v9379, %v9731
    %v9733 = vpop.f32.mrb[0].mxu0
    %v9734 = vadd.f32 %v9381, %v9733
    %v9735 = vpop.f32.mrb[0].mxu0
    %v9736 = vadd.f32 %v9383, %v9735
    %v9737 = vpop.f32.mrb[0].mxu0
    %v9738 = vadd.f32 %v9385, %v9737
    %9739 = vmatprep.mubr.bf16.mxu0 %v4822
    %9740 = vmatmul.mubr.bf16.gmra.mrb[0].mxu0 %v4821
    %v9741 = vpop.f32.mrb[0].mxu0
    %v9742 = vadd.f32 %v9389, %v9741
    %v9743 = vpop.f32.mrb[0].mxu0
    %v9744 = vadd.f32 %v9391, %v9743
    %v9745 = vpop.f32.mrb[0].mxu0
    %v9746 = vadd.f32 %v9393, %v9745
    %v9747 = vpop.f32.mrb[0].mxu0
    %v9748 = vadd.f32 %v9395, %v9747
    %9749 = vmatprep.mubr.bf16.mxu0 %v4831
    %9750 = vmatmul.mubr.bf16.gmra.mrb[0].mxu0 %v4830
    %v9751 = vpop.f32.mrb[0].mxu0
    %v9752 = vadd.f32 %v9399, %v9751
    %v9753 = vpop.f32.mrb[0].mxu0
    %v9754 = vadd.f32 %v9401, %v9753
    %v9755 = vpop.f32.mrb[0].mxu0
    %v9756 = vadd.f32 %v9403, %v9755
    %v9757 = vpop.f32.mrb[0].mxu0
    %v9758 = vadd.f32 %v9405, %v9757
    %9759 = vdwg.mxu0
    %9760 = vmatprep.subr.bf16.mxu0 %v6266
    %9761 = vmatpush1.bf16.msra.mxu0 %v6265
    %9762 = vmatprep.subr.bf16.mxu0 %v6270
    %9763 = vmatpush1.bf16.msra.mxu0 %v6269
    %9764 = vmatprep.subr.bf16.mxu0 %v6274
    %9765 = vmatpush1.bf16.msra.mxu0 %v6273
    %9766 = vmatprep.subr.bf16.mxu0 %v6278
    %9767 = vmatpush1.bf16.msra.mxu0 %v6277
    %9768 = vmatprep.subr.bf16.mxu0 %v6282
    %9769 = vmatpush1.bf16.msra.mxu0 %v6281
    %9770 = vmatprep.subr.bf16.mxu0 %v6286
    %9771 = vmatpush1.bf16.msra.mxu0 %v6285
    %9772 = vmatprep.subr.bf16.mxu0 %v6290
    %9773 = vmatpush1.bf16.msra.mxu0 %v6289
    %9774 = vmatprep.subr.bf16.mxu0 %v6294
    %9775 = vmatpush1.bf16.msra.mxu0 %v6293
    %9776 = vmatprep.subr.bf16.mxu0 0
    %9777 = vmatpush1.bf16.msra.mxu0 0
    %9778 = vmatprep.subr.bf16.mxu0 0
    %9779 = vmatpush1.bf16.msra.mxu0 0
    %9780 = vmatprep.subr.bf16.mxu0 0
    %9781 = vmatpush1.bf16.msra.mxu0 0
    %9782 = vmatprep.subr.bf16.mxu0 0
    %9783 = vmatpush1.bf16.msra.mxu0 0
    %9784 = vmatprep.subr.bf16.mxu0 0
    %9785 = vmatpush1.bf16.msra.mxu0 0
    %9786 = vmatprep.subr.bf16.mxu0 0
    %9787 = vmatpush1.bf16.msra.mxu0 0
    %9788 = vmatprep.subr.bf16.mxu0 0
    %9789 = vmatpush1.bf16.msra.mxu0 0
    %9790 = vmatprep.subr.bf16.mxu0 0
    %9791 = vmatpush1.bf16.msra.mxu0 0
    %9792 = vmatprep.mubr.bf16.mxu0 0
    %9793 = vmatmul.mubr.bf16.gmra.mrb[0].mxu0 %v4553
    %v9794 = vpop.f32.mrb[0].mxu0
    %v9795 = vadd.f32 %v9442, %v9794
    %v9796 = vpop.f32.mrb[0].mxu0
    %v9797 = vadd.f32 %v9444, %v9796
    %v9798 = vpop.f32.mrb[0].mxu0
    %v9799 = vadd.f32 %v9446, %v9798
    %v9800 = vpop.f32.mrb[0].mxu0
    %v9801 = vadd.f32 %v9448, %v9800
    %9802 = vmatprep.mubr.bf16.mxu0 0
    %9803 = vmatmul.mubr.bf16.gmra.mrb[0].mxu0 %v4562
    %v9804 = vpop.f32.mrb[0].mxu0
    %v9805 = vadd.f32 %v9452, %v9804
    %v9806 = vpop.f32.mrb[0].mxu0
    %v9807 = vadd.f32 %v9454, %v9806
    %v9808 = vpop.f32.mrb[0].mxu0
    %v9809 = vadd.f32 %v9456, %v9808
    %v9810 = vpop.f32.mrb[0].mxu0
    %v9811 = vadd.f32 %v9458, %v9810
    %9812 = vmatprep.mubr.bf16.mxu0 0
    %9813 = vmatmul.mubr.bf16.gmra.mrb[0].mxu0 %v4571
    %v9814 = vpop.f32.mrb[0].mxu0
    %v9815 = vadd.f32 %v9462, %v9814
    %v9816 = vpop.f32.mrb[0].mxu0
    %v9817 = vadd.f32 %v9464, %v9816
    %v9818 = vpop.f32.mrb[0].mxu0
    %v9819 = vadd.f32 %v9466, %v9818
    %v9820 = vpop.f32.mrb[0].mxu0
    %v9821 = vadd.f32 %v9468, %v9820
    %9822 = vmatprep.mubr.bf16.mxu0 0
    %9823 = vmatmul.mubr.bf16.gmra.mrb[0].mxu0 %v4580
    %v9824 = vpop.f32.mrb[0].mxu0
    %v9825 = vadd.f32 %v9472, %v9824
    %v9826 = vpop.f32.mrb[0].mxu0
    %v9827 = vadd.f32 %v9474, %v9826
    %v9828 = vpop.f32.mrb[0].mxu0
    %v9829 = vadd.f32 %v9476, %v9828
    %v9830 = vpop.f32.mrb[0].mxu0
    %v9831 = vadd.f32 %v9478, %v9830
    %9832 = vmatprep.mubr.bf16.mxu0 0
    %9833 = vmatmul.mubr.bf16.gmra.mrb[0].mxu0 %v4589
    %v9834 = vpop.f32.mrb[0].mxu0
    %v9835 = vadd.f32 %v9482, %v9834
    %v9836 = vpop.f32.mrb[0].mxu0
    %v9837 = vadd.f32 %v9484, %v9836
    %v9838 = vpop.f32.mrb[0].mxu0
    %v9839 = vadd.f32 %v9486, %v9838
    %v9840 = vpop.f32.mrb[0].mxu0
    %v9841 = vadd.f32 %v9488, %v9840
    %9842 = vmatprep.mubr.bf16.mxu0 0
    %9843 = vmatmul.mubr.bf16.gmra.mrb[0].mxu0 %v4598
    %v9844 = vpop.f32.mrb[0].mxu0
    %v9845 = vadd.f32 %v9492, %v9844
    %v9846 = vpop.f32.mrb[0].mxu0
    %v9847 = vadd.f32 %v9494, %v9846
    %v9848 = vpop.f32.mrb[0].mxu0
    %v9849 = vadd.f32 %v9496, %v9848
    %v9850 = vpop.f32.mrb[0].mxu0
    %v9851 = vadd.f32 %v9498, %v9850
    %9852 = vmatprep.mubr.bf16.mxu0 0
    %9853 = vmatmul.mubr.bf16.gmra.mrb[0].mxu0 %v4607
    %v9854 = vpop.f32.mrb[0].mxu0
    %v9855 = vadd.f32 %v9502, %v9854
    %v9856 = vpop.f32.mrb[0].mxu0
    %v9857 = vadd.f32 %v9504, %v9856
    %v9858 = vpop.f32.mrb[0].mxu0
    %v9859 = vadd.f32 %v9506, %v9858
    %v9860 = vpop.f32.mrb[0].mxu0
    %v9861 = vadd.f32 %v9508, %v9860
    %9862 = vmatprep.mubr.bf16.mxu0 0
    %9863 = vmatmul.mubr.bf16.gmra.mrb[0].mxu0 %v4616
    %v9864 = vpop.f32.mrb[0].mxu0
    %v9865 = vadd.f32 %v9512, %v9864
    %v9866 = vpop.f32.mrb[0].mxu0
    %v9867 = vadd.f32 %v9514, %v9866
    %v9868 = vpop.f32.mrb[0].mxu0
    %v9869 = vadd.f32 %v9516, %v9868
    %v9870 = vpop.f32.mrb[0].mxu0
    %v9871 = vadd.f32 %v9518, %v9870
    %9872 = vmatprep.mubr.bf16.mxu0 0
    %9873 = vmatmul.mubr.bf16.gmra.mrb[0].mxu0 %v4625
    %v9874 = vpop.f32.mrb[0].mxu0
    %v9875 = vadd.f32 %v9522, %v9874
    %v9876 = vpop.f32.mrb[0].mxu0
    %v9877 = vadd.f32 %v9524, %v9876
    %v9878 = vpop.f32.mrb[0].mxu0
    %v9879 = vadd.f32 %v9526, %v9878
    %v9880 = vpop.f32.mrb[0].mxu0
    %v9881 = vadd.f32 %v9528, %v9880
    %9882 = vmatprep.mubr.bf16.mxu0 0
    %9883 = vmatmul.mubr.bf16.gmra.mrb[0].mxu0 %v4634
    %v9884 = vpop.f32.mrb[0].mxu0
    %v9885 = vadd.f32 %v9532, %v9884
    %v9886 = vpop.f32.mrb[0].mxu0
    %v9887 = vadd.f32 %v9534, %v9886
    %v9888 = vpop.f32.mrb[0].mxu0
    %v9889 = vadd.f32 %v9536, %v9888
    %v9890 = vpop.f32.mrb[0].mxu0
    %v9891 = vadd.f32 %v9538, %v9890
    %9892 = vmatprep.mubr.bf16.mxu0 0
    %9893 = vmatmul.mubr.bf16.gmra.mrb[0].mxu0 %v4643
    %v9894 = vpop.f32.mrb[0].mxu0
    %v9895 = vadd.f32 %v9542, %v9894
    %v9896 = vpop.f32.mrb[0].mxu0
    %v9897 = vadd.f32 %v9544, %v9896
    %v9898 = vpop.f32.mrb[0].mxu0
    %v9899 = vadd.f32 %v9546, %v9898
    %v9900 = vpop.f32.mrb[0].mxu0
    %v9901 = vadd.f32 %v9548, %v9900
    %9902 = vmatprep.mubr.bf16.mxu0 0
    %9903 = vmatmul.mubr.bf16.gmra.mrb[0].mxu0 %v4652
    %v9904 = vpop.f32.mrb[0].mxu0
    %v9905 = vadd.f32 %v9552, %v9904
    %v9906 = vpop.f32.mrb[0].mxu0
    %v9907 = vadd.f32 %v9554, %v9906
    %v9908 = vpop.f32.mrb[0].mxu0
    %v9909 = vadd.f32 %v9556, %v9908
    %v9910 = vpop.f32.mrb[0].mxu0
    %v9911 = vadd.f32 %v9558, %v9910
    %9912 = vmatprep.mubr.bf16.mxu0 0
    %9913 = vmatmul.mubr.bf16.gmra.mrb[0].mxu0 %v4661
    %v9914 = vpop.f32.mrb[0].mxu0
    %v9915 = vadd.f32 %v9562, %v9914
    %v9916 = vpop.f32.mrb[0].mxu0
    %v9917 = vadd.f32 %v9564, %v9916
    %v9918 = vpop.f32.mrb[0].mxu0
    %v9919 = vadd.f32 %v9566, %v9918
    %v9920 = vpop.f32.mrb[0].mxu0
    %v9921 = vadd.f32 %v9568, %v9920
    %9922 = vmatprep.mubr.bf16.mxu0 0
    %9923 = vmatmul.mubr.bf16.gmra.mrb[0].mxu0 %v4670
    %v9924 = vpop.f32.mrb[0].mxu0
    %v9925 = vadd.f32 %v9572, %v9924
    %v9926 = vpop.f32.mrb[0].mxu0
    %v9927 = vadd.f32 %v9574, %v9926
    %v9928 = vpop.f32.mrb[0].mxu0
    %v9929 = vadd.f32 %v9576, %v9928
    %v9930 = vpop.f32.mrb[0].mxu0
    %v9931 = vadd.f32 %v9578, %v9930
    %9932 = vmatprep.mubr.bf16.mxu0 0
    %9933 = vmatmul.mubr.bf16.gmra.mrb[0].mxu0 %v4679
    %v9934 = vpop.f32.mrb[0].mxu0
    %v9935 = vadd.f32 %v9582, %v9934
    %v9936 = vpop.f32.mrb[0].mxu0
    %v9937 = vadd.f32 %v9584, %v9936
    %v9938 = vpop.f32.mrb[0].mxu0
    %v9939 = vadd.f32 %v9586, %v9938
    %v9940 = vpop.f32.mrb[0].mxu0
    %v9941 = vadd.f32 %v9588, %v9940
    %9942 = vmatprep.mubr.bf16.mxu0 0
    %9943 = vmatmul.mubr.bf16.gmra.mrb[0].mxu0 %v4688
    %v9944 = vpop.f32.mrb[0].mxu0
    %v9945 = vadd.f32 %v9592, %v9944
    %v9946 = vpop.f32.mrb[0].mxu0
    %v9947 = vadd.f32 %v9594, %v9946
    %v9948 = vpop.f32.mrb[0].mxu0
    %v9949 = vadd.f32 %v9596, %v9948
    %v9950 = vpop.f32.mrb[0].mxu0
    %v9951 = vadd.f32 %v9598, %v9950
    %9952 = vmatprep.mubr.bf16.mxu0 0
    %9953 = vmatmul.mubr.bf16.gmra.mrb[0].mxu0 %v4697
    %v9954 = vpop.f32.mrb[0].mxu0
    %v9955 = vadd.f32 %v9602, %v9954
    %v9956 = vpop.f32.mrb[0].mxu0
    %v9957 = vadd.f32 %v9604, %v9956
    %v9958 = vpop.f32.mrb[0].mxu0
    %v9959 = vadd.f32 %v9606, %v9958
    %v9960 = vpop.f32.mrb[0].mxu0
    %v9961 = vadd.f32 %v9608, %v9960
    %9962 = vmatprep.mubr.bf16.mxu0 0
    %9963 = vmatmul.mubr.bf16.gmra.mrb[0].mxu0 %v4706
    %v9964 = vpop.f32.mrb[0].mxu0
    %v9965 = vadd.f32 %v9612, %v9964
    %v9966 = vpop.f32.mrb[0].mxu0
    %v9967 = vadd.f32 %v9614, %v9966
    %v9968 = vpop.f32.mrb[0].mxu0
    %v9969 = vadd.f32 %v9616, %v9968
    %v9970 = vpop.f32.mrb[0].mxu0
    %v9971 = vadd.f32 %v9618, %v9970
    %9972 = vmatprep.mubr.bf16.mxu0 0
    %9973 = vmatmul.mubr.bf16.gmra.mrb[0].mxu0 %v4715
    %v9974 = vpop.f32.mrb[0].mxu0
    %v9975 = vadd.f32 %v9622, %v9974
    %v9976 = vpop.f32.mrb[0].mxu0
    %v9977 = vadd.f32 %v9624, %v9976
    %v9978 = vpop.f32.mrb[0].mxu0
    %v9979 = vadd.f32 %v9626, %v9978
    %v9980 = vpop.f32.mrb[0].mxu0
    %v9981 = vadd.f32 %v9628, %v9980
    %9982 = vmatprep.mubr.bf16.mxu0 0
    %9983 = vmatmul.mubr.bf16.gmra.mrb[0].mxu0 %v4724
    %v9984 = vpop.f32.mrb[0].mxu0
    %v9985 = vadd.f32 %v9632, %v9984
    %v9986 = vpop.f32.mrb[0].mxu0
    %v9987 = vadd.f32 %v9634, %v9986
    %v9988 = vpop.f32.mrb[0].mxu0
    %v9989 = vadd.f32 %v9636, %v9988
    %v9990 = vpop.f32.mrb[0].mxu0
    %v9991 = vadd.f32 %v9638, %v9990
    %9992 = vmatprep.mubr.bf16.mxu0 0
    %9993 = vmatmul.mubr.bf16.gmra.mrb[0].mxu0 %v4733
    %v9994 = vpop.f32.mrb[0].mxu0
    %v9995 = vadd.f32 %v9642, %v9994
    %v9996 = vpop.f32.mrb[0].mxu0
    %v9997 = vadd.f32 %v9644, %v9996
    %v9998 = vpop.f32.mrb[0].mxu0
    %v9999 = vadd.f32 %v9646, %v9998
    %v10000 = vpop.f32.mrb[0].mxu0
    %v10001 = vadd.f32 %v9648, %v10000
    %10002 = vmatprep.mubr.bf16.mxu0 0
    %10003 = vmatmul.mubr.bf16.gmra.mrb[0].mxu0 %v4742
    %v10004 = vpop.f32.mrb[0].mxu0
    %v10005 = vadd.f32 %v9652, %v10004
    %v10006 = vpop.f32.mrb[0].mxu0
    %v10007 = vadd.f32 %v9654, %v10006
    %v10008 = vpop.f32.mrb[0].mxu0
    %v10009 = vadd.f32 %v9656, %v10008
    %v10010 = vpop.f32.mrb[0].mxu0
    %v10011 = vadd.f32 %v9658, %v10010
    %10012 = vmatprep.mubr.bf16.mxu0 0
    %10013 = vmatmul.mubr.bf16.gmra.mrb[0].mxu0 %v4751
    %v10014 = vpop.f32.mrb[0].mxu0
    %v10015 = vadd.f32 %v9662, %v10014
    %v10016 = vpop.f32.mrb[0].mxu0
    %v10017 = vadd.f32 %v9664, %v10016
    %v10018 = vpop.f32.mrb[0].mxu0
    %v10019 = vadd.f32 %v9666, %v10018
    %v10020 = vpop.f32.mrb[0].mxu0
    %v10021 = vadd.f32 %v9668, %v10020
    %10022 = vmatprep.mubr.bf16.mxu0 0
    %10023 = vmatmul.mubr.bf16.gmra.mrb[0].mxu0 %v4760
    %v10024 = vpop.f32.mrb[0].mxu0
    %v10025 = vadd.f32 %v9672, %v10024
    %v10026 = vpop.f32.mrb[0].mxu0
    %v10027 = vadd.f32 %v9674, %v10026
    %v10028 = vpop.f32.mrb[0].mxu0
    %v10029 = vadd.f32 %v9676, %v10028
    %v10030 = vpop.f32.mrb[0].mxu0
    %v10031 = vadd.f32 %v9678, %v10030
    %10032 = vmatprep.mubr.bf16.mxu0 0
    %10033 = vmatmul.mubr.bf16.gmra.mrb[0].mxu0 %v4769
    %v10034 = vpop.f32.mrb[0].mxu0
    %v10035 = vadd.f32 %v9682, %v10034
    %v10036 = vpop.f32.mrb[0].mxu0
    %v10037 = vadd.f32 %v9684, %v10036
    %v10038 = vpop.f32.mrb[0].mxu0
    %v10039 = vadd.f32 %v9686, %v10038
    %v10040 = vpop.f32.mrb[0].mxu0
    %v10041 = vadd.f32 %v9688, %v10040
    %10042 = vmatprep.mubr.bf16.mxu0 0
    %10043 = vmatmul.mubr.bf16.gmra.mrb[0].mxu0 %v4778
    %v10044 = vpop.f32.mrb[0].mxu0
    %v10045 = vadd.f32 %v9692, %v10044
    %v10046 = vpop.f32.mrb[0].mxu0
    %v10047 = vadd.f32 %v9694, %v10046
    %v10048 = vpop.f32.mrb[0].mxu0
    %v10049 = vadd.f32 %v9696, %v10048
    %v10050 = vpop.f32.mrb[0].mxu0
    %v10051 = vadd.f32 %v9698, %v10050
    %10052 = vmatprep.mubr.bf16.mxu0 0
    %10053 = vmatmul.mubr.bf16.gmra.mrb[0].mxu0 %v4787
    %v10054 = vpop.f32.mrb[0].mxu0
    %v10055 = vadd.f32 %v9702, %v10054
    %v10056 = vpop.f32.mrb[0].mxu0
    %v10057 = vadd.f32 %v9704, %v10056
    %v10058 = vpop.f32.mrb[0].mxu0
    %v10059 = vadd.f32 %v9706, %v10058
    %v10060 = vpop.f32.mrb[0].mxu0
    %v10061 = vadd.f32 %v9708, %v10060
    %10062 = vmatprep.mubr.bf16.mxu0 0
    %10063 = vmatmul.mubr.bf16.gmra.mrb[0].mxu0 %v4796
    %v10064 = vpop.f32.mrb[0].mxu0
    %v10065 = vadd.f32 %v9712, %v10064
    %v10066 = vpop.f32.mrb[0].mxu0
    %v10067 = vadd.f32 %v9714, %v10066
    %v10068 = vpop.f32.mrb[0].mxu0
    %v10069 = vadd.f32 %v9716, %v10068
    %v10070 = vpop.f32.mrb[0].mxu0
    %v10071 = vadd.f32 %v9718, %v10070
    %10072 = vmatprep.mubr.bf16.mxu0 0
    %10073 = vmatmul.mubr.bf16.gmra.mrb[0].mxu0 %v4805
    %v10074 = vpop.f32.mrb[0].mxu0
    %v10075 = vadd.f32 %v9722, %v10074
    %v10076 = vpop.f32.mrb[0].mxu0
    %v10077 = vadd.f32 %v9724, %v10076
    %v10078 = vpop.f32.mrb[0].mxu0
    %v10079 = vadd.f32 %v9726, %v10078
    %v10080 = vpop.f32.mrb[0].mxu0
    %v10081 = vadd.f32 %v9728, %v10080
    %10082 = vmatprep.mubr.bf16.mxu0 0
    %10083 = vmatmul.mubr.bf16.gmra.mrb[0].mxu0 %v4814
    %v10084 = vpop.f32.mrb[0].mxu0
    %v10085 = vadd.f32 %v9732, %v10084
    %v10086 = vpop.f32.mrb[0].mxu0
    %v10087 = vadd.f32 %v9734, %v10086
    %v10088 = vpop.f32.mrb[0].mxu0
    %v10089 = vadd.f32 %v9736, %v10088
    %v10090 = vpop.f32.mrb[0].mxu0
    %v10091 = vadd.f32 %v9738, %v10090
    %10092 = vmatprep.mubr.bf16.mxu0 0
    %10093 = vmatmul.mubr.bf16.gmra.mrb[0].mxu0 %v4823
    %v10094 = vpop.f32.mrb[0].mxu0
    %v10095 = vadd.f32 %v9742, %v10094
    %v10096 = vpop.f32.mrb[0].mxu0
    %v10097 = vadd.f32 %v9744, %v10096
    %v10098 = vpop.f32.mrb[0].mxu0
    %v10099 = vadd.f32 %v9746, %v10098
    %v10100 = vpop.f32.mrb[0].mxu0
    %v10101 = vadd.f32 %v9748, %v10100
    %10102 = vmatprep.mubr.bf16.mxu0 0
    %10103 = vmatmul.mubr.bf16.gmra.mrb[0].mxu0 %v4832
    %v10104 = vpop.f32.mrb[0].mxu0
    %v10105 = vadd.f32 %v9752, %v10104
    %v10106 = vpop.f32.mrb[0].mxu0
    %v10107 = vadd.f32 %v9754, %v10106
    %v10108 = vpop.f32.mrb[0].mxu0
    %v10109 = vadd.f32 %v9756, %v10108
    %v10110 = vpop.f32.mrb[0].mxu0
    %v10111 = vadd.f32 %v9758, %v10110
    %10112 = vdwg.mxu0
    %v10113 = vmax.f32 %v8030, 0.0
    %v10114 = vmax.f32 %v8032, 0.0
    %v10115 = vmax.f32 %v9795, 0.0
    %v10116 = vmax.f32 %v9797, 0.0
    %v10117 = vmax.f32 %v8034, 0.0
    %v10118 = vmax.f32 %v8036, 0.0
    %v10119 = vmax.f32 %v9799, 0.0
    %v10120 = vmax.f32 %v9801, 0.0
    %v10121 = vmax.f32 %v8040, 0.0
    %v10122 = vmax.f32 %v8042, 0.0
    %v10123 = vmax.f32 %v9805, 0.0
    %v10124 = vmax.f32 %v9807, 0.0
    %v10125 = vmax.f32 %v8044, 0.0
    %v10126 = vmax.f32 %v8046, 0.0
    %v10127 = vmax.f32 %v9809, 0.0
    %v10128 = vmax.f32 %v9811, 0.0
    %v10129 = vmax.f32 %v8050, 0.0
    %v10130 = vmax.f32 %v8052, 0.0
    %v10131 = vmax.f32 %v9815, 0.0
    %v10132 = vmax.f32 %v9817, 0.0
    %v10133 = vmax.f32 %v8054, 0.0
    %v10134 = vmax.f32 %v8056, 0.0
    %v10135 = vmax.f32 %v9819, 0.0
    %v10136 = vmax.f32 %v9821, 0.0
    %v10137 = vmax.f32 %v8060, 0.0
    %v10138 = vmax.f32 %v8062, 0.0
    %v10139 = vmax.f32 %v9825, 0.0
    %v10140 = vmax.f32 %v9827, 0.0
    %v10141 = vmax.f32 %v8064, 0.0
    %v10142 = vmax.f32 %v8066, 0.0
    %v10143 = vmax.f32 %v9829, 0.0
    %v10144 = vmax.f32 %v9831, 0.0
    %v10145 = vmax.f32 %v8070, 0.0
    %v10146 = vmax.f32 %v8072, 0.0
    %v10147 = vmax.f32 %v9835, 0.0
    %v10148 = vmax.f32 %v9837, 0.0
    %v10149 = vmax.f32 %v8074, 0.0
    %v10150 = vmax.f32 %v8076, 0.0
    %v10151 = vmax.f32 %v9839, 0.0
    %v10152 = vmax.f32 %v9841, 0.0
    %v10153 = vmax.f32 %v8080, 0.0
    %v10154 = vmax.f32 %v8082, 0.0
    %v10155 = vmax.f32 %v9845, 0.0
    %v10156 = vmax.f32 %v9847, 0.0
    %v10157 = vmax.f32 %v8084, 0.0
    %v10158 = vmax.f32 %v8086, 0.0
    %v10159 = vmax.f32 %v9849, 0.0
    %v10160 = vmax.f32 %v9851, 0.0
    %v10161 = vmax.f32 %v8090, 0.0
    %v10162 = vmax.f32 %v8092, 0.0
    %v10163 = vmax.f32 %v9855, 0.0
    %v10164 = vmax.f32 %v9857, 0.0
    %v10165 = vmax.f32 %v8094, 0.0
    %v10166 = vmax.f32 %v8096, 0.0
    %v10167 = vmax.f32 %v9859, 0.0
    %v10168 = vmax.f32 %v9861, 0.0
    %v10169 = vmax.f32 %v8100, 0.0
    %v10170 = vmax.f32 %v8102, 0.0
    %v10171 = vmax.f32 %v9865, 0.0
    %v10172 = vmax.f32 %v9867, 0.0
    %v10173 = vmax.f32 %v8104, 0.0
    %v10174 = vmax.f32 %v8106, 0.0
    %v10175 = vmax.f32 %v9869, 0.0
    %v10176 = vmax.f32 %v9871, 0.0
    %v10177 = vmax.f32 %v8110, 0.0
    %v10178 = vmax.f32 %v8112, 0.0
    %v10179 = vmax.f32 %v9875, 0.0
    %v10180 = vmax.f32 %v9877, 0.0
    %v10181 = vmax.f32 %v8114, 0.0
    %v10182 = vmax.f32 %v8116, 0.0
    %v10183 = vmax.f32 %v9879, 0.0
    %v10184 = vmax.f32 %v9881, 0.0
    %v10185 = vmax.f32 %v8120, 0.0
    %v10186 = vmax.f32 %v8122, 0.0
    %v10187 = vmax.f32 %v9885, 0.0
    %v10188 = vmax.f32 %v9887, 0.0
    %v10189 = vmax.f32 %v8124, 0.0
    %v10190 = vmax.f32 %v8126, 0.0
    %v10191 = vmax.f32 %v9889, 0.0
    %v10192 = vmax.f32 %v9891, 0.0
    %v10193 = vmax.f32 %v8130, 0.0
    %v10194 = vmax.f32 %v8132, 0.0
    %v10195 = vmax.f32 %v9895, 0.0
    %v10196 = vmax.f32 %v9897, 0.0
    %v10197 = vmax.f32 %v8134, 0.0
    %v10198 = vmax.f32 %v8136, 0.0
    %v10199 = vmax.f32 %v9899, 0.0
    %v10200 = vmax.f32 %v9901, 0.0
    %v10201 = vmax.f32 %v8140, 0.0
    %v10202 = vmax.f32 %v8142, 0.0
    %v10203 = vmax.f32 %v9905, 0.0
    %v10204 = vmax.f32 %v9907, 0.0
    %v10205 = vmax.f32 %v8144, 0.0
    %v10206 = vmax.f32 %v8146, 0.0
    %v10207 = vmax.f32 %v9909, 0.0
    %v10208 = vmax.f32 %v9911, 0.0
    %v10209 = vmax.f32 %v8150, 0.0
    %v10210 = vmax.f32 %v8152, 0.0
    %v10211 = vmax.f32 %v9915, 0.0
    %v10212 = vmax.f32 %v9917, 0.0
    %v10213 = vmax.f32 %v8154, 0.0
    %v10214 = vmax.f32 %v8156, 0.0
    %v10215 = vmax.f32 %v9919, 0.0
    %v10216 = vmax.f32 %v9921, 0.0
    %v10217 = vmax.f32 %v8160, 0.0
    %v10218 = vmax.f32 %v8162, 0.0
    %v10219 = vmax.f32 %v9925, 0.0
    %v10220 = vmax.f32 %v9927, 0.0
    %v10221 = vmax.f32 %v8164, 0.0
    %v10222 = vmax.f32 %v8166, 0.0
    %v10223 = vmax.f32 %v9929, 0.0
    %v10224 = vmax.f32 %v9931, 0.0
    %v10225 = vmax.f32 %v8170, 0.0
    %v10226 = vmax.f32 %v8172, 0.0
    %v10227 = vmax.f32 %v9935, 0.0
    %v10228 = vmax.f32 %v9937, 0.0
    %v10229 = vmax.f32 %v8174, 0.0
    %v10230 = vmax.f32 %v8176, 0.0
    %v10231 = vmax.f32 %v9939, 0.0
    %v10232 = vmax.f32 %v9941, 0.0
    %v10233 = vmax.f32 %v8180, 0.0
    %v10234 = vmax.f32 %v8182, 0.0
    %v10235 = vmax.f32 %v9945, 0.0
    %v10236 = vmax.f32 %v9947, 0.0
    %v10237 = vmax.f32 %v8184, 0.0
    %v10238 = vmax.f32 %v8186, 0.0
    %v10239 = vmax.f32 %v9949, 0.0
    %v10240 = vmax.f32 %v9951, 0.0
    %v10241 = vmax.f32 %v8190, 0.0
    %v10242 = vmax.f32 %v8192, 0.0
    %v10243 = vmax.f32 %v9955, 0.0
    %v10244 = vmax.f32 %v9957, 0.0
    %v10245 = vmax.f32 %v8194, 0.0
    %v10246 = vmax.f32 %v8196, 0.0
    %v10247 = vmax.f32 %v9959, 0.0
    %v10248 = vmax.f32 %v9961, 0.0
    %v10249 = vmax.f32 %v8200, 0.0
    %v10250 = vmax.f32 %v8202, 0.0
    %v10251 = vmax.f32 %v9965, 0.0
    %v10252 = vmax.f32 %v9967, 0.0
    %v10253 = vmax.f32 %v8204, 0.0
    %v10254 = vmax.f32 %v8206, 0.0
    %v10255 = vmax.f32 %v9969, 0.0
    %v10256 = vmax.f32 %v9971, 0.0
    %v10257 = vmax.f32 %v8210, 0.0
    %v10258 = vmax.f32 %v8212, 0.0
    %v10259 = vmax.f32 %v9975, 0.0
    %v10260 = vmax.f32 %v9977, 0.0
    %v10261 = vmax.f32 %v8214, 0.0
    %v10262 = vmax.f32 %v8216, 0.0
    %v10263 = vmax.f32 %v9979, 0.0
    %v10264 = vmax.f32 %v9981, 0.0
    %v10265 = vmax.f32 %v8220, 0.0
    %v10266 = vmax.f32 %v8222, 0.0
    %v10267 = vmax.f32 %v9985, 0.0
    %v10268 = vmax.f32 %v9987, 0.0
    %v10269 = vmax.f32 %v8224, 0.0
    %v10270 = vmax.f32 %v8226, 0.0
    %v10271 = vmax.f32 %v9989, 0.0
    %v10272 = vmax.f32 %v9991, 0.0
    %v10273 = vmax.f32 %v8230, 0.0
    %v10274 = vmax.f32 %v8232, 0.0
    %v10275 = vmax.f32 %v9995, 0.0
    %v10276 = vmax.f32 %v9997, 0.0
    %v10277 = vmax.f32 %v8234, 0.0
    %v10278 = vmax.f32 %v8236, 0.0
    %v10279 = vmax.f32 %v9999, 0.0
    %v10280 = vmax.f32 %v10001, 0.0
    %v10281 = vmax.f32 %v8240, 0.0
    %v10282 = vmax.f32 %v8242, 0.0
    %v10283 = vmax.f32 %v10005, 0.0
    %v10284 = vmax.f32 %v10007, 0.0
    %v10285 = vmax.f32 %v8244, 0.0
    %v10286 = vmax.f32 %v8246, 0.0
    %v10287 = vmax.f32 %v10009, 0.0
    %v10288 = vmax.f32 %v10011, 0.0
    %v10289 = vmax.f32 %v8250, 0.0
    %v10290 = vmax.f32 %v8252, 0.0
    %v10291 = vmax.f32 %v10015, 0.0
    %v10292 = vmax.f32 %v10017, 0.0
    %v10293 = vmax.f32 %v8254, 0.0
    %v10294 = vmax.f32 %v8256, 0.0
    %v10295 = vmax.f32 %v10019, 0.0
    %v10296 = vmax.f32 %v10021, 0.0
    %v10297 = vmax.f32 %v8260, 0.0
    %v10298 = vmax.f32 %v8262, 0.0
    %v10299 = vmax.f32 %v10025, 0.0
    %v10300 = vmax.f32 %v10027, 0.0
    %v10301 = vmax.f32 %v8264, 0.0
    %v10302 = vmax.f32 %v8266, 0.0
    %v10303 = vmax.f32 %v10029, 0.0
    %v10304 = vmax.f32 %v10031, 0.0
    %v10305 = vmax.f32 %v8270, 0.0
    %v10306 = vmax.f32 %v8272, 0.0
    %v10307 = vmax.f32 %v10035, 0.0
    %v10308 = vmax.f32 %v10037, 0.0
    %v10309 = vmax.f32 %v8274, 0.0
    %v10310 = vmax.f32 %v8276, 0.0
    %v10311 = vmax.f32 %v10039, 0.0
    %v10312 = vmax.f32 %v10041, 0.0
    %v10313 = vmax.f32 %v8280, 0.0
    %v10314 = vmax.f32 %v8282, 0.0
    %v10315 = vmax.f32 %v10045, 0.0
    %v10316 = vmax.f32 %v10047, 0.0
    %v10317 = vmax.f32 %v8284, 0.0
    %v10318 = vmax.f32 %v8286, 0.0
    %v10319 = vmax.f32 %v10049, 0.0
    %v10320 = vmax.f32 %v10051, 0.0
    %v10321 = vmax.f32 %v8290, 0.0
    %v10322 = vmax.f32 %v8292, 0.0
    %v10323 = vmax.f32 %v10055, 0.0
    %v10324 = vmax.f32 %v10057, 0.0
    %v10325 = vmax.f32 %v8294, 0.0
    %v10326 = vmax.f32 %v8296, 0.0
    %v10327 = vmax.f32 %v10059, 0.0
    %v10328 = vmax.f32 %v10061, 0.0
    %v10329 = vmax.f32 %v8300, 0.0
    %v10330 = vmax.f32 %v8302, 0.0
    %v10331 = vmax.f32 %v10065, 0.0
    %v10332 = vmax.f32 %v10067, 0.0
    %v10333 = vmax.f32 %v8304, 0.0
    %v10334 = vmax.f32 %v8306, 0.0
    %v10335 = vmax.f32 %v10069, 0.0
    %v10336 = vmax.f32 %v10071, 0.0
    %v10337 = vmax.f32 %v8310, 0.0
    %v10338 = vmax.f32 %v8312, 0.0
    %v10339 = vmax.f32 %v10075, 0.0
    %v10340 = vmax.f32 %v10077, 0.0
    %v10341 = vmax.f32 %v8314, 0.0
    %v10342 = vmax.f32 %v8316, 0.0
    %v10343 = vmax.f32 %v10079, 0.0
    %v10344 = vmax.f32 %v10081, 0.0
    %v10345 = vmax.f32 %v8320, 0.0
    %v10346 = vmax.f32 %v8322, 0.0
    %v10347 = vmax.f32 %v10085, 0.0
    %v10348 = vmax.f32 %v10087, 0.0
    %v10349 = vmax.f32 %v8324, 0.0
    %v10350 = vmax.f32 %v8326, 0.0
    %v10351 = vmax.f32 %v10089, 0.0
    %v10352 = vmax.f32 %v10091, 0.0
    %v10353 = vmax.f32 %v8330, 0.0
    %v10354 = vmax.f32 %v8332, 0.0
    %v10355 = vmax.f32 %v10095, 0.0
    %v10356 = vmax.f32 %v10097, 0.0
    %v10357 = vmax.f32 %v8334, 0.0
    %v10358 = vmax.f32 %v8336, 0.0
    %v10359 = vmax.f32 %v10099, 0.0
    %v10360 = vmax.f32 %v10101, 0.0
    %v10361 = vmax.f32 %v8340, 0.0
    %v10362 = vmax.f32 %v8342, 0.0
    %v10363 = vmax.f32 %v10105, 0.0
    %v10364 = vmax.f32 %v10107, 0.0
    %v10365 = vmax.f32 %v8344, 0.0
    %v10366 = vmax.f32 %v8346, 0.0
    %v10367 = vmax.f32 %v10109, 0.0
    %v10368 = vmax.f32 %v10111, 0.0
    %v10369 = vpack.c.bf16 %v10117, %v10113
    %v10370 = vpack.c.bf16 %v10118, %v10114
    %v10371 = vpack.c.bf16 %v10119, %v10115
    %v10372 = vpack.c.bf16 %v10120, %v10116
    %v10373 = vpack.c.bf16 %v10125, %v10121
    %v10374 = vpack.c.bf16 %v10126, %v10122
    %v10375 = vpack.c.bf16 %v10127, %v10123
    %v10376 = vpack.c.bf16 %v10128, %v10124
    %v10377 = vpack.c.bf16 %v10133, %v10129
    %v10378 = vpack.c.bf16 %v10134, %v10130
    %v10379 = vpack.c.bf16 %v10135, %v10131
    %v10380 = vpack.c.bf16 %v10136, %v10132
    %v10381 = vpack.c.bf16 %v10141, %v10137
    %v10382 = vpack.c.bf16 %v10142, %v10138
    %v10383 = vpack.c.bf16 %v10143, %v10139
    %v10384 = vpack.c.bf16 %v10144, %v10140
    %v10385 = vpack.c.bf16 %v10149, %v10145
    %v10386 = vpack.c.bf16 %v10150, %v10146
    %v10387 = vpack.c.bf16 %v10151, %v10147
    %v10388 = vpack.c.bf16 %v10152, %v10148
    %v10389 = vpack.c.bf16 %v10157, %v10153
    %v10390 = vpack.c.bf16 %v10158, %v10154
    %v10391 = vpack.c.bf16 %v10159, %v10155
    %v10392 = vpack.c.bf16 %v10160, %v10156
    %v10393 = vpack.c.bf16 %v10165, %v10161
    %v10394 = vpack.c.bf16 %v10166, %v10162
    %v10395 = vpack.c.bf16 %v10167, %v10163
    %v10396 = vpack.c.bf16 %v10168, %v10164
    %v10397 = vpack.c.bf16 %v10173, %v10169
    %v10398 = vpack.c.bf16 %v10174, %v10170
    %v10399 = vpack.c.bf16 %v10175, %v10171
    %v10400 = vpack.c.bf16 %v10176, %v10172
    %v10401 = vpack.c.bf16 %v10181, %v10177
    %v10402 = vpack.c.bf16 %v10182, %v10178
    %v10403 = vpack.c.bf16 %v10183, %v10179
    %v10404 = vpack.c.bf16 %v10184, %v10180
    %v10405 = vpack.c.bf16 %v10189, %v10185
    %v10406 = vpack.c.bf16 %v10190, %v10186
    %v10407 = vpack.c.bf16 %v10191, %v10187
    %v10408 = vpack.c.bf16 %v10192, %v10188
    %v10409 = vpack.c.bf16 %v10197, %v10193
    %v10410 = vpack.c.bf16 %v10198, %v10194
    %v10411 = vpack.c.bf16 %v10199, %v10195
    %v10412 = vpack.c.bf16 %v10200, %v10196
    %v10413 = vpack.c.bf16 %v10205, %v10201
    %v10414 = vpack.c.bf16 %v10206, %v10202
    %v10415 = vpack.c.bf16 %v10207, %v10203
    %v10416 = vpack.c.bf16 %v10208, %v10204
    %v10417 = vpack.c.bf16 %v10213, %v10209
    %v10418 = vpack.c.bf16 %v10214, %v10210
    %v10419 = vpack.c.bf16 %v10215, %v10211
    %v10420 = vpack.c.bf16 %v10216, %v10212
    %v10421 = vpack.c.bf16 %v10221, %v10217
    %v10422 = vpack.c.bf16 %v10222, %v10218
    %v10423 = vpack.c.bf16 %v10223, %v10219
    %v10424 = vpack.c.bf16 %v10224, %v10220
    %v10425 = vpack.c.bf16 %v10229, %v10225
    %v10426 = vpack.c.bf16 %v10230, %v10226
    %v10427 = vpack.c.bf16 %v10231, %v10227
    %v10428 = vpack.c.bf16 %v10232, %v10228
    %v10429 = vpack.c.bf16 %v10237, %v10233
    %v10430 = vpack.c.bf16 %v10238, %v10234
    %v10431 = vpack.c.bf16 %v10239, %v10235
    %v10432 = vpack.c.bf16 %v10240, %v10236
    %v10433 = vpack.c.bf16 %v10245, %v10241
    %v10434 = vpack.c.bf16 %v10246, %v10242
    %v10435 = vpack.c.bf16 %v10247, %v10243
    %v10436 = vpack.c.bf16 %v10248, %v10244
    %v10437 = vpack.c.bf16 %v10253, %v10249
    %v10438 = vpack.c.bf16 %v10254, %v10250
    %v10439 = vpack.c.bf16 %v10255, %v10251
    %v10440 = vpack.c.bf16 %v10256, %v10252
    %v10441 = vpack.c.bf16 %v10261, %v10257
    %v10442 = vpack.c.bf16 %v10262, %v10258
    %v10443 = vpack.c.bf16 %v10263, %v10259
    %v10444 = vpack.c.bf16 %v10264, %v10260
    %v10445 = vpack.c.bf16 %v10269, %v10265
    %v10446 = vpack.c.bf16 %v10270, %v10266
    %v10447 = vpack.c.bf16 %v10271, %v10267
    %v10448 = vpack.c.bf16 %v10272, %v10268
    %v10449 = vpack.c.bf16 %v10277, %v10273
    %v10450 = vpack.c.bf16 %v10278, %v10274
    %v10451 = vpack.c.bf16 %v10279, %v10275
    %v10452 = vpack.c.bf16 %v10280, %v10276
    %v10453 = vpack.c.bf16 %v10285, %v10281
    %v10454 = vpack.c.bf16 %v10286, %v10282
    %v10455 = vpack.c.bf16 %v10287, %v10283
    %v10456 = vpack.c.bf16 %v10288, %v10284
    %v10457 = vpack.c.bf16 %v10293, %v10289
    %v10458 = vpack.c.bf16 %v10294, %v10290
    %v10459 = vpack.c.bf16 %v10295, %v10291
    %v10460 = vpack.c.bf16 %v10296, %v10292
    %v10461 = vpack.c.bf16 %v10301, %v10297
    %v10462 = vpack.c.bf16 %v10302, %v10298
    %v10463 = vpack.c.bf16 %v10303, %v10299
    %v10464 = vpack.c.bf16 %v10304, %v10300
    %v10465 = vpack.c.bf16 %v10309, %v10305
    %v10466 = vpack.c.bf16 %v10310, %v10306
    %v10467 = vpack.c.bf16 %v10311, %v10307
    %v10468 = vpack.c.bf16 %v10312, %v10308
    %v10469 = vpack.c.bf16 %v10317, %v10313
    %v10470 = vpack.c.bf16 %v10318, %v10314
    %v10471 = vpack.c.bf16 %v10319, %v10315
    %v10472 = vpack.c.bf16 %v10320, %v10316
    %v10473 = vpack.c.bf16 %v10325, %v10321
    %v10474 = vpack.c.bf16 %v10326, %v10322
    %v10475 = vpack.c.bf16 %v10327, %v10323
    %v10476 = vpack.c.bf16 %v10328, %v10324
    %v10477 = vpack.c.bf16 %v10333, %v10329
    %v10478 = vpack.c.bf16 %v10334, %v10330
    %v10479 = vpack.c.bf16 %v10335, %v10331
    %v10480 = vpack.c.bf16 %v10336, %v10332
    %v10481 = vpack.c.bf16 %v10341, %v10337
    %v10482 = vpack.c.bf16 %v10342, %v10338
    %v10483 = vpack.c.bf16 %v10343, %v10339
    %v10484 = vpack.c.bf16 %v10344, %v10340
    %v10485 = vpack.c.bf16 %v10349, %v10345
    %v10486 = vpack.c.bf16 %v10350, %v10346
    %v10487 = vpack.c.bf16 %v10351, %v10347
    %v10488 = vpack.c.bf16 %v10352, %v10348
    %v10489 = vpack.c.bf16 %v10357, %v10353
    %v10490 = vpack.c.bf16 %v10358, %v10354
    %v10491 = vpack.c.bf16 %v10359, %v10355
    %v10492 = vpack.c.bf16 %v10360, %v10356
    %v10493 = vpack.c.bf16 %v10365, %v10361
    %v10494 = vpack.c.bf16 %v10366, %v10362
    %v10495 = vpack.c.bf16 %v10367, %v10363
    %v10496 = vpack.c.bf16 %v10368, %v10364
    %v10497 = vld [vmem:[#allocation14] sm:$0xf]
    %v10498 = vld [vmem:[#allocation14 + $0x4] sm:$0xf]
    %v10499 = vld [vmem:[#allocation14 + $0x8] sm:$0xf]
    %v10500 = vld [vmem:[#allocation14 + $0xc] sm:$0xf]
    %v10501 = vld [vmem:[#allocation14 + $0x10] sm:$0xf]
    %v10502 = vld [vmem:[#allocation14 + $0x14] sm:$0xf]
    %v10503 = vld [vmem:[#allocation14 + $0x18] sm:$0xf]
    %v10504 = vld [vmem:[#allocation14 + $0x1c] sm:$0xf]
    %v10505 = vld [vmem:[#allocation14 + $0x20] sm:$0xf]
    %v10506 = vld [vmem:[#allocation14 + $0x24] sm:$0xf]
    %v10507 = vld [vmem:[#allocation14 + $0x28] sm:$0xf]
    %v10508 = vld [vmem:[#allocation14 + $0x2c] sm:$0xf]
    %v10509 = vld [vmem:[#allocation14 + $0x30] sm:$0xf]
    %v10510 = vld [vmem:[#allocation14 + $0x34] sm:$0xf]
    %v10511 = vld [vmem:[#allocation14 + $0x38] sm:$0xf]
    %v10512 = vld [vmem:[#allocation14 + $0x3c] sm:$0xf]
    %v10513 = vld [vmem:[#allocation14 + $0x40] sm:$0xf]
    %v10514 = vld [vmem:[#allocation14 + $0x44] sm:$0xf]
    %v10515 = vld [vmem:[#allocation14 + $0x48] sm:$0xf]
    %v10516 = vld [vmem:[#allocation14 + $0x4c] sm:$0xf]
    %v10517 = vld [vmem:[#allocation14 + $0x50] sm:$0xf]
    %v10518 = vld [vmem:[#allocation14 + $0x54] sm:$0xf]
    %v10519 = vld [vmem:[#allocation14 + $0x58] sm:$0xf]
    %v10520 = vld [vmem:[#allocation14 + $0x5c] sm:$0xf]
    %v10521 = vld [vmem:[#allocation14 + $0x60] sm:$0xf]
    %v10522 = vld [vmem:[#allocation14 + $0x64] sm:$0xf]
    %v10523 = vld [vmem:[#allocation14 + $0x68] sm:$0xf]
    %v10524 = vld [vmem:[#allocation14 + $0x6c] sm:$0xf]
    %v10525 = vld [vmem:[#allocation14 + $0x70] sm:$0xf]
    %v10526 = vld [vmem:[#allocation14 + $0x74] sm:$0xf]
    %v10527 = vld [vmem:[#allocation14 + $0x78] sm:$0xf]
    %v10528 = vld [vmem:[#allocation14 + $0x7c] sm:$0xf]
    %v10529 = vld [vmem:[#allocation14 + $0x80] sm:$0xf]
    %v10530 = vld [vmem:[#allocation14 + $0x84] sm:$0xf]
    %v10531 = vld [vmem:[#allocation14 + $0x88] sm:$0xf]
    %v10532 = vld [vmem:[#allocation14 + $0x8c] sm:$0xf]
    %v10533 = vld [vmem:[#allocation14 + $0x90] sm:$0xf]
    %v10534 = vld [vmem:[#allocation14 + $0x94] sm:$0xf]
    %v10535 = vld [vmem:[#allocation14 + $0x98] sm:$0xf]
    %v10536 = vld [vmem:[#allocation14 + $0x9c] sm:$0xf]
    %v10537 = vld [vmem:[#allocation14 + $0xa0] sm:$0xf]
    %v10538 = vld [vmem:[#allocation14 + $0xa4] sm:$0xf]
    %v10539 = vld [vmem:[#allocation14 + $0xa8] sm:$0xf]
    %v10540 = vld [vmem:[#allocation14 + $0xac] sm:$0xf]
    %v10541 = vld [vmem:[#allocation14 + $0xb0] sm:$0xf]
    %v10542 = vld [vmem:[#allocation14 + $0xb4] sm:$0xf]
    %v10543 = vld [vmem:[#allocation14 + $0xb8] sm:$0xf]
    %v10544 = vld [vmem:[#allocation14 + $0xbc] sm:$0xf]
    %v10545 = vld [vmem:[#allocation14 + $0xc0] sm:$0xf]
    %v10546 = vld [vmem:[#allocation14 + $0xc4] sm:$0xf]
    %v10547 = vld [vmem:[#allocation14 + $0xc8] sm:$0xf]
    %v10548 = vld [vmem:[#allocation14 + $0xcc] sm:$0xf]
    %v10549 = vld [vmem:[#allocation14 + $0xd0] sm:$0xf]
    %v10550 = vld [vmem:[#allocation14 + $0xd4] sm:$0xf]
    %v10551 = vld [vmem:[#allocation14 + $0xd8] sm:$0xf]
    %v10552 = vld [vmem:[#allocation14 + $0xdc] sm:$0xf]
    %v10553 = vld [vmem:[#allocation14 + $0xe0] sm:$0xf]
    %v10554 = vld [vmem:[#allocation14 + $0xe4] sm:$0xf]
    %v10555 = vld [vmem:[#allocation14 + $0xe8] sm:$0xf]
    %v10556 = vld [vmem:[#allocation14 + $0xec] sm:$0xf]
    %v10557 = vld [vmem:[#allocation14 + $0xf0] sm:$0xf]
    %v10558 = vld [vmem:[#allocation14 + $0xf4] sm:$0xf]
    %v10559 = vld [vmem:[#allocation14 + $0xf8] sm:$0xf]
    %v10560 = vld [vmem:[#allocation14 + $0xfc] sm:$0xf]
    %v10561 = vld [vmem:[#allocation15] sm:$0x1]
    %v10563 = vlaneseq
    %v10564 = vshrl.u32 %v10563, 7
    %v10565 = vsub.s32 0, %v10564
    %v10566 = vrot.slane %v10561, %v10565
    %v10632 = vunpack.c.l.b16 %v10497
    %v10633 = vunpack.c.l.b16 %v10498
    %v10634 = vunpack.c.l.b16 %v10499
    %v10635 = vunpack.c.l.b16 %v10500
    %v10636 = vunpack.c.l.b16 %v10501
    %v10637 = vunpack.c.l.b16 %v10502
    %v10638 = vunpack.c.l.b16 %v10503
    %v10639 = vunpack.c.l.b16 %v10504
    %v10640 = vunpack.c.l.b16 %v10505
    %v10641 = vunpack.c.l.b16 %v10506
    %v10642 = vunpack.c.l.b16 %v10507
    %v10643 = vunpack.c.l.b16 %v10508
    %v10644 = vunpack.c.l.b16 %v10509
    %v10645 = vunpack.c.l.b16 %v10510
    %v10646 = vunpack.c.l.b16 %v10511
    %v10647 = vunpack.c.l.b16 %v10512
    %v10648 = vunpack.c.l.b16 %v10513
    %v10649 = vunpack.c.l.b16 %v10514
    %v10650 = vunpack.c.l.b16 %v10515
    %v10651 = vunpack.c.l.b16 %v10516
    %v10652 = vunpack.c.l.b16 %v10517
    %v10653 = vunpack.c.l.b16 %v10518
    %v10654 = vunpack.c.l.b16 %v10519
    %v10655 = vunpack.c.l.b16 %v10520
    %v10656 = vunpack.c.l.b16 %v10521
    %v10657 = vunpack.c.l.b16 %v10522
    %v10658 = vunpack.c.l.b16 %v10523
    %v10659 = vunpack.c.l.b16 %v10524
    %v10660 = vunpack.c.l.b16 %v10525
    %v10661 = vunpack.c.l.b16 %v10526
    %v10662 = vunpack.c.l.b16 %v10527
    %v10663 = vunpack.c.l.b16 %v10528
    %v10664 = vunpack.c.l.b16 %v10529
    %v10665 = vunpack.c.l.b16 %v10530
    %v10666 = vunpack.c.l.b16 %v10531
    %v10667 = vunpack.c.l.b16 %v10532
    %v10668 = vunpack.c.l.b16 %v10533
    %v10669 = vunpack.c.l.b16 %v10534
    %v10670 = vunpack.c.l.b16 %v10535
    %v10671 = vunpack.c.l.b16 %v10536
    %v10672 = vunpack.c.l.b16 %v10537
    %v10673 = vunpack.c.l.b16 %v10538
    %v10674 = vunpack.c.l.b16 %v10539
    %v10675 = vunpack.c.l.b16 %v10540
    %v10676 = vunpack.c.l.b16 %v10541
    %v10677 = vunpack.c.l.b16 %v10542
    %v10678 = vunpack.c.l.b16 %v10543
    %v10679 = vunpack.c.l.b16 %v10544
    %v10680 = vunpack.c.l.b16 %v10545
    %v10681 = vunpack.c.l.b16 %v10546
    %v10682 = vunpack.c.l.b16 %v10547
    %v10683 = vunpack.c.l.b16 %v10548
    %v10684 = vunpack.c.l.b16 %v10549
    %v10685 = vunpack.c.l.b16 %v10550
    %v10686 = vunpack.c.l.b16 %v10551
    %v10687 = vunpack.c.l.b16 %v10552
    %v10688 = vunpack.c.l.b16 %v10553
    %v10689 = vunpack.c.l.b16 %v10554
    %v10690 = vunpack.c.l.b16 %v10555
    %v10691 = vunpack.c.l.b16 %v10556
    %v10692 = vunpack.c.l.b16 %v10557
    %v10693 = vunpack.c.l.b16 %v10558
    %v10694 = vunpack.c.l.b16 %v10559
    %v10695 = vunpack.c.l.b16 %v10560
    %v10696 = vpack.c.b16 %v10633, %v10632
    %v10697 = vpack.c.b16 %v10635, %v10634
    %v10698 = vpack.c.b16 %v10637, %v10636
    %v10699 = vpack.c.b16 %v10639, %v10638
    %v10700 = vpack.c.b16 %v10641, %v10640
    %v10701 = vpack.c.b16 %v10643, %v10642
    %v10702 = vpack.c.b16 %v10645, %v10644
    %v10703 = vpack.c.b16 %v10647, %v10646
    %v10704 = vpack.c.b16 %v10649, %v10648
    %v10705 = vpack.c.b16 %v10651, %v10650
    %v10706 = vpack.c.b16 %v10653, %v10652
    %v10707 = vpack.c.b16 %v10655, %v10654
    %v10708 = vpack.c.b16 %v10657, %v10656
    %v10709 = vpack.c.b16 %v10659, %v10658
    %v10710 = vpack.c.b16 %v10661, %v10660
    %v10711 = vpack.c.b16 %v10663, %v10662
    %v10712 = vpack.c.b16 %v10665, %v10664
    %v10713 = vpack.c.b16 %v10667, %v10666
    %v10714 = vpack.c.b16 %v10669, %v10668
    %v10715 = vpack.c.b16 %v10671, %v10670
    %v10716 = vpack.c.b16 %v10673, %v10672
    %v10717 = vpack.c.b16 %v10675, %v10674
    %v10718 = vpack.c.b16 %v10677, %v10676
    %v10719 = vpack.c.b16 %v10679, %v10678
    %v10720 = vpack.c.b16 %v10681, %v10680
    %v10721 = vpack.c.b16 %v10683, %v10682
    %v10722 = vpack.c.b16 %v10685, %v10684
    %v10723 = vpack.c.b16 %v10687, %v10686
    %v10724 = vpack.c.b16 %v10689, %v10688
    %v10725 = vpack.c.b16 %v10691, %v10690
    %v10726 = vpack.c.b16 %v10693, %v10692
    %v10727 = vpack.c.b16 %v10695, %v10694
    %10760 = vmatprep.subr.bf16.mxu0 0
    %10761 = vmatpush1.bf16.msra.mxu0 %v10696
    %10762 = vmatprep.subr.bf16.mxu0 0
    %10763 = vmatpush1.bf16.msra.mxu0 %v10697
    %10764 = vmatprep.subr.bf16.mxu0 0
    %10765 = vmatpush1.bf16.msra.mxu0 %v10698
    %10766 = vmatprep.subr.bf16.mxu0 0
    %10767 = vmatpush1.bf16.msra.mxu0 %v10699
    %10768 = vmatprep.subr.bf16.mxu0 0
    %10769 = vmatpush1.bf16.msra.mxu0 %v10700
    %10770 = vmatprep.subr.bf16.mxu0 0
    %10771 = vmatpush1.bf16.msra.mxu0 %v10701
    %10772 = vmatprep.subr.bf16.mxu0 0
    %10773 = vmatpush1.bf16.msra.mxu0 %v10702
    %10774 = vmatprep.subr.bf16.mxu0 0
    %10775 = vmatpush1.bf16.msra.mxu0 %v10703
    %10776 = vmatprep.subr.bf16.mxu0 0
    %10777 = vmatpush1.bf16.msra.mxu0 %v10704
    %10778 = vmatprep.subr.bf16.mxu0 0
    %10779 = vmatpush1.bf16.msra.mxu0 %v10705
    %10780 = vmatprep.subr.bf16.mxu0 0
    %10781 = vmatpush1.bf16.msra.mxu0 %v10706
    %10782 = vmatprep.subr.bf16.mxu0 0
    %10783 = vmatpush1.bf16.msra.mxu0 %v10707
    %10784 = vmatprep.subr.bf16.mxu0 0
    %10785 = vmatpush1.bf16.msra.mxu0 %v10708
    %10786 = vmatprep.subr.bf16.mxu0 0
    %10787 = vmatpush1.bf16.msra.mxu0 %v10709
    %10788 = vmatprep.subr.bf16.mxu0 0
    %10789 = vmatpush1.bf16.msra.mxu0 %v10710
    %10790 = vmatprep.subr.bf16.mxu0 0
    %10791 = vmatpush1.bf16.msra.mxu0 %v10711
    %10792 = vmatprep.mubr.bf16.mxu0 %v10370
    %10793 = vmatmul.mubr.bf16.gmra.mrb[0].mxu0 %v10369
    %v10794 = vpop.f32.mrb[0].mxu0
    %v10795 = vadd.f32 %v10566, %v10794
    %v10796 = vpop.f32.mrb[0].mxu0
    %v10797 = vpop.f32.mrb[0].mxu0
    %v10798 = vadd.f32 %v10566, %v10797
    %v10799 = vpop.f32.mrb[0].mxu0
    %10800 = vmatprep.mubr.bf16.mxu0 %v10374
    %10801 = vmatmul.mubr.bf16.gmra.mrb[0].mxu0 %v10373
    %v10802 = vpop.f32.mrb[0].mxu0
    %v10803 = vadd.f32 %v10566, %v10802
    %v10804 = vpop.f32.mrb[0].mxu0
    %v10805 = vpop.f32.mrb[0].mxu0
    %v10806 = vadd.f32 %v10566, %v10805
    %v10807 = vpop.f32.mrb[0].mxu0
    %10808 = vmatprep.mubr.bf16.mxu0 %v10378
    %10809 = vmatmul.mubr.bf16.gmra.mrb[0].mxu0 %v10377
    %v10810 = vpop.f32.mrb[0].mxu0
    %v10811 = vadd.f32 %v10566, %v10810
    %v10812 = vpop.f32.mrb[0].mxu0
    %v10813 = vpop.f32.mrb[0].mxu0
    %v10814 = vadd.f32 %v10566, %v10813
    %v10815 = vpop.f32.mrb[0].mxu0
    %10816 = vmatprep.mubr.bf16.mxu0 %v10382
    %10817 = vmatmul.mubr.bf16.gmra.mrb[0].mxu0 %v10381
    %v10818 = vpop.f32.mrb[0].mxu0
    %v10819 = vadd.f32 %v10566, %v10818
    %v10820 = vpop.f32.mrb[0].mxu0
    %v10821 = vpop.f32.mrb[0].mxu0
    %v10822 = vadd.f32 %v10566, %v10821
    %v10823 = vpop.f32.mrb[0].mxu0
    %10824 = vmatprep.mubr.bf16.mxu0 %v10386
    %10825 = vmatmul.mubr.bf16.gmra.mrb[0].mxu0 %v10385
    %v10826 = vpop.f32.mrb[0].mxu0
    %v10827 = vadd.f32 %v10566, %v10826
    %v10828 = vpop.f32.mrb[0].mxu0
    %v10829 = vpop.f32.mrb[0].mxu0
    %v10830 = vadd.f32 %v10566, %v10829
    %v10831 = vpop.f32.mrb[0].mxu0
    %10832 = vmatprep.mubr.bf16.mxu0 %v10390
    %10833 = vmatmul.mubr.bf16.gmra.mrb[0].mxu0 %v10389
    %v10834 = vpop.f32.mrb[0].mxu0
    %v10835 = vadd.f32 %v10566, %v10834
    %v10836 = vpop.f32.mrb[0].mxu0
    %v10837 = vpop.f32.mrb[0].mxu0
    %v10838 = vadd.f32 %v10566, %v10837
    %v10839 = vpop.f32.mrb[0].mxu0
    %10840 = vmatprep.mubr.bf16.mxu0 %v10394
    %10841 = vmatmul.mubr.bf16.gmra.mrb[0].mxu0 %v10393
    %v10842 = vpop.f32.mrb[0].mxu0
    %v10843 = vadd.f32 %v10566, %v10842
    %v10844 = vpop.f32.mrb[0].mxu0
    %v10845 = vpop.f32.mrb[0].mxu0
    %v10846 = vadd.f32 %v10566, %v10845
    %v10847 = vpop.f32.mrb[0].mxu0
    %10848 = vmatprep.mubr.bf16.mxu0 %v10398
    %10849 = vmatmul.mubr.bf16.gmra.mrb[0].mxu0 %v10397
    %v10850 = vpop.f32.mrb[0].mxu0
    %v10851 = vadd.f32 %v10566, %v10850
    %v10852 = vpop.f32.mrb[0].mxu0
    %v10853 = vpop.f32.mrb[0].mxu0
    %v10854 = vadd.f32 %v10566, %v10853
    %v10855 = vpop.f32.mrb[0].mxu0
    %10856 = vmatprep.mubr.bf16.mxu0 %v10402
    %10857 = vmatmul.mubr.bf16.gmra.mrb[0].mxu0 %v10401
    %v10858 = vpop.f32.mrb[0].mxu0
    %v10859 = vadd.f32 %v10566, %v10858
    %v10860 = vpop.f32.mrb[0].mxu0
    %v10861 = vpop.f32.mrb[0].mxu0
    %v10862 = vadd.f32 %v10566, %v10861
    %v10863 = vpop.f32.mrb[0].mxu0
    %10864 = vmatprep.mubr.bf16.mxu0 %v10406
    %10865 = vmatmul.mubr.bf16.gmra.mrb[0].mxu0 %v10405
    %v10866 = vpop.f32.mrb[0].mxu0
    %v10867 = vadd.f32 %v10566, %v10866
    %v10868 = vpop.f32.mrb[0].mxu0
    %v10869 = vpop.f32.mrb[0].mxu0
    %v10870 = vadd.f32 %v10566, %v10869
    %v10871 = vpop.f32.mrb[0].mxu0
    %10872 = vmatprep.mubr.bf16.mxu0 %v10410
    %10873 = vmatmul.mubr.bf16.gmra.mrb[0].mxu0 %v10409
    %v10874 = vpop.f32.mrb[0].mxu0
    %v10875 = vadd.f32 %v10566, %v10874
    %v10876 = vpop.f32.mrb[0].mxu0
    %v10877 = vpop.f32.mrb[0].mxu0
    %v10878 = vadd.f32 %v10566, %v10877
    %v10879 = vpop.f32.mrb[0].mxu0
    %10880 = vmatprep.mubr.bf16.mxu0 %v10414
    %10881 = vmatmul.mubr.bf16.gmra.mrb[0].mxu0 %v10413
    %v10882 = vpop.f32.mrb[0].mxu0
    %v10883 = vadd.f32 %v10566, %v10882
    %v10884 = vpop.f32.mrb[0].mxu0
    %v10885 = vpop.f32.mrb[0].mxu0
    %v10886 = vadd.f32 %v10566, %v10885
    %v10887 = vpop.f32.mrb[0].mxu0
    %10888 = vmatprep.mubr.bf16.mxu0 %v10418
    %10889 = vmatmul.mubr.bf16.gmra.mrb[0].mxu0 %v10417
    %v10890 = vpop.f32.mrb[0].mxu0
    %v10891 = vadd.f32 %v10566, %v10890
    %v10892 = vpop.f32.mrb[0].mxu0
    %v10893 = vpop.f32.mrb[0].mxu0
    %v10894 = vadd.f32 %v10566, %v10893
    %v10895 = vpop.f32.mrb[0].mxu0
    %10896 = vmatprep.mubr.bf16.mxu0 %v10422
    %10897 = vmatmul.mubr.bf16.gmra.mrb[0].mxu0 %v10421
    %v10898 = vpop.f32.mrb[0].mxu0
    %v10899 = vadd.f32 %v10566, %v10898
    %v10900 = vpop.f32.mrb[0].mxu0
    %v10901 = vpop.f32.mrb[0].mxu0
    %v10902 = vadd.f32 %v10566, %v10901
    %v10903 = vpop.f32.mrb[0].mxu0
    %10904 = vmatprep.mubr.bf16.mxu0 %v10426
    %10905 = vmatmul.mubr.bf16.gmra.mrb[0].mxu0 %v10425
    %v10906 = vpop.f32.mrb[0].mxu0
    %v10907 = vadd.f32 %v10566, %v10906
    %v10908 = vpop.f32.mrb[0].mxu0
    %v10909 = vpop.f32.mrb[0].mxu0
    %v10910 = vadd.f32 %v10566, %v10909
    %v10911 = vpop.f32.mrb[0].mxu0
    %10912 = vmatprep.mubr.bf16.mxu0 %v10430
    %10913 = vmatmul.mubr.bf16.gmra.mrb[0].mxu0 %v10429
    %v10914 = vpop.f32.mrb[0].mxu0
    %v10915 = vadd.f32 %v10566, %v10914
    %v10916 = vpop.f32.mrb[0].mxu0
    %v10917 = vpop.f32.mrb[0].mxu0
    %v10918 = vadd.f32 %v10566, %v10917
    %v10919 = vpop.f32.mrb[0].mxu0
    %10920 = vmatprep.mubr.bf16.mxu0 %v10434
    %10921 = vmatmul.mubr.bf16.gmra.mrb[0].mxu0 %v10433
    %v10922 = vpop.f32.mrb[0].mxu0
    %v10923 = vadd.f32 %v10566, %v10922
    %v10924 = vpop.f32.mrb[0].mxu0
    %v10925 = vpop.f32.mrb[0].mxu0
    %v10926 = vadd.f32 %v10566, %v10925
    %v10927 = vpop.f32.mrb[0].mxu0
    %10928 = vmatprep.mubr.bf16.mxu0 %v10438
    %10929 = vmatmul.mubr.bf16.gmra.mrb[0].mxu0 %v10437
    %v10930 = vpop.f32.mrb[0].mxu0
    %v10931 = vadd.f32 %v10566, %v10930
    %v10932 = vpop.f32.mrb[0].mxu0
    %v10933 = vpop.f32.mrb[0].mxu0
    %v10934 = vadd.f32 %v10566, %v10933
    %v10935 = vpop.f32.mrb[0].mxu0
    %10936 = vmatprep.mubr.bf16.mxu0 %v10442
    %10937 = vmatmul.mubr.bf16.gmra.mrb[0].mxu0 %v10441
    %v10938 = vpop.f32.mrb[0].mxu0
    %v10939 = vadd.f32 %v10566, %v10938
    %v10940 = vpop.f32.mrb[0].mxu0
    %v10941 = vpop.f32.mrb[0].mxu0
    %v10942 = vadd.f32 %v10566, %v10941
    %v10943 = vpop.f32.mrb[0].mxu0
    %10944 = vmatprep.mubr.bf16.mxu0 %v10446
    %10945 = vmatmul.mubr.bf16.gmra.mrb[0].mxu0 %v10445
    %v10946 = vpop.f32.mrb[0].mxu0
    %v10947 = vadd.f32 %v10566, %v10946
    %v10948 = vpop.f32.mrb[0].mxu0
    %v10949 = vpop.f32.mrb[0].mxu0
    %v10950 = vadd.f32 %v10566, %v10949
    %v10951 = vpop.f32.mrb[0].mxu0
    %10952 = vmatprep.mubr.bf16.mxu0 %v10450
    %10953 = vmatmul.mubr.bf16.gmra.mrb[0].mxu0 %v10449
    %v10954 = vpop.f32.mrb[0].mxu0
    %v10955 = vadd.f32 %v10566, %v10954
    %v10956 = vpop.f32.mrb[0].mxu0
    %v10957 = vpop.f32.mrb[0].mxu0
    %v10958 = vadd.f32 %v10566, %v10957
    %v10959 = vpop.f32.mrb[0].mxu0
    %10960 = vmatprep.mubr.bf16.mxu0 %v10454
    %10961 = vmatmul.mubr.bf16.gmra.mrb[0].mxu0 %v10453
    %v10962 = vpop.f32.mrb[0].mxu0
    %v10963 = vadd.f32 %v10566, %v10962
    %v10964 = vpop.f32.mrb[0].mxu0
    %v10965 = vpop.f32.mrb[0].mxu0
    %v10966 = vadd.f32 %v10566, %v10965
    %v10967 = vpop.f32.mrb[0].mxu0
    %10968 = vmatprep.mubr.bf16.mxu0 %v10458
    %10969 = vmatmul.mubr.bf16.gmra.mrb[0].mxu0 %v10457
    %v10970 = vpop.f32.mrb[0].mxu0
    %v10971 = vadd.f32 %v10566, %v10970
    %v10972 = vpop.f32.mrb[0].mxu0
    %v10973 = vpop.f32.mrb[0].mxu0
    %v10974 = vadd.f32 %v10566, %v10973
    %v10975 = vpop.f32.mrb[0].mxu0
    %10976 = vmatprep.mubr.bf16.mxu0 %v10462
    %10977 = vmatmul.mubr.bf16.gmra.mrb[0].mxu0 %v10461
    %v10978 = vpop.f32.mrb[0].mxu0
    %v10979 = vadd.f32 %v10566, %v10978
    %v10980 = vpop.f32.mrb[0].mxu0
    %v10981 = vpop.f32.mrb[0].mxu0
    %v10982 = vadd.f32 %v10566, %v10981
    %v10983 = vpop.f32.mrb[0].mxu0
    %10984 = vmatprep.mubr.bf16.mxu0 %v10466
    %10985 = vmatmul.mubr.bf16.gmra.mrb[0].mxu0 %v10465
    %v10986 = vpop.f32.mrb[0].mxu0
    %v10987 = vadd.f32 %v10566, %v10986
    %v10988 = vpop.f32.mrb[0].mxu0
    %v10989 = vpop.f32.mrb[0].mxu0
    %v10990 = vadd.f32 %v10566, %v10989
    %v10991 = vpop.f32.mrb[0].mxu0
    %10992 = vmatprep.mubr.bf16.mxu0 %v10470
    %10993 = vmatmul.mubr.bf16.gmra.mrb[0].mxu0 %v10469
    %v10994 = vpop.f32.mrb[0].mxu0
    %v10995 = vadd.f32 %v10566, %v10994
    %v10996 = vpop.f32.mrb[0].mxu0
    %v10997 = vpop.f32.mrb[0].mxu0
    %v10998 = vadd.f32 %v10566, %v10997
    %v10999 = vpop.f32.mrb[0].mxu0
    %11000 = vmatprep.mubr.bf16.mxu0 %v10474
    %11001 = vmatmul.mubr.bf16.gmra.mrb[0].mxu0 %v10473
    %v11002 = vpop.f32.mrb[0].mxu0
    %v11003 = vadd.f32 %v10566, %v11002
    %v11004 = vpop.f32.mrb[0].mxu0
    %v11005 = vpop.f32.mrb[0].mxu0
    %v11006 = vadd.f32 %v10566, %v11005
    %v11007 = vpop.f32.mrb[0].mxu0
    %11008 = vmatprep.mubr.bf16.mxu0 %v10478
    %11009 = vmatmul.mubr.bf16.gmra.mrb[0].mxu0 %v10477
    %v11010 = vpop.f32.mrb[0].mxu0
    %v11011 = vadd.f32 %v10566, %v11010
    %v11012 = vpop.f32.mrb[0].mxu0
    %v11013 = vpop.f32.mrb[0].mxu0
    %v11014 = vadd.f32 %v10566, %v11013
    %v11015 = vpop.f32.mrb[0].mxu0
    %11016 = vmatprep.mubr.bf16.mxu0 %v10482
    %11017 = vmatmul.mubr.bf16.gmra.mrb[0].mxu0 %v10481
    %v11018 = vpop.f32.mrb[0].mxu0
    %v11019 = vadd.f32 %v10566, %v11018
    %v11020 = vpop.f32.mrb[0].mxu0
    %v11021 = vpop.f32.mrb[0].mxu0
    %v11022 = vadd.f32 %v10566, %v11021
    %v11023 = vpop.f32.mrb[0].mxu0
    %11024 = vmatprep.mubr.bf16.mxu0 %v10486
    %11025 = vmatmul.mubr.bf16.gmra.mrb[0].mxu0 %v10485
    %v11026 = vpop.f32.mrb[0].mxu0
    %v11027 = vadd.f32 %v10566, %v11026
    %v11028 = vpop.f32.mrb[0].mxu0
    %v11029 = vpop.f32.mrb[0].mxu0
    %v11030 = vadd.f32 %v10566, %v11029
    %v11031 = vpop.f32.mrb[0].mxu0
    %11032 = vmatprep.mubr.bf16.mxu0 %v10490
    %11033 = vmatmul.mubr.bf16.gmra.mrb[0].mxu0 %v10489
    %v11034 = vpop.f32.mrb[0].mxu0
    %v11035 = vadd.f32 %v10566, %v11034
    %v11036 = vpop.f32.mrb[0].mxu0
    %v11037 = vpop.f32.mrb[0].mxu0
    %v11038 = vadd.f32 %v10566, %v11037
    %v11039 = vpop.f32.mrb[0].mxu0
    %11040 = vmatprep.mubr.bf16.mxu0 %v10494
    %11041 = vmatmul.mubr.bf16.gmra.mrb[0].mxu0 %v10493
    %v11042 = vpop.f32.mrb[0].mxu0
    %v11043 = vadd.f32 %v10566, %v11042
    %v11044 = vpop.f32.mrb[0].mxu0
    %v11045 = vpop.f32.mrb[0].mxu0
    %v11046 = vadd.f32 %v10566, %v11045
    %v11047 = vpop.f32.mrb[0].mxu0
    %11048 = vdwg.mxu0
    %11049 = vmatprep.subr.bf16.mxu0 0
    %11050 = vmatpush1.bf16.msra.mxu0 %v10712
    %11051 = vmatprep.subr.bf16.mxu0 0
    %11052 = vmatpush1.bf16.msra.mxu0 %v10713
    %11053 = vmatprep.subr.bf16.mxu0 0
    %11054 = vmatpush1.bf16.msra.mxu0 %v10714
    %11055 = vmatprep.subr.bf16.mxu0 0
    %11056 = vmatpush1.bf16.msra.mxu0 %v10715
    %11057 = vmatprep.subr.bf16.mxu0 0
    %11058 = vmatpush1.bf16.msra.mxu0 %v10716
    %11059 = vmatprep.subr.bf16.mxu0 0
    %11060 = vmatpush1.bf16.msra.mxu0 %v10717
    %11061 = vmatprep.subr.bf16.mxu0 0
    %11062 = vmatpush1.bf16.msra.mxu0 %v10718
    %11063 = vmatprep.subr.bf16.mxu0 0
    %11064 = vmatpush1.bf16.msra.mxu0 %v10719
    %11065 = vmatprep.subr.bf16.mxu0 0
    %11066 = vmatpush1.bf16.msra.mxu0 %v10720
    %11067 = vmatprep.subr.bf16.mxu0 0
    %11068 = vmatpush1.bf16.msra.mxu0 %v10721
    %11069 = vmatprep.subr.bf16.mxu0 0
    %11070 = vmatpush1.bf16.msra.mxu0 %v10722
    %11071 = vmatprep.subr.bf16.mxu0 0
    %11072 = vmatpush1.bf16.msra.mxu0 %v10723
    %11073 = vmatprep.subr.bf16.mxu0 0
    %11074 = vmatpush1.bf16.msra.mxu0 %v10724
    %11075 = vmatprep.subr.bf16.mxu0 0
    %11076 = vmatpush1.bf16.msra.mxu0 %v10725
    %11077 = vmatprep.subr.bf16.mxu0 0
    %11078 = vmatpush1.bf16.msra.mxu0 %v10726
    %11079 = vmatprep.subr.bf16.mxu0 0
    %11080 = vmatpush1.bf16.msra.mxu0 %v10727
    %11081 = vmatprep.mubr.bf16.mxu0 %v10372
    %11082 = vmatmul.mubr.bf16.gmra.mrb[0].mxu0 %v10371
    %v11083 = vpop.f32.mrb[0].mxu0
    %v11084 = vadd.f32 %v10795, %v11083
    %v11085 = vpop.f32.mrb[0].mxu0
    %v11086 = vpop.f32.mrb[0].mxu0
    %v11087 = vadd.f32 %v10798, %v11086
    %v11088 = vpop.f32.mrb[0].mxu0
    %11089 = vmatprep.mubr.bf16.mxu0 %v10376
    %11090 = vmatmul.mubr.bf16.gmra.mrb[0].mxu0 %v10375
    %v11091 = vpop.f32.mrb[0].mxu0
    %v11092 = vadd.f32 %v10803, %v11091
    %v11093 = vpop.f32.mrb[0].mxu0
    %v11094 = vpop.f32.mrb[0].mxu0
    %v11095 = vadd.f32 %v10806, %v11094
    %v11096 = vpop.f32.mrb[0].mxu0
    %11097 = vmatprep.mubr.bf16.mxu0 %v10380
    %11098 = vmatmul.mubr.bf16.gmra.mrb[0].mxu0 %v10379
    %v11099 = vpop.f32.mrb[0].mxu0
    %v11100 = vadd.f32 %v10811, %v11099
    %v11101 = vpop.f32.mrb[0].mxu0
    %v11102 = vpop.f32.mrb[0].mxu0
    %v11103 = vadd.f32 %v10814, %v11102
    %v11104 = vpop.f32.mrb[0].mxu0
    %11105 = vmatprep.mubr.bf16.mxu0 %v10384
    %11106 = vmatmul.mubr.bf16.gmra.mrb[0].mxu0 %v10383
    %v11107 = vpop.f32.mrb[0].mxu0
    %v11108 = vadd.f32 %v10819, %v11107
    %v11109 = vpop.f32.mrb[0].mxu0
    %v11110 = vpop.f32.mrb[0].mxu0
    %v11111 = vadd.f32 %v10822, %v11110
    %v11112 = vpop.f32.mrb[0].mxu0
    %11113 = vmatprep.mubr.bf16.mxu0 %v10388
    %11114 = vmatmul.mubr.bf16.gmra.mrb[0].mxu0 %v10387
    %v11115 = vpop.f32.mrb[0].mxu0
    %v11116 = vadd.f32 %v10827, %v11115
    %v11117 = vpop.f32.mrb[0].mxu0
    %v11118 = vpop.f32.mrb[0].mxu0
    %v11119 = vadd.f32 %v10830, %v11118
    %v11120 = vpop.f32.mrb[0].mxu0
    %11121 = vmatprep.mubr.bf16.mxu0 %v10392
    %11122 = vmatmul.mubr.bf16.gmra.mrb[0].mxu0 %v10391
    %v11123 = vpop.f32.mrb[0].mxu0
    %v11124 = vadd.f32 %v10835, %v11123
    %v11125 = vpop.f32.mrb[0].mxu0
    %v11126 = vpop.f32.mrb[0].mxu0
    %v11127 = vadd.f32 %v10838, %v11126
    %v11128 = vpop.f32.mrb[0].mxu0
    %11129 = vmatprep.mubr.bf16.mxu0 %v10396
    %11130 = vmatmul.mubr.bf16.gmra.mrb[0].mxu0 %v10395
    %v11131 = vpop.f32.mrb[0].mxu0
    %v11132 = vadd.f32 %v10843, %v11131
    %v11133 = vpop.f32.mrb[0].mxu0
    %v11134 = vpop.f32.mrb[0].mxu0
    %v11135 = vadd.f32 %v10846, %v11134
    %v11136 = vpop.f32.mrb[0].mxu0
    %11137 = vmatprep.mubr.bf16.mxu0 %v10400
    %11138 = vmatmul.mubr.bf16.gmra.mrb[0].mxu0 %v10399
    %v11139 = vpop.f32.mrb[0].mxu0
    %v11140 = vadd.f32 %v10851, %v11139
    %v11141 = vpop.f32.mrb[0].mxu0
    %v11142 = vpop.f32.mrb[0].mxu0
    %v11143 = vadd.f32 %v10854, %v11142
    %v11144 = vpop.f32.mrb[0].mxu0
    %11145 = vmatprep.mubr.bf16.mxu0 %v10404
    %11146 = vmatmul.mubr.bf16.gmra.mrb[0].mxu0 %v10403
    %v11147 = vpop.f32.mrb[0].mxu0
    %v11148 = vadd.f32 %v10859, %v11147
    %v11149 = vpop.f32.mrb[0].mxu0
    %v11150 = vpop.f32.mrb[0].mxu0
    %v11151 = vadd.f32 %v10862, %v11150
    %v11152 = vpop.f32.mrb[0].mxu0
    %11153 = vmatprep.mubr.bf16.mxu0 %v10408
    %11154 = vmatmul.mubr.bf16.gmra.mrb[0].mxu0 %v10407
    %v11155 = vpop.f32.mrb[0].mxu0
    %v11156 = vadd.f32 %v10867, %v11155
    %v11157 = vpop.f32.mrb[0].mxu0
    %v11158 = vpop.f32.mrb[0].mxu0
    %v11159 = vadd.f32 %v10870, %v11158
    %v11160 = vpop.f32.mrb[0].mxu0
    %11161 = vmatprep.mubr.bf16.mxu0 %v10412
    %11162 = vmatmul.mubr.bf16.gmra.mrb[0].mxu0 %v10411
    %v11163 = vpop.f32.mrb[0].mxu0
    %v11164 = vadd.f32 %v10875, %v11163
    %v11165 = vpop.f32.mrb[0].mxu0
    %v11166 = vpop.f32.mrb[0].mxu0
    %v11167 = vadd.f32 %v10878, %v11166
    %v11168 = vpop.f32.mrb[0].mxu0
    %11169 = vmatprep.mubr.bf16.mxu0 %v10416
    %11170 = vmatmul.mubr.bf16.gmra.mrb[0].mxu0 %v10415
    %v11171 = vpop.f32.mrb[0].mxu0
    %v11172 = vadd.f32 %v10883, %v11171
    %v11173 = vpop.f32.mrb[0].mxu0
    %v11174 = vpop.f32.mrb[0].mxu0
    %v11175 = vadd.f32 %v10886, %v11174
    %v11176 = vpop.f32.mrb[0].mxu0
    %11177 = vmatprep.mubr.bf16.mxu0 %v10420
    %11178 = vmatmul.mubr.bf16.gmra.mrb[0].mxu0 %v10419
    %v11179 = vpop.f32.mrb[0].mxu0
    %v11180 = vadd.f32 %v10891, %v11179
    %v11181 = vpop.f32.mrb[0].mxu0
    %v11182 = vpop.f32.mrb[0].mxu0
    %v11183 = vadd.f32 %v10894, %v11182
    %v11184 = vpop.f32.mrb[0].mxu0
    %11185 = vmatprep.mubr.bf16.mxu0 %v10424
    %11186 = vmatmul.mubr.bf16.gmra.mrb[0].mxu0 %v10423
    %v11187 = vpop.f32.mrb[0].mxu0
    %v11188 = vadd.f32 %v10899, %v11187
    %v11189 = vpop.f32.mrb[0].mxu0
    %v11190 = vpop.f32.mrb[0].mxu0
    %v11191 = vadd.f32 %v10902, %v11190
    %v11192 = vpop.f32.mrb[0].mxu0
    %11193 = vmatprep.mubr.bf16.mxu0 %v10428
    %11194 = vmatmul.mubr.bf16.gmra.mrb[0].mxu0 %v10427
    %v11195 = vpop.f32.mrb[0].mxu0
    %v11196 = vadd.f32 %v10907, %v11195
    %v11197 = vpop.f32.mrb[0].mxu0
    %v11198 = vpop.f32.mrb[0].mxu0
    %v11199 = vadd.f32 %v10910, %v11198
    %v11200 = vpop.f32.mrb[0].mxu0
    %11201 = vmatprep.mubr.bf16.mxu0 %v10432
    %11202 = vmatmul.mubr.bf16.gmra.mrb[0].mxu0 %v10431
    %v11203 = vpop.f32.mrb[0].mxu0
    %v11204 = vadd.f32 %v10915, %v11203
    %v11205 = vpop.f32.mrb[0].mxu0
    %v11206 = vpop.f32.mrb[0].mxu0
    %v11207 = vadd.f32 %v10918, %v11206
    %v11208 = vpop.f32.mrb[0].mxu0
    %11209 = vmatprep.mubr.bf16.mxu0 %v10436
    %11210 = vmatmul.mubr.bf16.gmra.mrb[0].mxu0 %v10435
    %v11211 = vpop.f32.mrb[0].mxu0
    %v11212 = vadd.f32 %v10923, %v11211
    %v11213 = vpop.f32.mrb[0].mxu0
    %v11214 = vpop.f32.mrb[0].mxu0
    %v11215 = vadd.f32 %v10926, %v11214
    %v11216 = vpop.f32.mrb[0].mxu0
    %11217 = vmatprep.mubr.bf16.mxu0 %v10440
    %11218 = vmatmul.mubr.bf16.gmra.mrb[0].mxu0 %v10439
    %v11219 = vpop.f32.mrb[0].mxu0
    %v11220 = vadd.f32 %v10931, %v11219
    %v11221 = vpop.f32.mrb[0].mxu0
    %v11222 = vpop.f32.mrb[0].mxu0
    %v11223 = vadd.f32 %v10934, %v11222
    %v11224 = vpop.f32.mrb[0].mxu0
    %11225 = vmatprep.mubr.bf16.mxu0 %v10444
    %11226 = vmatmul.mubr.bf16.gmra.mrb[0].mxu0 %v10443
    %v11227 = vpop.f32.mrb[0].mxu0
    %v11228 = vadd.f32 %v10939, %v11227
    %v11229 = vpop.f32.mrb[0].mxu0
    %v11230 = vpop.f32.mrb[0].mxu0
    %v11231 = vadd.f32 %v10942, %v11230
    %v11232 = vpop.f32.mrb[0].mxu0
    %11233 = vmatprep.mubr.bf16.mxu0 %v10448
    %11234 = vmatmul.mubr.bf16.gmra.mrb[0].mxu0 %v10447
    %v11235 = vpop.f32.mrb[0].mxu0
    %v11236 = vadd.f32 %v10947, %v11235
    %v11237 = vpop.f32.mrb[0].mxu0
    %v11238 = vpop.f32.mrb[0].mxu0
    %v11239 = vadd.f32 %v10950, %v11238
    %v11240 = vpop.f32.mrb[0].mxu0
    %11241 = vmatprep.mubr.bf16.mxu0 %v10452
    %11242 = vmatmul.mubr.bf16.gmra.mrb[0].mxu0 %v10451
    %v11243 = vpop.f32.mrb[0].mxu0
    %v11244 = vadd.f32 %v10955, %v11243
    %v11245 = vpop.f32.mrb[0].mxu0
    %v11246 = vpop.f32.mrb[0].mxu0
    %v11247 = vadd.f32 %v10958, %v11246
    %v11248 = vpop.f32.mrb[0].mxu0
    %11249 = vmatprep.mubr.bf16.mxu0 %v10456
    %11250 = vmatmul.mubr.bf16.gmra.mrb[0].mxu0 %v10455
    %v11251 = vpop.f32.mrb[0].mxu0
    %v11252 = vadd.f32 %v10963, %v11251
    %v11253 = vpop.f32.mrb[0].mxu0
    %v11254 = vpop.f32.mrb[0].mxu0
    %v11255 = vadd.f32 %v10966, %v11254
    %v11256 = vpop.f32.mrb[0].mxu0
    %11257 = vmatprep.mubr.bf16.mxu0 %v10460
    %11258 = vmatmul.mubr.bf16.gmra.mrb[0].mxu0 %v10459
    %v11259 = vpop.f32.mrb[0].mxu0
    %v11260 = vadd.f32 %v10971, %v11259
    %v11261 = vpop.f32.mrb[0].mxu0
    %v11262 = vpop.f32.mrb[0].mxu0
    %v11263 = vadd.f32 %v10974, %v11262
    %v11264 = vpop.f32.mrb[0].mxu0
    %11265 = vmatprep.mubr.bf16.mxu0 %v10464
    %11266 = vmatmul.mubr.bf16.gmra.mrb[0].mxu0 %v10463
    %v11267 = vpop.f32.mrb[0].mxu0
    %v11268 = vadd.f32 %v10979, %v11267
    %v11269 = vpop.f32.mrb[0].mxu0
    %v11270 = vpop.f32.mrb[0].mxu0
    %v11271 = vadd.f32 %v10982, %v11270
    %v11272 = vpop.f32.mrb[0].mxu0
    %11273 = vmatprep.mubr.bf16.mxu0 %v10468
    %11274 = vmatmul.mubr.bf16.gmra.mrb[0].mxu0 %v10467
    %v11275 = vpop.f32.mrb[0].mxu0
    %v11276 = vadd.f32 %v10987, %v11275
    %v11277 = vpop.f32.mrb[0].mxu0
    %v11278 = vpop.f32.mrb[0].mxu0
    %v11279 = vadd.f32 %v10990, %v11278
    %v11280 = vpop.f32.mrb[0].mxu0
    %11281 = vmatprep.mubr.bf16.mxu0 %v10472
    %11282 = vmatmul.mubr.bf16.gmra.mrb[0].mxu0 %v10471
    %v11283 = vpop.f32.mrb[0].mxu0
    %v11284 = vadd.f32 %v10995, %v11283
    %v11285 = vpop.f32.mrb[0].mxu0
    %v11286 = vpop.f32.mrb[0].mxu0
    %v11287 = vadd.f32 %v10998, %v11286
    %v11288 = vpop.f32.mrb[0].mxu0
    %11289 = vmatprep.mubr.bf16.mxu0 %v10476
    %11290 = vmatmul.mubr.bf16.gmra.mrb[0].mxu0 %v10475
    %v11291 = vpop.f32.mrb[0].mxu0
    %v11292 = vadd.f32 %v11003, %v11291
    %v11293 = vpop.f32.mrb[0].mxu0
    %v11294 = vpop.f32.mrb[0].mxu0
    %v11295 = vadd.f32 %v11006, %v11294
    %v11296 = vpop.f32.mrb[0].mxu0
    %11297 = vmatprep.mubr.bf16.mxu0 %v10480
    %11298 = vmatmul.mubr.bf16.gmra.mrb[0].mxu0 %v10479
    %v11299 = vpop.f32.mrb[0].mxu0
    %v11300 = vadd.f32 %v11011, %v11299
    %v11301 = vpop.f32.mrb[0].mxu0
    %v11302 = vpop.f32.mrb[0].mxu0
    %v11303 = vadd.f32 %v11014, %v11302
    %v11304 = vpop.f32.mrb[0].mxu0
    %11305 = vmatprep.mubr.bf16.mxu0 %v10484
    %11306 = vmatmul.mubr.bf16.gmra.mrb[0].mxu0 %v10483
    %v11307 = vpop.f32.mrb[0].mxu0
    %v11308 = vadd.f32 %v11019, %v11307
    %v11309 = vpop.f32.mrb[0].mxu0
    %v11310 = vpop.f32.mrb[0].mxu0
    %v11311 = vadd.f32 %v11022, %v11310
    %v11312 = vpop.f32.mrb[0].mxu0
    %11313 = vmatprep.mubr.bf16.mxu0 %v10488
    %11314 = vmatmul.mubr.bf16.gmra.mrb[0].mxu0 %v10487
    %v11315 = vpop.f32.mrb[0].mxu0
    %v11316 = vadd.f32 %v11027, %v11315
    %v11317 = vpop.f32.mrb[0].mxu0
    %v11318 = vpop.f32.mrb[0].mxu0
    %v11319 = vadd.f32 %v11030, %v11318
    %v11320 = vpop.f32.mrb[0].mxu0
    %11321 = vmatprep.mubr.bf16.mxu0 %v10492
    %11322 = vmatmul.mubr.bf16.gmra.mrb[0].mxu0 %v10491
    %v11323 = vpop.f32.mrb[0].mxu0
    %v11324 = vadd.f32 %v11035, %v11323
    %v11325 = vpop.f32.mrb[0].mxu0
    %v11326 = vpop.f32.mrb[0].mxu0
    %v11327 = vadd.f32 %v11038, %v11326
    %v11328 = vpop.f32.mrb[0].mxu0
    %11329 = vmatprep.mubr.bf16.mxu0 %v10496
    %11330 = vmatmul.mubr.bf16.gmra.mrb[0].mxu0 %v10495
    %v11331 = vpop.f32.mrb[0].mxu0
    %v11332 = vadd.f32 %v11043, %v11331
    %v11333 = vpop.f32.mrb[0].mxu0
    %v11334 = vpop.f32.mrb[0].mxu0
    %v11335 = vadd.f32 %v11046, %v11334
    %v11336 = vpop.f32.mrb[0].mxu0
    %11337 = vdwg.mxu0
    %v11338 = vsub.f32 0.0, %v11084
    %v11339 = vsub.f32 0.0, %v11087
    %v11340 = vsub.f32 0.0, %v11092
    %v11341 = vsub.f32 0.0, %v11095
    %v11342 = vsub.f32 0.0, %v11100
    %v11343 = vsub.f32 0.0, %v11103
    %v11344 = vsub.f32 0.0, %v11108
    %v11345 = vsub.f32 0.0, %v11111
    %v11346 = vsub.f32 0.0, %v11116
    %v11347 = vsub.f32 0.0, %v11119
    %v11348 = vsub.f32 0.0, %v11124
    %v11349 = vsub.f32 0.0, %v11127
    %v11350 = vsub.f32 0.0, %v11132
    %v11351 = vsub.f32 0.0, %v11135
    %v11352 = vsub.f32 0.0, %v11140
    %v11353 = vsub.f32 0.0, %v11143
    %v11354 = vsub.f32 0.0, %v11148
    %v11355 = vsub.f32 0.0, %v11151
    %v11356 = vsub.f32 0.0, %v11156
    %v11357 = vsub.f32 0.0, %v11159
    %v11358 = vsub.f32 0.0, %v11164
    %v11359 = vsub.f32 0.0, %v11167
    %v11360 = vsub.f32 0.0, %v11172
    %v11361 = vsub.f32 0.0, %v11175
    %v11362 = vsub.f32 0.0, %v11180
    %v11363 = vsub.f32 0.0, %v11183
    %v11364 = vsub.f32 0.0, %v11188
    %v11365 = vsub.f32 0.0, %v11191
    %v11366 = vsub.f32 0.0, %v11196
    %v11367 = vsub.f32 0.0, %v11199
    %v11368 = vsub.f32 0.0, %v11204
    %v11369 = vsub.f32 0.0, %v11207
    %v11370 = vsub.f32 0.0, %v11212
    %v11371 = vsub.f32 0.0, %v11215
    %v11372 = vsub.f32 0.0, %v11220
    %v11373 = vsub.f32 0.0, %v11223
    %v11374 = vsub.f32 0.0, %v11228
    %v11375 = vsub.f32 0.0, %v11231
    %v11376 = vsub.f32 0.0, %v11236
    %v11377 = vsub.f32 0.0, %v11239
    %v11378 = vsub.f32 0.0, %v11244
    %v11379 = vsub.f32 0.0, %v11247
    %v11380 = vsub.f32 0.0, %v11252
    %v11381 = vsub.f32 0.0, %v11255
    %v11382 = vsub.f32 0.0, %v11260
    %v11383 = vsub.f32 0.0, %v11263
    %v11384 = vsub.f32 0.0, %v11268
    %v11385 = vsub.f32 0.0, %v11271
    %v11386 = vsub.f32 0.0, %v11276
    %v11387 = vsub.f32 0.0, %v11279
    %v11388 = vsub.f32 0.0, %v11284
    %v11389 = vsub.f32 0.0, %v11287
    %v11390 = vsub.f32 0.0, %v11292
    %v11391 = vsub.f32 0.0, %v11295
    %v11392 = vsub.f32 0.0, %v11300
    %v11393 = vsub.f32 0.0, %v11303
    %v11394 = vsub.f32 0.0, %v11308
    %v11395 = vsub.f32 0.0, %v11311
    %v11396 = vsub.f32 0.0, %v11316
    %v11397 = vsub.f32 0.0, %v11319
    %v11398 = vsub.f32 0.0, %v11324
    %v11399 = vsub.f32 0.0, %v11327
    %v11400 = vsub.f32 0.0, %v11332
    %v11401 = vsub.f32 0.0, %v11335
    %v11402 = vmul.f32 %v11338, 1.442695
    %v11403 = vpow.pop %v11402
    %v11404 = vmul.f32 %v11339, 1.442695
    %v11405 = vpow.pop %v11404
    %v11406 = vmul.f32 %v11340, 1.442695
    %v11407 = vpow.pop %v11406
    %v11408 = vmul.f32 %v11341, 1.442695
    %v11409 = vpow.pop %v11408
    %v11410 = vmul.f32 %v11342, 1.442695
    %v11411 = vpow.pop %v11410
    %v11412 = vmul.f32 %v11343, 1.442695
    %v11413 = vpow.pop %v11412
    %v11414 = vmul.f32 %v11344, 1.442695
    %v11415 = vpow.pop %v11414
    %v11416 = vmul.f32 %v11345, 1.442695
    %v11417 = vpow.pop %v11416
    %v11418 = vmul.f32 %v11346, 1.442695
    %v11419 = vpow.pop %v11418
    %v11420 = vmul.f32 %v11347, 1.442695
    %v11421 = vpow.pop %v11420
    %v11422 = vmul.f32 %v11348, 1.442695
    %v11423 = vpow.pop %v11422
    %v11424 = vmul.f32 %v11349, 1.442695
    %v11425 = vpow.pop %v11424
    %v11426 = vmul.f32 %v11350, 1.442695
    %v11427 = vpow.pop %v11426
    %v11428 = vmul.f32 %v11351, 1.442695
    %v11429 = vpow.pop %v11428
    %v11430 = vmul.f32 %v11352, 1.442695
    %v11431 = vpow.pop %v11430
    %v11432 = vmul.f32 %v11353, 1.442695
    %v11433 = vpow.pop %v11432
    %v11434 = vmul.f32 %v11354, 1.442695
    %v11435 = vpow.pop %v11434
    %v11436 = vmul.f32 %v11355, 1.442695
    %v11437 = vpow.pop %v11436
    %v11438 = vmul.f32 %v11356, 1.442695
    %v11439 = vpow.pop %v11438
    %v11440 = vmul.f32 %v11357, 1.442695
    %v11441 = vpow.pop %v11440
    %v11442 = vmul.f32 %v11358, 1.442695
    %v11443 = vpow.pop %v11442
    %v11444 = vmul.f32 %v11359, 1.442695
    %v11445 = vpow.pop %v11444
    %v11446 = vmul.f32 %v11360, 1.442695
    %v11447 = vpow.pop %v11446
    %v11448 = vmul.f32 %v11361, 1.442695
    %v11449 = vpow.pop %v11448
    %v11450 = vmul.f32 %v11362, 1.442695
    %v11451 = vpow.pop %v11450
    %v11452 = vmul.f32 %v11363, 1.442695
    %v11453 = vpow.pop %v11452
    %v11454 = vmul.f32 %v11364, 1.442695
    %v11455 = vpow.pop %v11454
    %v11456 = vmul.f32 %v11365, 1.442695
    %v11457 = vpow.pop %v11456
    %v11458 = vmul.f32 %v11366, 1.442695
    %v11459 = vpow.pop %v11458
    %v11460 = vmul.f32 %v11367, 1.442695
    %v11461 = vpow.pop %v11460
    %v11462 = vmul.f32 %v11368, 1.442695
    %v11463 = vpow.pop %v11462
    %v11464 = vmul.f32 %v11369, 1.442695
    %v11465 = vpow.pop %v11464
    %v11466 = vmul.f32 %v11370, 1.442695
    %v11467 = vpow.pop %v11466
    %v11468 = vmul.f32 %v11371, 1.442695
    %v11469 = vpow.pop %v11468
    %v11470 = vmul.f32 %v11372, 1.442695
    %v11471 = vpow.pop %v11470
    %v11472 = vmul.f32 %v11373, 1.442695
    %v11473 = vpow.pop %v11472
    %v11474 = vmul.f32 %v11374, 1.442695
    %v11475 = vpow.pop %v11474
    %v11476 = vmul.f32 %v11375, 1.442695
    %v11477 = vpow.pop %v11476
    %v11478 = vmul.f32 %v11376, 1.442695
    %v11479 = vpow.pop %v11478
    %v11480 = vmul.f32 %v11377, 1.442695
    %v11481 = vpow.pop %v11480
    %v11482 = vmul.f32 %v11378, 1.442695
    %v11483 = vpow.pop %v11482
    %v11484 = vmul.f32 %v11379, 1.442695
    %v11485 = vpow.pop %v11484
    %v11486 = vmul.f32 %v11380, 1.442695
    %v11487 = vpow.pop %v11486
    %v11488 = vmul.f32 %v11381, 1.442695
    %v11489 = vpow.pop %v11488
    %v11490 = vmul.f32 %v11382, 1.442695
    %v11491 = vpow.pop %v11490
    %v11492 = vmul.f32 %v11383, 1.442695
    %v11493 = vpow.pop %v11492
    %v11494 = vmul.f32 %v11384, 1.442695
    %v11495 = vpow.pop %v11494
    %v11496 = vmul.f32 %v11385, 1.442695
    %v11497 = vpow.pop %v11496
    %v11498 = vmul.f32 %v11386, 1.442695
    %v11499 = vpow.pop %v11498
    %v11500 = vmul.f32 %v11387, 1.442695
    %v11501 = vpow.pop %v11500
    %v11502 = vmul.f32 %v11388, 1.442695
    %v11503 = vpow.pop %v11502
    %v11504 = vmul.f32 %v11389, 1.442695
    %v11505 = vpow.pop %v11504
    %v11506 = vmul.f32 %v11390, 1.442695
    %v11507 = vpow.pop %v11506
    %v11508 = vmul.f32 %v11391, 1.442695
    %v11509 = vpow.pop %v11508
    %v11510 = vmul.f32 %v11392, 1.442695
    %v11511 = vpow.pop %v11510
    %v11512 = vmul.f32 %v11393, 1.442695
    %v11513 = vpow.pop %v11512
    %v11514 = vmul.f32 %v11394, 1.442695
    %v11515 = vpow.pop %v11514
    %v11516 = vmul.f32 %v11395, 1.442695
    %v11517 = vpow.pop %v11516
    %v11518 = vmul.f32 %v11396, 1.442695
    %v11519 = vpow.pop %v11518
    %v11520 = vmul.f32 %v11397, 1.442695
    %v11521 = vpow.pop %v11520
    %v11522 = vmul.f32 %v11398, 1.442695
    %v11523 = vpow.pop %v11522
    %v11524 = vmul.f32 %v11399, 1.442695
    %v11525 = vpow.pop %v11524
    %v11526 = vmul.f32 %v11400, 1.442695
    %v11527 = vpow.pop %v11526
    %v11528 = vmul.f32 %v11401, 1.442695
    %v11529 = vpow.pop %v11528
    %v11530 = vadd.f32 %v11403, 1.0
    %v11531 = vadd.f32 %v11405, 1.0
    %v11532 = vadd.f32 %v11407, 1.0
    %v11533 = vadd.f32 %v11409, 1.0
    %v11534 = vadd.f32 %v11411, 1.0
    %v11535 = vadd.f32 %v11413, 1.0
    %v11536 = vadd.f32 %v11415, 1.0
    %v11537 = vadd.f32 %v11417, 1.0
    %v11538 = vadd.f32 %v11419, 1.0
    %v11539 = vadd.f32 %v11421, 1.0
    %v11540 = vadd.f32 %v11423, 1.0
    %v11541 = vadd.f32 %v11425, 1.0
    %v11542 = vadd.f32 %v11427, 1.0
    %v11543 = vadd.f32 %v11429, 1.0
    %v11544 = vadd.f32 %v11431, 1.0
    %v11545 = vadd.f32 %v11433, 1.0
    %v11546 = vadd.f32 %v11435, 1.0
    %v11547 = vadd.f32 %v11437, 1.0
    %v11548 = vadd.f32 %v11439, 1.0
    %v11549 = vadd.f32 %v11441, 1.0
    %v11550 = vadd.f32 %v11443, 1.0
    %v11551 = vadd.f32 %v11445, 1.0
    %v11552 = vadd.f32 %v11447, 1.0
    %v11553 = vadd.f32 %v11449, 1.0
    %v11554 = vadd.f32 %v11451, 1.0
    %v11555 = vadd.f32 %v11453, 1.0
    %v11556 = vadd.f32 %v11455, 1.0
    %v11557 = vadd.f32 %v11457, 1.0
    %v11558 = vadd.f32 %v11459, 1.0
    %v11559 = vadd.f32 %v11461, 1.0
    %v11560 = vadd.f32 %v11463, 1.0
    %v11561 = vadd.f32 %v11465, 1.0
    %v11562 = vadd.f32 %v11467, 1.0
    %v11563 = vadd.f32 %v11469, 1.0
    %v11564 = vadd.f32 %v11471, 1.0
    %v11565 = vadd.f32 %v11473, 1.0
    %v11566 = vadd.f32 %v11475, 1.0
    %v11567 = vadd.f32 %v11477, 1.0
    %v11568 = vadd.f32 %v11479, 1.0
    %v11569 = vadd.f32 %v11481, 1.0
    %v11570 = vadd.f32 %v11483, 1.0
    %v11571 = vadd.f32 %v11485, 1.0
    %v11572 = vadd.f32 %v11487, 1.0
    %v11573 = vadd.f32 %v11489, 1.0
    %v11574 = vadd.f32 %v11491, 1.0
    %v11575 = vadd.f32 %v11493, 1.0
    %v11576 = vadd.f32 %v11495, 1.0
    %v11577 = vadd.f32 %v11497, 1.0
    %v11578 = vadd.f32 %v11499, 1.0
    %v11579 = vadd.f32 %v11501, 1.0
    %v11580 = vadd.f32 %v11503, 1.0
    %v11581 = vadd.f32 %v11505, 1.0
    %v11582 = vadd.f32 %v11507, 1.0
    %v11583 = vadd.f32 %v11509, 1.0
    %v11584 = vadd.f32 %v11511, 1.0
    %v11585 = vadd.f32 %v11513, 1.0
    %v11586 = vadd.f32 %v11515, 1.0
    %v11587 = vadd.f32 %v11517, 1.0
    %v11588 = vadd.f32 %v11519, 1.0
    %v11589 = vadd.f32 %v11521, 1.0
    %v11590 = vadd.f32 %v11523, 1.0
    %v11591 = vadd.f32 %v11525, 1.0
    %v11592 = vadd.f32 %v11527, 1.0
    %v11593 = vadd.f32 %v11529, 1.0
    %v11594 = vrcp.pop %v11530
    %v11595 = vmul.f32 1.0, %v11594
    %v11596 = vrcp.pop %v11531
    %v11597 = vmul.f32 1.0, %v11596
    %v11598 = vrcp.pop %v11532
    %v11599 = vmul.f32 1.0, %v11598
    %v11600 = vrcp.pop %v11533
    %v11601 = vmul.f32 1.0, %v11600
    %v11602 = vrcp.pop %v11534
    %v11603 = vmul.f32 1.0, %v11602
    %v11604 = vrcp.pop %v11535
    %v11605 = vmul.f32 1.0, %v11604
    %v11606 = vrcp.pop %v11536
    %v11607 = vmul.f32 1.0, %v11606
    %v11608 = vrcp.pop %v11537
    %v11609 = vmul.f32 1.0, %v11608
    %v11610 = vrcp.pop %v11538
    %v11611 = vmul.f32 1.0, %v11610
    %v11612 = vrcp.pop %v11539
    %v11613 = vmul.f32 1.0, %v11612
    %v11614 = vrcp.pop %v11540
    %v11615 = vmul.f32 1.0, %v11614
    %v11616 = vrcp.pop %v11541
    %v11617 = vmul.f32 1.0, %v11616
    %v11618 = vrcp.pop %v11542
    %v11619 = vmul.f32 1.0, %v11618
    %v11620 = vrcp.pop %v11543
    %v11621 = vmul.f32 1.0, %v11620
    %v11622 = vrcp.pop %v11544
    %v11623 = vmul.f32 1.0, %v11622
    %v11624 = vrcp.pop %v11545
    %v11625 = vmul.f32 1.0, %v11624
    %v11626 = vrcp.pop %v11546
    %v11627 = vmul.f32 1.0, %v11626
    %v11628 = vrcp.pop %v11547
    %v11629 = vmul.f32 1.0, %v11628
    %v11630 = vrcp.pop %v11548
    %v11631 = vmul.f32 1.0, %v11630
    %v11632 = vrcp.pop %v11549
    %v11633 = vmul.f32 1.0, %v11632
    %v11634 = vrcp.pop %v11550
    %v11635 = vmul.f32 1.0, %v11634
    %v11636 = vrcp.pop %v11551
    %v11637 = vmul.f32 1.0, %v11636
    %v11638 = vrcp.pop %v11552
    %v11639 = vmul.f32 1.0, %v11638
    %v11640 = vrcp.pop %v11553
    %v11641 = vmul.f32 1.0, %v11640
    %v11642 = vrcp.pop %v11554
    %v11643 = vmul.f32 1.0, %v11642
    %v11644 = vrcp.pop %v11555
    %v11645 = vmul.f32 1.0, %v11644
    %v11646 = vrcp.pop %v11556
    %v11647 = vmul.f32 1.0, %v11646
    %v11648 = vrcp.pop %v11557
    %v11649 = vmul.f32 1.0, %v11648
    %v11650 = vrcp.pop %v11558
    %v11651 = vmul.f32 1.0, %v11650
    %v11652 = vrcp.pop %v11559
    %v11653 = vmul.f32 1.0, %v11652
    %v11654 = vrcp.pop %v11560
    %v11655 = vmul.f32 1.0, %v11654
    %v11656 = vrcp.pop %v11561
    %v11657 = vmul.f32 1.0, %v11656
    %v11658 = vrcp.pop %v11562
    %v11659 = vmul.f32 1.0, %v11658
    %v11660 = vrcp.pop %v11563
    %v11661 = vmul.f32 1.0, %v11660
    %v11662 = vrcp.pop %v11564
    %v11663 = vmul.f32 1.0, %v11662
    %v11664 = vrcp.pop %v11565
    %v11665 = vmul.f32 1.0, %v11664
    %v11666 = vrcp.pop %v11566
    %v11667 = vmul.f32 1.0, %v11666
    %v11668 = vrcp.pop %v11567
    %v11669 = vmul.f32 1.0, %v11668
    %v11670 = vrcp.pop %v11568
    %v11671 = vmul.f32 1.0, %v11670
    %v11672 = vrcp.pop %v11569
    %v11673 = vmul.f32 1.0, %v11672
    %v11674 = vrcp.pop %v11570
    %v11675 = vmul.f32 1.0, %v11674
    %v11676 = vrcp.pop %v11571
    %v11677 = vmul.f32 1.0, %v11676
    %v11678 = vrcp.pop %v11572
    %v11679 = vmul.f32 1.0, %v11678
    %v11680 = vrcp.pop %v11573
    %v11681 = vmul.f32 1.0, %v11680
    %v11682 = vrcp.pop %v11574
    %v11683 = vmul.f32 1.0, %v11682
    %v11684 = vrcp.pop %v11575
    %v11685 = vmul.f32 1.0, %v11684
    %v11686 = vrcp.pop %v11576
    %v11687 = vmul.f32 1.0, %v11686
    %v11688 = vrcp.pop %v11577
    %v11689 = vmul.f32 1.0, %v11688
    %v11690 = vrcp.pop %v11578
    %v11691 = vmul.f32 1.0, %v11690
    %v11692 = vrcp.pop %v11579
    %v11693 = vmul.f32 1.0, %v11692
    %v11694 = vrcp.pop %v11580
    %v11695 = vmul.f32 1.0, %v11694
    %v11696 = vrcp.pop %v11581
    %v11697 = vmul.f32 1.0, %v11696
    %v11698 = vrcp.pop %v11582
    %v11699 = vmul.f32 1.0, %v11698
    %v11700 = vrcp.pop %v11583
    %v11701 = vmul.f32 1.0, %v11700
    %v11702 = vrcp.pop %v11584
    %v11703 = vmul.f32 1.0, %v11702
    %v11704 = vrcp.pop %v11585
    %v11705 = vmul.f32 1.0, %v11704
    %v11706 = vrcp.pop %v11586
    %v11707 = vmul.f32 1.0, %v11706
    %v11708 = vrcp.pop %v11587
    %v11709 = vmul.f32 1.0, %v11708
    %v11710 = vrcp.pop %v11588
    %v11711 = vmul.f32 1.0, %v11710
    %v11712 = vrcp.pop %v11589
    %v11713 = vmul.f32 1.0, %v11712
    %v11714 = vrcp.pop %v11590
    %v11715 = vmul.f32 1.0, %v11714
    %v11716 = vrcp.pop %v11591
    %v11717 = vmul.f32 1.0, %v11716
    %v11718 = vrcp.pop %v11592
    %v11719 = vmul.f32 1.0, %v11718
    %v11720 = vrcp.pop %v11593
    %v11721 = vmul.f32 1.0, %v11720
    %v11722 = vpack.c.bf16 %v11597, %v11595
    %v11723 = vpack.c.bf16 %v11601, %v11599
    %v11724 = vpack.c.bf16 %v11605, %v11603
    %v11725 = vpack.c.bf16 %v11609, %v11607
    %v11726 = vpack.c.bf16 %v11613, %v11611
    %v11727 = vpack.c.bf16 %v11617, %v11615
    %v11728 = vpack.c.bf16 %v11621, %v11619
    %v11729 = vpack.c.bf16 %v11625, %v11623
    %v11730 = vpack.c.bf16 %v11629, %v11627
    %v11731 = vpack.c.bf16 %v11633, %v11631
    %v11732 = vpack.c.bf16 %v11637, %v11635
    %v11733 = vpack.c.bf16 %v11641, %v11639
    %v11734 = vpack.c.bf16 %v11645, %v11643
    %v11735 = vpack.c.bf16 %v11649, %v11647
    %v11736 = vpack.c.bf16 %v11653, %v11651
    %v11737 = vpack.c.bf16 %v11657, %v11655
    %v11738 = vpack.c.bf16 %v11661, %v11659
    %v11739 = vpack.c.bf16 %v11665, %v11663
    %v11740 = vpack.c.bf16 %v11669, %v11667
    %v11741 = vpack.c.bf16 %v11673, %v11671
    %v11742 = vpack.c.bf16 %v11677, %v11675
    %v11743 = vpack.c.bf16 %v11681, %v11679
    %v11744 = vpack.c.bf16 %v11685, %v11683
    %v11745 = vpack.c.bf16 %v11689, %v11687
    %v11746 = vpack.c.bf16 %v11693, %v11691
    %v11747 = vpack.c.bf16 %v11697, %v11695
    %v11748 = vpack.c.bf16 %v11701, %v11699
    %v11749 = vpack.c.bf16 %v11705, %v11703
    %v11750 = vpack.c.bf16 %v11709, %v11707
    %v11751 = vpack.c.bf16 %v11713, %v11711
    %v11752 = vpack.c.bf16 %v11717, %v11715
    %v11753 = vpack.c.bf16 %v11721, %v11719
    %v11786 = vunpack.c.l.b16 %v11722
    %v11787 = vunpack.c.h.b16 %v11722
    %v11788 = vunpack.c.l.b16 %v11723
    %v11789 = vunpack.c.h.b16 %v11723
    %v11790 = vunpack.c.l.b16 %v11724
    %v11791 = vunpack.c.h.b16 %v11724
    %v11792 = vunpack.c.l.b16 %v11725
    %v11793 = vunpack.c.h.b16 %v11725
    %v11794 = vunpack.c.l.b16 %v11726
    %v11795 = vunpack.c.h.b16 %v11726
    %v11796 = vunpack.c.l.b16 %v11727
    %v11797 = vunpack.c.h.b16 %v11727
    %v11798 = vunpack.c.l.b16 %v11728
    %v11799 = vunpack.c.h.b16 %v11728
    %v11800 = vunpack.c.l.b16 %v11729
    %v11801 = vunpack.c.h.b16 %v11729
    %v11802 = vunpack.c.l.b16 %v11730
    %v11803 = vunpack.c.h.b16 %v11730
    %v11804 = vunpack.c.l.b16 %v11731
    %v11805 = vunpack.c.h.b16 %v11731
    %v11806 = vunpack.c.l.b16 %v11732
    %v11807 = vunpack.c.h.b16 %v11732
    %v11808 = vunpack.c.l.b16 %v11733
    %v11809 = vunpack.c.h.b16 %v11733
    %v11810 = vunpack.c.l.b16 %v11734
    %v11811 = vunpack.c.h.b16 %v11734
    %v11812 = vunpack.c.l.b16 %v11735
    %v11813 = vunpack.c.h.b16 %v11735
    %v11814 = vunpack.c.l.b16 %v11736
    %v11815 = vunpack.c.h.b16 %v11736
    %v11816 = vunpack.c.l.b16 %v11737
    %v11817 = vunpack.c.h.b16 %v11737
    %v11818 = vunpack.c.l.b16 %v11738
    %v11819 = vunpack.c.h.b16 %v11738
    %v11820 = vunpack.c.l.b16 %v11739
    %v11821 = vunpack.c.h.b16 %v11739
    %v11822 = vunpack.c.l.b16 %v11740
    %v11823 = vunpack.c.h.b16 %v11740
    %v11824 = vunpack.c.l.b16 %v11741
    %v11825 = vunpack.c.h.b16 %v11741
    %v11826 = vunpack.c.l.b16 %v11742
    %v11827 = vunpack.c.h.b16 %v11742
    %v11828 = vunpack.c.l.b16 %v11743
    %v11829 = vunpack.c.h.b16 %v11743
    %v11830 = vunpack.c.l.b16 %v11744
    %v11831 = vunpack.c.h.b16 %v11744
    %v11832 = vunpack.c.l.b16 %v11745
    %v11833 = vunpack.c.h.b16 %v11745
    %v11834 = vunpack.c.l.b16 %v11746
    %v11835 = vunpack.c.h.b16 %v11746
    %v11836 = vunpack.c.l.b16 %v11747
    %v11837 = vunpack.c.h.b16 %v11747
    %v11838 = vunpack.c.l.b16 %v11748
    %v11839 = vunpack.c.h.b16 %v11748
    %v11840 = vunpack.c.l.b16 %v11749
    %v11841 = vunpack.c.h.b16 %v11749
    %v11842 = vunpack.c.l.b16 %v11750
    %v11843 = vunpack.c.h.b16 %v11750
    %v11844 = vunpack.c.l.b16 %v11751
    %v11845 = vunpack.c.h.b16 %v11751
    %v11846 = vunpack.c.l.b16 %v11752
    %v11847 = vunpack.c.h.b16 %v11752
    %v11848 = vunpack.c.l.b16 %v11753
    %v11849 = vunpack.c.h.b16 %v11753
    %v11850 = vpack.c.b16 %v11786, %v11786
    %v11851 = vpack.c.b16 %v11787, %v11787
    %v11852 = vpack.c.b16 %v11788, %v11788
    %v11853 = vpack.c.b16 %v11789, %v11789
    %v11854 = vpack.c.b16 %v11790, %v11790
    %v11855 = vpack.c.b16 %v11791, %v11791
    %v11856 = vpack.c.b16 %v11792, %v11792
    %v11857 = vpack.c.b16 %v11793, %v11793
    %v11858 = vpack.c.b16 %v11794, %v11794
    %v11859 = vpack.c.b16 %v11795, %v11795
    %v11860 = vpack.c.b16 %v11796, %v11796
    %v11861 = vpack.c.b16 %v11797, %v11797
    %v11862 = vpack.c.b16 %v11798, %v11798
    %v11863 = vpack.c.b16 %v11799, %v11799
    %v11864 = vpack.c.b16 %v11800, %v11800
    %v11865 = vpack.c.b16 %v11801, %v11801
    %v11866 = vpack.c.b16 %v11802, %v11802
    %v11867 = vpack.c.b16 %v11803, %v11803
    %v11868 = vpack.c.b16 %v11804, %v11804
    %v11869 = vpack.c.b16 %v11805, %v11805
    %v11870 = vpack.c.b16 %v11806, %v11806
    %v11871 = vpack.c.b16 %v11807, %v11807
    %v11872 = vpack.c.b16 %v11808, %v11808
    %v11873 = vpack.c.b16 %v11809, %v11809
    %v11874 = vpack.c.b16 %v11810, %v11810
    %v11875 = vpack.c.b16 %v11811, %v11811
    %v11876 = vpack.c.b16 %v11812, %v11812
    %v11877 = vpack.c.b16 %v11813, %v11813
    %v11878 = vpack.c.b16 %v11814, %v11814
    %v11879 = vpack.c.b16 %v11815, %v11815
    %v11880 = vpack.c.b16 %v11816, %v11816
    %v11881 = vpack.c.b16 %v11817, %v11817
    %v11882 = vpack.c.b16 %v11818, %v11818
    %v11883 = vpack.c.b16 %v11819, %v11819
    %v11884 = vpack.c.b16 %v11820, %v11820
    %v11885 = vpack.c.b16 %v11821, %v11821
    %v11886 = vpack.c.b16 %v11822, %v11822
    %v11887 = vpack.c.b16 %v11823, %v11823
    %v11888 = vpack.c.b16 %v11824, %v11824
    %v11889 = vpack.c.b16 %v11825, %v11825
    %v11890 = vpack.c.b16 %v11826, %v11826
    %v11891 = vpack.c.b16 %v11827, %v11827
    %v11892 = vpack.c.b16 %v11828, %v11828
    %v11893 = vpack.c.b16 %v11829, %v11829
    %v11894 = vpack.c.b16 %v11830, %v11830
    %v11895 = vpack.c.b16 %v11831, %v11831
    %v11896 = vpack.c.b16 %v11832, %v11832
    %v11897 = vpack.c.b16 %v11833, %v11833
    %v11898 = vpack.c.b16 %v11834, %v11834
    %v11899 = vpack.c.b16 %v11835, %v11835
    %v11900 = vpack.c.b16 %v11836, %v11836
    %v11901 = vpack.c.b16 %v11837, %v11837
    %v11902 = vpack.c.b16 %v11838, %v11838
    %v11903 = vpack.c.b16 %v11839, %v11839
    %v11904 = vpack.c.b16 %v11840, %v11840
    %v11905 = vpack.c.b16 %v11841, %v11841
    %v11906 = vpack.c.b16 %v11842, %v11842
    %v11907 = vpack.c.b16 %v11843, %v11843
    %v11908 = vpack.c.b16 %v11844, %v11844
    %v11909 = vpack.c.b16 %v11845, %v11845
    %v11910 = vpack.c.b16 %v11846, %v11846
    %v11911 = vpack.c.b16 %v11847, %v11847
    %v11912 = vpack.c.b16 %v11848, %v11848
    %v11913 = vpack.c.b16 %v11849, %v11849
    %11978 = vst [vmem:[%s8] sm:$0xf] %v11850
    %11979 = vst [vmem:[%s8 + $0x4] sm:$0xf] %v11851
    %11980 = vst [vmem:[%s8 + $0x8] sm:$0xf] %v11852
    %11981 = vst [vmem:[%s8 + $0xc] sm:$0xf] %v11853
    %11982 = vst [vmem:[%s8 + $0x10] sm:$0xf] %v11854
    %11983 = vst [vmem:[%s8 + $0x14] sm:$0xf] %v11855
    %11984 = vst [vmem:[%s8 + $0x18] sm:$0xf] %v11856
    %11985 = vst [vmem:[%s8 + $0x1c] sm:$0xf] %v11857
    %11986 = vst [vmem:[%s8 + $0x20] sm:$0xf] %v11858
    %11987 = vst [vmem:[%s8 + $0x24] sm:$0xf] %v11859
    %11988 = vst [vmem:[%s8 + $0x28] sm:$0xf] %v11860
    %11989 = vst [vmem:[%s8 + $0x2c] sm:$0xf] %v11861
    %11990 = vst [vmem:[%s8 + $0x30] sm:$0xf] %v11862
    %11991 = vst [vmem:[%s8 + $0x34] sm:$0xf] %v11863
    %11992 = vst [vmem:[%s8 + $0x38] sm:$0xf] %v11864
    %11993 = vst [vmem:[%s8 + $0x3c] sm:$0xf] %v11865
    %11994 = vst [vmem:[%s8 + $0x40] sm:$0xf] %v11866
    %11995 = vst [vmem:[%s8 + $0x44] sm:$0xf] %v11867
    %11996 = vst [vmem:[%s8 + $0x48] sm:$0xf] %v11868
    %11997 = vst [vmem:[%s8 + $0x4c] sm:$0xf] %v11869
    %11998 = vst [vmem:[%s8 + $0x50] sm:$0xf] %v11870
    %11999 = vst [vmem:[%s8 + $0x54] sm:$0xf] %v11871
    %12000 = vst [vmem:[%s8 + $0x58] sm:$0xf] %v11872
    %12001 = vst [vmem:[%s8 + $0x5c] sm:$0xf] %v11873
    %12002 = vst [vmem:[%s8 + $0x60] sm:$0xf] %v11874
    %12003 = vst [vmem:[%s8 + $0x64] sm:$0xf] %v11875
    %12004 = vst [vmem:[%s8 + $0x68] sm:$0xf] %v11876
    %12005 = vst [vmem:[%s8 + $0x6c] sm:$0xf] %v11877
    %12006 = vst [vmem:[%s8 + $0x70] sm:$0xf] %v11878
    %12007 = vst [vmem:[%s8 + $0x74] sm:$0xf] %v11879
    %12008 = vst [vmem:[%s8 + $0x78] sm:$0xf] %v11880
    %12009 = vst [vmem:[%s8 + $0x7c] sm:$0xf] %v11881
    %12010 = vst [vmem:[%s8 + $0x80] sm:$0xf] %v11882
    %12011 = vst [vmem:[%s8 + $0x84] sm:$0xf] %v11883
    %12012 = vst [vmem:[%s8 + $0x88] sm:$0xf] %v11884
    %12013 = vst [vmem:[%s8 + $0x8c] sm:$0xf] %v11885
    %12014 = vst [vmem:[%s8 + $0x90] sm:$0xf] %v11886
    %12015 = vst [vmem:[%s8 + $0x94] sm:$0xf] %v11887
    %12016 = vst [vmem:[%s8 + $0x98] sm:$0xf] %v11888
    %12017 = vst [vmem:[%s8 + $0x9c] sm:$0xf] %v11889
    %12018 = vst [vmem:[%s8 + $0xa0] sm:$0xf] %v11890
    %12019 = vst [vmem:[%s8 + $0xa4] sm:$0xf] %v11891
    %12020 = vst [vmem:[%s8 + $0xa8] sm:$0xf] %v11892
    %12021 = vst [vmem:[%s8 + $0xac] sm:$0xf] %v11893
    %12022 = vst [vmem:[%s8 + $0xb0] sm:$0xf] %v11894
    %12023 = vst [vmem:[%s8 + $0xb4] sm:$0xf] %v11895
    %12024 = vst [vmem:[%s8 + $0xb8] sm:$0xf] %v11896
    %12025 = vst [vmem:[%s8 + $0xbc] sm:$0xf] %v11897
    %12026 = vst [vmem:[%s8 + $0xc0] sm:$0xf] %v11898
    %12027 = vst [vmem:[%s8 + $0xc4] sm:$0xf] %v11899
    %12028 = vst [vmem:[%s8 + $0xc8] sm:$0xf] %v11900
    %12029 = vst [vmem:[%s8 + $0xcc] sm:$0xf] %v11901
    %12030 = vst [vmem:[%s8 + $0xd0] sm:$0xf] %v11902
    %12031 = vst [vmem:[%s8 + $0xd4] sm:$0xf] %v11903
    %12032 = vst [vmem:[%s8 + $0xd8] sm:$0xf] %v11904
    %12033 = vst [vmem:[%s8 + $0xdc] sm:$0xf] %v11905
    %12034 = vst [vmem:[%s8 + $0xe0] sm:$0xf] %v11906
    %12035 = vst [vmem:[%s8 + $0xe4] sm:$0xf] %v11907
    %12036 = vst [vmem:[%s8 + $0xe8] sm:$0xf] %v11908
    %12037 = vst [vmem:[%s8 + $0xec] sm:$0xf] %v11909
    %12038 = vst [vmem:[%s8 + $0xf0] sm:$0xf] %v11910
    %12039 = vst [vmem:[%s8 + $0xf4] sm:$0xf] %v11911
    %12040 = vst [vmem:[%s8 + $0xf8] sm:$0xf] %v11912
    %12041 = vst [vmem:[%s8 + $0xfc] sm:$0xf] %v11913
    // Predicated region
    $region54: #{mlp3_forward.2} parent=1 // pred_check
      _
    $region55: #{mlp3_forward.2} parent=1 // pred_check_branch
      %12043 = sbr.rel (0) target = $region57
    $region56: #{mlp3_forward.2} parent=1 // pred_region
      _
    $region57: #{mlp3_forward.2} parent=1 // pred_fallthru
      _
    // Predicated region
    $region58: #{mlp3_forward.2} parent=1 // pred_check
      _
    $region59: #{mlp3_forward.2} parent=1 // pred_check_branch
      %12045 = sbr.rel (0) target = $region61
    $region60: #{mlp3_forward.2} parent=1 // pred_region
      _
    $region61: #{mlp3_forward.2} parent=1 // pred_fallthru
      _
    %12046 = vsyncpa [#allocation8], 1
    %12047 = vsyncpa [#allocation10], 1
    %12048 = vsyncpa [#allocation13], 1
    %12049 = vsyncpa [#allocation16], 1

</llo_original>
